<compile_context>
chip_gen: v7x
topology: tpu7x:2x2x1
jax: 0.10.0
libtpu: 0.0.40
codegen_flags: <defaults>
</compile_context>

<pallas_src>
import jax
import jax.numpy as jnp
from jax.experimental import pallas as pl
from jax.experimental.pallas import tpu as pltpu

# ----------------------- small-model hyperparameters -----------------------
SRC_VOCAB = 128
TRG_VOCAB = 128
ENC_ESIZE = 128        # (300 in the original)
DEC_ESIZE = 128        # (300 in the original)
ENC_HSIZE = 128        # (512 in the original)
DEC_HSIZE = 2 * ENC_HSIZE   # (1024 in the original) -- required by ATTN wiring

BF16 = jnp.bfloat16


# ------------------------------ Pallas kernels ------------------------------

def _enc_kernel(x_ref, wih_ref, whh_ref, b_ref,
                out_ref, hT_ref, cT_ref,
                xg_sc, h_sc, c_sc):
    """One bidirectional-LSTM direction per grid point.

    x: (S*B, E) bf16 (shared), wih: (E, 4H) bf16, whh: (H, 4H) bf16,
    b: (1, 4H) f32.  Output block: (S, B, H) bf16 written into the d-th
    lane-block of (S, B, 2H); hT/cT: (B, H) f32 per direction."""
    d = pl.program_id(0)
    S, B, H = out_ref.shape

    # Non-recurrent input projection for all S timesteps in one MXU pass.
    xg = jnp.dot(x_ref[...], wih_ref[...],
                 preferred_element_type=jnp.float32) + b_ref[...]
    xg_sc[...] = xg                                   # (S*B, 4H) f32 scratch

    h_sc[...] = jnp.zeros_like(h_sc)
    c_sc[...] = jnp.zeros_like(c_sc)
    whh = whh_ref[...]                                # (H, 4H) bf16, loaded once

    def step(t, carry):
        # data-time index: fwd direction walks t, bwd direction walks S-1-t
        td = jnp.where(d == 0, t, S - 1 - t)
        start = pl.multiple_of(td * B, B)
        gates = (xg_sc[pl.ds(start, B), :]
                 + jnp.dot(h_sc[...].astype(BF16), whh,
                           preferred_element_type=jnp.float32))
        i = jax.nn.sigmoid(gates[:, 0 * H:1 * H])
        f = jax.nn.sigmoid(gates[:, 1 * H:2 * H])
        g = jnp.tanh(gates[:, 2 * H:3 * H])
        o = jax.nn.sigmoid(gates[:, 3 * H:4 * H])
        c_new = f * c_sc[...] + i * g
        h_new = o * jnp.tanh(c_new)
        h_sc[...] = h_new
        c_sc[...] = c_new
        out_ref[td] = h_new.astype(out_ref.dtype)     # per-step hidden
        return carry

    jax.lax.fori_loop(0, S, step, 0, unroll=True)

    # final state per direction, written exactly once
    hT_ref[...] = h_sc[...]
    cT_ref[...] = c_sc[...]


def _dec_kernel(h0_ref, c0_ref, enc_ref, encT_ref, temb_ref,
                wi_ref, wo_ref, wih_ref, whh_ref, b_ref, gw_ref, gb_ref,
                out_ref, h_sc, c_sc):
    """Whole teacher-forcing decoder in one kernel invocation.

    enc: (B*S, D) bf16 batch-major flattened encoder output, encT: (D, B*S)
    bf16 pre-transposed copy (avoids a per-step XLU transpose)."""
    B, Hd = h_sc.shape
    T, _, V = out_ref.shape
    BS, D = enc_ref.shape
    S = BS // B

    # row 0 of the output: -1 everywhere, 10 at column 2 (BOS init row)
    colv = jax.lax.broadcasted_iota(jnp.int32, (B, V), 1)
    out_ref[0] = jnp.where(colv == 2, 10.0, -1.0).astype(out_ref.dtype)

    h_sc[...] = h0_ref[...]
    c_sc[...] = c0_ref[...]

    # Load every resident operand exactly once, outside the time loop.
    enc = enc_ref[...]                    # (BS, D) bf16
    encT = encT_ref[...]                  # (D, BS) bf16
    wi = wi_ref[...]                      # (D, D)  bf16
    wo = wo_ref[...]                      # (D+Hd, D) bf16
    wo_s, wo_h = wo[:D, :], wo[D:, :]
    wih = wih_ref[...]                    # (Hd+Ed, 4Hd) bf16
    whh = whh_ref[...]                    # (Hd, 4Hd) bf16
    bias = b_ref[...]                     # (1, 4Hd) f32
    gw = gw_ref[...]                      # (Hd, V) bf16
    gb = gb_ref[...]                      # (1, V) f32

    # block-diagonal mask: row b may only attend to its own S source positions
    rowb = jax.lax.broadcasted_iota(jnp.int32, (B, BS), 0)
    colb = jax.lax.broadcasted_iota(jnp.int32, (B, BS), 1)
    own = (colb >= rowb * S) & (colb < (rowb + 1) * S)

    def step(t, carry):
        h = h_sc[...]
        c = c_sc[...]
        hb = h.astype(BF16)

        # ------------------------------ attention ------------------------------
        semi = jnp.dot(hb, wi, preferred_element_type=jnp.float32)       # (B, D)
        scores = jnp.dot(semi.astype(BF16), encT,
                         preferred_element_type=jnp.float32)             # (B, BS)
        scores = jnp.where(own, scores, jnp.float32(-1e30))
        m = jnp.max(scores, axis=-1, keepdims=True)
        e = jnp.exp(scores - m)
        p = e * pl.reciprocal(jnp.sum(e, axis=-1, keepdims=True), approx=True)
        s_tilde = jnp.dot(p.astype(BF16), enc,
                          preferred_element_type=jnp.float32)            # (B, D)
        # Wo(cat([s_tilde, h])) == s_tilde @ Wo[:D] + h @ Wo[D:]
        proj = (jnp.dot(s_tilde.astype(BF16), wo_s,
                        preferred_element_type=jnp.float32)
                + jnp.dot(hb, wo_h, preferred_element_type=jnp.float32))
        c_t = jnp.tanh(proj)                                             # (B, Hd)

        # ------------------ decoder LSTMCell, input = [c_t, emb] ----------------
        emb = temb_ref[t - 1]                                            # (B, Ed) bf16
        dec_in = jnp.concatenate([c_t.astype(BF16), emb], axis=1)        # (B, Hd+Ed)
        gates = (jnp.dot(dec_in, wih, preferred_element_type=jnp.float32)
                 + jnp.dot(hb, whh, preferred_element_type=jnp.float32)
                 + bias)
        ig = jax.nn.sigmoid(gates[:, 0 * Hd:1 * Hd])
        fg = jax.nn.sigmoid(gates[:, 1 * Hd:2 * Hd])
        gg = jnp.tanh(gates[:, 2 * Hd:3 * Hd])
        og = jax.nn.sigmoid(gates[:, 3 * Hd:4 * Hd])
        c_new = fg * c + ig * gg
        h_new = og * jnp.tanh(c_new)
        h_sc[...] = h_new
        c_sc[...] = c_new

        # ---------------------- generator + log-softmax -------------------------
        logits = (jnp.dot(h_new.astype(BF16), gw,
                          preferred_element_type=jnp.float32) + gb)
        lm = jnp.max(logits, axis=-1, keepdims=True)
        z = logits - lm
        lse = jnp.log(jnp.sum(jnp.exp(z), axis=-1, keepdims=True))
        out_ref[t] = (z - lse).astype(out_ref.dtype)
        return carry

    jax.lax.fori_loop(1, T, step, 0, unroll=True)


# ------------------------------ kernel wrappers ------------------------------

def encoder_bilstm(enc_in, wih, whh, b):
    """enc_in: (S, B, E) bf16; wih/whh (2, ...) bf16; b (2, 1, 4H) f32.
       Returns enc_out (S, B, 2H) bf16 and final hT/cT (2, B, H) f32."""
    S, B, E = enc_in.shape
    H = whh.shape[1]

    return pl.pallas_call(
        _enc_kernel,
        grid=(2,),
        in_specs=[
            pl.BlockSpec((S * B, E), lambda d: (0, 0)),          # x (shared)
            pl.BlockSpec((None, E, 4 * H), lambda d: (d, 0, 0)),  # W_ih per dir
            pl.BlockSpec((None, H, 4 * H), lambda d: (d, 0, 0)),  # W_hh per dir
            pl.BlockSpec((None, 1, 4 * H), lambda d: (d, 0, 0)),  # bias per dir
        ],
        out_specs=(
            pl.BlockSpec((S, B, H), lambda d: (0, 0, d)),   # fwd|bwd lane blocks
            pl.BlockSpec((None, B, H), lambda d: (d, 0, 0)),
            pl.BlockSpec((None, B, H), lambda d: (d, 0, 0)),
        ),
        out_shape=(
            jax.ShapeDtypeStruct((S, B, 2 * H), BF16),
            jax.ShapeDtypeStruct((2, B, H), jnp.float32),
            jax.ShapeDtypeStruct((2, B, H), jnp.float32),
        ),
        scratch_shapes=[pltpu.VMEM((S * B, 4 * H), jnp.float32),
                        pltpu.VMEM((B, H), jnp.float32),
                        pltpu.VMEM((B, H), jnp.float32)],
        compiler_params=pltpu.CompilerParams(dimension_semantics=("parallel",)),
    )(enc_in.reshape(S * B, E), wih, whh, b)


def decoder_fused(h0, c0, enc_flat, encT, trg_emb, wi, wo, wih, whh, b, gw, gb):
    """Single-invocation fused decoder (attention + LSTMCell + generator)."""
    B, Hd = h0.shape
    BS, D = enc_flat.shape
    T, _, Ed = trg_emb.shape
    V = gw.shape[1]
    c2 = lambda i: (0, 0)
    c3 = lambda i: (0, 0, 0)
    return pl.pallas_call(
        _dec_kernel,
        grid=(1,),
        in_specs=[
            pl.BlockSpec((B, Hd), c2),               # h0
            pl.BlockSpec((B, Hd), c2),               # c0
            pl.BlockSpec((BS, D), c2),               # encoder output (B*S, D)
            pl.BlockSpec((D, BS), c2),               # pre-transposed (D, B*S)
            pl.BlockSpec((T, B, Ed), c3),            # target embeddings
            pl.BlockSpec((D, D), c2),                # attn Wi
            pl.BlockSpec((D + Hd, D), c2),           # attn Wo
            pl.BlockSpec((Hd + Ed, 4 * Hd), c2),     # dec W_ih
            pl.BlockSpec((Hd, 4 * Hd), c2),          # dec W_hh
            pl.BlockSpec((1, 4 * Hd), c2),           # dec bias
            pl.BlockSpec((Hd, V), c2),               # gen W
            pl.BlockSpec((1, V), c2),                # gen b
        ],
        out_specs=pl.BlockSpec((T, B, V), c3),
        out_shape=jax.ShapeDtypeStruct((T, B, V), jnp.float32),
        scratch_shapes=[pltpu.VMEM((B, Hd), jnp.float32),
                        pltpu.VMEM((B, Hd), jnp.float32)],
        compiler_params=pltpu.CompilerParams(dimension_semantics=("arbitrary",)),
    )(h0, c0, enc_flat, encT, trg_emb, wi, wo, wih, whh, b, gw, gb)


# ------------------------------ parameter init ------------------------------

def init_params(key):
    def rn(k, shape, scale=0.1):
        return scale * jax.random.normal(k, shape, dtype=jnp.float32)

    ks = jax.random.split(key, 12)
    H, E = ENC_HSIZE, ENC_ESIZE
    Hd, Ed = DEC_HSIZE, DEC_ESIZE
    D = 2 * ENC_HSIZE                       # attention in_dim
    return {
        "eemb": rn(ks[0], (SRC_VOCAB, E)),
        # encoder bi-LSTM, stacked (fwd=0, bwd=1); bias = b_ih + b_hh
        "enc_wih": rn(ks[1], (2, E, 4 * H)),
        "enc_whh": rn(ks[2], (2, H, 4 * H)),
        "enc_b": rn(ks[3], (2, 1, 4 * H)),
        # attention
        "attn_wi": rn(ks[4], (D, D)),
        "attn_wo": rn(ks[5], (D + Hd, D)),
        # decoder LSTMCell
        "dec_wih": rn(ks[6], (Hd + Ed, 4 * Hd)),
        "dec_whh": rn(ks[7], (Hd, 4 * Hd)),
        "dec_b": rn(ks[8], (1, 4 * Hd)),
        "demb": rn(ks[9], (TRG_VOCAB, Ed)),
        # generator
        "gen_w": rn(ks[10], (Hd, TRG_VOCAB)),
        "gen_b": rn(ks[11], (1, TRG_VOCAB)),
    }


# --------------------------------- forward ----------------------------------

@jax.jit
def nmt_forward(params, input_src_batch, input_trg_batch):
    """Training-mode forward (validating=False).
       input_src_batch: (S, B) int32 ; input_trg_batch: (T, B) int32
       returns (T, B, TRG_VOCAB) float32 log-probs (row 0 is the init row)."""
    enc_in = params["eemb"][input_src_batch].astype(BF16)    # (S, B, E)
    S, B, _ = enc_in.shape
    H = ENC_HSIZE

    enc_out, hT, cT = encoder_bilstm(
        enc_in,
        params["enc_wih"].astype(BF16),
        params["enc_whh"].astype(BF16),
        params["enc_b"])

    # (S, B, 2H) -> batch-major flattened (B*S, 2H) plus its transpose (bf16)
    enc_flat = jnp.transpose(enc_out, (1, 0, 2)).reshape(B * S, 2 * H)
    encT = enc_flat.T

    # PyTorch: hidden.permute(1, 2, 0).view(B, 2H) -> interleave fwd/bwd per unit
    hidden = jnp.transpose(hT, (1, 2, 0)).reshape(B, 2 * H)
    context = jnp.transpose(cT, (1, 2, 0)).reshape(B, 2 * H)

    trg_emb = params["demb"][input_trg_batch].astype(BF16)   # (T, B, Ed)

    # TODO(synk): inference branch (greedy decode with data-dependent stop at
    # EOS token 3) is not implemented; only the training-mode forward path is.
    return decoder_fused(hidden, context, enc_flat, encT, trg_emb,
                         params["attn_wi"].astype(BF16),
                         params["attn_wo"].astype(BF16),
                         params["dec_wih"].astype(BF16),
                         params["dec_whh"].astype(BF16),
                         params["dec_b"],
                         params["gen_w"].astype(BF16),
                         params["gen_b"])


# --------------------------- pure-JAX reference ------------------------------

def _ref_lstm_cell(x, h, c, wih, whh, b):
    Hs = h.shape[1]
    g = x @ wih + h @ whh + b
    i = jax.nn.sigmoid(g[:, :Hs])
    f = jax.nn.sigmoid(g[:, Hs:2 * Hs])
    gg = jnp.tanh(g[:, 2 * Hs:3 * Hs])
    o = jax.nn.sigmoid(g[:, 3 * Hs:])
    c2 = f * c + i * gg
    return o * jnp.tanh(c2), c2


@jax.jit
def nmt_forward_ref(params, src, trg):
    T = trg.shape[0]
    x = params["eemb"][src]
    S, B, _ = x.shape
    H = ENC_HSIZE
    h = jnp.zeros((B, H), jnp.float32)
    c = jnp.zeros((B, H), jnp.float32)
    fwd = []
    for t in range(S):
        h, c = _ref_lstm_cell(x[t], h, c, params["enc_wih"][0],
                              params["enc_whh"][0], params["enc_b"][0])
        fwd.append(h)
    hf, cf = h, c
    h = jnp.zeros((B, H), jnp.float32)
    c = jnp.zeros((B, H), jnp.float32)
    bwd = [None] * S
    for t in range(S - 1, -1, -1):
        h, c = _ref_lstm_cell(x[t], h, c, params["enc_wih"][1],
                              params["enc_whh"][1], params["enc_b"][1])
        bwd[t] = h
    hb, cb = h, c
    enc_out = jnp.concatenate([jnp.stack(fwd, 0), jnp.stack(bwd, 0)], axis=-1)
    hidden = jnp.stack([hf, hb], axis=2).reshape(B, 2 * H)
    context = jnp.stack([cf, cb], axis=2).reshape(B, 2 * H)
    out = jnp.full((T, B, TRG_VOCAB), -1.0, jnp.float32).at[0, :, 2].set(10.0)
    for i in range(1, T):
        semi = hidden @ params["attn_wi"]
        scores = jnp.sum(enc_out * semi[None, :, :], axis=2)     # (S, B)
        p = jax.nn.softmax(scores, axis=0)
        s_tilde = jnp.sum(p[:, :, None] * enc_out, axis=0)       # (B, D)
        c_t = jnp.tanh(jnp.concatenate([s_tilde, hidden], axis=1) @ params["attn_wo"])
        dec_in = jnp.concatenate([c_t, params["demb"][trg[i - 1]]], axis=1)
        hidden, context = _ref_lstm_cell(dec_in, hidden, context,
                                         params["dec_wih"], params["dec_whh"],
                                         params["dec_b"])
        logits = hidden @ params["gen_w"] + params["gen_b"]
        out = out.at[i].set(jax.nn.log_softmax(logits, axis=-1))
    return out


# ----------------------------------- main ------------------------------------

if __name__ == "__main__":
    key = jax.random.PRNGKey(0)
    k_src, k_trg, k_params = jax.random.split(key, 3)

    S, B, T = 8, 8, 6
    src = jax.random.randint(k_src, (S, B), 0, SRC_VOCAB, dtype=jnp.int32)
    trg = jax.random.randint(k_trg, (T, B), 0, TRG_VOCAB, dtype=jnp.int32)
    params = init_params(k_params)

    out = jax.block_until_ready(nmt_forward(params, src, trg))
    assert out.shape == (T, B, TRG_VOCAB), out.shape
    assert out.dtype == jnp.float32

    with jax.default_matmul_precision("float32"):
        ref = jax.block_until_ready(nmt_forward_ref(params, src, trg))
    max_err = float(jnp.max(jnp.abs(out - ref)))
    assert max_err < 0.2, f"mismatch vs reference: max abs err = {max_err}"

    print("KERNEL_OK")
</pallas_src>

<mosaic_0001>
module attributes {stable_mosaic.version = 11 : i64} {
  func.func @_enc_kernel(%arg0: i32, %arg1: memref<64x128xbf16, #tpu.memory_space<vmem>>, %arg2: memref<1x128x512xbf16, #tpu.memory_space<vmem>>, %arg3: memref<1x128x512xbf16, #tpu.memory_space<vmem>>, %arg4: memref<1x1x512xf32, #tpu.memory_space<vmem>>, %arg5: memref<8x8x128xbf16, #tpu.memory_space<vmem>>, %arg6: memref<1x8x128xf32, #tpu.memory_space<vmem>>, %arg7: memref<1x8x128xf32, #tpu.memory_space<vmem>>, %arg8: memref<64x512xf32, #tpu.memory_space<vmem>>, %arg9: memref<8x128xf32, #tpu.memory_space<vmem>>, %arg10: memref<8x128xf32, #tpu.memory_space<vmem>>) attributes {dimension_semantics = [#tpu.dimension_semantics<parallel>], iteration_bounds = array<i64: 2>, scalar_prefetch = 0 : i64, scratch_operands = 3 : i64, tpu.core_type = #tpu.core_type<tc>, window_params = [{pipeline_mode = #tpu.pipeline_mode<synchronous>, transform_indices = @transform_0, window_bounds = array<i64: 64, 128>}, {transform_indices = @transform_1, window_bounds = array<i64: 1, 128, 512>}, {transform_indices = @transform_2, window_bounds = array<i64: 1, 128, 512>}, {transform_indices = @transform_3, window_bounds = array<i64: 1, 1, 512>}, {transform_indices = @transform_4, window_bounds = array<i64: 8, 8, 128>}, {transform_indices = @transform_5, window_bounds = array<i64: 1, 8, 128>}, {transform_indices = @transform_6, window_bounds = array<i64: 1, 8, 128>}]} {
    %c0 = arith.constant 0 : index
    %c0_0 = arith.constant 0 : index
    %0 = vector.load %arg1[%c0, %c0_0] : memref<64x128xbf16, #tpu.memory_space<vmem>>, vector<64x128xbf16>
    %c0_1 = arith.constant 0 : index
    %c0_2 = arith.constant 0 : index
    %c0_3 = arith.constant 0 : index
    %1 = vector.load %arg2[%c0_1, %c0_2, %c0_3] : memref<1x128x512xbf16, #tpu.memory_space<vmem>>, vector<1x128x512xbf16>
    %2 = vector.shape_cast %1 : vector<1x128x512xbf16> to vector<128x512xbf16>
    %cst = arith.constant dense<0.000000e+00> : vector<64x512xf32>
    %3 = tpu.matmul %0, %2, %cst {dimension_numbers = #tpu.dot_dimension_numbers<[1], [0], [0], [1], [0, 0, 1, 1], [], []>} : vector<64x128xbf16>, vector<128x512xbf16>, vector<64x512xf32> -> vector<64x512xf32>
    %c0_4 = arith.constant 0 : index
    %c0_5 = arith.constant 0 : index
    %c0_6 = arith.constant 0 : index
    %4 = vector.load %arg4[%c0_4, %c0_5, %c0_6] : memref<1x1x512xf32, #tpu.memory_space<vmem>>, vector<1x1x512xf32>
    %5 = vector.shape_cast %4 : vector<1x1x512xf32> to vector<1x512xf32>
    %6 = vector.broadcast %5 : vector<1x512xf32> to vector<64x512xf32>
    %7 = arith.addf %3, %6 : vector<64x512xf32>
    %c0_7 = arith.constant 0 : index
    %c0_8 = arith.constant 0 : index
    %8 = vector.load %arg8[%c0_7, %c0_8] : memref<64x512xf32, #tpu.memory_space<vmem>>, vector<64x512xf32>
    tpu.vector_store %arg8[%c0_7, %c0_8], %7 {strides = array<i32>} : memref<64x512xf32, #tpu.memory_space<vmem>>, vector<64x512xf32>,
    %cst_9 = arith.constant 0.000000e+00 : f32
    %9 = vector.broadcast %cst_9 : f32 to vector<8x128xf32>
    %c0_10 = arith.constant 0 : index
    %c0_11 = arith.constant 0 : index
    %10 = vector.load %arg9[%c0_10, %c0_11] : memref<8x128xf32, #tpu.memory_space<vmem>>, vector<8x128xf32>
    tpu.vector_store %arg9[%c0_10, %c0_11], %9 {strides = array<i32>} : memref<8x128xf32, #tpu.memory_space<vmem>>, vector<8x128xf32>,
    %cst_12 = arith.constant 0.000000e+00 : f32
    %11 = vector.broadcast %cst_12 : f32 to vector<8x128xf32>
    %c0_13 = arith.constant 0 : index
    %c0_14 = arith.constant 0 : index
    %12 = vector.load %arg10[%c0_13, %c0_14] : memref<8x128xf32, #tpu.memory_space<vmem>>, vector<8x128xf32>
    tpu.vector_store %arg10[%c0_13, %c0_14], %11 {strides = array<i32>} : memref<8x128xf32, #tpu.memory_space<vmem>>, vector<8x128xf32>,
    %c0_15 = arith.constant 0 : index
    %c0_16 = arith.constant 0 : index
    %c0_17 = arith.constant 0 : index
    %13 = vector.load %arg3[%c0_15, %c0_16, %c0_17] : memref<1x128x512xbf16, #tpu.memory_space<vmem>>, vector<1x128x512xbf16>
    %14 = vector.shape_cast %13 : vector<1x128x512xbf16> to vector<128x512xbf16>
    %c0_i32 = arith.constant 0 : i32
    %c0_i32_18 = arith.constant 0 : i32
    %15 = arith.cmpi eq, %arg0, %c0_i32_18 : i32
    %c7_i32 = arith.constant 7 : i32
    %16 = arith.subi %c7_i32, %c0_i32 : i32
    %17 = arith.select %15, %c0_i32, %16 : i32
    %c8_i32 = arith.constant 8 : i32
    %18 = arith.muli %17, %c8_i32 : i32
    %19 = tpu.assume_multiple %18, 8 : i32
    %20 = arith.index_cast %19 : i32 to index
    %c0_19 = arith.constant 0 : index
    %21 = vector.load %arg8[%20, %c0_19] : memref<64x512xf32, #tpu.memory_space<vmem>>, vector<8x512xf32>
    %c0_20 = arith.constant 0 : index
    %c0_21 = arith.constant 0 : index
    %22 = vector.load %arg9[%c0_20, %c0_21] : memref<8x128xf32, #tpu.memory_space<vmem>>, vector<8x128xf32>
    %23 = arith.truncf %22 : vector<8x128xf32> to vector<8x128xbf16>
    %cst_22 = arith.constant dense<0.000000e+00> : vector<8x512xf32>
    %24 = tpu.matmul %23, %14, %cst_22 {dimension_numbers = #tpu.dot_dimension_numbers<[1], [0], [0], [1], [0, 0, 1, 1], [], []>} : vector<8x128xbf16>, vector<128x512xbf16>, vector<8x512xf32> -> vector<8x512xf32>
    %25 = arith.addf %21, %24 : vector<8x512xf32>
    %26 = vector.extract_strided_slice %25 {offsets = [0, 0], sizes = [8, 128], strides = [1, 1]} : vector<8x512xf32> to vector<8x128xf32>
    %27 = arith.negf %26 : vector<8x128xf32>
    %28 = math.exp %27 : vector<8x128xf32>
    %cst_23 = arith.constant 1.000000e+00 : f32
    %29 = vector.broadcast %cst_23 : f32 to vector<8x128xf32>
    %30 = arith.addf %29, %28 : vector<8x128xf32>
    %31 = arith.divf %29, %30 : vector<8x128xf32>
    %32 = vector.extract_strided_slice %25 {offsets = [0, 128], sizes = [8, 128], strides = [1, 1]} : vector<8x512xf32> to vector<8x128xf32>
    %33 = arith.negf %32 : vector<8x128xf32>
    %34 = math.exp %33 : vector<8x128xf32>
    %cst_24 = arith.constant 1.000000e+00 : f32
    %35 = vector.broadcast %cst_24 : f32 to vector<8x128xf32>
    %36 = arith.addf %35, %34 : vector<8x128xf32>
    %37 = arith.divf %35, %36 : vector<8x128xf32>
    %38 = vector.extract_strided_slice %25 {offsets = [0, 256], sizes = [8, 128], strides = [1, 1]} : vector<8x512xf32> to vector<8x128xf32>
    %39 = math.tanh %38 : vector<8x128xf32>
    %40 = vector.extract_strided_slice %25 {offsets = [0, 384], sizes = [8, 128], strides = [1, 1]} : vector<8x512xf32> to vector<8x128xf32>
    %41 = arith.negf %40 : vector<8x128xf32>
    %42 = math.exp %41 : vector<8x128xf32>
    %cst_25 = arith.constant 1.000000e+00 : f32
    %43 = vector.broadcast %cst_25 : f32 to vector<8x128xf32>
    %44 = arith.addf %43, %42 : vector<8x128xf32>
    %45 = arith.divf %43, %44 : vector<8x128xf32>
    %c0_26 = arith.constant 0 : index
    %c0_27 = arith.constant 0 : index
    %46 = vector.load %arg10[%c0_26, %c0_27] : memref<8x128xf32, #tpu.memory_space<vmem>>, vector<8x128xf32>
    %47 = arith.mulf %37, %46 : vector<8x128xf32>
    %48 = arith.mulf %31, %39 : vector<8x128xf32>
    %49 = arith.addf %47, %48 : vector<8x128xf32>
    %50 = math.tanh %49 : vector<8x128xf32>
    %51 = arith.mulf %45, %50 : vector<8x128xf32>
    %c0_28 = arith.constant 0 : index
    %c0_29 = arith.constant 0 : index
    %52 = vector.load %arg9[%c0_28, %c0_29] : memref<8x128xf32, #tpu.memory_space<vmem>>, vector<8x128xf32>
    tpu.vector_store %arg9[%c0_28, %c0_29], %51 {strides = array<i32>} : memref<8x128xf32, #tpu.memory_space<vmem>>, vector<8x128xf32>,
    %c0_30 = arith.constant 0 : index
    %c0_31 = arith.constant 0 : index
    %53 = vector.load %arg10[%c0_30, %c0_31] : memref<8x128xf32, #tpu.memory_space<vmem>>, vector<8x128xf32>
    tpu.vector_store %arg10[%c0_30, %c0_31], %49 {strides = array<i32>} : memref<8x128xf32, #tpu.memory_space<vmem>>, vector<8x128xf32>,
    %54 = arith.truncf %51 : vector<8x128xf32> to vector<8x128xbf16>
    %55 = arith.index_cast %17 : i32 to index
    %c0_32 = arith.constant 0 : index
    %c0_33 = arith.constant 0 : index
    %56 = vector.load %arg5[%55, %c0_32, %c0_33] : memref<8x8x128xbf16, #tpu.memory_space<vmem>>, vector<1x8x128xbf16>
    %57 = vector.shape_cast %56 : vector<1x8x128xbf16> to vector<8x128xbf16>
    %58 = vector.shape_cast %54 : vector<8x128xbf16> to vector<1x8x128xbf16>
    tpu.vector_store %arg5[%55, %c0_32, %c0_33], %58 {strides = array<i32>} : memref<8x8x128xbf16, #tpu.memory_space<vmem>>, vector<1x8x128xbf16>,
    %c1_i32 = arith.constant 1 : i32
    %c0_i32_34 = arith.constant 0 : i32
    %59 = arith.cmpi eq, %arg0, %c0_i32_34 : i32
    %c7_i32_35 = arith.constant 7 : i32
    %60 = arith.subi %c7_i32_35, %c1_i32 : i32
    %61 = arith.select %59, %c1_i32, %60 : i32
    %c8_i32_36 = arith.constant 8 : i32
    %62 = arith.muli %61, %c8_i32_36 : i32
    %63 = tpu.assume_multiple %62, 8 : i32
    %64 = arith.index_cast %63 : i32 to index
    %c0_37 = arith.constant 0 : index
    %65 = vector.load %arg8[%64, %c0_37] : memref<64x512xf32, #tpu.memory_space<vmem>>, vector<8x512xf32>
    %c0_38 = arith.constant 0 : index
    %c0_39 = arith.constant 0 : index
    %66 = vector.load %arg9[%c0_38, %c0_39] : memref<8x128xf32, #tpu.memory_space<vmem>>, vector<8x128xf32>
    %67 = arith.truncf %66 : vector<8x128xf32> to vector<8x128xbf16>
    %cst_40 = arith.constant dense<0.000000e+00> : vector<8x512xf32>
    %68 = tpu.matmul %67, %14, %cst_40 {dimension_numbers = #tpu.dot_dimension_numbers<[1], [0], [0], [1], [0, 0, 1, 1], [], []>} : vector<8x128xbf16>, vector<128x512xbf16>, vector<8x512xf32> -> vector<8x512xf32>
    %69 = arith.addf %65, %68 : vector<8x512xf32>
    %70 = vector.extract_strided_slice %69 {offsets = [0, 0], sizes = [8, 128], strides = [1, 1]} : vector<8x512xf32> to vector<8x128xf32>
    %71 = arith.negf %70 : vector<8x128xf32>
    %72 = math.exp %71 : vector<8x128xf32>
    %cst_41 = arith.constant 1.000000e+00 : f32
    %73 = vector.broadcast %cst_41 : f32 to vector<8x128xf32>
    %74 = arith.addf %73, %72 : vector<8x128xf32>
    %75 = arith.divf %73, %74 : vector<8x128xf32>
    %76 = vector.extract_strided_slice %69 {offsets = [0, 128], sizes = [8, 128], strides = [1, 1]} : vector<8x512xf32> to vector<8x128xf32>
    %77 = arith.negf %76 : vector<8x128xf32>
    %78 = math.exp %77 : vector<8x128xf32>
    %cst_42 = arith.constant 1.000000e+00 : f32
    %79 = vector.broadcast %cst_42 : f32 to vector<8x128xf32>
    %80 = arith.addf %79, %78 : vector<8x128xf32>
    %81 = arith.divf %79, %80 : vector<8x128xf32>
    %82 = vector.extract_strided_slice %69 {offsets = [0, 256], sizes = [8, 128], strides = [1, 1]} : vector<8x512xf32> to vector<8x128xf32>
    %83 = math.tanh %82 : vector<8x128xf32>
    %84 = vector.extract_strided_slice %69 {offsets = [0, 384], sizes = [8, 128], strides = [1, 1]} : vector<8x512xf32> to vector<8x128xf32>
    %85 = arith.negf %84 : vector<8x128xf32>
    %86 = math.exp %85 : vector<8x128xf32>
    %cst_43 = arith.constant 1.000000e+00 : f32
    %87 = vector.broadcast %cst_43 : f32 to vector<8x128xf32>
    %88 = arith.addf %87, %86 : vector<8x128xf32>
    %89 = arith.divf %87, %88 : vector<8x128xf32>
    %c0_44 = arith.constant 0 : index
    %c0_45 = arith.constant 0 : index
    %90 = vector.load %arg10[%c0_44, %c0_45] : memref<8x128xf32, #tpu.memory_space<vmem>>, vector<8x128xf32>
    %91 = arith.mulf %81, %90 : vector<8x128xf32>
    %92 = arith.mulf %75, %83 : vector<8x128xf32>
    %93 = arith.addf %91, %92 : vector<8x128xf32>
    %94 = math.tanh %93 : vector<8x128xf32>
    %95 = arith.mulf %89, %94 : vector<8x128xf32>
    %c0_46 = arith.constant 0 : index
    %c0_47 = arith.constant 0 : index
    %96 = vector.load %arg9[%c0_46, %c0_47] : memref<8x128xf32, #tpu.memory_space<vmem>>, vector<8x128xf32>
    tpu.vector_store %arg9[%c0_46, %c0_47], %95 {strides = array<i32>} : memref<8x128xf32, #tpu.memory_space<vmem>>, vector<8x128xf32>,
    %c0_48 = arith.constant 0 : index
    %c0_49 = arith.constant 0 : index
    %97 = vector.load %arg10[%c0_48, %c0_49] : memref<8x128xf32, #tpu.memory_space<vmem>>, vector<8x128xf32>
    tpu.vector_store %arg10[%c0_48, %c0_49], %93 {strides = array<i32>} : memref<8x128xf32, #tpu.memory_space<vmem>>, vector<8x128xf32>,
    %98 = arith.truncf %95 : vector<8x128xf32> to vector<8x128xbf16>
    %99 = arith.index_cast %61 : i32 to index
    %c0_50 = arith.constant 0 : index
    %c0_51 = arith.constant 0 : index
    %100 = vector.load %arg5[%99, %c0_50, %c0_51] : memref<8x8x128xbf16, #tpu.memory_space<vmem>>, vector<1x8x128xbf16>
    %101 = vector.shape_cast %100 : vector<1x8x128xbf16> to vector<8x128xbf16>
    %102 = vector.shape_cast %98 : vector<8x128xbf16> to vector<1x8x128xbf16>
    tpu.vector_store %arg5[%99, %c0_50, %c0_51], %102 {strides = array<i32>} : memref<8x8x128xbf16, #tpu.memory_space<vmem>>, vector<1x8x128xbf16>,
    %c2_i32 = arith.constant 2 : i32
    %c0_i32_52 = arith.constant 0 : i32
    %103 = arith.cmpi eq, %arg0, %c0_i32_52 : i32
    %c7_i32_53 = arith.constant 7 : i32
    %104 = arith.subi %c7_i32_53, %c2_i32 : i32
    %105 = arith.select %103, %c2_i32, %104 : i32
    %c8_i32_54 = arith.constant 8 : i32
    %106 = arith.muli %105, %c8_i32_54 : i32
    %107 = tpu.assume_multiple %106, 8 : i32
    %108 = arith.index_cast %107 : i32 to index
    %c0_55 = arith.constant 0 : index
    %109 = vector.load %arg8[%108, %c0_55] : memref<64x512xf32, #tpu.memory_space<vmem>>, vector<8x512xf32>
    %c0_56 = arith.constant 0 : index
    %c0_57 = arith.constant 0 : index
    %110 = vector.load %arg9[%c0_56, %c0_57] : memref<8x128xf32, #tpu.memory_space<vmem>>, vector<8x128xf32>
    %111 = arith.truncf %110 : vector<8x128xf32> to vector<8x128xbf16>
    %cst_58 = arith.constant dense<0.000000e+00> : vector<8x512xf32>
    %112 = tpu.matmul %111, %14, %cst_58 {dimension_numbers = #tpu.dot_dimension_numbers<[1], [0], [0], [1], [0, 0, 1, 1], [], []>} : vector<8x128xbf16>, vector<128x512xbf16>, vector<8x512xf32> -> vector<8x512xf32>
    %113 = arith.addf %109, %112 : vector<8x512xf32>
    %114 = vector.extract_strided_slice %113 {offsets = [0, 0], sizes = [8, 128], strides = [1, 1]} : vector<8x512xf32> to vector<8x128xf32>
    %115 = arith.negf %114 : vector<8x128xf32>
    %116 = math.exp %115 : vector<8x128xf32>
    %cst_59 = arith.constant 1.000000e+00 : f32
    %117 = vector.broadcast %cst_59 : f32 to vector<8x128xf32>
    %118 = arith.addf %117, %116 : vector<8x128xf32>
    %119 = arith.divf %117, %118 : vector<8x128xf32>
    %120 = vector.extract_strided_slice %113 {offsets = [0, 128], sizes = [8, 128], strides = [1, 1]} : vector<8x512xf32> to vector<8x128xf32>
    %121 = arith.negf %120 : vector<8x128xf32>
    %122 = math.exp %121 : vector<8x128xf32>
    %cst_60 = arith.constant 1.000000e+00 : f32
    %123 = vector.broadcast %cst_60 : f32 to vector<8x128xf32>
    %124 = arith.addf %123, %122 : vector<8x128xf32>
    %125 = arith.divf %123, %124 : vector<8x128xf32>
    %126 = vector.extract_strided_slice %113 {offsets = [0, 256], sizes = [8, 128], strides = [1, 1]} : vector<8x512xf32> to vector<8x128xf32>
    %127 = math.tanh %126 : vector<8x128xf32>
    %128 = vector.extract_strided_slice %113 {offsets = [0, 384], sizes = [8, 128], strides = [1, 1]} : vector<8x512xf32> to vector<8x128xf32>
    %129 = arith.negf %128 : vector<8x128xf32>
    %130 = math.exp %129 : vector<8x128xf32>
    %cst_61 = arith.constant 1.000000e+00 : f32
    %131 = vector.broadcast %cst_61 : f32 to vector<8x128xf32>
    %132 = arith.addf %131, %130 : vector<8x128xf32>
    %133 = arith.divf %131, %132 : vector<8x128xf32>
    %c0_62 = arith.constant 0 : index
    %c0_63 = arith.constant 0 : index
    %134 = vector.load %arg10[%c0_62, %c0_63] : memref<8x128xf32, #tpu.memory_space<vmem>>, vector<8x128xf32>
    %135 = arith.mulf %125, %134 : vector<8x128xf32>
    %136 = arith.mulf %119, %127 : vector<8x128xf32>
    %137 = arith.addf %135, %136 : vector<8x128xf32>
    %138 = math.tanh %137 : vector<8x128xf32>
    %139 = arith.mulf %133, %138 : vector<8x128xf32>
    %c0_64 = arith.constant 0 : index
    %c0_65 = arith.constant 0 : index
    %140 = vector.load %arg9[%c0_64, %c0_65] : memref<8x128xf32, #tpu.memory_space<vmem>>, vector<8x128xf32>
    tpu.vector_store %arg9[%c0_64, %c0_65], %139 {strides = array<i32>} : memref<8x128xf32, #tpu.memory_space<vmem>>, vector<8x128xf32>,
    %c0_66 = arith.constant 0 : index
    %c0_67 = arith.constant 0 : index
    %141 = vector.load %arg10[%c0_66, %c0_67] : memref<8x128xf32, #tpu.memory_space<vmem>>, vector<8x128xf32>
    tpu.vector_store %arg10[%c0_66, %c0_67], %137 {strides = array<i32>} : memref<8x128xf32, #tpu.memory_space<vmem>>, vector<8x128xf32>,
    %142 = arith.truncf %139 : vector<8x128xf32> to vector<8x128xbf16>
    %143 = arith.index_cast %105 : i32 to index
    %c0_68 = arith.constant 0 : index
    %c0_69 = arith.constant 0 : index
    %144 = vector.load %arg5[%143, %c0_68, %c0_69] : memref<8x8x128xbf16, #tpu.memory_space<vmem>>, vector<1x8x128xbf16>
    %145 = vector.shape_cast %144 : vector<1x8x128xbf16> to vector<8x128xbf16>
    %146 = vector.shape_cast %142 : vector<8x128xbf16> to vector<1x8x128xbf16>
    tpu.vector_store %arg5[%143, %c0_68, %c0_69], %146 {strides = array<i32>} : memref<8x8x128xbf16, #tpu.memory_space<vmem>>, vector<1x8x128xbf16>,
    %c3_i32 = arith.constant 3 : i32
    %c0_i32_70 = arith.constant 0 : i32
    %147 = arith.cmpi eq, %arg0, %c0_i32_70 : i32
    %c7_i32_71 = arith.constant 7 : i32
    %148 = arith.subi %c7_i32_71, %c3_i32 : i32
    %149 = arith.select %147, %c3_i32, %148 : i32
    %c8_i32_72 = arith.constant 8 : i32
    %150 = arith.muli %149, %c8_i32_72 : i32
    %151 = tpu.assume_multiple %150, 8 : i32
    %152 = arith.index_cast %151 : i32 to index
    %c0_73 = arith.constant 0 : index
    %153 = vector.load %arg8[%152, %c0_73] : memref<64x512xf32, #tpu.memory_space<vmem>>, vector<8x512xf32>
    %c0_74 = arith.constant 0 : index
    %c0_75 = arith.constant 0 : index
    %154 = vector.load %arg9[%c0_74, %c0_75] : memref<8x128xf32, #tpu.memory_space<vmem>>, vector<8x128xf32>
    %155 = arith.truncf %154 : vector<8x128xf32> to vector<8x128xbf16>
    %cst_76 = arith.constant dense<0.000000e+00> : vector<8x512xf32>
    %156 = tpu.matmul %155, %14, %cst_76 {dimension_numbers = #tpu.dot_dimension_numbers<[1], [0], [0], [1], [0, 0, 1, 1], [], []>} : vector<8x128xbf16>, vector<128x512xbf16>, vector<8x512xf32> -> vector<8x512xf32>
    %157 = arith.addf %153, %156 : vector<8x512xf32>
    %158 = vector.extract_strided_slice %157 {offsets = [0, 0], sizes = [8, 128], strides = [1, 1]} : vector<8x512xf32> to vector<8x128xf32>
    %159 = arith.negf %158 : vector<8x128xf32>
    %160 = math.exp %159 : vector<8x128xf32>
    %cst_77 = arith.constant 1.000000e+00 : f32
    %161 = vector.broadcast %cst_77 : f32 to vector<8x128xf32>
    %162 = arith.addf %161, %160 : vector<8x128xf32>
    %163 = arith.divf %161, %162 : vector<8x128xf32>
    %164 = vector.extract_strided_slice %157 {offsets = [0, 128], sizes = [8, 128], strides = [1, 1]} : vector<8x512xf32> to vector<8x128xf32>
    %165 = arith.negf %164 : vector<8x128xf32>
    %166 = math.exp %165 : vector<8x128xf32>
    %cst_78 = arith.constant 1.000000e+00 : f32
    %167 = vector.broadcast %cst_78 : f32 to vector<8x128xf32>
    %168 = arith.addf %167, %166 : vector<8x128xf32>
    %169 = arith.divf %167, %168 : vector<8x128xf32>
    %170 = vector.extract_strided_slice %157 {offsets = [0, 256], sizes = [8, 128], strides = [1, 1]} : vector<8x512xf32> to vector<8x128xf32>
    %171 = math.tanh %170 : vector<8x128xf32>
    %172 = vector.extract_strided_slice %157 {offsets = [0, 384], sizes = [8, 128], strides = [1, 1]} : vector<8x512xf32> to vector<8x128xf32>
    %173 = arith.negf %172 : vector<8x128xf32>
    %174 = math.exp %173 : vector<8x128xf32>
    %cst_79 = arith.constant 1.000000e+00 : f32
    %175 = vector.broadcast %cst_79 : f32 to vector<8x128xf32>
    %176 = arith.addf %175, %174 : vector<8x128xf32>
    %177 = arith.divf %175, %176 : vector<8x128xf32>
    %c0_80 = arith.constant 0 : index
    %c0_81 = arith.constant 0 : index
    %178 = vector.load %arg10[%c0_80, %c0_81] : memref<8x128xf32, #tpu.memory_space<vmem>>, vector<8x128xf32>
    %179 = arith.mulf %169, %178 : vector<8x128xf32>
    %180 = arith.mulf %163, %171 : vector<8x128xf32>
    %181 = arith.addf %179, %180 : vector<8x128xf32>
    %182 = math.tanh %181 : vector<8x128xf32>
    %183 = arith.mulf %177, %182 : vector<8x128xf32>
    %c0_82 = arith.constant 0 : index
    %c0_83 = arith.constant 0 : index
    %184 = vector.load %arg9[%c0_82, %c0_83] : memref<8x128xf32, #tpu.memory_space<vmem>>, vector<8x128xf32>
    tpu.vector_store %arg9[%c0_82, %c0_83], %183 {strides = array<i32>} : memref<8x128xf32, #tpu.memory_space<vmem>>, vector<8x128xf32>,
    %c0_84 = arith.constant 0 : index
    %c0_85 = arith.constant 0 : index
    %185 = vector.load %arg10[%c0_84, %c0_85] : memref<8x128xf32, #tpu.memory_space<vmem>>, vector<8x128xf32>
    tpu.vector_store %arg10[%c0_84, %c0_85], %181 {strides = array<i32>} : memref<8x128xf32, #tpu.memory_space<vmem>>, vector<8x128xf32>,
    %186 = arith.truncf %183 : vector<8x128xf32> to vector<8x128xbf16>
    %187 = arith.index_cast %149 : i32 to index
    %c0_86 = arith.constant 0 : index
    %c0_87 = arith.constant 0 : index
    %188 = vector.load %arg5[%187, %c0_86, %c0_87] : memref<8x8x128xbf16, #tpu.memory_space<vmem>>, vector<1x8x128xbf16>
    %189 = vector.shape_cast %188 : vector<1x8x128xbf16> to vector<8x128xbf16>
    %190 = vector.shape_cast %186 : vector<8x128xbf16> to vector<1x8x128xbf16>
    tpu.vector_store %arg5[%187, %c0_86, %c0_87], %190 {strides = array<i32>} : memref<8x8x128xbf16, #tpu.memory_space<vmem>>, vector<1x8x128xbf16>,
    %c4_i32 = arith.constant 4 : i32
    %c0_i32_88 = arith.constant 0 : i32
    %191 = arith.cmpi eq, %arg0, %c0_i32_88 : i32
    %c7_i32_89 = arith.constant 7 : i32
    %192 = arith.subi %c7_i32_89, %c4_i32 : i32
    %193 = arith.select %191, %c4_i32, %192 : i32
    %c8_i32_90 = arith.constant 8 : i32
    %194 = arith.muli %193, %c8_i32_90 : i32
    %195 = tpu.assume_multiple %194, 8 : i32
    %196 = arith.index_cast %195 : i32 to index
    %c0_91 = arith.constant 0 : index
    %197 = vector.load %arg8[%196, %c0_91] : memref<64x512xf32, #tpu.memory_space<vmem>>, vector<8x512xf32>
    %c0_92 = arith.constant 0 : index
    %c0_93 = arith.constant 0 : index
    %198 = vector.load %arg9[%c0_92, %c0_93] : memref<8x128xf32, #tpu.memory_space<vmem>>, vector<8x128xf32>
    %199 = arith.truncf %198 : vector<8x128xf32> to vector<8x128xbf16>
    %cst_94 = arith.constant dense<0.000000e+00> : vector<8x512xf32>
    %200 = tpu.matmul %199, %14, %cst_94 {dimension_numbers = #tpu.dot_dimension_numbers<[1], [0], [0], [1], [0, 0, 1, 1], [], []>} : vector<8x128xbf16>, vector<128x512xbf16>, vector<8x512xf32> -> vector<8x512xf32>
    %201 = arith.addf %197, %200 : vector<8x512xf32>
    %202 = vector.extract_strided_slice %201 {offsets = [0, 0], sizes = [8, 128], strides = [1, 1]} : vector<8x512xf32> to vector<8x128xf32>
    %203 = arith.negf %202 : vector<8x128xf32>
    %204 = math.exp %203 : vector<8x128xf32>
    %cst_95 = arith.constant 1.000000e+00 : f32
    %205 = vector.broadcast %cst_95 : f32 to vector<8x128xf32>
    %206 = arith.addf %205, %204 : vector<8x128xf32>
    %207 = arith.divf %205, %206 : vector<8x128xf32>
    %208 = vector.extract_strided_slice %201 {offsets = [0, 128], sizes = [8, 128], strides = [1, 1]} : vector<8x512xf32> to vector<8x128xf32>
    %209 = arith.negf %208 : vector<8x128xf32>
    %210 = math.exp %209 : vector<8x128xf32>
    %cst_96 = arith.constant 1.000000e+00 : f32
    %211 = vector.broadcast %cst_96 : f32 to vector<8x128xf32>
    %212 = arith.addf %211, %210 : vector<8x128xf32>
    %213 = arith.divf %211, %212 : vector<8x128xf32>
    %214 = vector.extract_strided_slice %201 {offsets = [0, 256], sizes = [8, 128], strides = [1, 1]} : vector<8x512xf32> to vector<8x128xf32>
    %215 = math.tanh %214 : vector<8x128xf32>
    %216 = vector.extract_strided_slice %201 {offsets = [0, 384], sizes = [8, 128], strides = [1, 1]} : vector<8x512xf32> to vector<8x128xf32>
    %217 = arith.negf %216 : vector<8x128xf32>
    %218 = math.exp %217 : vector<8x128xf32>
    %cst_97 = arith.constant 1.000000e+00 : f32
    %219 = vector.broadcast %cst_97 : f32 to vector<8x128xf32>
    %220 = arith.addf %219, %218 : vector<8x128xf32>
    %221 = arith.divf %219, %220 : vector<8x128xf32>
    %c0_98 = arith.constant 0 : index
    %c0_99 = arith.constant 0 : index
    %222 = vector.load %arg10[%c0_98, %c0_99] : memref<8x128xf32, #tpu.memory_space<vmem>>, vector<8x128xf32>
    %223 = arith.mulf %213, %222 : vector<8x128xf32>
    %224 = arith.mulf %207, %215 : vector<8x128xf32>
    %225 = arith.addf %223, %224 : vector<8x128xf32>
    %226 = math.tanh %225 : vector<8x128xf32>
    %227 = arith.mulf %221, %226 : vector<8x128xf32>
    %c0_100 = arith.constant 0 : index
    %c0_101 = arith.constant 0 : index
    %228 = vector.load %arg9[%c0_100, %c0_101] : memref<8x128xf32, #tpu.memory_space<vmem>>, vector<8x128xf32>
    tpu.vector_store %arg9[%c0_100, %c0_101], %227 {strides = array<i32>} : memref<8x128xf32, #tpu.memory_space<vmem>>, vector<8x128xf32>,
    %c0_102 = arith.constant 0 : index
    %c0_103 = arith.constant 0 : index
    %229 = vector.load %arg10[%c0_102, %c0_103] : memref<8x128xf32, #tpu.memory_space<vmem>>, vector<8x128xf32>
    tpu.vector_store %arg10[%c0_102, %c0_103], %225 {strides = array<i32>} : memref<8x128xf32, #tpu.memory_space<vmem>>, vector<8x128xf32>,
    %230 = arith.truncf %227 : vector<8x128xf32> to vector<8x128xbf16>
    %231 = arith.index_cast %193 : i32 to index
    %c0_104 = arith.constant 0 : index
    %c0_105 = arith.constant 0 : index
    %232 = vector.load %arg5[%231, %c0_104, %c0_105] : memref<8x8x128xbf16, #tpu.memory_space<vmem>>, vector<1x8x128xbf16>
    %233 = vector.shape_cast %232 : vector<1x8x128xbf16> to vector<8x128xbf16>
    %234 = vector.shape_cast %230 : vector<8x128xbf16> to vector<1x8x128xbf16>
    tpu.vector_store %arg5[%231, %c0_104, %c0_105], %234 {strides = array<i32>} : memref<8x8x128xbf16, #tpu.memory_space<vmem>>, vector<1x8x128xbf16>,
    %c5_i32 = arith.constant 5 : i32
    %c0_i32_106 = arith.constant 0 : i32
    %235 = arith.cmpi eq, %arg0, %c0_i32_106 : i32
    %c7_i32_107 = arith.constant 7 : i32
    %236 = arith.subi %c7_i32_107, %c5_i32 : i32
    %237 = arith.select %235, %c5_i32, %236 : i32
    %c8_i32_108 = arith.constant 8 : i32
    %238 = arith.muli %237, %c8_i32_108 : i32
    %239 = tpu.assume_multiple %238, 8 : i32
    %240 = arith.index_cast %239 : i32 to index
    %c0_109 = arith.constant 0 : index
    %241 = vector.load %arg8[%240, %c0_109] : memref<64x512xf32, #tpu.memory_space<vmem>>, vector<8x512xf32>
    %c0_110 = arith.constant 0 : index
    %c0_111 = arith.constant 0 : index
    %242 = vector.load %arg9[%c0_110, %c0_111] : memref<8x128xf32, #tpu.memory_space<vmem>>, vector<8x128xf32>
    %243 = arith.truncf %242 : vector<8x128xf32> to vector<8x128xbf16>
    %cst_112 = arith.constant dense<0.000000e+00> : vector<8x512xf32>
    %244 = tpu.matmul %243, %14, %cst_112 {dimension_numbers = #tpu.dot_dimension_numbers<[1], [0], [0], [1], [0, 0, 1, 1], [], []>} : vector<8x128xbf16>, vector<128x512xbf16>, vector<8x512xf32> -> vector<8x512xf32>
    %245 = arith.addf %241, %244 : vector<8x512xf32>
    %246 = vector.extract_strided_slice %245 {offsets = [0, 0], sizes = [8, 128], strides = [1, 1]} : vector<8x512xf32> to vector<8x128xf32>
    %247 = arith.negf %246 : vector<8x128xf32>
    %248 = math.exp %247 : vector<8x128xf32>
    %cst_113 = arith.constant 1.000000e+00 : f32
    %249 = vector.broadcast %cst_113 : f32 to vector<8x128xf32>
    %250 = arith.addf %249, %248 : vector<8x128xf32>
    %251 = arith.divf %249, %250 : vector<8x128xf32>
    %252 = vector.extract_strided_slice %245 {offsets = [0, 128], sizes = [8, 128], strides = [1, 1]} : vector<8x512xf32> to vector<8x128xf32>
    %253 = arith.negf %252 : vector<8x128xf32>
    %254 = math.exp %253 : vector<8x128xf32>
    %cst_114 = arith.constant 1.000000e+00 : f32
    %255 = vector.broadcast %cst_114 : f32 to vector<8x128xf32>
    %256 = arith.addf %255, %254 : vector<8x128xf32>
    %257 = arith.divf %255, %256 : vector<8x128xf32>
    %258 = vector.extract_strided_slice %245 {offsets = [0, 256], sizes = [8, 128], strides = [1, 1]} : vector<8x512xf32> to vector<8x128xf32>
    %259 = math.tanh %258 : vector<8x128xf32>
    %260 = vector.extract_strided_slice %245 {offsets = [0, 384], sizes = [8, 128], strides = [1, 1]} : vector<8x512xf32> to vector<8x128xf32>
    %261 = arith.negf %260 : vector<8x128xf32>
    %262 = math.exp %261 : vector<8x128xf32>
    %cst_115 = arith.constant 1.000000e+00 : f32
    %263 = vector.broadcast %cst_115 : f32 to vector<8x128xf32>
    %264 = arith.addf %263, %262 : vector<8x128xf32>
    %265 = arith.divf %263, %264 : vector<8x128xf32>
    %c0_116 = arith.constant 0 : index
    %c0_117 = arith.constant 0 : index
    %266 = vector.load %arg10[%c0_116, %c0_117] : memref<8x128xf32, #tpu.memory_space<vmem>>, vector<8x128xf32>
    %267 = arith.mulf %257, %266 : vector<8x128xf32>
    %268 = arith.mulf %251, %259 : vector<8x128xf32>
    %269 = arith.addf %267, %268 : vector<8x128xf32>
    %270 = math.tanh %269 : vector<8x128xf32>
    %271 = arith.mulf %265, %270 : vector<8x128xf32>
    %c0_118 = arith.constant 0 : index
    %c0_119 = arith.constant 0 : index
    %272 = vector.load %arg9[%c0_118, %c0_119] : memref<8x128xf32, #tpu.memory_space<vmem>>, vector<8x128xf32>
    tpu.vector_store %arg9[%c0_118, %c0_119], %271 {strides = array<i32>} : memref<8x128xf32, #tpu.memory_space<vmem>>, vector<8x128xf32>,
    %c0_120 = arith.constant 0 : index
    %c0_121 = arith.constant 0 : index
    %273 = vector.load %arg10[%c0_120, %c0_121] : memref<8x128xf32, #tpu.memory_space<vmem>>, vector<8x128xf32>
    tpu.vector_store %arg10[%c0_120, %c0_121], %269 {strides = array<i32>} : memref<8x128xf32, #tpu.memory_space<vmem>>, vector<8x128xf32>,
    %274 = arith.truncf %271 : vector<8x128xf32> to vector<8x128xbf16>
    %275 = arith.index_cast %237 : i32 to index
    %c0_122 = arith.constant 0 : index
    %c0_123 = arith.constant 0 : index
    %276 = vector.load %arg5[%275, %c0_122, %c0_123] : memref<8x8x128xbf16, #tpu.memory_space<vmem>>, vector<1x8x128xbf16>
    %277 = vector.shape_cast %276 : vector<1x8x128xbf16> to vector<8x128xbf16>
    %278 = vector.shape_cast %274 : vector<8x128xbf16> to vector<1x8x128xbf16>
    tpu.vector_store %arg5[%275, %c0_122, %c0_123], %278 {strides = array<i32>} : memref<8x8x128xbf16, #tpu.memory_space<vmem>>, vector<1x8x128xbf16>,
    %c6_i32 = arith.constant 6 : i32
    %c0_i32_124 = arith.constant 0 : i32
    %279 = arith.cmpi eq, %arg0, %c0_i32_124 : i32
    %c7_i32_125 = arith.constant 7 : i32
    %280 = arith.subi %c7_i32_125, %c6_i32 : i32
    %281 = arith.select %279, %c6_i32, %280 : i32
    %c8_i32_126 = arith.constant 8 : i32
    %282 = arith.muli %281, %c8_i32_126 : i32
    %283 = tpu.assume_multiple %282, 8 : i32
    %284 = arith.index_cast %283 : i32 to index
    %c0_127 = arith.constant 0 : index
    %285 = vector.load %arg8[%284, %c0_127] : memref<64x512xf32, #tpu.memory_space<vmem>>, vector<8x512xf32>
    %c0_128 = arith.constant 0 : index
    %c0_129 = arith.constant 0 : index
    %286 = vector.load %arg9[%c0_128, %c0_129] : memref<8x128xf32, #tpu.memory_space<vmem>>, vector<8x128xf32>
    %287 = arith.truncf %286 : vector<8x128xf32> to vector<8x128xbf16>
    %cst_130 = arith.constant dense<0.000000e+00> : vector<8x512xf32>
    %288 = tpu.matmul %287, %14, %cst_130 {dimension_numbers = #tpu.dot_dimension_numbers<[1], [0], [0], [1], [0, 0, 1, 1], [], []>} : vector<8x128xbf16>, vector<128x512xbf16>, vector<8x512xf32> -> vector<8x512xf32>
    %289 = arith.addf %285, %288 : vector<8x512xf32>
    %290 = vector.extract_strided_slice %289 {offsets = [0, 0], sizes = [8, 128], strides = [1, 1]} : vector<8x512xf32> to vector<8x128xf32>
    %291 = arith.negf %290 : vector<8x128xf32>
    %292 = math.exp %291 : vector<8x128xf32>
    %cst_131 = arith.constant 1.000000e+00 : f32
    %293 = vector.broadcast %cst_131 : f32 to vector<8x128xf32>
    %294 = arith.addf %293, %292 : vector<8x128xf32>
    %295 = arith.divf %293, %294 : vector<8x128xf32>
    %296 = vector.extract_strided_slice %289 {offsets = [0, 128], sizes = [8, 128], strides = [1, 1]} : vector<8x512xf32> to vector<8x128xf32>
    %297 = arith.negf %296 : vector<8x128xf32>
    %298 = math.exp %297 : vector<8x128xf32>
    %cst_132 = arith.constant 1.000000e+00 : f32
    %299 = vector.broadcast %cst_132 : f32 to vector<8x128xf32>
    %300 = arith.addf %299, %298 : vector<8x128xf32>
    %301 = arith.divf %299, %300 : vector<8x128xf32>
    %302 = vector.extract_strided_slice %289 {offsets = [0, 256], sizes = [8, 128], strides = [1, 1]} : vector<8x512xf32> to vector<8x128xf32>
    %303 = math.tanh %302 : vector<8x128xf32>
    %304 = vector.extract_strided_slice %289 {offsets = [0, 384], sizes = [8, 128], strides = [1, 1]} : vector<8x512xf32> to vector<8x128xf32>
    %305 = arith.negf %304 : vector<8x128xf32>
    %306 = math.exp %305 : vector<8x128xf32>
    %cst_133 = arith.constant 1.000000e+00 : f32
    %307 = vector.broadcast %cst_133 : f32 to vector<8x128xf32>
    %308 = arith.addf %307, %306 : vector<8x128xf32>
    %309 = arith.divf %307, %308 : vector<8x128xf32>
    %c0_134 = arith.constant 0 : index
    %c0_135 = arith.constant 0 : index
    %310 = vector.load %arg10[%c0_134, %c0_135] : memref<8x128xf32, #tpu.memory_space<vmem>>, vector<8x128xf32>
    %311 = arith.mulf %301, %310 : vector<8x128xf32>
    %312 = arith.mulf %295, %303 : vector<8x128xf32>
    %313 = arith.addf %311, %312 : vector<8x128xf32>
    %314 = math.tanh %313 : vector<8x128xf32>
    %315 = arith.mulf %309, %314 : vector<8x128xf32>
    %c0_136 = arith.constant 0 : index
    %c0_137 = arith.constant 0 : index
    %316 = vector.load %arg9[%c0_136, %c0_137] : memref<8x128xf32, #tpu.memory_space<vmem>>, vector<8x128xf32>
    tpu.vector_store %arg9[%c0_136, %c0_137], %315 {strides = array<i32>} : memref<8x128xf32, #tpu.memory_space<vmem>>, vector<8x128xf32>,
    %c0_138 = arith.constant 0 : index
    %c0_139 = arith.constant 0 : index
    %317 = vector.load %arg10[%c0_138, %c0_139] : memref<8x128xf32, #tpu.memory_space<vmem>>, vector<8x128xf32>
    tpu.vector_store %arg10[%c0_138, %c0_139], %313 {strides = array<i32>} : memref<8x128xf32, #tpu.memory_space<vmem>>, vector<8x128xf32>,
    %318 = arith.truncf %315 : vector<8x128xf32> to vector<8x128xbf16>
    %319 = arith.index_cast %281 : i32 to index
    %c0_140 = arith.constant 0 : index
    %c0_141 = arith.constant 0 : index
    %320 = vector.load %arg5[%319, %c0_140, %c0_141] : memref<8x8x128xbf16, #tpu.memory_space<vmem>>, vector<1x8x128xbf16>
    %321 = vector.shape_cast %320 : vector<1x8x128xbf16> to vector<8x128xbf16>
    %322 = vector.shape_cast %318 : vector<8x128xbf16> to vector<1x8x128xbf16>
    tpu.vector_store %arg5[%319, %c0_140, %c0_141], %322 {strides = array<i32>} : memref<8x8x128xbf16, #tpu.memory_space<vmem>>, vector<1x8x128xbf16>,
    %c7_i32_142 = arith.constant 7 : i32
    %c0_i32_143 = arith.constant 0 : i32
    %323 = arith.cmpi eq, %arg0, %c0_i32_143 : i32
    %c7_i32_144 = arith.constant 7 : i32
    %324 = arith.subi %c7_i32_144, %c7_i32_142 : i32
    %325 = arith.select %323, %c7_i32_142, %324 : i32
    %c8_i32_145 = arith.constant 8 : i32
    %326 = arith.muli %325, %c8_i32_145 : i32
    %327 = tpu.assume_multiple %326, 8 : i32
    %328 = arith.index_cast %327 : i32 to index
    %c0_146 = arith.constant 0 : index
    %329 = vector.load %arg8[%328, %c0_146] : memref<64x512xf32, #tpu.memory_space<vmem>>, vector<8x512xf32>
    %c0_147 = arith.constant 0 : index
    %c0_148 = arith.constant 0 : index
    %330 = vector.load %arg9[%c0_147, %c0_148] : memref<8x128xf32, #tpu.memory_space<vmem>>, vector<8x128xf32>
    %331 = arith.truncf %330 : vector<8x128xf32> to vector<8x128xbf16>
    %cst_149 = arith.constant dense<0.000000e+00> : vector<8x512xf32>
    %332 = tpu.matmul %331, %14, %cst_149 {dimension_numbers = #tpu.dot_dimension_numbers<[1], [0], [0], [1], [0, 0, 1, 1], [], []>} : vector<8x128xbf16>, vector<128x512xbf16>, vector<8x512xf32> -> vector<8x512xf32>
    %333 = arith.addf %329, %332 : vector<8x512xf32>
    %334 = vector.extract_strided_slice %333 {offsets = [0, 0], sizes = [8, 128], strides = [1, 1]} : vector<8x512xf32> to vector<8x128xf32>
    %335 = arith.negf %334 : vector<8x128xf32>
    %336 = math.exp %335 : vector<8x128xf32>
    %cst_150 = arith.constant 1.000000e+00 : f32
    %337 = vector.broadcast %cst_150 : f32 to vector<8x128xf32>
    %338 = arith.addf %337, %336 : vector<8x128xf32>
    %339 = arith.divf %337, %338 : vector<8x128xf32>
    %340 = vector.extract_strided_slice %333 {offsets = [0, 128], sizes = [8, 128], strides = [1, 1]} : vector<8x512xf32> to vector<8x128xf32>
    %341 = arith.negf %340 : vector<8x128xf32>
    %342 = math.exp %341 : vector<8x128xf32>
    %cst_151 = arith.constant 1.000000e+00 : f32
    %343 = vector.broadcast %cst_151 : f32 to vector<8x128xf32>
    %344 = arith.addf %343, %342 : vector<8x128xf32>
    %345 = arith.divf %343, %344 : vector<8x128xf32>
    %346 = vector.extract_strided_slice %333 {offsets = [0, 256], sizes = [8, 128], strides = [1, 1]} : vector<8x512xf32> to vector<8x128xf32>
    %347 = math.tanh %346 : vector<8x128xf32>
    %348 = vector.extract_strided_slice %333 {offsets = [0, 384], sizes = [8, 128], strides = [1, 1]} : vector<8x512xf32> to vector<8x128xf32>
    %349 = arith.negf %348 : vector<8x128xf32>
    %350 = math.exp %349 : vector<8x128xf32>
    %cst_152 = arith.constant 1.000000e+00 : f32
    %351 = vector.broadcast %cst_152 : f32 to vector<8x128xf32>
    %352 = arith.addf %351, %350 : vector<8x128xf32>
    %353 = arith.divf %351, %352 : vector<8x128xf32>
    %c0_153 = arith.constant 0 : index
    %c0_154 = arith.constant 0 : index
    %354 = vector.load %arg10[%c0_153, %c0_154] : memref<8x128xf32, #tpu.memory_space<vmem>>, vector<8x128xf32>
    %355 = arith.mulf %345, %354 : vector<8x128xf32>
    %356 = arith.mulf %339, %347 : vector<8x128xf32>
    %357 = arith.addf %355, %356 : vector<8x128xf32>
    %358 = math.tanh %357 : vector<8x128xf32>
    %359 = arith.mulf %353, %358 : vector<8x128xf32>
    %c0_155 = arith.constant 0 : index
    %c0_156 = arith.constant 0 : index
    %360 = vector.load %arg9[%c0_155, %c0_156] : memref<8x128xf32, #tpu.memory_space<vmem>>, vector<8x128xf32>
    tpu.vector_store %arg9[%c0_155, %c0_156], %359 {strides = array<i32>} : memref<8x128xf32, #tpu.memory_space<vmem>>, vector<8x128xf32>,
    %c0_157 = arith.constant 0 : index
    %c0_158 = arith.constant 0 : index
    %361 = vector.load %arg10[%c0_157, %c0_158] : memref<8x128xf32, #tpu.memory_space<vmem>>, vector<8x128xf32>
    tpu.vector_store %arg10[%c0_157, %c0_158], %357 {strides = array<i32>} : memref<8x128xf32, #tpu.memory_space<vmem>>, vector<8x128xf32>,
    %362 = arith.truncf %359 : vector<8x128xf32> to vector<8x128xbf16>
    %363 = arith.index_cast %325 : i32 to index
    %c0_159 = arith.constant 0 : index
    %c0_160 = arith.constant 0 : index
    %364 = vector.load %arg5[%363, %c0_159, %c0_160] : memref<8x8x128xbf16, #tpu.memory_space<vmem>>, vector<1x8x128xbf16>
    %365 = vector.shape_cast %364 : vector<1x8x128xbf16> to vector<8x128xbf16>
    %366 = vector.shape_cast %362 : vector<8x128xbf16> to vector<1x8x128xbf16>
    tpu.vector_store %arg5[%363, %c0_159, %c0_160], %366 {strides = array<i32>} : memref<8x8x128xbf16, #tpu.memory_space<vmem>>, vector<1x8x128xbf16>,
    %c8_i32_161 = arith.constant 8 : i32
    %c0_162 = arith.constant 0 : index
    %c0_163 = arith.constant 0 : index
    %367 = vector.load %arg9[%c0_162, %c0_163] : memref<8x128xf32, #tpu.memory_space<vmem>>, vector<8x128xf32>
    %c0_164 = arith.constant 0 : index
    %c0_165 = arith.constant 0 : index
    %c0_166 = arith.constant 0 : index
    %368 = vector.load %arg6[%c0_164, %c0_165, %c0_166] : memref<1x8x128xf32, #tpu.memory_space<vmem>>, vector<1x8x128xf32>
    %369 = vector.shape_cast %368 : vector<1x8x128xf32> to vector<8x128xf32>
    %370 = vector.shape_cast %367 : vector<8x128xf32> to vector<1x8x128xf32>
    tpu.vector_store %arg6[%c0_164, %c0_165, %c0_166], %370 {strides = array<i32>} : memref<1x8x128xf32, #tpu.memory_space<vmem>>, vector<1x8x128xf32>,
    %c0_167 = arith.constant 0 : index
    %c0_168 = arith.constant 0 : index
    %371 = vector.load %arg10[%c0_167, %c0_168] : memref<8x128xf32, #tpu.memory_space<vmem>>, vector<8x128xf32>
    %c0_169 = arith.constant 0 : index
    %c0_170 = arith.constant 0 : index
    %c0_171 = arith.constant 0 : index
    %372 = vector.load %arg7[%c0_169, %c0_170, %c0_171] : memref<1x8x128xf32, #tpu.memory_space<vmem>>, vector<1x8x128xf32>
    %373 = vector.shape_cast %372 : vector<1x8x128xf32> to vector<8x128xf32>
    %374 = vector.shape_cast %371 : vector<8x128xf32> to vector<1x8x128xf32>
    tpu.vector_store %arg7[%c0_169, %c0_170, %c0_171], %374 {strides = array<i32>} : memref<1x8x128xf32, #tpu.memory_space<vmem>>, vector<1x8x128xf32>,
    return
  }
  func.func @transform_0(%arg0: i32) -> (i32, i32) {
    %c0_i32 = arith.constant 0 : i32
    %c0_i32_0 = arith.constant 0 : i32
    %c0_i32_1 = arith.constant 0 : i32
    return %c0_i32, %c0_i32_0 : i32, i32
  }
  func.func @transform_1(%arg0: i32) -> (i32, i32, i32) {
    %c0_i32 = arith.constant 0 : i32
    %c0_i32_0 = arith.constant 0 : i32
    %c0_i32_1 = arith.constant 0 : i32
    return %arg0, %c0_i32, %c0_i32_0 : i32, i32, i32
  }
  func.func @transform_2(%arg0: i32) -> (i32, i32, i32) {
    %c0_i32 = arith.constant 0 : i32
    %c0_i32_0 = arith.constant 0 : i32
    %c0_i32_1 = arith.constant 0 : i32
    return %arg0, %c0_i32, %c0_i32_0 : i32, i32, i32
  }
  func.func @transform_3(%arg0: i32) -> (i32, i32, i32) {
    %c0_i32 = arith.constant 0 : i32
    %c0_i32_0 = arith.constant 0 : i32
    %c0_i32_1 = arith.constant 0 : i32
    return %arg0, %c0_i32, %c0_i32_0 : i32, i32, i32
  }
  func.func @transform_4(%arg0: i32) -> (i32, i32, i32) {
    %c0_i32 = arith.constant 0 : i32
    %c0_i32_0 = arith.constant 0 : i32
    %c0_i32_1 = arith.constant 0 : i32
    return %c0_i32, %c0_i32_0, %arg0 : i32, i32, i32
  }
  func.func @transform_5(%arg0: i32) -> (i32, i32, i32) {
    %c0_i32 = arith.constant 0 : i32
    %c0_i32_0 = arith.constant 0 : i32
    %c0_i32_1 = arith.constant 0 : i32
    return %arg0, %c0_i32, %c0_i32_0 : i32, i32, i32
  }
  func.func @transform_6(%arg0: i32) -> (i32, i32, i32) {
    %c0_i32 = arith.constant 0 : i32
    %c0_i32_0 = arith.constant 0 : i32
    %c0_i32_1 = arith.constant 0 : i32
    return %arg0, %c0_i32, %c0_i32_0 : i32, i32, i32
  }
}

module attributes {stable_mosaic.version = 11 : i64} {
  func.func @_dec_kernel(%arg0: i32, %arg1: memref<8x256xf32, #tpu.memory_space<vmem>>, %arg2: memref<8x256xf32, #tpu.memory_space<vmem>>, %arg3: memref<64x256xbf16, #tpu.memory_space<vmem>>, %arg4: memref<256x64xbf16, #tpu.memory_space<vmem>>, %arg5: memref<6x8x128xbf16, #tpu.memory_space<vmem>>, %arg6: memref<256x256xbf16, #tpu.memory_space<vmem>>, %arg7: memref<512x256xbf16, #tpu.memory_space<vmem>>, %arg8: memref<384x1024xbf16, #tpu.memory_space<vmem>>, %arg9: memref<256x1024xbf16, #tpu.memory_space<vmem>>, %arg10: memref<1x1024xf32, #tpu.memory_space<vmem>>, %arg11: memref<256x128xbf16, #tpu.memory_space<vmem>>, %arg12: memref<1x128xf32, #tpu.memory_space<vmem>>, %arg13: memref<6x8x128xf32, #tpu.memory_space<vmem>>, %arg14: memref<8x256xf32, #tpu.memory_space<vmem>>, %arg15: memref<8x256xf32, #tpu.memory_space<vmem>>) attributes {dimension_semantics = [#tpu.dimension_semantics<arbitrary>], iteration_bounds = array<i64: 1>, scalar_prefetch = 0 : i64, scratch_operands = 2 : i64, tpu.core_type = #tpu.core_type<tc>, window_params = [{pipeline_mode = #tpu.pipeline_mode<synchronous>, transform_indices = @transform_0, window_bounds = array<i64: 8, 256>}, {pipeline_mode = #tpu.pipeline_mode<synchronous>, transform_indices = @transform_1, window_bounds = array<i64: 8, 256>}, {pipeline_mode = #tpu.pipeline_mode<synchronous>, transform_indices = @transform_2, window_bounds = array<i64: 64, 256>}, {pipeline_mode = #tpu.pipeline_mode<synchronous>, transform_indices = @transform_3, window_bounds = array<i64: 256, 64>}, {pipeline_mode = #tpu.pipeline_mode<synchronous>, transform_indices = @transform_4, window_bounds = array<i64: 6, 8, 128>}, {pipeline_mode = #tpu.pipeline_mode<synchronous>, transform_indices = @transform_5, window_bounds = array<i64: 256, 256>}, {pipeline_mode = #tpu.pipeline_mode<synchronous>, transform_indices = @transform_6, window_bounds = array<i64: 512, 256>}, {pipeline_mode = #tpu.pipeline_mode<synchronous>, transform_indices = @transform_7, window_bounds = array<i64: 384, 1024>}, {pipeline_mode = #tpu.pipeline_mode<synchronous>, transform_indices = @transform_8, window_bounds = array<i64: 256, 1024>}, {pipeline_mode = #tpu.pipeline_mode<synchronous>, transform_indices = @transform_9, window_bounds = array<i64: 1, 1024>}, {pipeline_mode = #tpu.pipeline_mode<synchronous>, transform_indices = @transform_10, window_bounds = array<i64: 256, 128>}, {pipeline_mode = #tpu.pipeline_mode<synchronous>, transform_indices = @transform_11, window_bounds = array<i64: 1, 128>}, {pipeline_mode = #tpu.pipeline_mode<synchronous>, transform_indices = @transform_12, window_bounds = array<i64: 6, 8, 128>}]} {
    %0 = tpu.iota {dimensions = array<i32: 1>} : vector<8x128xi32>
    %c2_i32 = arith.constant 2 : i32
    %1 = vector.broadcast %c2_i32 : i32 to vector<8x128xi32>
    %2 = arith.cmpi eq, %0, %1 : vector<8x128xi32>
    %cst = arith.constant 1.000000e+01 : f32
    %cst_0 = arith.constant -1.000000e+00 : f32
    %3 = vector.broadcast %cst : f32 to vector<8x128xf32>
    %4 = vector.broadcast %cst_0 : f32 to vector<8x128xf32>
    %5 = arith.select %2, %3, %4 : vector<8x128xi1>, vector<8x128xf32>
    %c0 = arith.constant 0 : index
    %c0_1 = arith.constant 0 : index
    %c0_2 = arith.constant 0 : index
    %6 = vector.load %arg13[%c0, %c0_1, %c0_2] : memref<6x8x128xf32, #tpu.memory_space<vmem>>, vector<1x8x128xf32>
    %7 = vector.shape_cast %6 : vector<1x8x128xf32> to vector<8x128xf32>
    %8 = vector.shape_cast %5 : vector<8x128xf32> to vector<1x8x128xf32>
    tpu.vector_store %arg13[%c0, %c0_1, %c0_2], %8 {strides = array<i32>} : memref<6x8x128xf32, #tpu.memory_space<vmem>>, vector<1x8x128xf32>,
    %c0_3 = arith.constant 0 : index
    %c0_4 = arith.constant 0 : index
    %9 = vector.load %arg1[%c0_3, %c0_4] : memref<8x256xf32, #tpu.memory_space<vmem>>, vector<8x256xf32>
    %c0_5 = arith.constant 0 : index
    %c0_6 = arith.constant 0 : index
    %10 = vector.load %arg14[%c0_5, %c0_6] : memref<8x256xf32, #tpu.memory_space<vmem>>, vector<8x256xf32>
    tpu.vector_store %arg14[%c0_5, %c0_6], %9 {strides = array<i32>} : memref<8x256xf32, #tpu.memory_space<vmem>>, vector<8x256xf32>,
    %c0_7 = arith.constant 0 : index
    %c0_8 = arith.constant 0 : index
    %11 = vector.load %arg2[%c0_7, %c0_8] : memref<8x256xf32, #tpu.memory_space<vmem>>, vector<8x256xf32>
    %c0_9 = arith.constant 0 : index
    %c0_10 = arith.constant 0 : index
    %12 = vector.load %arg15[%c0_9, %c0_10] : memref<8x256xf32, #tpu.memory_space<vmem>>, vector<8x256xf32>
    tpu.vector_store %arg15[%c0_9, %c0_10], %11 {strides = array<i32>} : memref<8x256xf32, #tpu.memory_space<vmem>>, vector<8x256xf32>,
    %c0_11 = arith.constant 0 : index
    %c0_12 = arith.constant 0 : index
    %13 = vector.load %arg3[%c0_11, %c0_12] : memref<64x256xbf16, #tpu.memory_space<vmem>>, vector<64x256xbf16>
    %c0_13 = arith.constant 0 : index
    %c0_14 = arith.constant 0 : index
    %14 = vector.load %arg4[%c0_13, %c0_14] : memref<256x64xbf16, #tpu.memory_space<vmem>>, vector<256x64xbf16>
    %c0_15 = arith.constant 0 : index
    %c0_16 = arith.constant 0 : index
    %15 = vector.load %arg6[%c0_15, %c0_16] : memref<256x256xbf16, #tpu.memory_space<vmem>>, vector<256x256xbf16>
    %c0_17 = arith.constant 0 : index
    %c0_18 = arith.constant 0 : index
    %16 = vector.load %arg7[%c0_17, %c0_18] : memref<512x256xbf16, #tpu.memory_space<vmem>>, vector<512x256xbf16>
    %17 = vector.extract_strided_slice %16 {offsets = [0, 0], sizes = [256, 256], strides = [1, 1]} : vector<512x256xbf16> to vector<256x256xbf16>
    %18 = vector.extract_strided_slice %16 {offsets = [256, 0], sizes = [256, 256], strides = [1, 1]} : vector<512x256xbf16> to vector<256x256xbf16>
    %c0_19 = arith.constant 0 : index
    %c0_20 = arith.constant 0 : index
    %19 = vector.load %arg8[%c0_19, %c0_20] : memref<384x1024xbf16, #tpu.memory_space<vmem>>, vector<384x1024xbf16>
    %c0_21 = arith.constant 0 : index
    %c0_22 = arith.constant 0 : index
    %20 = vector.load %arg9[%c0_21, %c0_22] : memref<256x1024xbf16, #tpu.memory_space<vmem>>, vector<256x1024xbf16>
    %c0_23 = arith.constant 0 : index
    %c0_24 = arith.constant 0 : index
    %21 = vector.load %arg10[%c0_23, %c0_24] : memref<1x1024xf32, #tpu.memory_space<vmem>>, vector<1x1024xf32>
    %c0_25 = arith.constant 0 : index
    %c0_26 = arith.constant 0 : index
    %22 = vector.load %arg11[%c0_25, %c0_26] : memref<256x128xbf16, #tpu.memory_space<vmem>>, vector<256x128xbf16>
    %c0_27 = arith.constant 0 : index
    %c0_28 = arith.constant 0 : index
    %23 = vector.load %arg12[%c0_27, %c0_28] : memref<1x128xf32, #tpu.memory_space<vmem>>, vector<1x128xf32>
    %24 = tpu.iota {dimensions = array<i32: 0>} : vector<8x64xi32>
    %25 = tpu.iota {dimensions = array<i32: 1>} : vector<8x64xi32>
    %c8_i32 = arith.constant 8 : i32
    %26 = vector.broadcast %c8_i32 : i32 to vector<8x64xi32>
    %27 = arith.muli %24, %26 : vector<8x64xi32>
    %28 = arith.cmpi sge, %25, %27 : vector<8x64xi32>
    %c1_i32 = arith.constant 1 : i32
    %29 = vector.broadcast %c1_i32 : i32 to vector<8x64xi32>
    %30 = arith.addi %24, %29 : vector<8x64xi32>
    %c8_i32_29 = arith.constant 8 : i32
    %31 = vector.broadcast %c8_i32_29 : i32 to vector<8x64xi32>
    %32 = arith.muli %30, %31 : vector<8x64xi32>
    %33 = arith.cmpi slt, %25, %32 : vector<8x64xi32>
    %34 = arith.andi %28, %33 : vector<8x64xi1>
    %c1_i32_30 = arith.constant 1 : i32
    %c0_31 = arith.constant 0 : index
    %c0_32 = arith.constant 0 : index
    %35 = vector.load %arg14[%c0_31, %c0_32] : memref<8x256xf32, #tpu.memory_space<vmem>>, vector<8x256xf32>
    %c0_33 = arith.constant 0 : index
    %c0_34 = arith.constant 0 : index
    %36 = vector.load %arg15[%c0_33, %c0_34] : memref<8x256xf32, #tpu.memory_space<vmem>>, vector<8x256xf32>
    %37 = arith.truncf %35 : vector<8x256xf32> to vector<8x256xbf16>
    %cst_35 = arith.constant dense<0.000000e+00> : vector<8x256xf32>
    %38 = tpu.matmul %37, %15, %cst_35 {dimension_numbers = #tpu.dot_dimension_numbers<[1], [0], [0], [1], [0, 0, 1, 1], [], []>} : vector<8x256xbf16>, vector<256x256xbf16>, vector<8x256xf32> -> vector<8x256xf32>
    %39 = arith.truncf %38 : vector<8x256xf32> to vector<8x256xbf16>
    %cst_36 = arith.constant dense<0.000000e+00> : vector<8x64xf32>
    %40 = tpu.matmul %39, %14, %cst_36 {dimension_numbers = #tpu.dot_dimension_numbers<[1], [0], [0], [1], [0, 0, 1, 1], [], []>} : vector<8x256xbf16>, vector<256x64xbf16>, vector<8x64xf32> -> vector<8x64xf32>
    %cst_37 = arith.constant -1.000000e+30 : f32
    %41 = vector.broadcast %cst_37 : f32 to vector<8x64xf32>
    %42 = arith.select %34, %40, %41 : vector<8x64xi1>, vector<8x64xf32>
    %cst_38 = arith.constant dense<0xFF800000> : vector<8xf32>
    %43 = vector.multi_reduction <maximumf>, %42, %cst_38 [1] : vector<8x64xf32> to vector<8xf32>
    %44 = vector.shape_cast %43 : vector<8xf32> to vector<8x1xf32>
    %45 = vector.broadcast %44 : vector<8x1xf32> to vector<8x64xf32>
    %46 = arith.subf %42, %45 : vector<8x64xf32>
    %47 = math.exp %46 : vector<8x64xf32>
    %cst_39 = arith.constant dense<0.000000e+00> : vector<8xf32>
    %48 = vector.multi_reduction <add>, %47, %cst_39 [1] : vector<8x64xf32> to vector<8xf32>
    %49 = vector.shape_cast %48 : vector<8xf32> to vector<8x1xf32>
    %50 = tpu.reciprocal %49 {approx = true} : vector<8x1xf32> -> vector<8x1xf32>
    %51 = vector.broadcast %50 : vector<8x1xf32> to vector<8x64xf32>
    %52 = arith.mulf %47, %51 : vector<8x64xf32>
    %53 = arith.truncf %52 : vector<8x64xf32> to vector<8x64xbf16>
    %cst_40 = arith.constant dense<0.000000e+00> : vector<8x256xf32>
    %54 = tpu.matmul %53, %13, %cst_40 {dimension_numbers = #tpu.dot_dimension_numbers<[1], [0], [0], [1], [0, 0, 1, 1], [], []>} : vector<8x64xbf16>, vector<64x256xbf16>, vector<8x256xf32> -> vector<8x256xf32>
    %55 = arith.truncf %54 : vector<8x256xf32> to vector<8x256xbf16>
    %cst_41 = arith.constant dense<0.000000e+00> : vector<8x256xf32>
    %56 = tpu.matmul %55, %17, %cst_41 {dimension_numbers = #tpu.dot_dimension_numbers<[1], [0], [0], [1], [0, 0, 1, 1], [], []>} : vector<8x256xbf16>, vector<256x256xbf16>, vector<8x256xf32> -> vector<8x256xf32>
    %cst_42 = arith.constant dense<0.000000e+00> : vector<8x256xf32>
    %57 = tpu.matmul %37, %18, %cst_42 {dimension_numbers = #tpu.dot_dimension_numbers<[1], [0], [0], [1], [0, 0, 1, 1], [], []>} : vector<8x256xbf16>, vector<256x256xbf16>, vector<8x256xf32> -> vector<8x256xf32>
    %58 = arith.addf %56, %57 : vector<8x256xf32>
    %59 = math.tanh %58 : vector<8x256xf32>
    %c1_i32_43 = arith.constant 1 : i32
    %60 = arith.subi %c1_i32_30, %c1_i32_43 : i32
    %61 = arith.index_cast %60 : i32 to index
    %c0_44 = arith.constant 0 : index
    %c0_45 = arith.constant 0 : index
    %62 = vector.load %arg5[%61, %c0_44, %c0_45] : memref<6x8x128xbf16, #tpu.memory_space<vmem>>, vector<1x8x128xbf16>
    %63 = vector.shape_cast %62 : vector<1x8x128xbf16> to vector<8x128xbf16>
    %64 = arith.truncf %59 : vector<8x256xf32> to vector<8x256xbf16>
    %65 = tpu.concatenate %64, %63 in 1 : vector<8x256xbf16>, vector<8x128xbf16> -> vector<8x384xbf16>
    %cst_46 = arith.constant dense<0.000000e+00> : vector<8x1024xf32>
    %66 = tpu.matmul %65, %19, %cst_46 {dimension_numbers = #tpu.dot_dimension_numbers<[1], [0], [0], [1], [0, 0, 1, 1], [], []>} : vector<8x384xbf16>, vector<384x1024xbf16>, vector<8x1024xf32> -> vector<8x1024xf32>
    %cst_47 = arith.constant dense<0.000000e+00> : vector<8x1024xf32>
    %67 = tpu.matmul %37, %20, %cst_47 {dimension_numbers = #tpu.dot_dimension_numbers<[1], [0], [0], [1], [0, 0, 1, 1], [], []>} : vector<8x256xbf16>, vector<256x1024xbf16>, vector<8x1024xf32> -> vector<8x1024xf32>
    %68 = arith.addf %66, %67 : vector<8x1024xf32>
    %69 = vector.broadcast %21 : vector<1x1024xf32> to vector<8x1024xf32>
    %70 = arith.addf %68, %69 : vector<8x1024xf32>
    %71 = vector.extract_strided_slice %70 {offsets = [0, 0], sizes = [8, 256], strides = [1, 1]} : vector<8x1024xf32> to vector<8x256xf32>
    %72 = arith.negf %71 : vector<8x256xf32>
    %73 = math.exp %72 : vector<8x256xf32>
    %cst_48 = arith.constant 1.000000e+00 : f32
    %74 = vector.broadcast %cst_48 : f32 to vector<8x256xf32>
    %75 = arith.addf %74, %73 : vector<8x256xf32>
    %76 = arith.divf %74, %75 : vector<8x256xf32>
    %77 = vector.extract_strided_slice %70 {offsets = [0, 256], sizes = [8, 256], strides = [1, 1]} : vector<8x1024xf32> to vector<8x256xf32>
    %78 = arith.negf %77 : vector<8x256xf32>
    %79 = math.exp %78 : vector<8x256xf32>
    %cst_49 = arith.constant 1.000000e+00 : f32
    %80 = vector.broadcast %cst_49 : f32 to vector<8x256xf32>
    %81 = arith.addf %80, %79 : vector<8x256xf32>
    %82 = arith.divf %80, %81 : vector<8x256xf32>
    %83 = vector.extract_strided_slice %70 {offsets = [0, 512], sizes = [8, 256], strides = [1, 1]} : vector<8x1024xf32> to vector<8x256xf32>
    %84 = math.tanh %83 : vector<8x256xf32>
    %85 = vector.extract_strided_slice %70 {offsets = [0, 768], sizes = [8, 256], strides = [1, 1]} : vector<8x1024xf32> to vector<8x256xf32>
    %86 = arith.negf %85 : vector<8x256xf32>
    %87 = math.exp %86 : vector<8x256xf32>
    %cst_50 = arith.constant 1.000000e+00 : f32
    %88 = vector.broadcast %cst_50 : f32 to vector<8x256xf32>
    %89 = arith.addf %88, %87 : vector<8x256xf32>
    %90 = arith.divf %88, %89 : vector<8x256xf32>
    %91 = arith.mulf %82, %36 : vector<8x256xf32>
    %92 = arith.mulf %76, %84 : vector<8x256xf32>
    %93 = arith.addf %91, %92 : vector<8x256xf32>
    %94 = math.tanh %93 : vector<8x256xf32>
    %95 = arith.mulf %90, %94 : vector<8x256xf32>
    %c0_51 = arith.constant 0 : index
    %c0_52 = arith.constant 0 : index
    %96 = vector.load %arg14[%c0_51, %c0_52] : memref<8x256xf32, #tpu.memory_space<vmem>>, vector<8x256xf32>
    tpu.vector_store %arg14[%c0_51, %c0_52], %95 {strides = array<i32>} : memref<8x256xf32, #tpu.memory_space<vmem>>, vector<8x256xf32>,
    %c0_53 = arith.constant 0 : index
    %c0_54 = arith.constant 0 : index
    %97 = vector.load %arg15[%c0_53, %c0_54] : memref<8x256xf32, #tpu.memory_space<vmem>>, vector<8x256xf32>
    tpu.vector_store %arg15[%c0_53, %c0_54], %93 {strides = array<i32>} : memref<8x256xf32, #tpu.memory_space<vmem>>, vector<8x256xf32>,
    %98 = arith.truncf %95 : vector<8x256xf32> to vector<8x256xbf16>
    %cst_55 = arith.constant dense<0.000000e+00> : vector<8x128xf32>
    %99 = tpu.matmul %98, %22, %cst_55 {dimension_numbers = #tpu.dot_dimension_numbers<[1], [0], [0], [1], [0, 0, 1, 1], [], []>} : vector<8x256xbf16>, vector<256x128xbf16>, vector<8x128xf32> -> vector<8x128xf32>
    %100 = vector.broadcast %23 : vector<1x128xf32> to vector<8x128xf32>
    %101 = arith.addf %99, %100 : vector<8x128xf32>
    %cst_56 = arith.constant dense<0xFF800000> : vector<8xf32>
    %102 = vector.multi_reduction <maximumf>, %101, %cst_56 [1] : vector<8x128xf32> to vector<8xf32>
    %103 = vector.shape_cast %102 : vector<8xf32> to vector<8x1xf32>
    %104 = vector.broadcast %103 : vector<8x1xf32> to vector<8x128xf32>
    %105 = arith.subf %101, %104 : vector<8x128xf32>
    %106 = math.exp %105 : vector<8x128xf32>
    %cst_57 = arith.constant dense<0.000000e+00> : vector<8xf32>
    %107 = vector.multi_reduction <add>, %106, %cst_57 [1] : vector<8x128xf32> to vector<8xf32>
    %108 = vector.shape_cast %107 : vector<8xf32> to vector<8x1xf32>
    %109 = math.log %108 : vector<8x1xf32>
    %110 = vector.broadcast %109 : vector<8x1xf32> to vector<8x128xf32>
    %111 = arith.subf %105, %110 : vector<8x128xf32>
    %112 = arith.index_cast %c1_i32_30 : i32 to index
    %c0_58 = arith.constant 0 : index
    %c0_59 = arith.constant 0 : index
    %113 = vector.load %arg13[%112, %c0_58, %c0_59] : memref<6x8x128xf32, #tpu.memory_space<vmem>>, vector<1x8x128xf32>
    %114 = vector.shape_cast %113 : vector<1x8x128xf32> to vector<8x128xf32>
    %115 = vector.shape_cast %111 : vector<8x128xf32> to vector<1x8x128xf32>
    tpu.vector_store %arg13[%112, %c0_58, %c0_59], %115 {strides = array<i32>} : memref<6x8x128xf32, #tpu.memory_space<vmem>>, vector<1x8x128xf32>,
    %c2_i32_60 = arith.constant 2 : i32
    %c0_61 = arith.constant 0 : index
    %c0_62 = arith.constant 0 : index
    %116 = vector.load %arg14[%c0_61, %c0_62] : memref<8x256xf32, #tpu.memory_space<vmem>>, vector<8x256xf32>
    %c0_63 = arith.constant 0 : index
    %c0_64 = arith.constant 0 : index
    %117 = vector.load %arg15[%c0_63, %c0_64] : memref<8x256xf32, #tpu.memory_space<vmem>>, vector<8x256xf32>
    %118 = arith.truncf %116 : vector<8x256xf32> to vector<8x256xbf16>
    %cst_65 = arith.constant dense<0.000000e+00> : vector<8x256xf32>
    %119 = tpu.matmul %118, %15, %cst_65 {dimension_numbers = #tpu.dot_dimension_numbers<[1], [0], [0], [1], [0, 0, 1, 1], [], []>} : vector<8x256xbf16>, vector<256x256xbf16>, vector<8x256xf32> -> vector<8x256xf32>
    %120 = arith.truncf %119 : vector<8x256xf32> to vector<8x256xbf16>
    %cst_66 = arith.constant dense<0.000000e+00> : vector<8x64xf32>
    %121 = tpu.matmul %120, %14, %cst_66 {dimension_numbers = #tpu.dot_dimension_numbers<[1], [0], [0], [1], [0, 0, 1, 1], [], []>} : vector<8x256xbf16>, vector<256x64xbf16>, vector<8x64xf32> -> vector<8x64xf32>
    %cst_67 = arith.constant -1.000000e+30 : f32
    %122 = vector.broadcast %cst_67 : f32 to vector<8x64xf32>
    %123 = arith.select %34, %121, %122 : vector<8x64xi1>, vector<8x64xf32>
    %cst_68 = arith.constant dense<0xFF800000> : vector<8xf32>
    %124 = vector.multi_reduction <maximumf>, %123, %cst_68 [1] : vector<8x64xf32> to vector<8xf32>
    %125 = vector.shape_cast %124 : vector<8xf32> to vector<8x1xf32>
    %126 = vector.broadcast %125 : vector<8x1xf32> to vector<8x64xf32>
    %127 = arith.subf %123, %126 : vector<8x64xf32>
    %128 = math.exp %127 : vector<8x64xf32>
    %cst_69 = arith.constant dense<0.000000e+00> : vector<8xf32>
    %129 = vector.multi_reduction <add>, %128, %cst_69 [1] : vector<8x64xf32> to vector<8xf32>
    %130 = vector.shape_cast %129 : vector<8xf32> to vector<8x1xf32>
    %131 = tpu.reciprocal %130 {approx = true} : vector<8x1xf32> -> vector<8x1xf32>
    %132 = vector.broadcast %131 : vector<8x1xf32> to vector<8x64xf32>
    %133 = arith.mulf %128, %132 : vector<8x64xf32>
    %134 = arith.truncf %133 : vector<8x64xf32> to vector<8x64xbf16>
    %cst_70 = arith.constant dense<0.000000e+00> : vector<8x256xf32>
    %135 = tpu.matmul %134, %13, %cst_70 {dimension_numbers = #tpu.dot_dimension_numbers<[1], [0], [0], [1], [0, 0, 1, 1], [], []>} : vector<8x64xbf16>, vector<64x256xbf16>, vector<8x256xf32> -> vector<8x256xf32>
    %136 = arith.truncf %135 : vector<8x256xf32> to vector<8x256xbf16>
    %cst_71 = arith.constant dense<0.000000e+00> : vector<8x256xf32>
    %137 = tpu.matmul %136, %17, %cst_71 {dimension_numbers = #tpu.dot_dimension_numbers<[1], [0], [0], [1], [0, 0, 1, 1], [], []>} : vector<8x256xbf16>, vector<256x256xbf16>, vector<8x256xf32> -> vector<8x256xf32>
    %cst_72 = arith.constant dense<0.000000e+00> : vector<8x256xf32>
    %138 = tpu.matmul %118, %18, %cst_72 {dimension_numbers = #tpu.dot_dimension_numbers<[1], [0], [0], [1], [0, 0, 1, 1], [], []>} : vector<8x256xbf16>, vector<256x256xbf16>, vector<8x256xf32> -> vector<8x256xf32>
    %139 = arith.addf %137, %138 : vector<8x256xf32>
    %140 = math.tanh %139 : vector<8x256xf32>
    %c1_i32_73 = arith.constant 1 : i32
    %141 = arith.subi %c2_i32_60, %c1_i32_73 : i32
    %142 = arith.index_cast %141 : i32 to index
    %c0_74 = arith.constant 0 : index
    %c0_75 = arith.constant 0 : index
    %143 = vector.load %arg5[%142, %c0_74, %c0_75] : memref<6x8x128xbf16, #tpu.memory_space<vmem>>, vector<1x8x128xbf16>
    %144 = vector.shape_cast %143 : vector<1x8x128xbf16> to vector<8x128xbf16>
    %145 = arith.truncf %140 : vector<8x256xf32> to vector<8x256xbf16>
    %146 = tpu.concatenate %145, %144 in 1 : vector<8x256xbf16>, vector<8x128xbf16> -> vector<8x384xbf16>
    %cst_76 = arith.constant dense<0.000000e+00> : vector<8x1024xf32>
    %147 = tpu.matmul %146, %19, %cst_76 {dimension_numbers = #tpu.dot_dimension_numbers<[1], [0], [0], [1], [0, 0, 1, 1], [], []>} : vector<8x384xbf16>, vector<384x1024xbf16>, vector<8x1024xf32> -> vector<8x1024xf32>
    %cst_77 = arith.constant dense<0.000000e+00> : vector<8x1024xf32>
    %148 = tpu.matmul %118, %20, %cst_77 {dimension_numbers = #tpu.dot_dimension_numbers<[1], [0], [0], [1], [0, 0, 1, 1], [], []>} : vector<8x256xbf16>, vector<256x1024xbf16>, vector<8x1024xf32> -> vector<8x1024xf32>
    %149 = arith.addf %147, %148 : vector<8x1024xf32>
    %150 = vector.broadcast %21 : vector<1x1024xf32> to vector<8x1024xf32>
    %151 = arith.addf %149, %150 : vector<8x1024xf32>
    %152 = vector.extract_strided_slice %151 {offsets = [0, 0], sizes = [8, 256], strides = [1, 1]} : vector<8x1024xf32> to vector<8x256xf32>
    %153 = arith.negf %152 : vector<8x256xf32>
    %154 = math.exp %153 : vector<8x256xf32>
    %cst_78 = arith.constant 1.000000e+00 : f32
    %155 = vector.broadcast %cst_78 : f32 to vector<8x256xf32>
    %156 = arith.addf %155, %154 : vector<8x256xf32>
    %157 = arith.divf %155, %156 : vector<8x256xf32>
    %158 = vector.extract_strided_slice %151 {offsets = [0, 256], sizes = [8, 256], strides = [1, 1]} : vector<8x1024xf32> to vector<8x256xf32>
    %159 = arith.negf %158 : vector<8x256xf32>
    %160 = math.exp %159 : vector<8x256xf32>
    %cst_79 = arith.constant 1.000000e+00 : f32
    %161 = vector.broadcast %cst_79 : f32 to vector<8x256xf32>
    %162 = arith.addf %161, %160 : vector<8x256xf32>
    %163 = arith.divf %161, %162 : vector<8x256xf32>
    %164 = vector.extract_strided_slice %151 {offsets = [0, 512], sizes = [8, 256], strides = [1, 1]} : vector<8x1024xf32> to vector<8x256xf32>
    %165 = math.tanh %164 : vector<8x256xf32>
    %166 = vector.extract_strided_slice %151 {offsets = [0, 768], sizes = [8, 256], strides = [1, 1]} : vector<8x1024xf32> to vector<8x256xf32>
    %167 = arith.negf %166 : vector<8x256xf32>
    %168 = math.exp %167 : vector<8x256xf32>
    %cst_80 = arith.constant 1.000000e+00 : f32
    %169 = vector.broadcast %cst_80 : f32 to vector<8x256xf32>
    %170 = arith.addf %169, %168 : vector<8x256xf32>
    %171 = arith.divf %169, %170 : vector<8x256xf32>
    %172 = arith.mulf %163, %117 : vector<8x256xf32>
    %173 = arith.mulf %157, %165 : vector<8x256xf32>
    %174 = arith.addf %172, %173 : vector<8x256xf32>
    %175 = math.tanh %174 : vector<8x256xf32>
    %176 = arith.mulf %171, %175 : vector<8x256xf32>
    %c0_81 = arith.constant 0 : index
    %c0_82 = arith.constant 0 : index
    %177 = vector.load %arg14[%c0_81, %c0_82] : memref<8x256xf32, #tpu.memory_space<vmem>>, vector<8x256xf32>
    tpu.vector_store %arg14[%c0_81, %c0_82], %176 {strides = array<i32>} : memref<8x256xf32, #tpu.memory_space<vmem>>, vector<8x256xf32>,
    %c0_83 = arith.constant 0 : index
    %c0_84 = arith.constant 0 : index
    %178 = vector.load %arg15[%c0_83, %c0_84] : memref<8x256xf32, #tpu.memory_space<vmem>>, vector<8x256xf32>
    tpu.vector_store %arg15[%c0_83, %c0_84], %174 {strides = array<i32>} : memref<8x256xf32, #tpu.memory_space<vmem>>, vector<8x256xf32>,
    %179 = arith.truncf %176 : vector<8x256xf32> to vector<8x256xbf16>
    %cst_85 = arith.constant dense<0.000000e+00> : vector<8x128xf32>
    %180 = tpu.matmul %179, %22, %cst_85 {dimension_numbers = #tpu.dot_dimension_numbers<[1], [0], [0], [1], [0, 0, 1, 1], [], []>} : vector<8x256xbf16>, vector<256x128xbf16>, vector<8x128xf32> -> vector<8x128xf32>
    %181 = vector.broadcast %23 : vector<1x128xf32> to vector<8x128xf32>
    %182 = arith.addf %180, %181 : vector<8x128xf32>
    %cst_86 = arith.constant dense<0xFF800000> : vector<8xf32>
    %183 = vector.multi_reduction <maximumf>, %182, %cst_86 [1] : vector<8x128xf32> to vector<8xf32>
    %184 = vector.shape_cast %183 : vector<8xf32> to vector<8x1xf32>
    %185 = vector.broadcast %184 : vector<8x1xf32> to vector<8x128xf32>
    %186 = arith.subf %182, %185 : vector<8x128xf32>
    %187 = math.exp %186 : vector<8x128xf32>
    %cst_87 = arith.constant dense<0.000000e+00> : vector<8xf32>
    %188 = vector.multi_reduction <add>, %187, %cst_87 [1] : vector<8x128xf32> to vector<8xf32>
    %189 = vector.shape_cast %188 : vector<8xf32> to vector<8x1xf32>
    %190 = math.log %189 : vector<8x1xf32>
    %191 = vector.broadcast %190 : vector<8x1xf32> to vector<8x128xf32>
    %192 = arith.subf %186, %191 : vector<8x128xf32>
    %193 = arith.index_cast %c2_i32_60 : i32 to index
    %c0_88 = arith.constant 0 : index
    %c0_89 = arith.constant 0 : index
    %194 = vector.load %arg13[%193, %c0_88, %c0_89] : memref<6x8x128xf32, #tpu.memory_space<vmem>>, vector<1x8x128xf32>
    %195 = vector.shape_cast %194 : vector<1x8x128xf32> to vector<8x128xf32>
    %196 = vector.shape_cast %192 : vector<8x128xf32> to vector<1x8x128xf32>
    tpu.vector_store %arg13[%193, %c0_88, %c0_89], %196 {strides = array<i32>} : memref<6x8x128xf32, #tpu.memory_space<vmem>>, vector<1x8x128xf32>,
    %c3_i32 = arith.constant 3 : i32
    %c0_90 = arith.constant 0 : index
    %c0_91 = arith.constant 0 : index
    %197 = vector.load %arg14[%c0_90, %c0_91] : memref<8x256xf32, #tpu.memory_space<vmem>>, vector<8x256xf32>
    %c0_92 = arith.constant 0 : index
    %c0_93 = arith.constant 0 : index
    %198 = vector.load %arg15[%c0_92, %c0_93] : memref<8x256xf32, #tpu.memory_space<vmem>>, vector<8x256xf32>
    %199 = arith.truncf %197 : vector<8x256xf32> to vector<8x256xbf16>
    %cst_94 = arith.constant dense<0.000000e+00> : vector<8x256xf32>
    %200 = tpu.matmul %199, %15, %cst_94 {dimension_numbers = #tpu.dot_dimension_numbers<[1], [0], [0], [1], [0, 0, 1, 1], [], []>} : vector<8x256xbf16>, vector<256x256xbf16>, vector<8x256xf32> -> vector<8x256xf32>
    %201 = arith.truncf %200 : vector<8x256xf32> to vector<8x256xbf16>
    %cst_95 = arith.constant dense<0.000000e+00> : vector<8x64xf32>
    %202 = tpu.matmul %201, %14, %cst_95 {dimension_numbers = #tpu.dot_dimension_numbers<[1], [0], [0], [1], [0, 0, 1, 1], [], []>} : vector<8x256xbf16>, vector<256x64xbf16>, vector<8x64xf32> -> vector<8x64xf32>
    %cst_96 = arith.constant -1.000000e+30 : f32
    %203 = vector.broadcast %cst_96 : f32 to vector<8x64xf32>
    %204 = arith.select %34, %202, %203 : vector<8x64xi1>, vector<8x64xf32>
    %cst_97 = arith.constant dense<0xFF800000> : vector<8xf32>
    %205 = vector.multi_reduction <maximumf>, %204, %cst_97 [1] : vector<8x64xf32> to vector<8xf32>
    %206 = vector.shape_cast %205 : vector<8xf32> to vector<8x1xf32>
    %207 = vector.broadcast %206 : vector<8x1xf32> to vector<8x64xf32>
    %208 = arith.subf %204, %207 : vector<8x64xf32>
    %209 = math.exp %208 : vector<8x64xf32>
    %cst_98 = arith.constant dense<0.000000e+00> : vector<8xf32>
    %210 = vector.multi_reduction <add>, %209, %cst_98 [1] : vector<8x64xf32> to vector<8xf32>
    %211 = vector.shape_cast %210 : vector<8xf32> to vector<8x1xf32>
    %212 = tpu.reciprocal %211 {approx = true} : vector<8x1xf32> -> vector<8x1xf32>
    %213 = vector.broadcast %212 : vector<8x1xf32> to vector<8x64xf32>
    %214 = arith.mulf %209, %213 : vector<8x64xf32>
    %215 = arith.truncf %214 : vector<8x64xf32> to vector<8x64xbf16>
    %cst_99 = arith.constant dense<0.000000e+00> : vector<8x256xf32>
    %216 = tpu.matmul %215, %13, %cst_99 {dimension_numbers = #tpu.dot_dimension_numbers<[1], [0], [0], [1], [0, 0, 1, 1], [], []>} : vector<8x64xbf16>, vector<64x256xbf16>, vector<8x256xf32> -> vector<8x256xf32>
    %217 = arith.truncf %216 : vector<8x256xf32> to vector<8x256xbf16>
    %cst_100 = arith.constant dense<0.000000e+00> : vector<8x256xf32>
    %218 = tpu.matmul %217, %17, %cst_100 {dimension_numbers = #tpu.dot_dimension_numbers<[1], [0], [0], [1], [0, 0, 1, 1], [], []>} : vector<8x256xbf16>, vector<256x256xbf16>, vector<8x256xf32> -> vector<8x256xf32>
    %cst_101 = arith.constant dense<0.000000e+00> : vector<8x256xf32>
    %219 = tpu.matmul %199, %18, %cst_101 {dimension_numbers = #tpu.dot_dimension_numbers<[1], [0], [0], [1], [0, 0, 1, 1], [], []>} : vector<8x256xbf16>, vector<256x256xbf16>, vector<8x256xf32> -> vector<8x256xf32>
    %220 = arith.addf %218, %219 : vector<8x256xf32>
    %221 = math.tanh %220 : vector<8x256xf32>
    %c1_i32_102 = arith.constant 1 : i32
    %222 = arith.subi %c3_i32, %c1_i32_102 : i32
    %223 = arith.index_cast %222 : i32 to index
    %c0_103 = arith.constant 0 : index
    %c0_104 = arith.constant 0 : index
    %224 = vector.load %arg5[%223, %c0_103, %c0_104] : memref<6x8x128xbf16, #tpu.memory_space<vmem>>, vector<1x8x128xbf16>
    %225 = vector.shape_cast %224 : vector<1x8x128xbf16> to vector<8x128xbf16>
    %226 = arith.truncf %221 : vector<8x256xf32> to vector<8x256xbf16>
    %227 = tpu.concatenate %226, %225 in 1 : vector<8x256xbf16>, vector<8x128xbf16> -> vector<8x384xbf16>
    %cst_105 = arith.constant dense<0.000000e+00> : vector<8x1024xf32>
    %228 = tpu.matmul %227, %19, %cst_105 {dimension_numbers = #tpu.dot_dimension_numbers<[1], [0], [0], [1], [0, 0, 1, 1], [], []>} : vector<8x384xbf16>, vector<384x1024xbf16>, vector<8x1024xf32> -> vector<8x1024xf32>
    %cst_106 = arith.constant dense<0.000000e+00> : vector<8x1024xf32>
    %229 = tpu.matmul %199, %20, %cst_106 {dimension_numbers = #tpu.dot_dimension_numbers<[1], [0], [0], [1], [0, 0, 1, 1], [], []>} : vector<8x256xbf16>, vector<256x1024xbf16>, vector<8x1024xf32> -> vector<8x1024xf32>
    %230 = arith.addf %228, %229 : vector<8x1024xf32>
    %231 = vector.broadcast %21 : vector<1x1024xf32> to vector<8x1024xf32>
    %232 = arith.addf %230, %231 : vector<8x1024xf32>
    %233 = vector.extract_strided_slice %232 {offsets = [0, 0], sizes = [8, 256], strides = [1, 1]} : vector<8x1024xf32> to vector<8x256xf32>
    %234 = arith.negf %233 : vector<8x256xf32>
    %235 = math.exp %234 : vector<8x256xf32>
    %cst_107 = arith.constant 1.000000e+00 : f32
    %236 = vector.broadcast %cst_107 : f32 to vector<8x256xf32>
    %237 = arith.addf %236, %235 : vector<8x256xf32>
    %238 = arith.divf %236, %237 : vector<8x256xf32>
    %239 = vector.extract_strided_slice %232 {offsets = [0, 256], sizes = [8, 256], strides = [1, 1]} : vector<8x1024xf32> to vector<8x256xf32>
    %240 = arith.negf %239 : vector<8x256xf32>
    %241 = math.exp %240 : vector<8x256xf32>
    %cst_108 = arith.constant 1.000000e+00 : f32
    %242 = vector.broadcast %cst_108 : f32 to vector<8x256xf32>
    %243 = arith.addf %242, %241 : vector<8x256xf32>
    %244 = arith.divf %242, %243 : vector<8x256xf32>
    %245 = vector.extract_strided_slice %232 {offsets = [0, 512], sizes = [8, 256], strides = [1, 1]} : vector<8x1024xf32> to vector<8x256xf32>
    %246 = math.tanh %245 : vector<8x256xf32>
    %247 = vector.extract_strided_slice %232 {offsets = [0, 768], sizes = [8, 256], strides = [1, 1]} : vector<8x1024xf32> to vector<8x256xf32>
    %248 = arith.negf %247 : vector<8x256xf32>
    %249 = math.exp %248 : vector<8x256xf32>
    %cst_109 = arith.constant 1.000000e+00 : f32
    %250 = vector.broadcast %cst_109 : f32 to vector<8x256xf32>
    %251 = arith.addf %250, %249 : vector<8x256xf32>
    %252 = arith.divf %250, %251 : vector<8x256xf32>
    %253 = arith.mulf %244, %198 : vector<8x256xf32>
    %254 = arith.mulf %238, %246 : vector<8x256xf32>
    %255 = arith.addf %253, %254 : vector<8x256xf32>
    %256 = math.tanh %255 : vector<8x256xf32>
    %257 = arith.mulf %252, %256 : vector<8x256xf32>
    %c0_110 = arith.constant 0 : index
    %c0_111 = arith.constant 0 : index
    %258 = vector.load %arg14[%c0_110, %c0_111] : memref<8x256xf32, #tpu.memory_space<vmem>>, vector<8x256xf32>
    tpu.vector_store %arg14[%c0_110, %c0_111], %257 {strides = array<i32>} : memref<8x256xf32, #tpu.memory_space<vmem>>, vector<8x256xf32>,
    %c0_112 = arith.constant 0 : index
    %c0_113 = arith.constant 0 : index
    %259 = vector.load %arg15[%c0_112, %c0_113] : memref<8x256xf32, #tpu.memory_space<vmem>>, vector<8x256xf32>
    tpu.vector_store %arg15[%c0_112, %c0_113], %255 {strides = array<i32>} : memref<8x256xf32, #tpu.memory_space<vmem>>, vector<8x256xf32>,
    %260 = arith.truncf %257 : vector<8x256xf32> to vector<8x256xbf16>
    %cst_114 = arith.constant dense<0.000000e+00> : vector<8x128xf32>
    %261 = tpu.matmul %260, %22, %cst_114 {dimension_numbers = #tpu.dot_dimension_numbers<[1], [0], [0], [1], [0, 0, 1, 1], [], []>} : vector<8x256xbf16>, vector<256x128xbf16>, vector<8x128xf32> -> vector<8x128xf32>
    %262 = vector.broadcast %23 : vector<1x128xf32> to vector<8x128xf32>
    %263 = arith.addf %261, %262 : vector<8x128xf32>
    %cst_115 = arith.constant dense<0xFF800000> : vector<8xf32>
    %264 = vector.multi_reduction <maximumf>, %263, %cst_115 [1] : vector<8x128xf32> to vector<8xf32>
    %265 = vector.shape_cast %264 : vector<8xf32> to vector<8x1xf32>
    %266 = vector.broadcast %265 : vector<8x1xf32> to vector<8x128xf32>
    %267 = arith.subf %263, %266 : vector<8x128xf32>
    %268 = math.exp %267 : vector<8x128xf32>
    %cst_116 = arith.constant dense<0.000000e+00> : vector<8xf32>
    %269 = vector.multi_reduction <add>, %268, %cst_116 [1] : vector<8x128xf32> to vector<8xf32>
    %270 = vector.shape_cast %269 : vector<8xf32> to vector<8x1xf32>
    %271 = math.log %270 : vector<8x1xf32>
    %272 = vector.broadcast %271 : vector<8x1xf32> to vector<8x128xf32>
    %273 = arith.subf %267, %272 : vector<8x128xf32>
    %274 = arith.index_cast %c3_i32 : i32 to index
    %c0_117 = arith.constant 0 : index
    %c0_118 = arith.constant 0 : index
    %275 = vector.load %arg13[%274, %c0_117, %c0_118] : memref<6x8x128xf32, #tpu.memory_space<vmem>>, vector<1x8x128xf32>
    %276 = vector.shape_cast %275 : vector<1x8x128xf32> to vector<8x128xf32>
    %277 = vector.shape_cast %273 : vector<8x128xf32> to vector<1x8x128xf32>
    tpu.vector_store %arg13[%274, %c0_117, %c0_118], %277 {strides = array<i32>} : memref<6x8x128xf32, #tpu.memory_space<vmem>>, vector<1x8x128xf32>,
    %c4_i32 = arith.constant 4 : i32
    %c0_119 = arith.constant 0 : index
    %c0_120 = arith.constant 0 : index
    %278 = vector.load %arg14[%c0_119, %c0_120] : memref<8x256xf32, #tpu.memory_space<vmem>>, vector<8x256xf32>
    %c0_121 = arith.constant 0 : index
    %c0_122 = arith.constant 0 : index
    %279 = vector.load %arg15[%c0_121, %c0_122] : memref<8x256xf32, #tpu.memory_space<vmem>>, vector<8x256xf32>
    %280 = arith.truncf %278 : vector<8x256xf32> to vector<8x256xbf16>
    %cst_123 = arith.constant dense<0.000000e+00> : vector<8x256xf32>
    %281 = tpu.matmul %280, %15, %cst_123 {dimension_numbers = #tpu.dot_dimension_numbers<[1], [0], [0], [1], [0, 0, 1, 1], [], []>} : vector<8x256xbf16>, vector<256x256xbf16>, vector<8x256xf32> -> vector<8x256xf32>
    %282 = arith.truncf %281 : vector<8x256xf32> to vector<8x256xbf16>
    %cst_124 = arith.constant dense<0.000000e+00> : vector<8x64xf32>
    %283 = tpu.matmul %282, %14, %cst_124 {dimension_numbers = #tpu.dot_dimension_numbers<[1], [0], [0], [1], [0, 0, 1, 1], [], []>} : vector<8x256xbf16>, vector<256x64xbf16>, vector<8x64xf32> -> vector<8x64xf32>
    %cst_125 = arith.constant -1.000000e+30 : f32
    %284 = vector.broadcast %cst_125 : f32 to vector<8x64xf32>
    %285 = arith.select %34, %283, %284 : vector<8x64xi1>, vector<8x64xf32>
    %cst_126 = arith.constant dense<0xFF800000> : vector<8xf32>
    %286 = vector.multi_reduction <maximumf>, %285, %cst_126 [1] : vector<8x64xf32> to vector<8xf32>
    %287 = vector.shape_cast %286 : vector<8xf32> to vector<8x1xf32>
    %288 = vector.broadcast %287 : vector<8x1xf32> to vector<8x64xf32>
    %289 = arith.subf %285, %288 : vector<8x64xf32>
    %290 = math.exp %289 : vector<8x64xf32>
    %cst_127 = arith.constant dense<0.000000e+00> : vector<8xf32>
    %291 = vector.multi_reduction <add>, %290, %cst_127 [1] : vector<8x64xf32> to vector<8xf32>
    %292 = vector.shape_cast %291 : vector<8xf32> to vector<8x1xf32>
    %293 = tpu.reciprocal %292 {approx = true} : vector<8x1xf32> -> vector<8x1xf32>
    %294 = vector.broadcast %293 : vector<8x1xf32> to vector<8x64xf32>
    %295 = arith.mulf %290, %294 : vector<8x64xf32>
    %296 = arith.truncf %295 : vector<8x64xf32> to vector<8x64xbf16>
    %cst_128 = arith.constant dense<0.000000e+00> : vector<8x256xf32>
    %297 = tpu.matmul %296, %13, %cst_128 {dimension_numbers = #tpu.dot_dimension_numbers<[1], [0], [0], [1], [0, 0, 1, 1], [], []>} : vector<8x64xbf16>, vector<64x256xbf16>, vector<8x256xf32> -> vector<8x256xf32>
    %298 = arith.truncf %297 : vector<8x256xf32> to vector<8x256xbf16>
    %cst_129 = arith.constant dense<0.000000e+00> : vector<8x256xf32>
    %299 = tpu.matmul %298, %17, %cst_129 {dimension_numbers = #tpu.dot_dimension_numbers<[1], [0], [0], [1], [0, 0, 1, 1], [], []>} : vector<8x256xbf16>, vector<256x256xbf16>, vector<8x256xf32> -> vector<8x256xf32>
    %cst_130 = arith.constant dense<0.000000e+00> : vector<8x256xf32>
    %300 = tpu.matmul %280, %18, %cst_130 {dimension_numbers = #tpu.dot_dimension_numbers<[1], [0], [0], [1], [0, 0, 1, 1], [], []>} : vector<8x256xbf16>, vector<256x256xbf16>, vector<8x256xf32> -> vector<8x256xf32>
    %301 = arith.addf %299, %300 : vector<8x256xf32>
    %302 = math.tanh %301 : vector<8x256xf32>
    %c1_i32_131 = arith.constant 1 : i32
    %303 = arith.subi %c4_i32, %c1_i32_131 : i32
    %304 = arith.index_cast %303 : i32 to index
    %c0_132 = arith.constant 0 : index
    %c0_133 = arith.constant 0 : index
    %305 = vector.load %arg5[%304, %c0_132, %c0_133] : memref<6x8x128xbf16, #tpu.memory_space<vmem>>, vector<1x8x128xbf16>
    %306 = vector.shape_cast %305 : vector<1x8x128xbf16> to vector<8x128xbf16>
    %307 = arith.truncf %302 : vector<8x256xf32> to vector<8x256xbf16>
    %308 = tpu.concatenate %307, %306 in 1 : vector<8x256xbf16>, vector<8x128xbf16> -> vector<8x384xbf16>
    %cst_134 = arith.constant dense<0.000000e+00> : vector<8x1024xf32>
    %309 = tpu.matmul %308, %19, %cst_134 {dimension_numbers = #tpu.dot_dimension_numbers<[1], [0], [0], [1], [0, 0, 1, 1], [], []>} : vector<8x384xbf16>, vector<384x1024xbf16>, vector<8x1024xf32> -> vector<8x1024xf32>
    %cst_135 = arith.constant dense<0.000000e+00> : vector<8x1024xf32>
    %310 = tpu.matmul %280, %20, %cst_135 {dimension_numbers = #tpu.dot_dimension_numbers<[1], [0], [0], [1], [0, 0, 1, 1], [], []>} : vector<8x256xbf16>, vector<256x1024xbf16>, vector<8x1024xf32> -> vector<8x1024xf32>
    %311 = arith.addf %309, %310 : vector<8x1024xf32>
    %312 = vector.broadcast %21 : vector<1x1024xf32> to vector<8x1024xf32>
    %313 = arith.addf %311, %312 : vector<8x1024xf32>
    %314 = vector.extract_strided_slice %313 {offsets = [0, 0], sizes = [8, 256], strides = [1, 1]} : vector<8x1024xf32> to vector<8x256xf32>
    %315 = arith.negf %314 : vector<8x256xf32>
    %316 = math.exp %315 : vector<8x256xf32>
    %cst_136 = arith.constant 1.000000e+00 : f32
    %317 = vector.broadcast %cst_136 : f32 to vector<8x256xf32>
    %318 = arith.addf %317, %316 : vector<8x256xf32>
    %319 = arith.divf %317, %318 : vector<8x256xf32>
    %320 = vector.extract_strided_slice %313 {offsets = [0, 256], sizes = [8, 256], strides = [1, 1]} : vector<8x1024xf32> to vector<8x256xf32>
    %321 = arith.negf %320 : vector<8x256xf32>
    %322 = math.exp %321 : vector<8x256xf32>
    %cst_137 = arith.constant 1.000000e+00 : f32
    %323 = vector.broadcast %cst_137 : f32 to vector<8x256xf32>
    %324 = arith.addf %323, %322 : vector<8x256xf32>
    %325 = arith.divf %323, %324 : vector<8x256xf32>
    %326 = vector.extract_strided_slice %313 {offsets = [0, 512], sizes = [8, 256], strides = [1, 1]} : vector<8x1024xf32> to vector<8x256xf32>
    %327 = math.tanh %326 : vector<8x256xf32>
    %328 = vector.extract_strided_slice %313 {offsets = [0, 768], sizes = [8, 256], strides = [1, 1]} : vector<8x1024xf32> to vector<8x256xf32>
    %329 = arith.negf %328 : vector<8x256xf32>
    %330 = math.exp %329 : vector<8x256xf32>
    %cst_138 = arith.constant 1.000000e+00 : f32
    %331 = vector.broadcast %cst_138 : f32 to vector<8x256xf32>
    %332 = arith.addf %331, %330 : vector<8x256xf32>
    %333 = arith.divf %331, %332 : vector<8x256xf32>
    %334 = arith.mulf %325, %279 : vector<8x256xf32>
    %335 = arith.mulf %319, %327 : vector<8x256xf32>
    %336 = arith.addf %334, %335 : vector<8x256xf32>
    %337 = math.tanh %336 : vector<8x256xf32>
    %338 = arith.mulf %333, %337 : vector<8x256xf32>
    %c0_139 = arith.constant 0 : index
    %c0_140 = arith.constant 0 : index
    %339 = vector.load %arg14[%c0_139, %c0_140] : memref<8x256xf32, #tpu.memory_space<vmem>>, vector<8x256xf32>
    tpu.vector_store %arg14[%c0_139, %c0_140], %338 {strides = array<i32>} : memref<8x256xf32, #tpu.memory_space<vmem>>, vector<8x256xf32>,
    %c0_141 = arith.constant 0 : index
    %c0_142 = arith.constant 0 : index
    %340 = vector.load %arg15[%c0_141, %c0_142] : memref<8x256xf32, #tpu.memory_space<vmem>>, vector<8x256xf32>
    tpu.vector_store %arg15[%c0_141, %c0_142], %336 {strides = array<i32>} : memref<8x256xf32, #tpu.memory_space<vmem>>, vector<8x256xf32>,
    %341 = arith.truncf %338 : vector<8x256xf32> to vector<8x256xbf16>
    %cst_143 = arith.constant dense<0.000000e+00> : vector<8x128xf32>
    %342 = tpu.matmul %341, %22, %cst_143 {dimension_numbers = #tpu.dot_dimension_numbers<[1], [0], [0], [1], [0, 0, 1, 1], [], []>} : vector<8x256xbf16>, vector<256x128xbf16>, vector<8x128xf32> -> vector<8x128xf32>
    %343 = vector.broadcast %23 : vector<1x128xf32> to vector<8x128xf32>
    %344 = arith.addf %342, %343 : vector<8x128xf32>
    %cst_144 = arith.constant dense<0xFF800000> : vector<8xf32>
    %345 = vector.multi_reduction <maximumf>, %344, %cst_144 [1] : vector<8x128xf32> to vector<8xf32>
    %346 = vector.shape_cast %345 : vector<8xf32> to vector<8x1xf32>
    %347 = vector.broadcast %346 : vector<8x1xf32> to vector<8x128xf32>
    %348 = arith.subf %344, %347 : vector<8x128xf32>
    %349 = math.exp %348 : vector<8x128xf32>
    %cst_145 = arith.constant dense<0.000000e+00> : vector<8xf32>
    %350 = vector.multi_reduction <add>, %349, %cst_145 [1] : vector<8x128xf32> to vector<8xf32>
    %351 = vector.shape_cast %350 : vector<8xf32> to vector<8x1xf32>
    %352 = math.log %351 : vector<8x1xf32>
    %353 = vector.broadcast %352 : vector<8x1xf32> to vector<8x128xf32>
    %354 = arith.subf %348, %353 : vector<8x128xf32>
    %355 = arith.index_cast %c4_i32 : i32 to index
    %c0_146 = arith.constant 0 : index
    %c0_147 = arith.constant 0 : index
    %356 = vector.load %arg13[%355, %c0_146, %c0_147] : memref<6x8x128xf32, #tpu.memory_space<vmem>>, vector<1x8x128xf32>
    %357 = vector.shape_cast %356 : vector<1x8x128xf32> to vector<8x128xf32>
    %358 = vector.shape_cast %354 : vector<8x128xf32> to vector<1x8x128xf32>
    tpu.vector_store %arg13[%355, %c0_146, %c0_147], %358 {strides = array<i32>} : memref<6x8x128xf32, #tpu.memory_space<vmem>>, vector<1x8x128xf32>,
    %c5_i32 = arith.constant 5 : i32
    %c0_148 = arith.constant 0 : index
    %c0_149 = arith.constant 0 : index
    %359 = vector.load %arg14[%c0_148, %c0_149] : memref<8x256xf32, #tpu.memory_space<vmem>>, vector<8x256xf32>
    %c0_150 = arith.constant 0 : index
    %c0_151 = arith.constant 0 : index
    %360 = vector.load %arg15[%c0_150, %c0_151] : memref<8x256xf32, #tpu.memory_space<vmem>>, vector<8x256xf32>
    %361 = arith.truncf %359 : vector<8x256xf32> to vector<8x256xbf16>
    %cst_152 = arith.constant dense<0.000000e+00> : vector<8x256xf32>
    %362 = tpu.matmul %361, %15, %cst_152 {dimension_numbers = #tpu.dot_dimension_numbers<[1], [0], [0], [1], [0, 0, 1, 1], [], []>} : vector<8x256xbf16>, vector<256x256xbf16>, vector<8x256xf32> -> vector<8x256xf32>
    %363 = arith.truncf %362 : vector<8x256xf32> to vector<8x256xbf16>
    %cst_153 = arith.constant dense<0.000000e+00> : vector<8x64xf32>
    %364 = tpu.matmul %363, %14, %cst_153 {dimension_numbers = #tpu.dot_dimension_numbers<[1], [0], [0], [1], [0, 0, 1, 1], [], []>} : vector<8x256xbf16>, vector<256x64xbf16>, vector<8x64xf32> -> vector<8x64xf32>
    %cst_154 = arith.constant -1.000000e+30 : f32
    %365 = vector.broadcast %cst_154 : f32 to vector<8x64xf32>
    %366 = arith.select %34, %364, %365 : vector<8x64xi1>, vector<8x64xf32>
    %cst_155 = arith.constant dense<0xFF800000> : vector<8xf32>
    %367 = vector.multi_reduction <maximumf>, %366, %cst_155 [1] : vector<8x64xf32> to vector<8xf32>
    %368 = vector.shape_cast %367 : vector<8xf32> to vector<8x1xf32>
    %369 = vector.broadcast %368 : vector<8x1xf32> to vector<8x64xf32>
    %370 = arith.subf %366, %369 : vector<8x64xf32>
    %371 = math.exp %370 : vector<8x64xf32>
    %cst_156 = arith.constant dense<0.000000e+00> : vector<8xf32>
    %372 = vector.multi_reduction <add>, %371, %cst_156 [1] : vector<8x64xf32> to vector<8xf32>
    %373 = vector.shape_cast %372 : vector<8xf32> to vector<8x1xf32>
    %374 = tpu.reciprocal %373 {approx = true} : vector<8x1xf32> -> vector<8x1xf32>
    %375 = vector.broadcast %374 : vector<8x1xf32> to vector<8x64xf32>
    %376 = arith.mulf %371, %375 : vector<8x64xf32>
    %377 = arith.truncf %376 : vector<8x64xf32> to vector<8x64xbf16>
    %cst_157 = arith.constant dense<0.000000e+00> : vector<8x256xf32>
    %378 = tpu.matmul %377, %13, %cst_157 {dimension_numbers = #tpu.dot_dimension_numbers<[1], [0], [0], [1], [0, 0, 1, 1], [], []>} : vector<8x64xbf16>, vector<64x256xbf16>, vector<8x256xf32> -> vector<8x256xf32>
    %379 = arith.truncf %378 : vector<8x256xf32> to vector<8x256xbf16>
    %cst_158 = arith.constant dense<0.000000e+00> : vector<8x256xf32>
    %380 = tpu.matmul %379, %17, %cst_158 {dimension_numbers = #tpu.dot_dimension_numbers<[1], [0], [0], [1], [0, 0, 1, 1], [], []>} : vector<8x256xbf16>, vector<256x256xbf16>, vector<8x256xf32> -> vector<8x256xf32>
    %cst_159 = arith.constant dense<0.000000e+00> : vector<8x256xf32>
    %381 = tpu.matmul %361, %18, %cst_159 {dimension_numbers = #tpu.dot_dimension_numbers<[1], [0], [0], [1], [0, 0, 1, 1], [], []>} : vector<8x256xbf16>, vector<256x256xbf16>, vector<8x256xf32> -> vector<8x256xf32>
    %382 = arith.addf %380, %381 : vector<8x256xf32>
    %383 = math.tanh %382 : vector<8x256xf32>
    %c1_i32_160 = arith.constant 1 : i32
    %384 = arith.subi %c5_i32, %c1_i32_160 : i32
    %385 = arith.index_cast %384 : i32 to index
    %c0_161 = arith.constant 0 : index
    %c0_162 = arith.constant 0 : index
    %386 = vector.load %arg5[%385, %c0_161, %c0_162] : memref<6x8x128xbf16, #tpu.memory_space<vmem>>, vector<1x8x128xbf16>
    %387 = vector.shape_cast %386 : vector<1x8x128xbf16> to vector<8x128xbf16>
    %388 = arith.truncf %383 : vector<8x256xf32> to vector<8x256xbf16>
    %389 = tpu.concatenate %388, %387 in 1 : vector<8x256xbf16>, vector<8x128xbf16> -> vector<8x384xbf16>
    %cst_163 = arith.constant dense<0.000000e+00> : vector<8x1024xf32>
    %390 = tpu.matmul %389, %19, %cst_163 {dimension_numbers = #tpu.dot_dimension_numbers<[1], [0], [0], [1], [0, 0, 1, 1], [], []>} : vector<8x384xbf16>, vector<384x1024xbf16>, vector<8x1024xf32> -> vector<8x1024xf32>
    %cst_164 = arith.constant dense<0.000000e+00> : vector<8x1024xf32>
    %391 = tpu.matmul %361, %20, %cst_164 {dimension_numbers = #tpu.dot_dimension_numbers<[1], [0], [0], [1], [0, 0, 1, 1], [], []>} : vector<8x256xbf16>, vector<256x1024xbf16>, vector<8x1024xf32> -> vector<8x1024xf32>
    %392 = arith.addf %390, %391 : vector<8x1024xf32>
    %393 = vector.broadcast %21 : vector<1x1024xf32> to vector<8x1024xf32>
    %394 = arith.addf %392, %393 : vector<8x1024xf32>
    %395 = vector.extract_strided_slice %394 {offsets = [0, 0], sizes = [8, 256], strides = [1, 1]} : vector<8x1024xf32> to vector<8x256xf32>
    %396 = arith.negf %395 : vector<8x256xf32>
    %397 = math.exp %396 : vector<8x256xf32>
    %cst_165 = arith.constant 1.000000e+00 : f32
    %398 = vector.broadcast %cst_165 : f32 to vector<8x256xf32>
    %399 = arith.addf %398, %397 : vector<8x256xf32>
    %400 = arith.divf %398, %399 : vector<8x256xf32>
    %401 = vector.extract_strided_slice %394 {offsets = [0, 256], sizes = [8, 256], strides = [1, 1]} : vector<8x1024xf32> to vector<8x256xf32>
    %402 = arith.negf %401 : vector<8x256xf32>
    %403 = math.exp %402 : vector<8x256xf32>
    %cst_166 = arith.constant 1.000000e+00 : f32
    %404 = vector.broadcast %cst_166 : f32 to vector<8x256xf32>
    %405 = arith.addf %404, %403 : vector<8x256xf32>
    %406 = arith.divf %404, %405 : vector<8x256xf32>
    %407 = vector.extract_strided_slice %394 {offsets = [0, 512], sizes = [8, 256], strides = [1, 1]} : vector<8x1024xf32> to vector<8x256xf32>
    %408 = math.tanh %407 : vector<8x256xf32>
    %409 = vector.extract_strided_slice %394 {offsets = [0, 768], sizes = [8, 256], strides = [1, 1]} : vector<8x1024xf32> to vector<8x256xf32>
    %410 = arith.negf %409 : vector<8x256xf32>
    %411 = math.exp %410 : vector<8x256xf32>
    %cst_167 = arith.constant 1.000000e+00 : f32
    %412 = vector.broadcast %cst_167 : f32 to vector<8x256xf32>
    %413 = arith.addf %412, %411 : vector<8x256xf32>
    %414 = arith.divf %412, %413 : vector<8x256xf32>
    %415 = arith.mulf %406, %360 : vector<8x256xf32>
    %416 = arith.mulf %400, %408 : vector<8x256xf32>
    %417 = arith.addf %415, %416 : vector<8x256xf32>
    %418 = math.tanh %417 : vector<8x256xf32>
    %419 = arith.mulf %414, %418 : vector<8x256xf32>
    %c0_168 = arith.constant 0 : index
    %c0_169 = arith.constant 0 : index
    %420 = vector.load %arg14[%c0_168, %c0_169] : memref<8x256xf32, #tpu.memory_space<vmem>>, vector<8x256xf32>
    tpu.vector_store %arg14[%c0_168, %c0_169], %419 {strides = array<i32>} : memref<8x256xf32, #tpu.memory_space<vmem>>, vector<8x256xf32>,
    %c0_170 = arith.constant 0 : index
    %c0_171 = arith.constant 0 : index
    %421 = vector.load %arg15[%c0_170, %c0_171] : memref<8x256xf32, #tpu.memory_space<vmem>>, vector<8x256xf32>
    tpu.vector_store %arg15[%c0_170, %c0_171], %417 {strides = array<i32>} : memref<8x256xf32, #tpu.memory_space<vmem>>, vector<8x256xf32>,
    %422 = arith.truncf %419 : vector<8x256xf32> to vector<8x256xbf16>
    %cst_172 = arith.constant dense<0.000000e+00> : vector<8x128xf32>
    %423 = tpu.matmul %422, %22, %cst_172 {dimension_numbers = #tpu.dot_dimension_numbers<[1], [0], [0], [1], [0, 0, 1, 1], [], []>} : vector<8x256xbf16>, vector<256x128xbf16>, vector<8x128xf32> -> vector<8x128xf32>
    %424 = vector.broadcast %23 : vector<1x128xf32> to vector<8x128xf32>
    %425 = arith.addf %423, %424 : vector<8x128xf32>
    %cst_173 = arith.constant dense<0xFF800000> : vector<8xf32>
    %426 = vector.multi_reduction <maximumf>, %425, %cst_173 [1] : vector<8x128xf32> to vector<8xf32>
    %427 = vector.shape_cast %426 : vector<8xf32> to vector<8x1xf32>
    %428 = vector.broadcast %427 : vector<8x1xf32> to vector<8x128xf32>
    %429 = arith.subf %425, %428 : vector<8x128xf32>
    %430 = math.exp %429 : vector<8x128xf32>
    %cst_174 = arith.constant dense<0.000000e+00> : vector<8xf32>
    %431 = vector.multi_reduction <add>, %430, %cst_174 [1] : vector<8x128xf32> to vector<8xf32>
    %432 = vector.shape_cast %431 : vector<8xf32> to vector<8x1xf32>
    %433 = math.log %432 : vector<8x1xf32>
    %434 = vector.broadcast %433 : vector<8x1xf32> to vector<8x128xf32>
    %435 = arith.subf %429, %434 : vector<8x128xf32>
    %436 = arith.index_cast %c5_i32 : i32 to index
    %c0_175 = arith.constant 0 : index
    %c0_176 = arith.constant 0 : index
    %437 = vector.load %arg13[%436, %c0_175, %c0_176] : memref<6x8x128xf32, #tpu.memory_space<vmem>>, vector<1x8x128xf32>
    %438 = vector.shape_cast %437 : vector<1x8x128xf32> to vector<8x128xf32>
    %439 = vector.shape_cast %435 : vector<8x128xf32> to vector<1x8x128xf32>
    tpu.vector_store %arg13[%436, %c0_175, %c0_176], %439 {strides = array<i32>} : memref<6x8x128xf32, #tpu.memory_space<vmem>>, vector<1x8x128xf32>,
    %c5_i32_177 = arith.constant 5 : i32
    return
  }
  func.func @transform_0(%arg0: i32) -> (i32, i32) {
    %c0_i32 = arith.constant 0 : i32
    %c0_i32_0 = arith.constant 0 : i32
    %c0_i32_1 = arith.constant 0 : i32
    return %c0_i32, %c0_i32_0 : i32, i32
  }
  func.func @transform_1(%arg0: i32) -> (i32, i32) {
    %c0_i32 = arith.constant 0 : i32
    %c0_i32_0 = arith.constant 0 : i32
    %c0_i32_1 = arith.constant 0 : i32
    return %c0_i32, %c0_i32_0 : i32, i32
  }
  func.func @transform_2(%arg0: i32) -> (i32, i32) {
    %c0_i32 = arith.constant 0 : i32
    %c0_i32_0 = arith.constant 0 : i32
    %c0_i32_1 = arith.constant 0 : i32
    return %c0_i32, %c0_i32_0 : i32, i32
  }
  func.func @transform_3(%arg0: i32) -> (i32, i32) {
    %c0_i32 = arith.constant 0 : i32
    %c0_i32_0 = arith.constant 0 : i32
    %c0_i32_1 = arith.constant 0 : i32
    return %c0_i32, %c0_i32_0 : i32, i32
  }
  func.func @transform_4(%arg0: i32) -> (i32, i32, i32) {
    %c0_i32 = arith.constant 0 : i32
    %c0_i32_0 = arith.constant 0 : i32
    %c0_i32_1 = arith.constant 0 : i32
    %c0_i32_2 = arith.constant 0 : i32
    return %c0_i32, %c0_i32_0, %c0_i32_1 : i32, i32, i32
  }
  func.func @transform_5(%arg0: i32) -> (i32, i32) {
    %c0_i32 = arith.constant 0 : i32
    %c0_i32_0 = arith.constant 0 : i32
    %c0_i32_1 = arith.constant 0 : i32
    return %c0_i32, %c0_i32_0 : i32, i32
  }
  func.func @transform_6(%arg0: i32) -> (i32, i32) {
    %c0_i32 = arith.constant 0 : i32
    %c0_i32_0 = arith.constant 0 : i32
    %c0_i32_1 = arith.constant 0 : i32
    return %c0_i32, %c0_i32_0 : i32, i32
  }
  func.func @transform_7(%arg0: i32) -> (i32, i32) {
    %c0_i32 = arith.constant 0 : i32
    %c0_i32_0 = arith.constant 0 : i32
    %c0_i32_1 = arith.constant 0 : i32
    return %c0_i32, %c0_i32_0 : i32, i32
  }
  func.func @transform_8(%arg0: i32) -> (i32, i32) {
    %c0_i32 = arith.constant 0 : i32
    %c0_i32_0 = arith.constant 0 : i32
    %c0_i32_1 = arith.constant 0 : i32
    return %c0_i32, %c0_i32_0 : i32, i32
  }
  func.func @transform_9(%arg0: i32) -> (i32, i32) {
    %c0_i32 = arith.constant 0 : i32
    %c0_i32_0 = arith.constant 0 : i32
    %c0_i32_1 = arith.constant 0 : i32
    return %c0_i32, %c0_i32_0 : i32, i32
  }
  func.func @transform_10(%arg0: i32) -> (i32, i32) {
    %c0_i32 = arith.constant 0 : i32
    %c0_i32_0 = arith.constant 0 : i32
    %c0_i32_1 = arith.constant 0 : i32
    return %c0_i32, %c0_i32_0 : i32, i32
  }
  func.func @transform_11(%arg0: i32) -> (i32, i32) {
    %c0_i32 = arith.constant 0 : i32
    %c0_i32_0 = arith.constant 0 : i32
    %c0_i32_1 = arith.constant 0 : i32
    return %c0_i32, %c0_i32_0 : i32, i32
  }
  func.func @transform_12(%arg0: i32) -> (i32, i32, i32) {
    %c0_i32 = arith.constant 0 : i32
    %c0_i32_0 = arith.constant 0 : i32
    %c0_i32_1 = arith.constant 0 : i32
    %c0_i32_2 = arith.constant 0 : i32
    return %c0_i32, %c0_i32_0, %c0_i32_1 : i32, i32, i32
  }
}

</mosaic_0001>

<llo_original>
// kernel: nmt_forward.2
$region0: #{nmt_forward.2}
  #allocation0 [shape = 'u32[]', space=smem, size = 0x4, offset = 0x4, fixed_abs, tag = 'smem constant byte address 0x4 - core index']
  #allocation1 [shape = 'u32[144,128]{1,0:T(1,128)}', space=vmem, size = 0x12000, scoped, tag = 'internal scratch']
  #allocation2 [shape = 'f32[64,512]{1,0:T(8,128)}', space=vmem, size = 0x20000, scoped, tag = 'scratch operand']
  #allocation3 [shape = 'f32[8,128]{1,0:T(8,128)}', space=vmem, size = 0x1000, scoped, tag = 'scratch operand']
  #allocation4 [shape = 'f32[8,128]{1,0:T(8,128)}', space=vmem, size = 0x1000, scoped, tag = 'scratch operand']
  %s0 = inlined_call_operand.vmem [shape: bf16[64,128], index: 0, kind: input, shape index: {}]
  %s1 = inlined_call_operand.vmem [shape: bf16[2,128,512], index: 1, kind: input, shape index: {}]
  %s2 = inlined_call_operand.vmem [shape: bf16[2,128,512], index: 2, kind: input, shape index: {}]
  %s3 = inlined_call_operand.vmem [shape: f32[2,1,512], index: 3, kind: input, shape index: {}]
  %s4 = inlined_call_operand.vmem [shape: bf16[8,8,256], index: 4, kind: output, shape index: {0}]
  %s5 = inlined_call_operand.vmem [shape: f32[2,8,128], index: 5, kind: output, shape index: {1}]
  %s6 = inlined_call_operand.vmem [shape: f32[2,8,128], index: 6, kind: output, shape index: {2}]
  %7 = xla_tuple %s4, %s5, %s6
  %s8 = sld [smem:[#allocation0]]
  $region102: #{nmt_forward.2} parent=0
    _
  %s10 = ssub.s32 1, %s8
  %s11 = scalar_select 0, %s10, %s8
  $region1: #{nmt_forward.2} parent=0
    #allocation5 [shape = 'u8[32768]{0}', space=vmem, size = 0x8000, scoped, tag = 'output window, operand 0']
    loop: start=0, step=1, limit=4
    $region2: #{nmt_forward.2} parent=1 // loop_pre_header
      _
    $region3: #{nmt_forward.2} parent=1 // loop_header
      %s13 = sphi 0, %s17
      %p14 = scmp.ge.s32.totalorder %s13, 4
      %s21 = sphi 0, %s21
      %s23 = sphi 0, %s21
      %s24 = sphi 0, %s23
      %s38 = sphi 0, %s24
      %s44 = sphi 0, %s46
      %s47 = sphi 0, %s44
      %s48 = sphi 0, %s47
      %s64 = sphi 0, %s48
      %s70 = sphi 0, %s72
      %s73 = sphi 0, %s70
      %s74 = sphi 0, %s73
      %s90 = sphi 0, %s74
      %s96 = sphi 0, %s98
      %s99 = sphi 0, %s96
      %s100 = sphi 0, %s99
      %s116 = sphi 0, %s100
      %s122 = sphi 0, %s124
      %s125 = sphi 0, %s122
      %s126 = sphi 0, %s125
      %s142 = sphi 0, %s126
      %s148 = sphi 0, %s150
      %s151 = sphi 0, %s148
      %s152 = sphi 0, %s151
      %s168 = sphi 0, %s152
      %s174 = sphi 0, %s176
      %s177 = sphi 0, %s174
      %s178 = sphi 0, %s177
      %s194 = sphi 0, %s178
    $region4: #{nmt_forward.2} parent=1 // loop_header_branch
      %16 = sbr.rel (%p14) target = $region8
    $region5: #{nmt_forward.2} parent=1 // loop_body
      %s18 = ssub.s32 %s13, 1
      %s19 = ssub.s32 %s13, 2
      %s20 = sadd.s32 %s13, 1
      %s22 = sadd.s32 %s21, 1
      %p25 = scmp.eq.s32.totalorder %s13, 1
      %p26 = scmp.ne.s32.totalorder %s21, %s23
      %p27 = scmp.eq.s32.totalorder %s13, 0
      %p28 = por %p26, %p27
      %p29 = scmp.ne.s32.totalorder %s21, %s23
      %p30 = scmp.eq.s32.totalorder %s18, 1
      %p31 = por %p29, %p30
      %p32 = scmp.ne.s32.totalorder %s23, %s24
      %p33 = scmp.eq.s32.totalorder %s18, 0
      %p34 = por %p32, %p33
      %p35 = scmp.ne.s32.totalorder %s23, %s24
      %p36 = scmp.eq.s32.totalorder %s19, 1
      %p37 = por %p35, %p36
      %p39 = scmp.ne.s32.totalorder %s24, %s38
      %p40 = scmp.eq.s32.totalorder %s19, 0
      %p41 = por %p39, %p40
      %s42 = ssub.s32 %s13, %s20
      %p43 = scmp.eq.s32.totalorder %s42, 0
      %s45 = sadd.s32 %s44, 1
      %s46 = scalar_select %p43, %s44, %s45
      %p49 = pneg %p43
      %p50 = scmp.eq.s32.totalorder %s13, 1
      %p51 = por %p49, %p50
      %p52 = scmp.ne.s32.totalorder %s44, %s47
      %p53 = scmp.eq.s32.totalorder %s13, 0
      %p54 = por %p52, %p53
      %p55 = scmp.ne.s32.totalorder %s44, %s47
      %p56 = scmp.eq.s32.totalorder %s18, 1
      %p57 = por %p55, %p56
      %p58 = scmp.ne.s32.totalorder %s47, %s48
      %p59 = scmp.eq.s32.totalorder %s18, 0
      %p60 = por %p58, %p59
      %p61 = scmp.ne.s32.totalorder %s47, %s48
      %p62 = scmp.eq.s32.totalorder %s19, 1
      %p63 = por %p61, %p62
      %p65 = scmp.ne.s32.totalorder %s48, %s64
      %p66 = scmp.eq.s32.totalorder %s19, 0
      %p67 = por %p65, %p66
      %s68 = ssub.s32 %s13, %s20
      %p69 = scmp.eq.s32.totalorder %s68, 0
      %s71 = sadd.s32 %s70, 1
      %s72 = scalar_select %p69, %s70, %s71
      %p75 = pneg %p69
      %p76 = scmp.eq.s32.totalorder %s13, 1
      %p77 = por %p75, %p76
      %p78 = scmp.ne.s32.totalorder %s70, %s73
      %p79 = scmp.eq.s32.totalorder %s13, 0
      %p80 = por %p78, %p79
      %p81 = scmp.ne.s32.totalorder %s70, %s73
      %p82 = scmp.eq.s32.totalorder %s18, 1
      %p83 = por %p81, %p82
      %p84 = scmp.ne.s32.totalorder %s73, %s74
      %p85 = scmp.eq.s32.totalorder %s18, 0
      %p86 = por %p84, %p85
      %p87 = scmp.ne.s32.totalorder %s73, %s74
      %p88 = scmp.eq.s32.totalorder %s19, 1
      %p89 = por %p87, %p88
      %p91 = scmp.ne.s32.totalorder %s74, %s90
      %p92 = scmp.eq.s32.totalorder %s19, 0
      %p93 = por %p91, %p92
      %s94 = ssub.s32 %s13, %s20
      %p95 = scmp.eq.s32.totalorder %s94, 0
      %s97 = sadd.s32 %s96, 1
      %s98 = scalar_select %p95, %s96, %s97
      %p101 = pneg %p95
      %p102 = scmp.eq.s32.totalorder %s13, 1
      %p103 = por %p101, %p102
      %p104 = scmp.ne.s32.totalorder %s96, %s99
      %p105 = scmp.eq.s32.totalorder %s13, 0
      %p106 = por %p104, %p105
      %p107 = scmp.ne.s32.totalorder %s96, %s99
      %p108 = scmp.eq.s32.totalorder %s18, 1
      %p109 = por %p107, %p108
      %p110 = scmp.ne.s32.totalorder %s99, %s100
      %p111 = scmp.eq.s32.totalorder %s18, 0
      %p112 = por %p110, %p111
      %p113 = scmp.ne.s32.totalorder %s99, %s100
      %p114 = scmp.eq.s32.totalorder %s19, 1
      %p115 = por %p113, %p114
      %p117 = scmp.ne.s32.totalorder %s100, %s116
      %p118 = scmp.eq.s32.totalorder %s19, 0
      %p119 = por %p117, %p118
      %s120 = ssub.s32 %s13, %s20
      %p121 = scmp.eq.s32.totalorder %s120, 0
      %s123 = sadd.s32 %s122, 1
      %s124 = scalar_select %p121, %s122, %s123
      %p127 = pneg %p121
      %p128 = scmp.eq.s32.totalorder %s13, 1
      %p129 = por %p127, %p128
      %p130 = scmp.ne.s32.totalorder %s122, %s125
      %p131 = scmp.eq.s32.totalorder %s13, 0
      %p132 = por %p130, %p131
      %p133 = scmp.ne.s32.totalorder %s122, %s125
      %p134 = scmp.eq.s32.totalorder %s18, 1
      %p135 = por %p133, %p134
      %p136 = scmp.ne.s32.totalorder %s125, %s126
      %p137 = scmp.eq.s32.totalorder %s18, 0
      %p138 = por %p136, %p137
      %p139 = scmp.ne.s32.totalorder %s125, %s126
      %p140 = scmp.eq.s32.totalorder %s19, 1
      %p141 = por %p139, %p140
      %p143 = scmp.ne.s32.totalorder %s126, %s142
      %p144 = scmp.eq.s32.totalorder %s19, 0
      %p145 = por %p143, %p144
      %s146 = ssub.s32 %s13, %s20
      %p147 = scmp.eq.s32.totalorder %s146, 0
      %s149 = sadd.s32 %s148, 1
      %s150 = scalar_select %p147, %s148, %s149
      %p153 = pneg %p147
      %p154 = scmp.eq.s32.totalorder %s13, 1
      %p155 = por %p153, %p154
      %p156 = scmp.ne.s32.totalorder %s148, %s151
      %p157 = scmp.eq.s32.totalorder %s13, 0
      %p158 = por %p156, %p157
      %p159 = scmp.ne.s32.totalorder %s148, %s151
      %p160 = scmp.eq.s32.totalorder %s18, 1
      %p161 = por %p159, %p160
      %p162 = scmp.ne.s32.totalorder %s151, %s152
      %p163 = scmp.eq.s32.totalorder %s18, 0
      %p164 = por %p162, %p163
      %p165 = scmp.ne.s32.totalorder %s151, %s152
      %p166 = scmp.eq.s32.totalorder %s19, 1
      %p167 = por %p165, %p166
      %p169 = scmp.ne.s32.totalorder %s152, %s168
      %p170 = scmp.eq.s32.totalorder %s19, 0
      %p171 = por %p169, %p170
      %s172 = ssub.s32 %s13, %s20
      %p173 = scmp.eq.s32.totalorder %s172, 0
      %s175 = sadd.s32 %s174, 1
      %s176 = scalar_select %p173, %s174, %s175
      %p179 = pneg %p173
      %p180 = scmp.eq.s32.totalorder %s13, 1
      %p181 = por %p179, %p180
      %p182 = scmp.ne.s32.totalorder %s174, %s177
      %p183 = scmp.eq.s32.totalorder %s13, 0
      %p184 = por %p182, %p183
      %p185 = scmp.ne.s32.totalorder %s174, %s177
      %p186 = scmp.eq.s32.totalorder %s18, 1
      %p187 = por %p185, %p186
      %p188 = scmp.ne.s32.totalorder %s177, %s178
      %p189 = scmp.eq.s32.totalorder %s18, 0
      %p190 = por %p188, %p189
      %p191 = scmp.ne.s32.totalorder %s177, %s178
      %p192 = scmp.eq.s32.totalorder %s19, 1
      %p193 = por %p191, %p192
      %p195 = scmp.ne.s32.totalorder %s178, %s194
      %p196 = scmp.eq.s32.totalorder %s19, 0
      %p197 = por %p195, %p196
      %p198 = scmp.le.s32.totalorder 1, %s13
      %p199 = scmp.lt.s32.totalorder %s13, 3
      %p200 = pnand %p198, %p199
      %p201 = pneg %p200
      // Predicated region
      $region9: #{nmt_forward.2} parent=5 // pred_check
        _
      $region10: #{nmt_forward.2} parent=5 // pred_check_branch
        %203 = sbr.rel (%p200) target = $region12
      $region11: #{nmt_forward.2} parent=5 // pred_region
        %s204 = ssub.s32 %s13, 1
        // Predicated region
        $region13: #{nmt_forward.2} parent=11 // pred_check
          %p205 = pneg %p34
        $region14: #{nmt_forward.2} parent=11 // pred_check_branch
          %207 = sbr.rel (%p205) target = $region16
        $region15: #{nmt_forward.2} parent=11 // pred_region
          _
        $region16: #{nmt_forward.2} parent=11 // pred_fallthru
          _
      $region12: #{nmt_forward.2} parent=5 // pred_fallthru
        _
      %p208 = scmp.lt.s32.totalorder %s13, 2
      // Predicated region
      $region17: #{nmt_forward.2} parent=5 // pred_check
        %p209 = pneg %p208
      $region18: #{nmt_forward.2} parent=5 // pred_check_branch
        %211 = sbr.rel (%p209) target = $region20
      $region19: #{nmt_forward.2} parent=5 // pred_region
        // Predicated region
        $region21: #{nmt_forward.2} parent=19 // pred_check
          %p212 = pneg %p54
        $region22: #{nmt_forward.2} parent=19 // pred_check_branch
          %214 = sbr.rel (%p212) target = $region24
        $region23: #{nmt_forward.2} parent=19 // pred_region
          %p215 = scmp.lt.s32.totalorder %s13, 1
          %s216 = scalar_select %p215, %s13, 1
          %s217 = smul.addr %s216, 64
          %s218 = smul.addr %s217, 4
          %s219 = scalar_lea.vmem %s1, %s218
        $region24: #{nmt_forward.2} parent=19 // pred_fallthru
          _
        // Predicated region
        $region25: #{nmt_forward.2} parent=19 // pred_check
          %p220 = pneg %p80
        $region26: #{nmt_forward.2} parent=19 // pred_check_branch
          %222 = sbr.rel (%p220) target = $region28
        $region27: #{nmt_forward.2} parent=19 // pred_region
          %p223 = scmp.lt.s32.totalorder %s13, 1
          %s224 = scalar_select %p223, %s13, 1
          %s225 = smul.addr %s224, 64
          %s226 = smul.addr %s225, 4
          %s227 = scalar_lea.vmem %s2, %s226
        $region28: #{nmt_forward.2} parent=19 // pred_fallthru
          _
        // Predicated region
        $region29: #{nmt_forward.2} parent=19 // pred_check
          %p228 = pneg %p106
        $region30: #{nmt_forward.2} parent=19 // pred_check_branch
          %230 = sbr.rel (%p228) target = $region32
        $region31: #{nmt_forward.2} parent=19 // pred_region
          %p231 = scmp.lt.s32.totalorder %s13, 1
          %s232 = scalar_select %p231, %s13, 1
          %s233 = smul.addr %s232, 4
          %s234 = scalar_lea.vmem %s3, %s233
        $region32: #{nmt_forward.2} parent=19 // pred_fallthru
          _
      $region20: #{nmt_forward.2} parent=5 // pred_fallthru
        _
      %p235 = scmp.le.s32.totalorder 1, %s13
      %p236 = scmp.lt.s32.totalorder %s13, 3
      %p237 = pnand %p235, %p236
      %p238 = pneg %p237
      // Predicated region
      $region33: #{nmt_forward.2} parent=5 // pred_check
        _
      $region34: #{nmt_forward.2} parent=5 // pred_check_branch
        %240 = sbr.rel (%p237) target = $region36
      $region35: #{nmt_forward.2} parent=5 // pred_region
        %s241 = ssub.s32 %s13, 1
        %p242 = pneg %p34
        %p243 = pneg %p31
        %p244 = scmp.lt.s32.totalorder %s18, 1
        %s245 = scalar_select %p244, %s18, 1
        %s246 = smul.addr %s245, 64
        %s247 = smul.addr %s246, 4
        %s248 = scalar_lea.vmem %s1, %s247
        %p249 = pneg %p60
        %p250 = pneg %p57
        %p251 = scmp.lt.s32.totalorder %s18, 1
        %s252 = scalar_select %p251, %s18, 1
        %s253 = smul.addr %s252, 64
        %s254 = smul.addr %s253, 4
        %s255 = scalar_lea.vmem %s2, %s254
        %p256 = pneg %p86
        %p257 = pneg %p83
        %p258 = scmp.lt.s32.totalorder %s18, 1
        %s259 = scalar_select %p258, %s18, 1
        %s260 = smul.addr %s259, 4
        %s261 = scalar_lea.vmem %s3, %s260
        %p262 = pneg %p112
        %p263 = pneg %p109
        %p264 = pneg %p138
        %p265 = pneg %p135
        %s266 = sand.u32 %s125, 1
        %s267 = sand.u32 %s125, 1
        %s268 = smul.addr %s267, 32
        %s269 = scalar_lea.vmem [#allocation5], %s268
        %p270 = pneg %p164
        %p271 = pneg %p161
        %p272 = scmp.lt.s32.totalorder %s18, 1
        %s273 = scalar_select %p272, %s18, 1
        %s274 = smul.addr %s273, 8
        %s275 = scalar_lea.vmem %s5, %s274
        %p276 = pneg %p190
        %p277 = pneg %p187
        %p278 = scmp.lt.s32.totalorder %s18, 1
        %s279 = scalar_select %p278, %s18, 1
        %s280 = smul.addr %s279, 8
        %s281 = scalar_lea.vmem %s6, %s280
        %p282 = scmp.lt.s32.totalorder %s18, 1
        %s283 = scalar_select %p282, %s18, 1
        %s284 = smul.addr %s283, 64
        %s285 = smul.addr %s284, 4
        %s286 = scalar_lea.vmem %s1, %s285
        %p287 = scmp.lt.s32.totalorder %s18, 1
        %s288 = scalar_select %p287, %s18, 1
        %s289 = smul.addr %s288, 64
        %s290 = smul.addr %s289, 4
        %s291 = scalar_lea.vmem %s2, %s290
        %p292 = scmp.lt.s32.totalorder %s18, 1
        %s293 = scalar_select %p292, %s18, 1
        %s294 = smul.addr %s293, 4
        %s295 = scalar_lea.vmem %s3, %s294
        %p296 = scmp.lt.s32.totalorder %s18, 1
        %s297 = scalar_select %p296, %s18, 1
        %s298 = smul.addr %s297, 8
        %s299 = scalar_lea.vmem %s5, %s298
        %p300 = scmp.lt.s32.totalorder %s18, 1
        %s301 = scalar_select %p300, %s18, 1
        %s302 = smul.addr %s301, 8
        %s303 = scalar_lea.vmem %s6, %s302
        %v305 = vld [vmem:[%s0] sm:$0xf]
        %v306 = vld [vmem:[%s0 + $0x4] sm:$0xf]
        %v307 = vld [vmem:[%s0 + $0x8] sm:$0xf]
        %v308 = vld [vmem:[%s0 + $0xc] sm:$0xf]
        %v309 = vld [vmem:[%s0 + $0x10] sm:$0xf]
        %v310 = vld [vmem:[%s0 + $0x14] sm:$0xf]
        %v311 = vld [vmem:[%s0 + $0x18] sm:$0xf]
        %v312 = vld [vmem:[%s0 + $0x1c] sm:$0xf]
        %v313 = vld [vmem:[%s286] sm:$0xff]
        %v314 = vld [vmem:[%s286 + $0x8] sm:$0xff]
        %v315 = vld [vmem:[%s286 + $0x10] sm:$0xff]
        %v316 = vld [vmem:[%s286 + $0x18] sm:$0xff]
        %v317 = vld [vmem:[%s286 + $0x20] sm:$0xff]
        %v318 = vld [vmem:[%s286 + $0x28] sm:$0xff]
        %v319 = vld [vmem:[%s286 + $0x30] sm:$0xff]
        %v320 = vld [vmem:[%s286 + $0x38] sm:$0xff]
        %v321 = vld [vmem:[%s286 + $0x40] sm:$0xff]
        %v322 = vld [vmem:[%s286 + $0x48] sm:$0xff]
        %v323 = vld [vmem:[%s286 + $0x50] sm:$0xff]
        %v324 = vld [vmem:[%s286 + $0x58] sm:$0xff]
        %v325 = vld [vmem:[%s286 + $0x60] sm:$0xff]
        %v326 = vld [vmem:[%s286 + $0x68] sm:$0xff]
        %v327 = vld [vmem:[%s286 + $0x70] sm:$0xff]
        %v328 = vld [vmem:[%s286 + $0x78] sm:$0xff]
        %v329 = vld [vmem:[%s286 + $0x80] sm:$0xff]
        %v330 = vld [vmem:[%s286 + $0x88] sm:$0xff]
        %v331 = vld [vmem:[%s286 + $0x90] sm:$0xff]
        %v332 = vld [vmem:[%s286 + $0x98] sm:$0xff]
        %v333 = vld [vmem:[%s286 + $0xa0] sm:$0xff]
        %v334 = vld [vmem:[%s286 + $0xa8] sm:$0xff]
        %v335 = vld [vmem:[%s286 + $0xb0] sm:$0xff]
        %v336 = vld [vmem:[%s286 + $0xb8] sm:$0xff]
        %v337 = vld [vmem:[%s286 + $0xc0] sm:$0xff]
        %v338 = vld [vmem:[%s286 + $0xc8] sm:$0xff]
        %v339 = vld [vmem:[%s286 + $0xd0] sm:$0xff]
        %v340 = vld [vmem:[%s286 + $0xd8] sm:$0xff]
        %v341 = vld [vmem:[%s286 + $0xe0] sm:$0xff]
        %v342 = vld [vmem:[%s286 + $0xe8] sm:$0xff]
        %v343 = vld [vmem:[%s286 + $0xf0] sm:$0xff]
        %v344 = vld [vmem:[%s286 + $0xf8] sm:$0xff]
        %v345 = vld [vmem:[%s295] sm:$0xf]
        %v347 = vlaneseq
        %v348 = vshrl.u32 %v347, 7
        %v349 = vsub.s32 0, %v348
        %v350 = vrot.slane %v345, %v349
        %v351 = vlaneseq
        %v352 = vshrl.u32 %v351, 7
        %v353 = vsub.s32 1, %v352
        %v354 = vrot.slane %v345, %v353
        %v355 = vlaneseq
        %v356 = vshrl.u32 %v355, 7
        %v357 = vsub.s32 2, %v356
        %v358 = vrot.slane %v345, %v357
        %v359 = vlaneseq
        %v360 = vshrl.u32 %v359, 7
        %v361 = vsub.s32 3, %v360
        %v362 = vrot.slane %v345, %v361
        %v375 = vunpack.c.l.b16 %v305
        %v376 = vunpack.c.l.b16 %v306
        %v377 = vunpack.c.l.b16 %v307
        %v378 = vunpack.c.l.b16 %v308
        %v379 = vunpack.c.l.b16 %v309
        %v380 = vunpack.c.l.b16 %v310
        %v381 = vunpack.c.l.b16 %v311
        %v382 = vunpack.c.l.b16 %v312
        %v383 = vpack.c.b16 %v376, %v375
        %v384 = vpack.c.b16 %v378, %v377
        %v385 = vpack.c.b16 %v380, %v379
        %v386 = vpack.c.b16 %v382, %v381
        %v423 = vunpack.c.l.b16 %v313
        %v424 = vunpack.c.h.b16 %v313
        %v425 = vunpack.c.l.b16 %v314
        %v426 = vunpack.c.h.b16 %v314
        %v427 = vunpack.c.l.b16 %v315
        %v428 = vunpack.c.h.b16 %v315
        %v429 = vunpack.c.l.b16 %v316
        %v430 = vunpack.c.h.b16 %v316
        %v431 = vunpack.c.l.b16 %v317
        %v432 = vunpack.c.h.b16 %v317
        %v433 = vunpack.c.l.b16 %v318
        %v434 = vunpack.c.h.b16 %v318
        %v435 = vunpack.c.l.b16 %v319
        %v436 = vunpack.c.h.b16 %v319
        %v437 = vunpack.c.l.b16 %v320
        %v438 = vunpack.c.h.b16 %v320
        %v439 = vunpack.c.l.b16 %v321
        %v440 = vunpack.c.h.b16 %v321
        %v441 = vunpack.c.l.b16 %v322
        %v442 = vunpack.c.h.b16 %v322
        %v443 = vunpack.c.l.b16 %v323
        %v444 = vunpack.c.h.b16 %v323
        %v445 = vunpack.c.l.b16 %v324
        %v446 = vunpack.c.h.b16 %v324
        %v447 = vunpack.c.l.b16 %v325
        %v448 = vunpack.c.h.b16 %v325
        %v449 = vunpack.c.l.b16 %v326
        %v450 = vunpack.c.h.b16 %v326
        %v451 = vunpack.c.l.b16 %v327
        %v452 = vunpack.c.h.b16 %v327
        %v453 = vunpack.c.l.b16 %v328
        %v454 = vunpack.c.h.b16 %v328
        %v455 = vunpack.c.l.b16 %v329
        %v456 = vunpack.c.h.b16 %v329
        %v457 = vunpack.c.l.b16 %v330
        %v458 = vunpack.c.h.b16 %v330
        %v459 = vunpack.c.l.b16 %v331
        %v460 = vunpack.c.h.b16 %v331
        %v461 = vunpack.c.l.b16 %v332
        %v462 = vunpack.c.h.b16 %v332
        %v463 = vunpack.c.l.b16 %v333
        %v464 = vunpack.c.h.b16 %v333
        %v465 = vunpack.c.l.b16 %v334
        %v466 = vunpack.c.h.b16 %v334
        %v467 = vunpack.c.l.b16 %v335
        %v468 = vunpack.c.h.b16 %v335
        %v469 = vunpack.c.l.b16 %v336
        %v470 = vunpack.c.h.b16 %v336
        %v471 = vunpack.c.l.b16 %v337
        %v472 = vunpack.c.h.b16 %v337
        %v473 = vunpack.c.l.b16 %v338
        %v474 = vunpack.c.h.b16 %v338
        %v475 = vunpack.c.l.b16 %v339
        %v476 = vunpack.c.h.b16 %v339
        %v477 = vunpack.c.l.b16 %v340
        %v478 = vunpack.c.h.b16 %v340
        %v479 = vunpack.c.l.b16 %v341
        %v480 = vunpack.c.h.b16 %v341
        %v481 = vunpack.c.l.b16 %v342
        %v482 = vunpack.c.h.b16 %v342
        %v483 = vunpack.c.l.b16 %v343
        %v484 = vunpack.c.h.b16 %v343
        %v485 = vunpack.c.l.b16 %v344
        %v486 = vunpack.c.h.b16 %v344
        %v487 = vpack.c.b16 %v427, %v423
        %v488 = vpack.c.b16 %v428, %v424
        %v489 = vpack.c.b16 %v429, %v425
        %v490 = vpack.c.b16 %v430, %v426
        %v491 = vpack.c.b16 %v435, %v431
        %v492 = vpack.c.b16 %v436, %v432
        %v493 = vpack.c.b16 %v437, %v433
        %v494 = vpack.c.b16 %v438, %v434
        %v495 = vpack.c.b16 %v443, %v439
        %v496 = vpack.c.b16 %v444, %v440
        %v497 = vpack.c.b16 %v445, %v441
        %v498 = vpack.c.b16 %v446, %v442
        %v499 = vpack.c.b16 %v451, %v447
        %v500 = vpack.c.b16 %v452, %v448
        %v501 = vpack.c.b16 %v453, %v449
        %v502 = vpack.c.b16 %v454, %v450
        %v503 = vpack.c.b16 %v459, %v455
        %v504 = vpack.c.b16 %v460, %v456
        %v505 = vpack.c.b16 %v461, %v457
        %v506 = vpack.c.b16 %v462, %v458
        %v507 = vpack.c.b16 %v467, %v463
        %v508 = vpack.c.b16 %v468, %v464
        %v509 = vpack.c.b16 %v469, %v465
        %v510 = vpack.c.b16 %v470, %v466
        %v511 = vpack.c.b16 %v475, %v471
        %v512 = vpack.c.b16 %v476, %v472
        %v513 = vpack.c.b16 %v477, %v473
        %v514 = vpack.c.b16 %v478, %v474
        %v515 = vpack.c.b16 %v483, %v479
        %v516 = vpack.c.b16 %v484, %v480
        %v517 = vpack.c.b16 %v485, %v481
        %v518 = vpack.c.b16 %v486, %v482
        %551 = vmatprep.subr.bf16.mxu0 %v488
        %552 = vmatpush1.bf16.msra.mxu0 %v487
        %553 = vmatprep.subr.bf16.mxu0 %v492
        %554 = vmatpush1.bf16.msra.mxu0 %v491
        %555 = vmatprep.subr.bf16.mxu0 %v496
        %556 = vmatpush1.bf16.msra.mxu0 %v495
        %557 = vmatprep.subr.bf16.mxu0 %v500
        %558 = vmatpush1.bf16.msra.mxu0 %v499
        %559 = vmatprep.subr.bf16.mxu0 %v504
        %560 = vmatpush1.bf16.msra.mxu0 %v503
        %561 = vmatprep.subr.bf16.mxu0 %v508
        %562 = vmatpush1.bf16.msra.mxu0 %v507
        %563 = vmatprep.subr.bf16.mxu0 %v512
        %564 = vmatpush1.bf16.msra.mxu0 %v511
        %565 = vmatprep.subr.bf16.mxu0 %v516
        %566 = vmatpush1.bf16.msra.mxu0 %v515
        %567 = vmatprep.subr.bf16.mxu0 0
        %568 = vmatpush1.bf16.msra.mxu0 0
        %569 = vmatprep.subr.bf16.mxu0 0
        %570 = vmatpush1.bf16.msra.mxu0 0
        %571 = vmatprep.subr.bf16.mxu0 0
        %572 = vmatpush1.bf16.msra.mxu0 0
        %573 = vmatprep.subr.bf16.mxu0 0
        %574 = vmatpush1.bf16.msra.mxu0 0
        %575 = vmatprep.subr.bf16.mxu0 0
        %576 = vmatpush1.bf16.msra.mxu0 0
        %577 = vmatprep.subr.bf16.mxu0 0
        %578 = vmatpush1.bf16.msra.mxu0 0
        %579 = vmatprep.subr.bf16.mxu0 0
        %580 = vmatpush1.bf16.msra.mxu0 0
        %581 = vmatprep.subr.bf16.mxu0 0
        %582 = vmatpush1.bf16.msra.mxu0 0
        %583 = vmatprep.mubr.bf16.mxu0 0
        %584 = vmatmul.mubr.bf16.gmra.mrb[0].mxu0 %v383
        %v585 = vpop.f32.mrb[0].mxu0
        %v586 = vadd.f32 %v350, %v585
        %v587 = vpop.f32.mrb[0].mxu0
        %v588 = vadd.f32 %v354, %v587
        %v589 = vpop.f32.mrb[0].mxu0
        %v590 = vadd.f32 %v350, %v589
        %v591 = vpop.f32.mrb[0].mxu0
        %v592 = vadd.f32 %v354, %v591
        %593 = vmatprep.mubr.bf16.mxu0 0
        %594 = vmatmul.mubr.bf16.gmra.mrb[0].mxu0 %v384
        %v595 = vpop.f32.mrb[0].mxu0
        %v596 = vadd.f32 %v350, %v595
        %v597 = vpop.f32.mrb[0].mxu0
        %v598 = vadd.f32 %v354, %v597
        %v599 = vpop.f32.mrb[0].mxu0
        %v600 = vadd.f32 %v350, %v599
        %v601 = vpop.f32.mrb[0].mxu0
        %v602 = vadd.f32 %v354, %v601
        %603 = vmatprep.mubr.bf16.mxu0 0
        %604 = vmatmul.mubr.bf16.gmra.mrb[0].mxu0 %v385
        %v605 = vpop.f32.mrb[0].mxu0
        %v606 = vadd.f32 %v350, %v605
        %v607 = vpop.f32.mrb[0].mxu0
        %v608 = vadd.f32 %v354, %v607
        %v609 = vpop.f32.mrb[0].mxu0
        %v610 = vadd.f32 %v350, %v609
        %v611 = vpop.f32.mrb[0].mxu0
        %v612 = vadd.f32 %v354, %v611
        %613 = vmatprep.mubr.bf16.mxu0 0
        %614 = vmatmul.mubr.bf16.gmra.mrb[0].mxu0 %v386
        %v615 = vpop.f32.mrb[0].mxu0
        %v616 = vadd.f32 %v350, %v615
        %v617 = vpop.f32.mrb[0].mxu0
        %v618 = vadd.f32 %v354, %v617
        %v619 = vpop.f32.mrb[0].mxu0
        %v620 = vadd.f32 %v350, %v619
        %v621 = vpop.f32.mrb[0].mxu0
        %v622 = vadd.f32 %v354, %v621
        %623 = vdwg.mxu0
        %624 = vmatprep.subr.bf16.mxu0 %v490
        %625 = vmatpush1.bf16.msra.mxu0 %v489
        %626 = vmatprep.subr.bf16.mxu0 %v494
        %627 = vmatpush1.bf16.msra.mxu0 %v493
        %628 = vmatprep.subr.bf16.mxu0 %v498
        %629 = vmatpush1.bf16.msra.mxu0 %v497
        %630 = vmatprep.subr.bf16.mxu0 %v502
        %631 = vmatpush1.bf16.msra.mxu0 %v501
        %632 = vmatprep.subr.bf16.mxu0 %v506
        %633 = vmatpush1.bf16.msra.mxu0 %v505
        %634 = vmatprep.subr.bf16.mxu0 %v510
        %635 = vmatpush1.bf16.msra.mxu0 %v509
        %636 = vmatprep.subr.bf16.mxu0 %v514
        %637 = vmatpush1.bf16.msra.mxu0 %v513
        %638 = vmatprep.subr.bf16.mxu0 %v518
        %639 = vmatpush1.bf16.msra.mxu0 %v517
        %640 = vmatprep.subr.bf16.mxu0 0
        %641 = vmatpush1.bf16.msra.mxu0 0
        %642 = vmatprep.subr.bf16.mxu0 0
        %643 = vmatpush1.bf16.msra.mxu0 0
        %644 = vmatprep.subr.bf16.mxu0 0
        %645 = vmatpush1.bf16.msra.mxu0 0
        %646 = vmatprep.subr.bf16.mxu0 0
        %647 = vmatpush1.bf16.msra.mxu0 0
        %648 = vmatprep.subr.bf16.mxu0 0
        %649 = vmatpush1.bf16.msra.mxu0 0
        %650 = vmatprep.subr.bf16.mxu0 0
        %651 = vmatpush1.bf16.msra.mxu0 0
        %652 = vmatprep.subr.bf16.mxu0 0
        %653 = vmatpush1.bf16.msra.mxu0 0
        %654 = vmatprep.subr.bf16.mxu0 0
        %655 = vmatpush1.bf16.msra.mxu0 0
        %656 = vmatprep.mubr.bf16.mxu0 0
        %657 = vmatmul.mubr.bf16.gmra.mrb[0].mxu0 %v383
        %v658 = vpop.f32.mrb[0].mxu0
        %v659 = vadd.f32 %v358, %v658
        %v660 = vpop.f32.mrb[0].mxu0
        %v661 = vadd.f32 %v362, %v660
        %v662 = vpop.f32.mrb[0].mxu0
        %v663 = vadd.f32 %v358, %v662
        %v664 = vpop.f32.mrb[0].mxu0
        %v665 = vadd.f32 %v362, %v664
        %666 = vmatprep.mubr.bf16.mxu0 0
        %667 = vmatmul.mubr.bf16.gmra.mrb[0].mxu0 %v384
        %v668 = vpop.f32.mrb[0].mxu0
        %v669 = vadd.f32 %v358, %v668
        %v670 = vpop.f32.mrb[0].mxu0
        %v671 = vadd.f32 %v362, %v670
        %v672 = vpop.f32.mrb[0].mxu0
        %v673 = vadd.f32 %v358, %v672
        %v674 = vpop.f32.mrb[0].mxu0
        %v675 = vadd.f32 %v362, %v674
        %676 = vmatprep.mubr.bf16.mxu0 0
        %677 = vmatmul.mubr.bf16.gmra.mrb[0].mxu0 %v385
        %v678 = vpop.f32.mrb[0].mxu0
        %v679 = vadd.f32 %v358, %v678
        %v680 = vpop.f32.mrb[0].mxu0
        %v681 = vadd.f32 %v362, %v680
        %v682 = vpop.f32.mrb[0].mxu0
        %v683 = vadd.f32 %v358, %v682
        %v684 = vpop.f32.mrb[0].mxu0
        %v685 = vadd.f32 %v362, %v684
        %686 = vmatprep.mubr.bf16.mxu0 0
        %687 = vmatmul.mubr.bf16.gmra.mrb[0].mxu0 %v386
        %v688 = vpop.f32.mrb[0].mxu0
        %v689 = vadd.f32 %v358, %v688
        %v690 = vpop.f32.mrb[0].mxu0
        %v691 = vadd.f32 %v362, %v690
        %v692 = vpop.f32.mrb[0].mxu0
        %v693 = vadd.f32 %v358, %v692
        %v694 = vpop.f32.mrb[0].mxu0
        %v695 = vadd.f32 %v362, %v694
        %696 = vdwg.mxu0
        %697 = vst [vmem:[#allocation2] sm:$0xff] %v586
        %698 = vst [vmem:[#allocation2 + $0x8] sm:$0xff] %v588
        %699 = vst [vmem:[#allocation2 + $0x10] sm:$0xff] %v659
        %700 = vst [vmem:[#allocation2 + $0x18] sm:$0xff] %v661
        %701 = vst [vmem:[#allocation2 + $0x20] sm:$0xff] %v590
        %702 = vst [vmem:[#allocation2 + $0x28] sm:$0xff] %v592
        %703 = vst [vmem:[#allocation2 + $0x30] sm:$0xff] %v663
        %704 = vst [vmem:[#allocation2 + $0x38] sm:$0xff] %v665
        %705 = vst [vmem:[#allocation2 + $0x40] sm:$0xff] %v596
        %706 = vst [vmem:[#allocation2 + $0x48] sm:$0xff] %v598
        %707 = vst [vmem:[#allocation2 + $0x50] sm:$0xff] %v669
        %708 = vst [vmem:[#allocation2 + $0x58] sm:$0xff] %v671
        %709 = vst [vmem:[#allocation2 + $0x60] sm:$0xff] %v600
        %710 = vst [vmem:[#allocation2 + $0x68] sm:$0xff] %v602
        %711 = vst [vmem:[#allocation2 + $0x70] sm:$0xff] %v673
        %712 = vst [vmem:[#allocation2 + $0x78] sm:$0xff] %v675
        %713 = vst [vmem:[#allocation2 + $0x80] sm:$0xff] %v606
        %714 = vst [vmem:[#allocation2 + $0x88] sm:$0xff] %v608
        %715 = vst [vmem:[#allocation2 + $0x90] sm:$0xff] %v679
        %716 = vst [vmem:[#allocation2 + $0x98] sm:$0xff] %v681
        %717 = vst [vmem:[#allocation2 + $0xa0] sm:$0xff] %v610
        %718 = vst [vmem:[#allocation2 + $0xa8] sm:$0xff] %v612
        %719 = vst [vmem:[#allocation2 + $0xb0] sm:$0xff] %v683
        %720 = vst [vmem:[#allocation2 + $0xb8] sm:$0xff] %v685
        %721 = vst [vmem:[#allocation2 + $0xc0] sm:$0xff] %v616
        %722 = vst [vmem:[#allocation2 + $0xc8] sm:$0xff] %v618
        %723 = vst [vmem:[#allocation2 + $0xd0] sm:$0xff] %v689
        %724 = vst [vmem:[#allocation2 + $0xd8] sm:$0xff] %v691
        %725 = vst [vmem:[#allocation2 + $0xe0] sm:$0xff] %v620
        %726 = vst [vmem:[#allocation2 + $0xe8] sm:$0xff] %v622
        %727 = vst [vmem:[#allocation2 + $0xf0] sm:$0xff] %v693
        %728 = vst [vmem:[#allocation2 + $0xf8] sm:$0xff] %v695
        %729 = vst [vmem:[#allocation3] sm:$0xff] 0.0
        %730 = vst [vmem:[#allocation4] sm:$0xff] 0.0
        %v731 = vld [vmem:[%s291] sm:$0xff]
        %v732 = vld [vmem:[%s291 + $0x8] sm:$0xff]
        %v733 = vld [vmem:[%s291 + $0x10] sm:$0xff]
        %v734 = vld [vmem:[%s291 + $0x18] sm:$0xff]
        %v735 = vld [vmem:[%s291 + $0x20] sm:$0xff]
        %v736 = vld [vmem:[%s291 + $0x28] sm:$0xff]
        %v737 = vld [vmem:[%s291 + $0x30] sm:$0xff]
        %v738 = vld [vmem:[%s291 + $0x38] sm:$0xff]
        %v739 = vld [vmem:[%s291 + $0x40] sm:$0xff]
        %v740 = vld [vmem:[%s291 + $0x48] sm:$0xff]
        %v741 = vld [vmem:[%s291 + $0x50] sm:$0xff]
        %v742 = vld [vmem:[%s291 + $0x58] sm:$0xff]
        %v743 = vld [vmem:[%s291 + $0x60] sm:$0xff]
        %v744 = vld [vmem:[%s291 + $0x68] sm:$0xff]
        %v745 = vld [vmem:[%s291 + $0x70] sm:$0xff]
        %v746 = vld [vmem:[%s291 + $0x78] sm:$0xff]
        %v747 = vld [vmem:[%s291 + $0x80] sm:$0xff]
        %v748 = vld [vmem:[%s291 + $0x88] sm:$0xff]
        %v749 = vld [vmem:[%s291 + $0x90] sm:$0xff]
        %v750 = vld [vmem:[%s291 + $0x98] sm:$0xff]
        %v751 = vld [vmem:[%s291 + $0xa0] sm:$0xff]
        %v752 = vld [vmem:[%s291 + $0xa8] sm:$0xff]
        %v753 = vld [vmem:[%s291 + $0xb0] sm:$0xff]
        %v754 = vld [vmem:[%s291 + $0xb8] sm:$0xff]
        %v755 = vld [vmem:[%s291 + $0xc0] sm:$0xff]
        %v756 = vld [vmem:[%s291 + $0xc8] sm:$0xff]
        %v757 = vld [vmem:[%s291 + $0xd0] sm:$0xff]
        %v758 = vld [vmem:[%s291 + $0xd8] sm:$0xff]
        %v759 = vld [vmem:[%s291 + $0xe0] sm:$0xff]
        %v760 = vld [vmem:[%s291 + $0xe8] sm:$0xff]
        %v761 = vld [vmem:[%s291 + $0xf0] sm:$0xff]
        %v762 = vld [vmem:[%s291 + $0xf8] sm:$0xff]
        %p763 = scmp.eq.s32.totalorder %s18, 0
        %s764 = scalar_select %p763, 0, 7
        %s765 = smul.u32 %s764, 8
        %s766 = sshra.s32 %s765, 3
        %s767 = sand.u32 %s765, 7
        %s768 = smul.u32 %s766, 4
        %s769 = smul.addr %s768, 8
        %s770 = scalar_lea.vmem [#allocation2], %s769
        %v771 = vld [vmem:[%s770] sm:$0xff]
        %v772 = vld [vmem:[%s770 + $0x8] sm:$0xff]
        %v773 = vld [vmem:[%s770 + $0x10] sm:$0xff]
        %v774 = vld [vmem:[%s770 + $0x18] sm:$0xff]
        %v775 = vld [vmem:[#allocation3] sm:$0xff]
        %v776 = vpack.c.bf16 %v775, %v775
        %v809 = vunpack.c.l.b16 %v731
        %v810 = vunpack.c.h.b16 %v731
        %v811 = vunpack.c.l.b16 %v732
        %v812 = vunpack.c.h.b16 %v732
        %v813 = vunpack.c.l.b16 %v733
        %v814 = vunpack.c.h.b16 %v733
        %v815 = vunpack.c.l.b16 %v734
        %v816 = vunpack.c.h.b16 %v734
        %v817 = vunpack.c.l.b16 %v735
        %v818 = vunpack.c.h.b16 %v735
        %v819 = vunpack.c.l.b16 %v736
        %v820 = vunpack.c.h.b16 %v736
        %v821 = vunpack.c.l.b16 %v737
        %v822 = vunpack.c.h.b16 %v737
        %v823 = vunpack.c.l.b16 %v738
        %v824 = vunpack.c.h.b16 %v738
        %v825 = vunpack.c.l.b16 %v739
        %v826 = vunpack.c.h.b16 %v739
        %v827 = vunpack.c.l.b16 %v740
        %v828 = vunpack.c.h.b16 %v740
        %v829 = vunpack.c.l.b16 %v741
        %v830 = vunpack.c.h.b16 %v741
        %v831 = vunpack.c.l.b16 %v742
        %v832 = vunpack.c.h.b16 %v742
        %v833 = vunpack.c.l.b16 %v743
        %v834 = vunpack.c.h.b16 %v743
        %v835 = vunpack.c.l.b16 %v744
        %v836 = vunpack.c.h.b16 %v744
        %v837 = vunpack.c.l.b16 %v745
        %v838 = vunpack.c.h.b16 %v745
        %v839 = vunpack.c.l.b16 %v746
        %v840 = vunpack.c.h.b16 %v746
        %v841 = vunpack.c.l.b16 %v747
        %v842 = vunpack.c.h.b16 %v747
        %v843 = vunpack.c.l.b16 %v748
        %v844 = vunpack.c.h.b16 %v748
        %v845 = vunpack.c.l.b16 %v749
        %v846 = vunpack.c.h.b16 %v749
        %v847 = vunpack.c.l.b16 %v750
        %v848 = vunpack.c.h.b16 %v750
        %v849 = vunpack.c.l.b16 %v751
        %v850 = vunpack.c.h.b16 %v751
        %v851 = vunpack.c.l.b16 %v752
        %v852 = vunpack.c.h.b16 %v752
        %v853 = vunpack.c.l.b16 %v753
        %v854 = vunpack.c.h.b16 %v753
        %v855 = vunpack.c.l.b16 %v754
        %v856 = vunpack.c.h.b16 %v754
        %v857 = vunpack.c.l.b16 %v755
        %v858 = vunpack.c.h.b16 %v755
        %v859 = vunpack.c.l.b16 %v756
        %v860 = vunpack.c.h.b16 %v756
        %v861 = vunpack.c.l.b16 %v757
        %v862 = vunpack.c.h.b16 %v757
        %v863 = vunpack.c.l.b16 %v758
        %v864 = vunpack.c.h.b16 %v758
        %v865 = vunpack.c.l.b16 %v759
        %v866 = vunpack.c.h.b16 %v759
        %v867 = vunpack.c.l.b16 %v760
        %v868 = vunpack.c.h.b16 %v760
        %v869 = vunpack.c.l.b16 %v761
        %v870 = vunpack.c.h.b16 %v761
        %v871 = vunpack.c.l.b16 %v762
        %v872 = vunpack.c.h.b16 %v762
        %v873 = vpack.c.b16 %v813, %v809
        %v874 = vpack.c.b16 %v814, %v810
        %v875 = vpack.c.b16 %v815, %v811
        %v876 = vpack.c.b16 %v816, %v812
        %v877 = vpack.c.b16 %v821, %v817
        %v878 = vpack.c.b16 %v822, %v818
        %v879 = vpack.c.b16 %v823, %v819
        %v880 = vpack.c.b16 %v824, %v820
        %v881 = vpack.c.b16 %v829, %v825
        %v882 = vpack.c.b16 %v830, %v826
        %v883 = vpack.c.b16 %v831, %v827
        %v884 = vpack.c.b16 %v832, %v828
        %v885 = vpack.c.b16 %v837, %v833
        %v886 = vpack.c.b16 %v838, %v834
        %v887 = vpack.c.b16 %v839, %v835
        %v888 = vpack.c.b16 %v840, %v836
        %v889 = vpack.c.b16 %v845, %v841
        %v890 = vpack.c.b16 %v846, %v842
        %v891 = vpack.c.b16 %v847, %v843
        %v892 = vpack.c.b16 %v848, %v844
        %v893 = vpack.c.b16 %v853, %v849
        %v894 = vpack.c.b16 %v854, %v850
        %v895 = vpack.c.b16 %v855, %v851
        %v896 = vpack.c.b16 %v856, %v852
        %v897 = vpack.c.b16 %v861, %v857
        %v898 = vpack.c.b16 %v862, %v858
        %v899 = vpack.c.b16 %v863, %v859
        %v900 = vpack.c.b16 %v864, %v860
        %v901 = vpack.c.b16 %v869, %v865
        %v902 = vpack.c.b16 %v870, %v866
        %v903 = vpack.c.b16 %v871, %v867
        %v904 = vpack.c.b16 %v872, %v868
        %937 = vmatprep.subr.bf16.mxu0 %v874
        %938 = vmatpush1.bf16.msra.mxu0 %v873
        %939 = vmatprep.subr.bf16.mxu0 %v878
        %940 = vmatpush1.bf16.msra.mxu0 %v877
        %941 = vmatprep.subr.bf16.mxu0 %v882
        %942 = vmatpush1.bf16.msra.mxu0 %v881
        %943 = vmatprep.subr.bf16.mxu0 %v886
        %944 = vmatpush1.bf16.msra.mxu0 %v885
        %945 = vmatprep.subr.bf16.mxu0 %v890
        %946 = vmatpush1.bf16.msra.mxu0 %v889
        %947 = vmatprep.subr.bf16.mxu0 %v894
        %948 = vmatpush1.bf16.msra.mxu0 %v893
        %949 = vmatprep.subr.bf16.mxu0 %v898
        %950 = vmatpush1.bf16.msra.mxu0 %v897
        %951 = vmatprep.subr.bf16.mxu0 %v902
        %952 = vmatpush1.bf16.msra.mxu0 %v901
        %953 = vmatprep.subr.bf16.mxu0 0
        %954 = vmatpush1.bf16.msra.mxu0 0
        %955 = vmatprep.subr.bf16.mxu0 0
        %956 = vmatpush1.bf16.msra.mxu0 0
        %957 = vmatprep.subr.bf16.mxu0 0
        %958 = vmatpush1.bf16.msra.mxu0 0
        %959 = vmatprep.subr.bf16.mxu0 0
        %960 = vmatpush1.bf16.msra.mxu0 0
        %961 = vmatprep.subr.bf16.mxu0 0
        %962 = vmatpush1.bf16.msra.mxu0 0
        %963 = vmatprep.subr.bf16.mxu0 0
        %964 = vmatpush1.bf16.msra.mxu0 0
        %965 = vmatprep.subr.bf16.mxu0 0
        %966 = vmatpush1.bf16.msra.mxu0 0
        %967 = vmatprep.subr.bf16.mxu0 0
        %968 = vmatpush1.bf16.msra.mxu0 0
        %969 = vmatprep.mubr.bf16.mxu0 0
        %970 = vmatmul.mubr.bf16.gmra.mrb[0].mxu0 %v776
        %v971 = vpop.f32.mrb[0].mxu0
        %v972 = vadd.f32 0.0, %v971
        %v973 = vpop.f32.mrb[0].mxu0
        %v974 = vadd.f32 0.0, %v973
        %v975 = vpop.f32.mrb[0].mxu0
        %v976 = vpop.f32.mrb[0].mxu0
        %977 = vdwg.mxu0
        %978 = vmatprep.subr.bf16.mxu0 %v876
        %979 = vmatpush1.bf16.msra.mxu0 %v875
        %980 = vmatprep.subr.bf16.mxu0 %v880
        %981 = vmatpush1.bf16.msra.mxu0 %v879
        %982 = vmatprep.subr.bf16.mxu0 %v884
        %983 = vmatpush1.bf16.msra.mxu0 %v883
        %984 = vmatprep.subr.bf16.mxu0 %v888
        %985 = vmatpush1.bf16.msra.mxu0 %v887
        %986 = vmatprep.subr.bf16.mxu0 %v892
        %987 = vmatpush1.bf16.msra.mxu0 %v891
        %988 = vmatprep.subr.bf16.mxu0 %v896
        %989 = vmatpush1.bf16.msra.mxu0 %v895
        %990 = vmatprep.subr.bf16.mxu0 %v900
        %991 = vmatpush1.bf16.msra.mxu0 %v899
        %992 = vmatprep.subr.bf16.mxu0 %v904
        %993 = vmatpush1.bf16.msra.mxu0 %v903
        %994 = vmatprep.subr.bf16.mxu0 0
        %995 = vmatpush1.bf16.msra.mxu0 0
        %996 = vmatprep.subr.bf16.mxu0 0
        %997 = vmatpush1.bf16.msra.mxu0 0
        %998 = vmatprep.subr.bf16.mxu0 0
        %999 = vmatpush1.bf16.msra.mxu0 0
        %1000 = vmatprep.subr.bf16.mxu0 0
        %1001 = vmatpush1.bf16.msra.mxu0 0
        %1002 = vmatprep.subr.bf16.mxu0 0
        %1003 = vmatpush1.bf16.msra.mxu0 0
        %1004 = vmatprep.subr.bf16.mxu0 0
        %1005 = vmatpush1.bf16.msra.mxu0 0
        %1006 = vmatprep.subr.bf16.mxu0 0
        %1007 = vmatpush1.bf16.msra.mxu0 0
        %1008 = vmatprep.subr.bf16.mxu0 0
        %1009 = vmatpush1.bf16.msra.mxu0 0
        %1010 = vmatprep.mubr.bf16.mxu0 0
        %1011 = vmatmul.mubr.bf16.gmra.mrb[0].mxu0 %v776
        %v1012 = vpop.f32.mrb[0].mxu0
        %v1013 = vadd.f32 0.0, %v1012
        %v1014 = vpop.f32.mrb[0].mxu0
        %v1015 = vadd.f32 0.0, %v1014
        %v1016 = vpop.f32.mrb[0].mxu0
        %v1017 = vpop.f32.mrb[0].mxu0
        %1018 = vdwg.mxu0
        %v1019 = vadd.f32 %v771, %v972
        %v1020 = vadd.f32 %v772, %v974
        %v1021 = vadd.f32 %v773, %v1013
        %v1022 = vadd.f32 %v774, %v1015
        %v1023 = vxor.u32 %v1019, 2147483648
        %v1024 = vmul.f32 %v1023, 1.442695
        %v1025 = vpow.pop %v1024
        %v1026 = vadd.f32 %v1025, 1.0
        %v1027 = vrcp.pop %v1026
        %v1028 = vmul.f32 1.0, %v1027
        %v1029 = vxor.u32 %v1020, 2147483648
        %v1030 = vmul.f32 %v1029, 1.442695
        %v1031 = vpow.pop %v1030
        %v1032 = vadd.f32 %v1031, 1.0
        %v1033 = vrcp.pop %v1032
        %v1034 = vmul.f32 1.0, %v1033
        %v1035 = vtanh.pop %v1021
        %v1036 = vxor.u32 %v1022, 2147483648
        %v1037 = vmul.f32 %v1036, 1.442695
        %v1038 = vpow.pop %v1037
        %v1039 = vadd.f32 %v1038, 1.0
        %v1040 = vrcp.pop %v1039
        %v1041 = vmul.f32 1.0, %v1040
        %v1042 = vld [vmem:[#allocation4] sm:$0xff]
        %v1043 = vmul.f32 %v1034, %v1042
        %v1044 = vmul.f32 %v1028, %v1035
        %v1045 = vadd.f32 %v1043, %v1044
        %v1046 = vtanh.pop %v1045
        %v1047 = vmul.f32 %v1041, %v1046
        %1048 = vst [vmem:[#allocation3] sm:$0xff] %v1047
        %1049 = vst [vmem:[#allocation4] sm:$0xff] %v1045
        %v1050 = vpack.c.bf16 %v1047, %v1047
        %s1051 = smul.addr %s764, 4
        %s1052 = scalar_lea.vmem %s269, %s1051 [#allocation5]
        %1053 = vst [vmem:[%s1052] sm:$0xf] %v1050
        %s1054 = scalar_select %p763, 1, 6
        %s1055 = smul.u32 %s1054, 8
        %s1056 = sshra.s32 %s1055, 3
        %s1057 = sand.u32 %s1055, 7
        %s1058 = smul.u32 %s1056, 4
        %s1059 = smul.addr %s1058, 8
        %s1060 = scalar_lea.vmem [#allocation2], %s1059
        %v1061 = vld [vmem:[%s1060] sm:$0xff]
        %v1062 = vld [vmem:[%s1060 + $0x8] sm:$0xff]
        %v1063 = vld [vmem:[%s1060 + $0x10] sm:$0xff]
        %v1064 = vld [vmem:[%s1060 + $0x18] sm:$0xff]
        %v1065 = vld [vmem:[#allocation3] sm:$0xff]
        %v1066 = vpack.c.bf16 %v1065, %v1065
        %1067 = vmatprep.subr.bf16.mxu0 %v874
        %1068 = vmatpush1.bf16.msra.mxu0 %v873
        %1069 = vmatprep.subr.bf16.mxu0 %v878
        %1070 = vmatpush1.bf16.msra.mxu0 %v877
        %1071 = vmatprep.subr.bf16.mxu0 %v882
        %1072 = vmatpush1.bf16.msra.mxu0 %v881
        %1073 = vmatprep.subr.bf16.mxu0 %v886
        %1074 = vmatpush1.bf16.msra.mxu0 %v885
        %1075 = vmatprep.subr.bf16.mxu0 %v890
        %1076 = vmatpush1.bf16.msra.mxu0 %v889
        %1077 = vmatprep.subr.bf16.mxu0 %v894
        %1078 = vmatpush1.bf16.msra.mxu0 %v893
        %1079 = vmatprep.subr.bf16.mxu0 %v898
        %1080 = vmatpush1.bf16.msra.mxu0 %v897
        %1081 = vmatprep.subr.bf16.mxu0 %v902
        %1082 = vmatpush1.bf16.msra.mxu0 %v901
        %1083 = vmatprep.subr.bf16.mxu0 0
        %1084 = vmatpush1.bf16.msra.mxu0 0
        %1085 = vmatprep.subr.bf16.mxu0 0
        %1086 = vmatpush1.bf16.msra.mxu0 0
        %1087 = vmatprep.subr.bf16.mxu0 0
        %1088 = vmatpush1.bf16.msra.mxu0 0
        %1089 = vmatprep.subr.bf16.mxu0 0
        %1090 = vmatpush1.bf16.msra.mxu0 0
        %1091 = vmatprep.subr.bf16.mxu0 0
        %1092 = vmatpush1.bf16.msra.mxu0 0
        %1093 = vmatprep.subr.bf16.mxu0 0
        %1094 = vmatpush1.bf16.msra.mxu0 0
        %1095 = vmatprep.subr.bf16.mxu0 0
        %1096 = vmatpush1.bf16.msra.mxu0 0
        %1097 = vmatprep.subr.bf16.mxu0 0
        %1098 = vmatpush1.bf16.msra.mxu0 0
        %1099 = vmatprep.mubr.bf16.mxu0 0
        %1100 = vmatmul.mubr.bf16.gmra.mrb[0].mxu0 %v1066
        %v1101 = vpop.f32.mrb[0].mxu0
        %v1102 = vadd.f32 0.0, %v1101
        %v1103 = vpop.f32.mrb[0].mxu0
        %v1104 = vadd.f32 0.0, %v1103
        %v1105 = vpop.f32.mrb[0].mxu0
        %v1106 = vpop.f32.mrb[0].mxu0
        %1107 = vdwg.mxu0
        %1108 = vmatprep.subr.bf16.mxu0 %v876
        %1109 = vmatpush1.bf16.msra.mxu0 %v875
        %1110 = vmatprep.subr.bf16.mxu0 %v880
        %1111 = vmatpush1.bf16.msra.mxu0 %v879
        %1112 = vmatprep.subr.bf16.mxu0 %v884
        %1113 = vmatpush1.bf16.msra.mxu0 %v883
        %1114 = vmatprep.subr.bf16.mxu0 %v888
        %1115 = vmatpush1.bf16.msra.mxu0 %v887
        %1116 = vmatprep.subr.bf16.mxu0 %v892
        %1117 = vmatpush1.bf16.msra.mxu0 %v891
        %1118 = vmatprep.subr.bf16.mxu0 %v896
        %1119 = vmatpush1.bf16.msra.mxu0 %v895
        %1120 = vmatprep.subr.bf16.mxu0 %v900
        %1121 = vmatpush1.bf16.msra.mxu0 %v899
        %1122 = vmatprep.subr.bf16.mxu0 %v904
        %1123 = vmatpush1.bf16.msra.mxu0 %v903
        %1124 = vmatprep.subr.bf16.mxu0 0
        %1125 = vmatpush1.bf16.msra.mxu0 0
        %1126 = vmatprep.subr.bf16.mxu0 0
        %1127 = vmatpush1.bf16.msra.mxu0 0
        %1128 = vmatprep.subr.bf16.mxu0 0
        %1129 = vmatpush1.bf16.msra.mxu0 0
        %1130 = vmatprep.subr.bf16.mxu0 0
        %1131 = vmatpush1.bf16.msra.mxu0 0
        %1132 = vmatprep.subr.bf16.mxu0 0
        %1133 = vmatpush1.bf16.msra.mxu0 0
        %1134 = vmatprep.subr.bf16.mxu0 0
        %1135 = vmatpush1.bf16.msra.mxu0 0
        %1136 = vmatprep.subr.bf16.mxu0 0
        %1137 = vmatpush1.bf16.msra.mxu0 0
        %1138 = vmatprep.subr.bf16.mxu0 0
        %1139 = vmatpush1.bf16.msra.mxu0 0
        %1140 = vmatprep.mubr.bf16.mxu0 0
        %1141 = vmatmul.mubr.bf16.gmra.mrb[0].mxu0 %v1066
        %v1142 = vpop.f32.mrb[0].mxu0
        %v1143 = vadd.f32 0.0, %v1142
        %v1144 = vpop.f32.mrb[0].mxu0
        %v1145 = vadd.f32 0.0, %v1144
        %v1146 = vpop.f32.mrb[0].mxu0
        %v1147 = vpop.f32.mrb[0].mxu0
        %1148 = vdwg.mxu0
        %v1149 = vadd.f32 %v1061, %v1102
        %v1150 = vadd.f32 %v1062, %v1104
        %v1151 = vadd.f32 %v1063, %v1143
        %v1152 = vadd.f32 %v1064, %v1145
        %v1153 = vxor.u32 %v1149, 2147483648
        %v1154 = vmul.f32 %v1153, 1.442695
        %v1155 = vpow.pop %v1154
        %v1156 = vadd.f32 %v1155, 1.0
        %v1157 = vrcp.pop %v1156
        %v1158 = vmul.f32 1.0, %v1157
        %v1159 = vxor.u32 %v1150, 2147483648
        %v1160 = vmul.f32 %v1159, 1.442695
        %v1161 = vpow.pop %v1160
        %v1162 = vadd.f32 %v1161, 1.0
        %v1163 = vrcp.pop %v1162
        %v1164 = vmul.f32 1.0, %v1163
        %v1165 = vtanh.pop %v1151
        %v1166 = vxor.u32 %v1152, 2147483648
        %v1167 = vmul.f32 %v1166, 1.442695
        %v1168 = vpow.pop %v1167
        %v1169 = vadd.f32 %v1168, 1.0
        %v1170 = vrcp.pop %v1169
        %v1171 = vmul.f32 1.0, %v1170
        %v1172 = vld [vmem:[#allocation4] sm:$0xff]
        %v1173 = vmul.f32 %v1164, %v1172
        %v1174 = vmul.f32 %v1158, %v1165
        %v1175 = vadd.f32 %v1173, %v1174
        %v1176 = vtanh.pop %v1175
        %v1177 = vmul.f32 %v1171, %v1176
        %1178 = vst [vmem:[#allocation3] sm:$0xff] %v1177
        %1179 = vst [vmem:[#allocation4] sm:$0xff] %v1175
        %v1180 = vpack.c.bf16 %v1177, %v1177
        %s1181 = smul.addr %s1054, 4
        %s1182 = scalar_lea.vmem %s269, %s1181 [#allocation5]
        %1183 = vst [vmem:[%s1182] sm:$0xf] %v1180
        %s1184 = scalar_select %p763, 2, 5
        %s1185 = smul.u32 %s1184, 8
        %s1186 = sshra.s32 %s1185, 3
        %s1187 = sand.u32 %s1185, 7
        %s1188 = smul.u32 %s1186, 4
        %s1189 = smul.addr %s1188, 8
        %s1190 = scalar_lea.vmem [#allocation2], %s1189
        %v1191 = vld [vmem:[%s1190] sm:$0xff]
        %v1192 = vld [vmem:[%s1190 + $0x8] sm:$0xff]
        %v1193 = vld [vmem:[%s1190 + $0x10] sm:$0xff]
        %v1194 = vld [vmem:[%s1190 + $0x18] sm:$0xff]
        %v1195 = vld [vmem:[#allocation3] sm:$0xff]
        %v1196 = vpack.c.bf16 %v1195, %v1195
        %1197 = vmatprep.subr.bf16.mxu0 %v874
        %1198 = vmatpush1.bf16.msra.mxu0 %v873
        %1199 = vmatprep.subr.bf16.mxu0 %v878
        %1200 = vmatpush1.bf16.msra.mxu0 %v877
        %1201 = vmatprep.subr.bf16.mxu0 %v882
        %1202 = vmatpush1.bf16.msra.mxu0 %v881
        %1203 = vmatprep.subr.bf16.mxu0 %v886
        %1204 = vmatpush1.bf16.msra.mxu0 %v885
        %1205 = vmatprep.subr.bf16.mxu0 %v890
        %1206 = vmatpush1.bf16.msra.mxu0 %v889
        %1207 = vmatprep.subr.bf16.mxu0 %v894
        %1208 = vmatpush1.bf16.msra.mxu0 %v893
        %1209 = vmatprep.subr.bf16.mxu0 %v898
        %1210 = vmatpush1.bf16.msra.mxu0 %v897
        %1211 = vmatprep.subr.bf16.mxu0 %v902
        %1212 = vmatpush1.bf16.msra.mxu0 %v901
        %1213 = vmatprep.subr.bf16.mxu0 0
        %1214 = vmatpush1.bf16.msra.mxu0 0
        %1215 = vmatprep.subr.bf16.mxu0 0
        %1216 = vmatpush1.bf16.msra.mxu0 0
        %1217 = vmatprep.subr.bf16.mxu0 0
        %1218 = vmatpush1.bf16.msra.mxu0 0
        %1219 = vmatprep.subr.bf16.mxu0 0
        %1220 = vmatpush1.bf16.msra.mxu0 0
        %1221 = vmatprep.subr.bf16.mxu0 0
        %1222 = vmatpush1.bf16.msra.mxu0 0
        %1223 = vmatprep.subr.bf16.mxu0 0
        %1224 = vmatpush1.bf16.msra.mxu0 0
        %1225 = vmatprep.subr.bf16.mxu0 0
        %1226 = vmatpush1.bf16.msra.mxu0 0
        %1227 = vmatprep.subr.bf16.mxu0 0
        %1228 = vmatpush1.bf16.msra.mxu0 0
        %1229 = vmatprep.mubr.bf16.mxu0 0
        %1230 = vmatmul.mubr.bf16.gmra.mrb[0].mxu0 %v1196
        %v1231 = vpop.f32.mrb[0].mxu0
        %v1232 = vadd.f32 0.0, %v1231
        %v1233 = vpop.f32.mrb[0].mxu0
        %v1234 = vadd.f32 0.0, %v1233
        %v1235 = vpop.f32.mrb[0].mxu0
        %v1236 = vpop.f32.mrb[0].mxu0
        %1237 = vdwg.mxu0
        %1238 = vmatprep.subr.bf16.mxu0 %v876
        %1239 = vmatpush1.bf16.msra.mxu0 %v875
        %1240 = vmatprep.subr.bf16.mxu0 %v880
        %1241 = vmatpush1.bf16.msra.mxu0 %v879
        %1242 = vmatprep.subr.bf16.mxu0 %v884
        %1243 = vmatpush1.bf16.msra.mxu0 %v883
        %1244 = vmatprep.subr.bf16.mxu0 %v888
        %1245 = vmatpush1.bf16.msra.mxu0 %v887
        %1246 = vmatprep.subr.bf16.mxu0 %v892
        %1247 = vmatpush1.bf16.msra.mxu0 %v891
        %1248 = vmatprep.subr.bf16.mxu0 %v896
        %1249 = vmatpush1.bf16.msra.mxu0 %v895
        %1250 = vmatprep.subr.bf16.mxu0 %v900
        %1251 = vmatpush1.bf16.msra.mxu0 %v899
        %1252 = vmatprep.subr.bf16.mxu0 %v904
        %1253 = vmatpush1.bf16.msra.mxu0 %v903
        %1254 = vmatprep.subr.bf16.mxu0 0
        %1255 = vmatpush1.bf16.msra.mxu0 0
        %1256 = vmatprep.subr.bf16.mxu0 0
        %1257 = vmatpush1.bf16.msra.mxu0 0
        %1258 = vmatprep.subr.bf16.mxu0 0
        %1259 = vmatpush1.bf16.msra.mxu0 0
        %1260 = vmatprep.subr.bf16.mxu0 0
        %1261 = vmatpush1.bf16.msra.mxu0 0
        %1262 = vmatprep.subr.bf16.mxu0 0
        %1263 = vmatpush1.bf16.msra.mxu0 0
        %1264 = vmatprep.subr.bf16.mxu0 0
        %1265 = vmatpush1.bf16.msra.mxu0 0
        %1266 = vmatprep.subr.bf16.mxu0 0
        %1267 = vmatpush1.bf16.msra.mxu0 0
        %1268 = vmatprep.subr.bf16.mxu0 0
        %1269 = vmatpush1.bf16.msra.mxu0 0
        %1270 = vmatprep.mubr.bf16.mxu0 0
        %1271 = vmatmul.mubr.bf16.gmra.mrb[0].mxu0 %v1196
        %v1272 = vpop.f32.mrb[0].mxu0
        %v1273 = vadd.f32 0.0, %v1272
        %v1274 = vpop.f32.mrb[0].mxu0
        %v1275 = vadd.f32 0.0, %v1274
        %v1276 = vpop.f32.mrb[0].mxu0
        %v1277 = vpop.f32.mrb[0].mxu0
        %1278 = vdwg.mxu0
        %v1279 = vadd.f32 %v1191, %v1232
        %v1280 = vadd.f32 %v1192, %v1234
        %v1281 = vadd.f32 %v1193, %v1273
        %v1282 = vadd.f32 %v1194, %v1275
        %v1283 = vxor.u32 %v1279, 2147483648
        %v1284 = vmul.f32 %v1283, 1.442695
        %v1285 = vpow.pop %v1284
        %v1286 = vadd.f32 %v1285, 1.0
        %v1287 = vrcp.pop %v1286
        %v1288 = vmul.f32 1.0, %v1287
        %v1289 = vxor.u32 %v1280, 2147483648
        %v1290 = vmul.f32 %v1289, 1.442695
        %v1291 = vpow.pop %v1290
        %v1292 = vadd.f32 %v1291, 1.0
        %v1293 = vrcp.pop %v1292
        %v1294 = vmul.f32 1.0, %v1293
        %v1295 = vtanh.pop %v1281
        %v1296 = vxor.u32 %v1282, 2147483648
        %v1297 = vmul.f32 %v1296, 1.442695
        %v1298 = vpow.pop %v1297
        %v1299 = vadd.f32 %v1298, 1.0
        %v1300 = vrcp.pop %v1299
        %v1301 = vmul.f32 1.0, %v1300
        %v1302 = vld [vmem:[#allocation4] sm:$0xff]
        %v1303 = vmul.f32 %v1294, %v1302
        %v1304 = vmul.f32 %v1288, %v1295
        %v1305 = vadd.f32 %v1303, %v1304
        %v1306 = vtanh.pop %v1305
        %v1307 = vmul.f32 %v1301, %v1306
        %1308 = vst [vmem:[#allocation3] sm:$0xff] %v1307
        %1309 = vst [vmem:[#allocation4] sm:$0xff] %v1305
        %v1310 = vpack.c.bf16 %v1307, %v1307
        %s1311 = smul.addr %s1184, 4
        %s1312 = scalar_lea.vmem %s269, %s1311 [#allocation5]
        %1313 = vst [vmem:[%s1312] sm:$0xf] %v1310
        %s1314 = scalar_select %p763, 3, 4
        %s1315 = smul.u32 %s1314, 8
        %s1316 = sshra.s32 %s1315, 3
        %s1317 = sand.u32 %s1315, 7
        %s1318 = smul.u32 %s1316, 4
        %s1319 = smul.addr %s1318, 8
        %s1320 = scalar_lea.vmem [#allocation2], %s1319
        %v1321 = vld [vmem:[%s1320] sm:$0xff]
        %v1322 = vld [vmem:[%s1320 + $0x8] sm:$0xff]
        %v1323 = vld [vmem:[%s1320 + $0x10] sm:$0xff]
        %v1324 = vld [vmem:[%s1320 + $0x18] sm:$0xff]
        %v1325 = vld [vmem:[#allocation3] sm:$0xff]
        %v1326 = vpack.c.bf16 %v1325, %v1325
        %1327 = vmatprep.subr.bf16.mxu0 %v874
        %1328 = vmatpush1.bf16.msra.mxu0 %v873
        %1329 = vmatprep.subr.bf16.mxu0 %v878
        %1330 = vmatpush1.bf16.msra.mxu0 %v877
        %1331 = vmatprep.subr.bf16.mxu0 %v882
        %1332 = vmatpush1.bf16.msra.mxu0 %v881
        %1333 = vmatprep.subr.bf16.mxu0 %v886
        %1334 = vmatpush1.bf16.msra.mxu0 %v885
        %1335 = vmatprep.subr.bf16.mxu0 %v890
        %1336 = vmatpush1.bf16.msra.mxu0 %v889
        %1337 = vmatprep.subr.bf16.mxu0 %v894
        %1338 = vmatpush1.bf16.msra.mxu0 %v893
        %1339 = vmatprep.subr.bf16.mxu0 %v898
        %1340 = vmatpush1.bf16.msra.mxu0 %v897
        %1341 = vmatprep.subr.bf16.mxu0 %v902
        %1342 = vmatpush1.bf16.msra.mxu0 %v901
        %1343 = vmatprep.subr.bf16.mxu0 0
        %1344 = vmatpush1.bf16.msra.mxu0 0
        %1345 = vmatprep.subr.bf16.mxu0 0
        %1346 = vmatpush1.bf16.msra.mxu0 0
        %1347 = vmatprep.subr.bf16.mxu0 0
        %1348 = vmatpush1.bf16.msra.mxu0 0
        %1349 = vmatprep.subr.bf16.mxu0 0
        %1350 = vmatpush1.bf16.msra.mxu0 0
        %1351 = vmatprep.subr.bf16.mxu0 0
        %1352 = vmatpush1.bf16.msra.mxu0 0
        %1353 = vmatprep.subr.bf16.mxu0 0
        %1354 = vmatpush1.bf16.msra.mxu0 0
        %1355 = vmatprep.subr.bf16.mxu0 0
        %1356 = vmatpush1.bf16.msra.mxu0 0
        %1357 = vmatprep.subr.bf16.mxu0 0
        %1358 = vmatpush1.bf16.msra.mxu0 0
        %1359 = vmatprep.mubr.bf16.mxu0 0
        %1360 = vmatmul.mubr.bf16.gmra.mrb[0].mxu0 %v1326
        %v1361 = vpop.f32.mrb[0].mxu0
        %v1362 = vadd.f32 0.0, %v1361
        %v1363 = vpop.f32.mrb[0].mxu0
        %v1364 = vadd.f32 0.0, %v1363
        %v1365 = vpop.f32.mrb[0].mxu0
        %v1366 = vpop.f32.mrb[0].mxu0
        %1367 = vdwg.mxu0
        %1368 = vmatprep.subr.bf16.mxu0 %v876
        %1369 = vmatpush1.bf16.msra.mxu0 %v875
        %1370 = vmatprep.subr.bf16.mxu0 %v880
        %1371 = vmatpush1.bf16.msra.mxu0 %v879
        %1372 = vmatprep.subr.bf16.mxu0 %v884
        %1373 = vmatpush1.bf16.msra.mxu0 %v883
        %1374 = vmatprep.subr.bf16.mxu0 %v888
        %1375 = vmatpush1.bf16.msra.mxu0 %v887
        %1376 = vmatprep.subr.bf16.mxu0 %v892
        %1377 = vmatpush1.bf16.msra.mxu0 %v891
        %1378 = vmatprep.subr.bf16.mxu0 %v896
        %1379 = vmatpush1.bf16.msra.mxu0 %v895
        %1380 = vmatprep.subr.bf16.mxu0 %v900
        %1381 = vmatpush1.bf16.msra.mxu0 %v899
        %1382 = vmatprep.subr.bf16.mxu0 %v904
        %1383 = vmatpush1.bf16.msra.mxu0 %v903
        %1384 = vmatprep.subr.bf16.mxu0 0
        %1385 = vmatpush1.bf16.msra.mxu0 0
        %1386 = vmatprep.subr.bf16.mxu0 0
        %1387 = vmatpush1.bf16.msra.mxu0 0
        %1388 = vmatprep.subr.bf16.mxu0 0
        %1389 = vmatpush1.bf16.msra.mxu0 0
        %1390 = vmatprep.subr.bf16.mxu0 0
        %1391 = vmatpush1.bf16.msra.mxu0 0
        %1392 = vmatprep.subr.bf16.mxu0 0
        %1393 = vmatpush1.bf16.msra.mxu0 0
        %1394 = vmatprep.subr.bf16.mxu0 0
        %1395 = vmatpush1.bf16.msra.mxu0 0
        %1396 = vmatprep.subr.bf16.mxu0 0
        %1397 = vmatpush1.bf16.msra.mxu0 0
        %1398 = vmatprep.subr.bf16.mxu0 0
        %1399 = vmatpush1.bf16.msra.mxu0 0
        %1400 = vmatprep.mubr.bf16.mxu0 0
        %1401 = vmatmul.mubr.bf16.gmra.mrb[0].mxu0 %v1326
        %v1402 = vpop.f32.mrb[0].mxu0
        %v1403 = vadd.f32 0.0, %v1402
        %v1404 = vpop.f32.mrb[0].mxu0
        %v1405 = vadd.f32 0.0, %v1404
        %v1406 = vpop.f32.mrb[0].mxu0
        %v1407 = vpop.f32.mrb[0].mxu0
        %1408 = vdwg.mxu0
        %v1409 = vadd.f32 %v1321, %v1362
        %v1410 = vadd.f32 %v1322, %v1364
        %v1411 = vadd.f32 %v1323, %v1403
        %v1412 = vadd.f32 %v1324, %v1405
        %v1413 = vxor.u32 %v1409, 2147483648
        %v1414 = vmul.f32 %v1413, 1.442695
        %v1415 = vpow.pop %v1414
        %v1416 = vadd.f32 %v1415, 1.0
        %v1417 = vrcp.pop %v1416
        %v1418 = vmul.f32 1.0, %v1417
        %v1419 = vxor.u32 %v1410, 2147483648
        %v1420 = vmul.f32 %v1419, 1.442695
        %v1421 = vpow.pop %v1420
        %v1422 = vadd.f32 %v1421, 1.0
        %v1423 = vrcp.pop %v1422
        %v1424 = vmul.f32 1.0, %v1423
        %v1425 = vtanh.pop %v1411
        %v1426 = vxor.u32 %v1412, 2147483648
        %v1427 = vmul.f32 %v1426, 1.442695
        %v1428 = vpow.pop %v1427
        %v1429 = vadd.f32 %v1428, 1.0
        %v1430 = vrcp.pop %v1429
        %v1431 = vmul.f32 1.0, %v1430
        %v1432 = vld [vmem:[#allocation4] sm:$0xff]
        %v1433 = vmul.f32 %v1424, %v1432
        %v1434 = vmul.f32 %v1418, %v1425
        %v1435 = vadd.f32 %v1433, %v1434
        %v1436 = vtanh.pop %v1435
        %v1437 = vmul.f32 %v1431, %v1436
        %1438 = vst [vmem:[#allocation3] sm:$0xff] %v1437
        %1439 = vst [vmem:[#allocation4] sm:$0xff] %v1435
        %v1440 = vpack.c.bf16 %v1437, %v1437
        %s1441 = smul.addr %s1314, 4
        %s1442 = scalar_lea.vmem %s269, %s1441 [#allocation5]
        %1443 = vst [vmem:[%s1442] sm:$0xf] %v1440
        %s1444 = scalar_select %p763, 4, 3
        %s1445 = smul.u32 %s1444, 8
        %s1446 = sshra.s32 %s1445, 3
        %s1447 = sand.u32 %s1445, 7
        %s1448 = smul.u32 %s1446, 4
        %s1449 = smul.addr %s1448, 8
        %s1450 = scalar_lea.vmem [#allocation2], %s1449
        %v1451 = vld [vmem:[%s1450] sm:$0xff]
        %v1452 = vld [vmem:[%s1450 + $0x8] sm:$0xff]
        %v1453 = vld [vmem:[%s1450 + $0x10] sm:$0xff]
        %v1454 = vld [vmem:[%s1450 + $0x18] sm:$0xff]
        %v1455 = vld [vmem:[#allocation3] sm:$0xff]
        %v1456 = vpack.c.bf16 %v1455, %v1455
        %1457 = vmatprep.subr.bf16.mxu0 %v874
        %1458 = vmatpush1.bf16.msra.mxu0 %v873
        %1459 = vmatprep.subr.bf16.mxu0 %v878
        %1460 = vmatpush1.bf16.msra.mxu0 %v877
        %1461 = vmatprep.subr.bf16.mxu0 %v882
        %1462 = vmatpush1.bf16.msra.mxu0 %v881
        %1463 = vmatprep.subr.bf16.mxu0 %v886
        %1464 = vmatpush1.bf16.msra.mxu0 %v885
        %1465 = vmatprep.subr.bf16.mxu0 %v890
        %1466 = vmatpush1.bf16.msra.mxu0 %v889
        %1467 = vmatprep.subr.bf16.mxu0 %v894
        %1468 = vmatpush1.bf16.msra.mxu0 %v893
        %1469 = vmatprep.subr.bf16.mxu0 %v898
        %1470 = vmatpush1.bf16.msra.mxu0 %v897
        %1471 = vmatprep.subr.bf16.mxu0 %v902
        %1472 = vmatpush1.bf16.msra.mxu0 %v901
        %1473 = vmatprep.subr.bf16.mxu0 0
        %1474 = vmatpush1.bf16.msra.mxu0 0
        %1475 = vmatprep.subr.bf16.mxu0 0
        %1476 = vmatpush1.bf16.msra.mxu0 0
        %1477 = vmatprep.subr.bf16.mxu0 0
        %1478 = vmatpush1.bf16.msra.mxu0 0
        %1479 = vmatprep.subr.bf16.mxu0 0
        %1480 = vmatpush1.bf16.msra.mxu0 0
        %1481 = vmatprep.subr.bf16.mxu0 0
        %1482 = vmatpush1.bf16.msra.mxu0 0
        %1483 = vmatprep.subr.bf16.mxu0 0
        %1484 = vmatpush1.bf16.msra.mxu0 0
        %1485 = vmatprep.subr.bf16.mxu0 0
        %1486 = vmatpush1.bf16.msra.mxu0 0
        %1487 = vmatprep.subr.bf16.mxu0 0
        %1488 = vmatpush1.bf16.msra.mxu0 0
        %1489 = vmatprep.mubr.bf16.mxu0 0
        %1490 = vmatmul.mubr.bf16.gmra.mrb[0].mxu0 %v1456
        %v1491 = vpop.f32.mrb[0].mxu0
        %v1492 = vadd.f32 0.0, %v1491
        %v1493 = vpop.f32.mrb[0].mxu0
        %v1494 = vadd.f32 0.0, %v1493
        %v1495 = vpop.f32.mrb[0].mxu0
        %v1496 = vpop.f32.mrb[0].mxu0
        %1497 = vdwg.mxu0
        %1498 = vmatprep.subr.bf16.mxu0 %v876
        %1499 = vmatpush1.bf16.msra.mxu0 %v875
        %1500 = vmatprep.subr.bf16.mxu0 %v880
        %1501 = vmatpush1.bf16.msra.mxu0 %v879
        %1502 = vmatprep.subr.bf16.mxu0 %v884
        %1503 = vmatpush1.bf16.msra.mxu0 %v883
        %1504 = vmatprep.subr.bf16.mxu0 %v888
        %1505 = vmatpush1.bf16.msra.mxu0 %v887
        %1506 = vmatprep.subr.bf16.mxu0 %v892
        %1507 = vmatpush1.bf16.msra.mxu0 %v891
        %1508 = vmatprep.subr.bf16.mxu0 %v896
        %1509 = vmatpush1.bf16.msra.mxu0 %v895
        %1510 = vmatprep.subr.bf16.mxu0 %v900
        %1511 = vmatpush1.bf16.msra.mxu0 %v899
        %1512 = vmatprep.subr.bf16.mxu0 %v904
        %1513 = vmatpush1.bf16.msra.mxu0 %v903
        %1514 = vmatprep.subr.bf16.mxu0 0
        %1515 = vmatpush1.bf16.msra.mxu0 0
        %1516 = vmatprep.subr.bf16.mxu0 0
        %1517 = vmatpush1.bf16.msra.mxu0 0
        %1518 = vmatprep.subr.bf16.mxu0 0
        %1519 = vmatpush1.bf16.msra.mxu0 0
        %1520 = vmatprep.subr.bf16.mxu0 0
        %1521 = vmatpush1.bf16.msra.mxu0 0
        %1522 = vmatprep.subr.bf16.mxu0 0
        %1523 = vmatpush1.bf16.msra.mxu0 0
        %1524 = vmatprep.subr.bf16.mxu0 0
        %1525 = vmatpush1.bf16.msra.mxu0 0
        %1526 = vmatprep.subr.bf16.mxu0 0
        %1527 = vmatpush1.bf16.msra.mxu0 0
        %1528 = vmatprep.subr.bf16.mxu0 0
        %1529 = vmatpush1.bf16.msra.mxu0 0
        %1530 = vmatprep.mubr.bf16.mxu0 0
        %1531 = vmatmul.mubr.bf16.gmra.mrb[0].mxu0 %v1456
        %v1532 = vpop.f32.mrb[0].mxu0
        %v1533 = vadd.f32 0.0, %v1532
        %v1534 = vpop.f32.mrb[0].mxu0
        %v1535 = vadd.f32 0.0, %v1534
        %v1536 = vpop.f32.mrb[0].mxu0
        %v1537 = vpop.f32.mrb[0].mxu0
        %1538 = vdwg.mxu0
        %v1539 = vadd.f32 %v1451, %v1492
        %v1540 = vadd.f32 %v1452, %v1494
        %v1541 = vadd.f32 %v1453, %v1533
        %v1542 = vadd.f32 %v1454, %v1535
        %v1543 = vxor.u32 %v1539, 2147483648
        %v1544 = vmul.f32 %v1543, 1.442695
        %v1545 = vpow.pop %v1544
        %v1546 = vadd.f32 %v1545, 1.0
        %v1547 = vrcp.pop %v1546
        %v1548 = vmul.f32 1.0, %v1547
        %v1549 = vxor.u32 %v1540, 2147483648
        %v1550 = vmul.f32 %v1549, 1.442695
        %v1551 = vpow.pop %v1550
        %v1552 = vadd.f32 %v1551, 1.0
        %v1553 = vrcp.pop %v1552
        %v1554 = vmul.f32 1.0, %v1553
        %v1555 = vtanh.pop %v1541
        %v1556 = vxor.u32 %v1542, 2147483648
        %v1557 = vmul.f32 %v1556, 1.442695
        %v1558 = vpow.pop %v1557
        %v1559 = vadd.f32 %v1558, 1.0
        %v1560 = vrcp.pop %v1559
        %v1561 = vmul.f32 1.0, %v1560
        %v1562 = vld [vmem:[#allocation4] sm:$0xff]
        %v1563 = vmul.f32 %v1554, %v1562
        %v1564 = vmul.f32 %v1548, %v1555
        %v1565 = vadd.f32 %v1563, %v1564
        %v1566 = vtanh.pop %v1565
        %v1567 = vmul.f32 %v1561, %v1566
        %1568 = vst [vmem:[#allocation3] sm:$0xff] %v1567
        %1569 = vst [vmem:[#allocation4] sm:$0xff] %v1565
        %v1570 = vpack.c.bf16 %v1567, %v1567
        %s1571 = smul.addr %s1444, 4
        %s1572 = scalar_lea.vmem %s269, %s1571 [#allocation5]
        %1573 = vst [vmem:[%s1572] sm:$0xf] %v1570
        %s1574 = scalar_select %p763, 5, 2
        %s1575 = smul.u32 %s1574, 8
        %s1576 = sshra.s32 %s1575, 3
        %s1577 = sand.u32 %s1575, 7
        %s1578 = smul.u32 %s1576, 4
        %s1579 = smul.addr %s1578, 8
        %s1580 = scalar_lea.vmem [#allocation2], %s1579
        %v1581 = vld [vmem:[%s1580] sm:$0xff]
        %v1582 = vld [vmem:[%s1580 + $0x8] sm:$0xff]
        %v1583 = vld [vmem:[%s1580 + $0x10] sm:$0xff]
        %v1584 = vld [vmem:[%s1580 + $0x18] sm:$0xff]
        %v1585 = vld [vmem:[#allocation3] sm:$0xff]
        %v1586 = vpack.c.bf16 %v1585, %v1585
        %1587 = vmatprep.subr.bf16.mxu0 %v874
        %1588 = vmatpush1.bf16.msra.mxu0 %v873
        %1589 = vmatprep.subr.bf16.mxu0 %v878
        %1590 = vmatpush1.bf16.msra.mxu0 %v877
        %1591 = vmatprep.subr.bf16.mxu0 %v882
        %1592 = vmatpush1.bf16.msra.mxu0 %v881
        %1593 = vmatprep.subr.bf16.mxu0 %v886
        %1594 = vmatpush1.bf16.msra.mxu0 %v885
        %1595 = vmatprep.subr.bf16.mxu0 %v890
        %1596 = vmatpush1.bf16.msra.mxu0 %v889
        %1597 = vmatprep.subr.bf16.mxu0 %v894
        %1598 = vmatpush1.bf16.msra.mxu0 %v893
        %1599 = vmatprep.subr.bf16.mxu0 %v898
        %1600 = vmatpush1.bf16.msra.mxu0 %v897
        %1601 = vmatprep.subr.bf16.mxu0 %v902
        %1602 = vmatpush1.bf16.msra.mxu0 %v901
        %1603 = vmatprep.subr.bf16.mxu0 0
        %1604 = vmatpush1.bf16.msra.mxu0 0
        %1605 = vmatprep.subr.bf16.mxu0 0
        %1606 = vmatpush1.bf16.msra.mxu0 0
        %1607 = vmatprep.subr.bf16.mxu0 0
        %1608 = vmatpush1.bf16.msra.mxu0 0
        %1609 = vmatprep.subr.bf16.mxu0 0
        %1610 = vmatpush1.bf16.msra.mxu0 0
        %1611 = vmatprep.subr.bf16.mxu0 0
        %1612 = vmatpush1.bf16.msra.mxu0 0
        %1613 = vmatprep.subr.bf16.mxu0 0
        %1614 = vmatpush1.bf16.msra.mxu0 0
        %1615 = vmatprep.subr.bf16.mxu0 0
        %1616 = vmatpush1.bf16.msra.mxu0 0
        %1617 = vmatprep.subr.bf16.mxu0 0
        %1618 = vmatpush1.bf16.msra.mxu0 0
        %1619 = vmatprep.mubr.bf16.mxu0 0
        %1620 = vmatmul.mubr.bf16.gmra.mrb[0].mxu0 %v1586
        %v1621 = vpop.f32.mrb[0].mxu0
        %v1622 = vadd.f32 0.0, %v1621
        %v1623 = vpop.f32.mrb[0].mxu0
        %v1624 = vadd.f32 0.0, %v1623
        %v1625 = vpop.f32.mrb[0].mxu0
        %v1626 = vpop.f32.mrb[0].mxu0
        %1627 = vdwg.mxu0
        %1628 = vmatprep.subr.bf16.mxu0 %v876
        %1629 = vmatpush1.bf16.msra.mxu0 %v875
        %1630 = vmatprep.subr.bf16.mxu0 %v880
        %1631 = vmatpush1.bf16.msra.mxu0 %v879
        %1632 = vmatprep.subr.bf16.mxu0 %v884
        %1633 = vmatpush1.bf16.msra.mxu0 %v883
        %1634 = vmatprep.subr.bf16.mxu0 %v888
        %1635 = vmatpush1.bf16.msra.mxu0 %v887
        %1636 = vmatprep.subr.bf16.mxu0 %v892
        %1637 = vmatpush1.bf16.msra.mxu0 %v891
        %1638 = vmatprep.subr.bf16.mxu0 %v896
        %1639 = vmatpush1.bf16.msra.mxu0 %v895
        %1640 = vmatprep.subr.bf16.mxu0 %v900
        %1641 = vmatpush1.bf16.msra.mxu0 %v899
        %1642 = vmatprep.subr.bf16.mxu0 %v904
        %1643 = vmatpush1.bf16.msra.mxu0 %v903
        %1644 = vmatprep.subr.bf16.mxu0 0
        %1645 = vmatpush1.bf16.msra.mxu0 0
        %1646 = vmatprep.subr.bf16.mxu0 0
        %1647 = vmatpush1.bf16.msra.mxu0 0
        %1648 = vmatprep.subr.bf16.mxu0 0
        %1649 = vmatpush1.bf16.msra.mxu0 0
        %1650 = vmatprep.subr.bf16.mxu0 0
        %1651 = vmatpush1.bf16.msra.mxu0 0
        %1652 = vmatprep.subr.bf16.mxu0 0
        %1653 = vmatpush1.bf16.msra.mxu0 0
        %1654 = vmatprep.subr.bf16.mxu0 0
        %1655 = vmatpush1.bf16.msra.mxu0 0
        %1656 = vmatprep.subr.bf16.mxu0 0
        %1657 = vmatpush1.bf16.msra.mxu0 0
        %1658 = vmatprep.subr.bf16.mxu0 0
        %1659 = vmatpush1.bf16.msra.mxu0 0
        %1660 = vmatprep.mubr.bf16.mxu0 0
        %1661 = vmatmul.mubr.bf16.gmra.mrb[0].mxu0 %v1586
        %v1662 = vpop.f32.mrb[0].mxu0
        %v1663 = vadd.f32 0.0, %v1662
        %v1664 = vpop.f32.mrb[0].mxu0
        %v1665 = vadd.f32 0.0, %v1664
        %v1666 = vpop.f32.mrb[0].mxu0
        %v1667 = vpop.f32.mrb[0].mxu0
        %1668 = vdwg.mxu0
        %v1669 = vadd.f32 %v1581, %v1622
        %v1670 = vadd.f32 %v1582, %v1624
        %v1671 = vadd.f32 %v1583, %v1663
        %v1672 = vadd.f32 %v1584, %v1665
        %v1673 = vxor.u32 %v1669, 2147483648
        %v1674 = vmul.f32 %v1673, 1.442695
        %v1675 = vpow.pop %v1674
        %v1676 = vadd.f32 %v1675, 1.0
        %v1677 = vrcp.pop %v1676
        %v1678 = vmul.f32 1.0, %v1677
        %v1679 = vxor.u32 %v1670, 2147483648
        %v1680 = vmul.f32 %v1679, 1.442695
        %v1681 = vpow.pop %v1680
        %v1682 = vadd.f32 %v1681, 1.0
        %v1683 = vrcp.pop %v1682
        %v1684 = vmul.f32 1.0, %v1683
        %v1685 = vtanh.pop %v1671
        %v1686 = vxor.u32 %v1672, 2147483648
        %v1687 = vmul.f32 %v1686, 1.442695
        %v1688 = vpow.pop %v1687
        %v1689 = vadd.f32 %v1688, 1.0
        %v1690 = vrcp.pop %v1689
        %v1691 = vmul.f32 1.0, %v1690
        %v1692 = vld [vmem:[#allocation4] sm:$0xff]
        %v1693 = vmul.f32 %v1684, %v1692
        %v1694 = vmul.f32 %v1678, %v1685
        %v1695 = vadd.f32 %v1693, %v1694
        %v1696 = vtanh.pop %v1695
        %v1697 = vmul.f32 %v1691, %v1696
        %1698 = vst [vmem:[#allocation3] sm:$0xff] %v1697
        %1699 = vst [vmem:[#allocation4] sm:$0xff] %v1695
        %v1700 = vpack.c.bf16 %v1697, %v1697
        %s1701 = smul.addr %s1574, 4
        %s1702 = scalar_lea.vmem %s269, %s1701 [#allocation5]
        %1703 = vst [vmem:[%s1702] sm:$0xf] %v1700
        %s1704 = scalar_select %p763, 6, 1
        %s1705 = smul.u32 %s1704, 8
        %s1706 = sshra.s32 %s1705, 3
        %s1707 = sand.u32 %s1705, 7
        %s1708 = smul.u32 %s1706, 4
        %s1709 = smul.addr %s1708, 8
        %s1710 = scalar_lea.vmem [#allocation2], %s1709
        %v1711 = vld [vmem:[%s1710] sm:$0xff]
        %v1712 = vld [vmem:[%s1710 + $0x8] sm:$0xff]
        %v1713 = vld [vmem:[%s1710 + $0x10] sm:$0xff]
        %v1714 = vld [vmem:[%s1710 + $0x18] sm:$0xff]
        %v1715 = vld [vmem:[#allocation3] sm:$0xff]
        %v1716 = vpack.c.bf16 %v1715, %v1715
        %1717 = vmatprep.subr.bf16.mxu0 %v874
        %1718 = vmatpush1.bf16.msra.mxu0 %v873
        %1719 = vmatprep.subr.bf16.mxu0 %v878
        %1720 = vmatpush1.bf16.msra.mxu0 %v877
        %1721 = vmatprep.subr.bf16.mxu0 %v882
        %1722 = vmatpush1.bf16.msra.mxu0 %v881
        %1723 = vmatprep.subr.bf16.mxu0 %v886
        %1724 = vmatpush1.bf16.msra.mxu0 %v885
        %1725 = vmatprep.subr.bf16.mxu0 %v890
        %1726 = vmatpush1.bf16.msra.mxu0 %v889
        %1727 = vmatprep.subr.bf16.mxu0 %v894
        %1728 = vmatpush1.bf16.msra.mxu0 %v893
        %1729 = vmatprep.subr.bf16.mxu0 %v898
        %1730 = vmatpush1.bf16.msra.mxu0 %v897
        %1731 = vmatprep.subr.bf16.mxu0 %v902
        %1732 = vmatpush1.bf16.msra.mxu0 %v901
        %1733 = vmatprep.subr.bf16.mxu0 0
        %1734 = vmatpush1.bf16.msra.mxu0 0
        %1735 = vmatprep.subr.bf16.mxu0 0
        %1736 = vmatpush1.bf16.msra.mxu0 0
        %1737 = vmatprep.subr.bf16.mxu0 0
        %1738 = vmatpush1.bf16.msra.mxu0 0
        %1739 = vmatprep.subr.bf16.mxu0 0
        %1740 = vmatpush1.bf16.msra.mxu0 0
        %1741 = vmatprep.subr.bf16.mxu0 0
        %1742 = vmatpush1.bf16.msra.mxu0 0
        %1743 = vmatprep.subr.bf16.mxu0 0
        %1744 = vmatpush1.bf16.msra.mxu0 0
        %1745 = vmatprep.subr.bf16.mxu0 0
        %1746 = vmatpush1.bf16.msra.mxu0 0
        %1747 = vmatprep.subr.bf16.mxu0 0
        %1748 = vmatpush1.bf16.msra.mxu0 0
        %1749 = vmatprep.mubr.bf16.mxu0 0
        %1750 = vmatmul.mubr.bf16.gmra.mrb[0].mxu0 %v1716
        %v1751 = vpop.f32.mrb[0].mxu0
        %v1752 = vadd.f32 0.0, %v1751
        %v1753 = vpop.f32.mrb[0].mxu0
        %v1754 = vadd.f32 0.0, %v1753
        %v1755 = vpop.f32.mrb[0].mxu0
        %v1756 = vpop.f32.mrb[0].mxu0
        %1757 = vdwg.mxu0
        %1758 = vmatprep.subr.bf16.mxu0 %v876
        %1759 = vmatpush1.bf16.msra.mxu0 %v875
        %1760 = vmatprep.subr.bf16.mxu0 %v880
        %1761 = vmatpush1.bf16.msra.mxu0 %v879
        %1762 = vmatprep.subr.bf16.mxu0 %v884
        %1763 = vmatpush1.bf16.msra.mxu0 %v883
        %1764 = vmatprep.subr.bf16.mxu0 %v888
        %1765 = vmatpush1.bf16.msra.mxu0 %v887
        %1766 = vmatprep.subr.bf16.mxu0 %v892
        %1767 = vmatpush1.bf16.msra.mxu0 %v891
        %1768 = vmatprep.subr.bf16.mxu0 %v896
        %1769 = vmatpush1.bf16.msra.mxu0 %v895
        %1770 = vmatprep.subr.bf16.mxu0 %v900
        %1771 = vmatpush1.bf16.msra.mxu0 %v899
        %1772 = vmatprep.subr.bf16.mxu0 %v904
        %1773 = vmatpush1.bf16.msra.mxu0 %v903
        %1774 = vmatprep.subr.bf16.mxu0 0
        %1775 = vmatpush1.bf16.msra.mxu0 0
        %1776 = vmatprep.subr.bf16.mxu0 0
        %1777 = vmatpush1.bf16.msra.mxu0 0
        %1778 = vmatprep.subr.bf16.mxu0 0
        %1779 = vmatpush1.bf16.msra.mxu0 0
        %1780 = vmatprep.subr.bf16.mxu0 0
        %1781 = vmatpush1.bf16.msra.mxu0 0
        %1782 = vmatprep.subr.bf16.mxu0 0
        %1783 = vmatpush1.bf16.msra.mxu0 0
        %1784 = vmatprep.subr.bf16.mxu0 0
        %1785 = vmatpush1.bf16.msra.mxu0 0
        %1786 = vmatprep.subr.bf16.mxu0 0
        %1787 = vmatpush1.bf16.msra.mxu0 0
        %1788 = vmatprep.subr.bf16.mxu0 0
        %1789 = vmatpush1.bf16.msra.mxu0 0
        %1790 = vmatprep.mubr.bf16.mxu0 0
        %1791 = vmatmul.mubr.bf16.gmra.mrb[0].mxu0 %v1716
        %v1792 = vpop.f32.mrb[0].mxu0
        %v1793 = vadd.f32 0.0, %v1792
        %v1794 = vpop.f32.mrb[0].mxu0
        %v1795 = vadd.f32 0.0, %v1794
        %v1796 = vpop.f32.mrb[0].mxu0
        %v1797 = vpop.f32.mrb[0].mxu0
        %1798 = vdwg.mxu0
        %v1799 = vadd.f32 %v1711, %v1752
        %v1800 = vadd.f32 %v1712, %v1754
        %v1801 = vadd.f32 %v1713, %v1793
        %v1802 = vadd.f32 %v1714, %v1795
        %v1803 = vxor.u32 %v1799, 2147483648
        %v1804 = vmul.f32 %v1803, 1.442695
        %v1805 = vpow.pop %v1804
        %v1806 = vadd.f32 %v1805, 1.0
        %v1807 = vrcp.pop %v1806
        %v1808 = vmul.f32 1.0, %v1807
        %v1809 = vxor.u32 %v1800, 2147483648
        %v1810 = vmul.f32 %v1809, 1.442695
        %v1811 = vpow.pop %v1810
        %v1812 = vadd.f32 %v1811, 1.0
        %v1813 = vrcp.pop %v1812
        %v1814 = vmul.f32 1.0, %v1813
        %v1815 = vtanh.pop %v1801
        %v1816 = vxor.u32 %v1802, 2147483648
        %v1817 = vmul.f32 %v1816, 1.442695
        %v1818 = vpow.pop %v1817
        %v1819 = vadd.f32 %v1818, 1.0
        %v1820 = vrcp.pop %v1819
        %v1821 = vmul.f32 1.0, %v1820
        %v1822 = vld [vmem:[#allocation4] sm:$0xff]
        %v1823 = vmul.f32 %v1814, %v1822
        %v1824 = vmul.f32 %v1808, %v1815
        %v1825 = vadd.f32 %v1823, %v1824
        %v1826 = vtanh.pop %v1825
        %v1827 = vmul.f32 %v1821, %v1826
        %1828 = vst [vmem:[#allocation3] sm:$0xff] %v1827
        %1829 = vst [vmem:[#allocation4] sm:$0xff] %v1825
        %v1830 = vpack.c.bf16 %v1827, %v1827
        %s1831 = smul.addr %s1704, 4
        %s1832 = scalar_lea.vmem %s269, %s1831 [#allocation5]
        %1833 = vst [vmem:[%s1832] sm:$0xf] %v1830
        %s1834 = scalar_select %p763, 7, 0
        %s1835 = smul.u32 %s1834, 8
        %s1836 = sshra.s32 %s1835, 3
        %s1837 = sand.u32 %s1835, 7
        %s1838 = smul.u32 %s1836, 4
        %s1839 = smul.addr %s1838, 8
        %s1840 = scalar_lea.vmem [#allocation2], %s1839
        %v1841 = vld [vmem:[%s1840] sm:$0xff]
        %v1842 = vld [vmem:[%s1840 + $0x8] sm:$0xff]
        %v1843 = vld [vmem:[%s1840 + $0x10] sm:$0xff]
        %v1844 = vld [vmem:[%s1840 + $0x18] sm:$0xff]
        %v1845 = vld [vmem:[#allocation3] sm:$0xff]
        %v1846 = vpack.c.bf16 %v1845, %v1845
        %1847 = vmatprep.subr.bf16.mxu0 %v874
        %1848 = vmatpush1.bf16.msra.mxu0 %v873
        %1849 = vmatprep.subr.bf16.mxu0 %v878
        %1850 = vmatpush1.bf16.msra.mxu0 %v877
        %1851 = vmatprep.subr.bf16.mxu0 %v882
        %1852 = vmatpush1.bf16.msra.mxu0 %v881
        %1853 = vmatprep.subr.bf16.mxu0 %v886
        %1854 = vmatpush1.bf16.msra.mxu0 %v885
        %1855 = vmatprep.subr.bf16.mxu0 %v890
        %1856 = vmatpush1.bf16.msra.mxu0 %v889
        %1857 = vmatprep.subr.bf16.mxu0 %v894
        %1858 = vmatpush1.bf16.msra.mxu0 %v893
        %1859 = vmatprep.subr.bf16.mxu0 %v898
        %1860 = vmatpush1.bf16.msra.mxu0 %v897
        %1861 = vmatprep.subr.bf16.mxu0 %v902
        %1862 = vmatpush1.bf16.msra.mxu0 %v901
        %1863 = vmatprep.subr.bf16.mxu0 0
        %1864 = vmatpush1.bf16.msra.mxu0 0
        %1865 = vmatprep.subr.bf16.mxu0 0
        %1866 = vmatpush1.bf16.msra.mxu0 0
        %1867 = vmatprep.subr.bf16.mxu0 0
        %1868 = vmatpush1.bf16.msra.mxu0 0
        %1869 = vmatprep.subr.bf16.mxu0 0
        %1870 = vmatpush1.bf16.msra.mxu0 0
        %1871 = vmatprep.subr.bf16.mxu0 0
        %1872 = vmatpush1.bf16.msra.mxu0 0
        %1873 = vmatprep.subr.bf16.mxu0 0
        %1874 = vmatpush1.bf16.msra.mxu0 0
        %1875 = vmatprep.subr.bf16.mxu0 0
        %1876 = vmatpush1.bf16.msra.mxu0 0
        %1877 = vmatprep.subr.bf16.mxu0 0
        %1878 = vmatpush1.bf16.msra.mxu0 0
        %1879 = vmatprep.mubr.bf16.mxu0 0
        %1880 = vmatmul.mubr.bf16.gmra.mrb[0].mxu0 %v1846
        %v1881 = vpop.f32.mrb[0].mxu0
        %v1882 = vadd.f32 0.0, %v1881
        %v1883 = vpop.f32.mrb[0].mxu0
        %v1884 = vadd.f32 0.0, %v1883
        %v1885 = vpop.f32.mrb[0].mxu0
        %v1886 = vpop.f32.mrb[0].mxu0
        %1887 = vdwg.mxu0
        %1888 = vmatprep.subr.bf16.mxu0 %v876
        %1889 = vmatpush1.bf16.msra.mxu0 %v875
        %1890 = vmatprep.subr.bf16.mxu0 %v880
        %1891 = vmatpush1.bf16.msra.mxu0 %v879
        %1892 = vmatprep.subr.bf16.mxu0 %v884
        %1893 = vmatpush1.bf16.msra.mxu0 %v883
        %1894 = vmatprep.subr.bf16.mxu0 %v888
        %1895 = vmatpush1.bf16.msra.mxu0 %v887
        %1896 = vmatprep.subr.bf16.mxu0 %v892
        %1897 = vmatpush1.bf16.msra.mxu0 %v891
        %1898 = vmatprep.subr.bf16.mxu0 %v896
        %1899 = vmatpush1.bf16.msra.mxu0 %v895
        %1900 = vmatprep.subr.bf16.mxu0 %v900
        %1901 = vmatpush1.bf16.msra.mxu0 %v899
        %1902 = vmatprep.subr.bf16.mxu0 %v904
        %1903 = vmatpush1.bf16.msra.mxu0 %v903
        %1904 = vmatprep.subr.bf16.mxu0 0
        %1905 = vmatpush1.bf16.msra.mxu0 0
        %1906 = vmatprep.subr.bf16.mxu0 0
        %1907 = vmatpush1.bf16.msra.mxu0 0
        %1908 = vmatprep.subr.bf16.mxu0 0
        %1909 = vmatpush1.bf16.msra.mxu0 0
        %1910 = vmatprep.subr.bf16.mxu0 0
        %1911 = vmatpush1.bf16.msra.mxu0 0
        %1912 = vmatprep.subr.bf16.mxu0 0
        %1913 = vmatpush1.bf16.msra.mxu0 0
        %1914 = vmatprep.subr.bf16.mxu0 0
        %1915 = vmatpush1.bf16.msra.mxu0 0
        %1916 = vmatprep.subr.bf16.mxu0 0
        %1917 = vmatpush1.bf16.msra.mxu0 0
        %1918 = vmatprep.subr.bf16.mxu0 0
        %1919 = vmatpush1.bf16.msra.mxu0 0
        %1920 = vmatprep.mubr.bf16.mxu0 0
        %1921 = vmatmul.mubr.bf16.gmra.mrb[0].mxu0 %v1846
        %v1922 = vpop.f32.mrb[0].mxu0
        %v1923 = vadd.f32 0.0, %v1922
        %v1924 = vpop.f32.mrb[0].mxu0
        %v1925 = vadd.f32 0.0, %v1924
        %v1926 = vpop.f32.mrb[0].mxu0
        %v1927 = vpop.f32.mrb[0].mxu0
        %1928 = vdwg.mxu0
        %v1929 = vadd.f32 %v1841, %v1882
        %v1930 = vadd.f32 %v1842, %v1884
        %v1931 = vadd.f32 %v1843, %v1923
        %v1932 = vadd.f32 %v1844, %v1925
        %v1933 = vxor.u32 %v1929, 2147483648
        %v1934 = vmul.f32 %v1933, 1.442695
        %v1935 = vpow.pop %v1934
        %v1936 = vadd.f32 %v1935, 1.0
        %v1937 = vrcp.pop %v1936
        %v1938 = vmul.f32 1.0, %v1937
        %v1939 = vxor.u32 %v1930, 2147483648
        %v1940 = vmul.f32 %v1939, 1.442695
        %v1941 = vpow.pop %v1940
        %v1942 = vadd.f32 %v1941, 1.0
        %v1943 = vrcp.pop %v1942
        %v1944 = vmul.f32 1.0, %v1943
        %v1945 = vtanh.pop %v1931
        %v1946 = vxor.u32 %v1932, 2147483648
        %v1947 = vmul.f32 %v1946, 1.442695
        %v1948 = vpow.pop %v1947
        %v1949 = vadd.f32 %v1948, 1.0
        %v1950 = vrcp.pop %v1949
        %v1951 = vmul.f32 1.0, %v1950
        %v1952 = vld [vmem:[#allocation4] sm:$0xff]
        %v1953 = vmul.f32 %v1944, %v1952
        %v1954 = vmul.f32 %v1938, %v1945
        %v1955 = vadd.f32 %v1953, %v1954
        %v1956 = vtanh.pop %v1955
        %v1957 = vmul.f32 %v1951, %v1956
        %1958 = vst [vmem:[#allocation3] sm:$0xff] %v1957
        %1959 = vst [vmem:[#allocation4] sm:$0xff] %v1955
        %v1960 = vpack.c.bf16 %v1957, %v1957
        %s1961 = smul.addr %s1834, 4
        %s1962 = scalar_lea.vmem %s269, %s1961 [#allocation5]
        %1963 = vst [vmem:[%s1962] sm:$0xf] %v1960
        %v1964 = vld [vmem:[#allocation3] sm:$0xff]
        %1965 = vst [vmem:[%s299] sm:$0xff] %v1964
        %v1966 = vld [vmem:[#allocation4] sm:$0xff]
        %1967 = vst [vmem:[%s303] sm:$0xff] %v1966
        %s1968 = sand.u32 %s125, 1
        %s1969 = sand.u32 %s125, 1
        %s1970 = smul.addr %s1969, 32
        %s1971 = scalar_lea.vmem [#allocation5], %s1970
        %p1972 = scmp.lt.s32.totalorder %s18, 1
        %s1973 = scalar_select %p1972, %s18, 1
        %s1974 = smul.addr %s1973, 8
        %s1975 = scalar_lea.vmem %s5, %s1974
        %p1976 = scmp.lt.s32.totalorder %s18, 1
        %s1977 = scalar_select %p1976, %s18, 1
        %s1978 = smul.addr %s1977, 8
        %s1979 = scalar_lea.vmem %s6, %s1978
        // Predicated region
        $region37: #{nmt_forward.2} parent=35 // pred_check
          %p1980 = pneg %p135
        $region38: #{nmt_forward.2} parent=35 // pred_check_branch
          %1982 = sbr.rel (%p1980) target = $region40
        $region39: #{nmt_forward.2} parent=35 // pred_region
          %s1983 = smul.addr %s18, 4
          %s1984 = scalar_lea.vmem %s4, %s1983
          // Predicated region
          $region41: #{nmt_forward.2} parent=39 // pred_check
            _
          $region42: #{nmt_forward.2} parent=39 // pred_check_branch
            %1986 = sbr.rel (0) target = $region44
          $region43: #{nmt_forward.2} parent=39 // pred_region
            // Predicated region
            $region45: #{nmt_forward.2} parent=43 // pred_check
              _
            $region46: #{nmt_forward.2} parent=43 // pred_check_branch
              %1988 = sbr.rel target = $region48
            $region47: #{nmt_forward.2} parent=43 // pred_region
              // Predicated region
              $region60: #{nmt_forward.2} parent=47 // pred_check
                _
              $region61: #{nmt_forward.2} parent=47 // pred_check_branch
                %2017 = sbr.rel (0) target = $region63
              $region62: #{nmt_forward.2} parent=47 // pred_region
                loop: start=0, step=1, limit=1
                $region64: #{nmt_forward.2} parent=62 // loop_pre_header
                  _
                $region65: #{nmt_forward.2} parent=62 // loop_header
                  %s2019 = sphi 0, %s2023
                  %p2020 = scmp.ge.s32.totalorder %s2019, 1
                  %s2024 = sphi %s1971, %s1971
                  %s2025 = sphi %s1984, %s1984
                $region66: #{nmt_forward.2} parent=62 // loop_header_branch
                  %2022 = sbr.rel (%p2020) target = $region70
                $region67: #{nmt_forward.2} parent=62 // loop_body
                  _
                $region68: #{nmt_forward.2} parent=62 // loop_footer
                  %s2023 = sadd.s32 1, %s2019
                $region69: #{nmt_forward.2} parent=62 // loop_footer_branch
                  %2018 = sbr.rel target = $region65
                $region70: #{nmt_forward.2} parent=62 // loop_exit
                  _
                loop: start=0, step=1, limit=1
                $region71: #{nmt_forward.2} parent=62 // loop_pre_header
                  _
                $region72: #{nmt_forward.2} parent=62 // loop_header
                  %s2028 = sphi 0, %s2032
                  %p2029 = scmp.ge.s32.totalorder %s2028, 1
                  %s2033 = sphi %s1971, %s1971
                  %s2034 = sphi %s1984, %s1984
                $region73: #{nmt_forward.2} parent=62 // loop_header_branch
                  %2031 = sbr.rel (%p2029) target = $region77
                $region74: #{nmt_forward.2} parent=62 // loop_body
                  %v2035 = vld [vmem:[%s2033] sm:$0xf]
                  %2036 = vst [vmem:[%s2034] sm:$0xf] %v2035
                  %v2037 = vld [vmem:[%s2033 + $0x4] sm:$0xf]
                  %2038 = vst [vmem:[%s2034 + $0x8] sm:$0xf] %v2037
                  %v2039 = vld [vmem:[%s2033 + $0x8] sm:$0xf]
                  %2040 = vst [vmem:[%s2034 + $0x10] sm:$0xf] %v2039
                  %v2041 = vld [vmem:[%s2033 + $0xc] sm:$0xf]
                  %2042 = vst [vmem:[%s2034 + $0x18] sm:$0xf] %v2041
                  %v2043 = vld [vmem:[%s2033 + $0x10] sm:$0xf]
                  %2044 = vst [vmem:[%s2034 + $0x20] sm:$0xf] %v2043
                  %v2045 = vld [vmem:[%s2033 + $0x14] sm:$0xf]
                  %2046 = vst [vmem:[%s2034 + $0x28] sm:$0xf] %v2045
                  %v2047 = vld [vmem:[%s2033 + $0x18] sm:$0xf]
                  %2048 = vst [vmem:[%s2034 + $0x30] sm:$0xf] %v2047
                  %v2049 = vld [vmem:[%s2033 + $0x1c] sm:$0xf]
                  %2050 = vst [vmem:[%s2034 + $0x38] sm:$0xf] %v2049
                $region75: #{nmt_forward.2} parent=62 // loop_footer
                  %s2032 = sadd.s32 1, %s2028
                $region76: #{nmt_forward.2} parent=62 // loop_footer_branch
                  %2027 = sbr.rel target = $region72
                $region77: #{nmt_forward.2} parent=62 // loop_exit
                  _
              $region63: #{nmt_forward.2} parent=47 // pred_fallthru
                _
            $region48: #{nmt_forward.2} parent=43 // pred_fallthru
              _
            // Predicated region
            $region49: #{nmt_forward.2} parent=43 // pred_check
              _
            $region50: #{nmt_forward.2} parent=43 // pred_check_branch
              %1990 = sbr.rel (0) target = $region52
            $region51: #{nmt_forward.2} parent=43 // pred_region
              loop: start=0, step=1, limit=1
              $region53: #{nmt_forward.2} parent=51 // loop_pre_header
                _
              $region54: #{nmt_forward.2} parent=51 // loop_header
                %s1993 = sphi 0, %s1997
                %p1994 = scmp.ge.s32.totalorder %s1993, 1
                %s1998 = sphi %s1971, %s1971
                %s1999 = sphi %s1984, %s1984
              $region55: #{nmt_forward.2} parent=51 // loop_header_branch
                %1996 = sbr.rel (%p1994) target = $region59
              $region56: #{nmt_forward.2} parent=51 // loop_body
                %v2000 = vld [vmem:[%s1998] sm:$0xf]
                %2001 = vst [vmem:[%s1999] sm:$0xf] %v2000
                %v2002 = vld [vmem:[%s1998 + $0x4] sm:$0xf]
                %2003 = vst [vmem:[%s1999 + $0x8] sm:$0xf] %v2002
                %v2004 = vld [vmem:[%s1998 + $0x8] sm:$0xf]
                %2005 = vst [vmem:[%s1999 + $0x10] sm:$0xf] %v2004
                %v2006 = vld [vmem:[%s1998 + $0xc] sm:$0xf]
                %2007 = vst [vmem:[%s1999 + $0x18] sm:$0xf] %v2006
                %v2008 = vld [vmem:[%s1998 + $0x10] sm:$0xf]
                %2009 = vst [vmem:[%s1999 + $0x20] sm:$0xf] %v2008
                %v2010 = vld [vmem:[%s1998 + $0x14] sm:$0xf]
                %2011 = vst [vmem:[%s1999 + $0x28] sm:$0xf] %v2010
                %v2012 = vld [vmem:[%s1998 + $0x18] sm:$0xf]
                %2013 = vst [vmem:[%s1999 + $0x30] sm:$0xf] %v2012
                %v2014 = vld [vmem:[%s1998 + $0x1c] sm:$0xf]
                %2015 = vst [vmem:[%s1999 + $0x38] sm:$0xf] %v2014
              $region57: #{nmt_forward.2} parent=51 // loop_footer
                %s1997 = sadd.s32 1, %s1993
              $region58: #{nmt_forward.2} parent=51 // loop_footer_branch
                %1992 = sbr.rel target = $region54
              $region59: #{nmt_forward.2} parent=51 // loop_exit
                _
            $region52: #{nmt_forward.2} parent=43 // pred_fallthru
              _
          $region44: #{nmt_forward.2} parent=39 // pred_fallthru
            _
          %2051 = vnop
        $region40: #{nmt_forward.2} parent=35 // pred_fallthru
          _
        // Predicated region
        $region78: #{nmt_forward.2} parent=35 // pred_check
          %p2052 = pneg %p161
        $region79: #{nmt_forward.2} parent=35 // pred_check_branch
          %2054 = sbr.rel (%p2052) target = $region81
        $region80: #{nmt_forward.2} parent=35 // pred_region
          _
        $region81: #{nmt_forward.2} parent=35 // pred_fallthru
          _
        // Predicated region
        $region82: #{nmt_forward.2} parent=35 // pred_check
          %p2055 = pneg %p187
        $region83: #{nmt_forward.2} parent=35 // pred_check_branch
          %2057 = sbr.rel (%p2055) target = $region85
        $region84: #{nmt_forward.2} parent=35 // pred_region
          _
        $region85: #{nmt_forward.2} parent=35 // pred_fallthru
          _
      $region36: #{nmt_forward.2} parent=5 // pred_fallthru
        _
      %p2058 = scmp.le.s32.totalorder 2, %s13
      // Predicated region
      $region86: #{nmt_forward.2} parent=5 // pred_check
        %p2059 = pneg %p2058
      $region87: #{nmt_forward.2} parent=5 // pred_check_branch
        %2061 = sbr.rel (%p2059) target = $region89
      $region88: #{nmt_forward.2} parent=5 // pred_region
        %s2062 = ssub.s32 %s13, 2
        // Predicated region
        $region90: #{nmt_forward.2} parent=88 // pred_check
          %p2063 = pneg %p141
        $region91: #{nmt_forward.2} parent=88 // pred_check_branch
          %2065 = sbr.rel (%p2063) target = $region93
        $region92: #{nmt_forward.2} parent=88 // pred_region
          %s2066 = sand.u32 %s126, 1
          %s2067 = sand.u32 %s126, 1
          %s2068 = smul.addr %s2067, 32
          %s2069 = scalar_lea.vmem [#allocation5], %s2068
        $region93: #{nmt_forward.2} parent=88 // pred_fallthru
          _
        // Predicated region
        $region94: #{nmt_forward.2} parent=88 // pred_check
          %p2070 = pneg %p167
        $region95: #{nmt_forward.2} parent=88 // pred_check_branch
          %2072 = sbr.rel (%p2070) target = $region97
        $region96: #{nmt_forward.2} parent=88 // pred_region
          %p2073 = scmp.lt.s32.totalorder %s19, 1
          %s2074 = scalar_select %p2073, %s19, 1
          %s2075 = smul.addr %s2074, 8
          %s2076 = scalar_lea.vmem %s5, %s2075
        $region97: #{nmt_forward.2} parent=88 // pred_fallthru
          _
        // Predicated region
        $region98: #{nmt_forward.2} parent=88 // pred_check
          %p2077 = pneg %p193
        $region99: #{nmt_forward.2} parent=88 // pred_check_branch
          %2079 = sbr.rel (%p2077) target = $region101
        $region100: #{nmt_forward.2} parent=88 // pred_region
          %p2080 = scmp.lt.s32.totalorder %s19, 1
          %s2081 = scalar_select %p2080, %s19, 1
          %s2082 = smul.addr %s2081, 8
          %s2083 = scalar_lea.vmem %s6, %s2082
        $region101: #{nmt_forward.2} parent=88 // pred_fallthru
          _
      $region89: #{nmt_forward.2} parent=5 // pred_fallthru
        _
    $region6: #{nmt_forward.2} parent=1 // loop_footer
      %s17 = sadd.s32 1, %s13
    $region7: #{nmt_forward.2} parent=1 // loop_footer_branch
      %12 = sbr.rel target = $region3
    $region8: #{nmt_forward.2} parent=1 // loop_exit
      _

// kernel: nmt_forward.3
$region0: #{nmt_forward.3}
  #allocation0 [shape = 'u32[]', space=smem, size = 0x4, offset = 0x4, fixed_abs, tag = 'smem constant byte address 0x4 - core index']
  #allocation1 [shape = 'u32[144,128]{1,0:T(1,128)}', space=vmem, size = 0x12000, scoped, tag = 'internal scratch']
  #allocation2 [shape = 'f32[8,256]{1,0:T(8,128)}', space=vmem, size = 0x2000, scoped, tag = 'scratch operand']
  #allocation3 [shape = 'f32[8,256]{1,0:T(8,128)}', space=vmem, size = 0x2000, scoped, tag = 'scratch operand']
  %s0 = inlined_call_operand.vmem [shape: f32[8,256], index: 0, kind: input, shape index: {}]
  %s1 = inlined_call_operand.vmem [shape: f32[8,256], index: 1, kind: input, shape index: {}]
  %s2 = inlined_call_operand.vmem [shape: bf16[64,256], index: 2, kind: input, shape index: {}]
  %s3 = inlined_call_operand.vmem [shape: bf16[256,64], index: 3, kind: input, shape index: {}]
  %s4 = inlined_call_operand.vmem [shape: bf16[6,8,128], index: 4, kind: input, shape index: {}]
  %s5 = inlined_call_operand.vmem [shape: bf16[256,256], index: 5, kind: input, shape index: {}]
  %s6 = inlined_call_operand.vmem [shape: bf16[512,256], index: 6, kind: input, shape index: {}]
  %s7 = inlined_call_operand.vmem [shape: bf16[384,1024], index: 7, kind: input, shape index: {}]
  %s8 = inlined_call_operand.vmem [shape: bf16[256,1024], index: 8, kind: input, shape index: {}]
  %s9 = inlined_call_operand.vmem [shape: f32[1,1024], index: 9, kind: input, shape index: {}]
  %s10 = inlined_call_operand.vmem [shape: bf16[256,128], index: 10, kind: input, shape index: {}]
  %s11 = inlined_call_operand.vmem [shape: f32[1,128], index: 11, kind: input, shape index: {}]
  %s12 = inlined_call_operand.hbm [shape: f32[6,8,128], index: 12, kind: output, shape index: {}]
  %s13 = sld [smem:[#allocation0]]
  $region58: #{nmt_forward.3} parent=0
    _
  %s15 = ssub.s32 1, %s13
  %s16 = scalar_select 0, %s15, %s13
  $region1: #{nmt_forward.3} parent=0
    #allocation4 [shape = 'u8[24576]{0}', space=vmem, size = 0x6000, scoped, tag = 'output window, operand 0, single buffered']
    #allocation5 [shape = 's32[1]{0}', space=sflag, size = 0x4, scoped, tag = 'scoped memory for nmt_forward.3']
    %17 = vsyncpa [#allocation5], 0
    // Predicated region
    $region2: #{nmt_forward.3} parent=1 // pred_check
      _
    $region3: #{nmt_forward.3} parent=1 // pred_check_branch
      %19 = sbr.rel (0) target = $region5
    $region4: #{nmt_forward.3} parent=1 // pred_region
      _
    $region5: #{nmt_forward.3} parent=1 // pred_fallthru
      _
    // Predicated region
    $region6: #{nmt_forward.3} parent=1 // pred_check
      _
    $region7: #{nmt_forward.3} parent=1 // pred_check_branch
      %21 = sbr.rel (0) target = $region9
    $region8: #{nmt_forward.3} parent=1 // pred_region
      _
    $region9: #{nmt_forward.3} parent=1 // pred_fallthru
      _
    // Predicated region
    $region10: #{nmt_forward.3} parent=1 // pred_check
      _
    $region11: #{nmt_forward.3} parent=1 // pred_check_branch
      %23 = sbr.rel (0) target = $region13
    $region12: #{nmt_forward.3} parent=1 // pred_region
      _
    $region13: #{nmt_forward.3} parent=1 // pred_fallthru
      _
    // Predicated region
    $region14: #{nmt_forward.3} parent=1 // pred_check
      _
    $region15: #{nmt_forward.3} parent=1 // pred_check_branch
      %25 = sbr.rel (0) target = $region17
    $region16: #{nmt_forward.3} parent=1 // pred_region
      _
    $region17: #{nmt_forward.3} parent=1 // pred_fallthru
      _
    // Predicated region
    $region18: #{nmt_forward.3} parent=1 // pred_check
      _
    $region19: #{nmt_forward.3} parent=1 // pred_check_branch
      %27 = sbr.rel (0) target = $region21
    $region20: #{nmt_forward.3} parent=1 // pred_region
      _
    $region21: #{nmt_forward.3} parent=1 // pred_fallthru
      _
    // Predicated region
    $region22: #{nmt_forward.3} parent=1 // pred_check
      _
    $region23: #{nmt_forward.3} parent=1 // pred_check_branch
      %29 = sbr.rel (0) target = $region25
    $region24: #{nmt_forward.3} parent=1 // pred_region
      _
    $region25: #{nmt_forward.3} parent=1 // pred_fallthru
      _
    // Predicated region
    $region26: #{nmt_forward.3} parent=1 // pred_check
      _
    $region27: #{nmt_forward.3} parent=1 // pred_check_branch
      %31 = sbr.rel (0) target = $region29
    $region28: #{nmt_forward.3} parent=1 // pred_region
      _
    $region29: #{nmt_forward.3} parent=1 // pred_fallthru
      _
    // Predicated region
    $region30: #{nmt_forward.3} parent=1 // pred_check
      _
    $region31: #{nmt_forward.3} parent=1 // pred_check_branch
      %33 = sbr.rel (0) target = $region33
    $region32: #{nmt_forward.3} parent=1 // pred_region
      _
    $region33: #{nmt_forward.3} parent=1 // pred_fallthru
      _
    // Predicated region
    $region34: #{nmt_forward.3} parent=1 // pred_check
      _
    $region35: #{nmt_forward.3} parent=1 // pred_check_branch
      %35 = sbr.rel (0) target = $region37
    $region36: #{nmt_forward.3} parent=1 // pred_region
      _
    $region37: #{nmt_forward.3} parent=1 // pred_fallthru
      _
    // Predicated region
    $region38: #{nmt_forward.3} parent=1 // pred_check
      _
    $region39: #{nmt_forward.3} parent=1 // pred_check_branch
      %37 = sbr.rel (0) target = $region41
    $region40: #{nmt_forward.3} parent=1 // pred_region
      _
    $region41: #{nmt_forward.3} parent=1 // pred_fallthru
      _
    // Predicated region
    $region42: #{nmt_forward.3} parent=1 // pred_check
      _
    $region43: #{nmt_forward.3} parent=1 // pred_check_branch
      %39 = sbr.rel (0) target = $region45
    $region44: #{nmt_forward.3} parent=1 // pred_region
      _
    $region45: #{nmt_forward.3} parent=1 // pred_fallthru
      _
    // Predicated region
    $region46: #{nmt_forward.3} parent=1 // pred_check
      _
    $region47: #{nmt_forward.3} parent=1 // pred_check_branch
      %41 = sbr.rel (0) target = $region49
    $region48: #{nmt_forward.3} parent=1 // pred_region
      _
    $region49: #{nmt_forward.3} parent=1 // pred_fallthru
      _
    %v43 = vlaneseq
    %v44 = vand.u32 %v43, 127
    %vm45 = vcmp.eq.s32.totalorder %v44, 2
    %v46 = vsel %vm45, 10.0, -1.0
    %47 = vst [vmem:[#allocation4] sm:$0xff] %v46
    %v48 = vld [vmem:[%s0] sm:$0xff]
    %v49 = vld [vmem:[%s0 + $0x8] sm:$0xff]
    %50 = vst [vmem:[#allocation2] sm:$0xff] %v48
    %51 = vst [vmem:[#allocation2 + $0x8] sm:$0xff] %v49
    %v52 = vld [vmem:[%s1] sm:$0xff]
    %v53 = vld [vmem:[%s1 + $0x8] sm:$0xff]
    %54 = vst [vmem:[#allocation3] sm:$0xff] %v52
    %55 = vst [vmem:[#allocation3 + $0x8] sm:$0xff] %v53
    %v56 = vld [vmem:[%s2] sm:$0xff]
    %v57 = vld [vmem:[%s2 + $0x8] sm:$0xff]
    %v58 = vld [vmem:[%s2 + $0x10] sm:$0xff]
    %v59 = vld [vmem:[%s2 + $0x18] sm:$0xff]
    %v60 = vld [vmem:[%s2 + $0x20] sm:$0xff]
    %v61 = vld [vmem:[%s2 + $0x28] sm:$0xff]
    %v62 = vld [vmem:[%s2 + $0x30] sm:$0xff]
    %v63 = vld [vmem:[%s2 + $0x38] sm:$0xff]
    %v64 = vld [vmem:[%s3] sm:$0xf]
    %v65 = vld [vmem:[%s3 + $0x4] sm:$0xf]
    %v66 = vld [vmem:[%s3 + $0x8] sm:$0xf]
    %v67 = vld [vmem:[%s3 + $0xc] sm:$0xf]
    %v68 = vld [vmem:[%s3 + $0x10] sm:$0xf]
    %v69 = vld [vmem:[%s3 + $0x14] sm:$0xf]
    %v70 = vld [vmem:[%s3 + $0x18] sm:$0xf]
    %v71 = vld [vmem:[%s3 + $0x1c] sm:$0xf]
    %v72 = vld [vmem:[%s3 + $0x20] sm:$0xf]
    %v73 = vld [vmem:[%s3 + $0x24] sm:$0xf]
    %v74 = vld [vmem:[%s3 + $0x28] sm:$0xf]
    %v75 = vld [vmem:[%s3 + $0x2c] sm:$0xf]
    %v76 = vld [vmem:[%s3 + $0x30] sm:$0xf]
    %v77 = vld [vmem:[%s3 + $0x34] sm:$0xf]
    %v78 = vld [vmem:[%s3 + $0x38] sm:$0xf]
    %v79 = vld [vmem:[%s3 + $0x3c] sm:$0xf]
    %v80 = vld [vmem:[%s3 + $0x40] sm:$0xf]
    %v81 = vld [vmem:[%s3 + $0x44] sm:$0xf]
    %v82 = vld [vmem:[%s3 + $0x48] sm:$0xf]
    %v83 = vld [vmem:[%s3 + $0x4c] sm:$0xf]
    %v84 = vld [vmem:[%s3 + $0x50] sm:$0xf]
    %v85 = vld [vmem:[%s3 + $0x54] sm:$0xf]
    %v86 = vld [vmem:[%s3 + $0x58] sm:$0xf]
    %v87 = vld [vmem:[%s3 + $0x5c] sm:$0xf]
    %v88 = vld [vmem:[%s3 + $0x60] sm:$0xf]
    %v89 = vld [vmem:[%s3 + $0x64] sm:$0xf]
    %v90 = vld [vmem:[%s3 + $0x68] sm:$0xf]
    %v91 = vld [vmem:[%s3 + $0x6c] sm:$0xf]
    %v92 = vld [vmem:[%s3 + $0x70] sm:$0xf]
    %v93 = vld [vmem:[%s3 + $0x74] sm:$0xf]
    %v94 = vld [vmem:[%s3 + $0x78] sm:$0xf]
    %v95 = vld [vmem:[%s3 + $0x7c] sm:$0xf]
    %v96 = vld [vmem:[%s5] sm:$0xff]
    %v97 = vld [vmem:[%s5 + $0x8] sm:$0xff]
    %v98 = vld [vmem:[%s5 + $0x10] sm:$0xff]
    %v99 = vld [vmem:[%s5 + $0x18] sm:$0xff]
    %v100 = vld [vmem:[%s5 + $0x20] sm:$0xff]
    %v101 = vld [vmem:[%s5 + $0x28] sm:$0xff]
    %v102 = vld [vmem:[%s5 + $0x30] sm:$0xff]
    %v103 = vld [vmem:[%s5 + $0x38] sm:$0xff]
    %v104 = vld [vmem:[%s5 + $0x40] sm:$0xff]
    %v105 = vld [vmem:[%s5 + $0x48] sm:$0xff]
    %v106 = vld [vmem:[%s5 + $0x50] sm:$0xff]
    %v107 = vld [vmem:[%s5 + $0x58] sm:$0xff]
    %v108 = vld [vmem:[%s5 + $0x60] sm:$0xff]
    %v109 = vld [vmem:[%s5 + $0x68] sm:$0xff]
    %v110 = vld [vmem:[%s5 + $0x70] sm:$0xff]
    %v111 = vld [vmem:[%s5 + $0x78] sm:$0xff]
    %v112 = vld [vmem:[%s5 + $0x80] sm:$0xff]
    %v113 = vld [vmem:[%s5 + $0x88] sm:$0xff]
    %v114 = vld [vmem:[%s5 + $0x90] sm:$0xff]
    %v115 = vld [vmem:[%s5 + $0x98] sm:$0xff]
    %v116 = vld [vmem:[%s5 + $0xa0] sm:$0xff]
    %v117 = vld [vmem:[%s5 + $0xa8] sm:$0xff]
    %v118 = vld [vmem:[%s5 + $0xb0] sm:$0xff]
    %v119 = vld [vmem:[%s5 + $0xb8] sm:$0xff]
    %v120 = vld [vmem:[%s5 + $0xc0] sm:$0xff]
    %v121 = vld [vmem:[%s5 + $0xc8] sm:$0xff]
    %v122 = vld [vmem:[%s5 + $0xd0] sm:$0xff]
    %v123 = vld [vmem:[%s5 + $0xd8] sm:$0xff]
    %v124 = vld [vmem:[%s5 + $0xe0] sm:$0xff]
    %v125 = vld [vmem:[%s5 + $0xe8] sm:$0xff]
    %v126 = vld [vmem:[%s5 + $0xf0] sm:$0xff]
    %v127 = vld [vmem:[%s5 + $0xf8] sm:$0xff]
    %v128 = vld [vmem:[%s6] sm:$0xff]
    %v129 = vld [vmem:[%s6 + $0x8] sm:$0xff]
    %v130 = vld [vmem:[%s6 + $0x10] sm:$0xff]
    %v131 = vld [vmem:[%s6 + $0x18] sm:$0xff]
    %v132 = vld [vmem:[%s6 + $0x20] sm:$0xff]
    %v133 = vld [vmem:[%s6 + $0x28] sm:$0xff]
    %v134 = vld [vmem:[%s6 + $0x30] sm:$0xff]
    %v135 = vld [vmem:[%s6 + $0x38] sm:$0xff]
    %v136 = vld [vmem:[%s6 + $0x40] sm:$0xff]
    %v137 = vld [vmem:[%s6 + $0x48] sm:$0xff]
    %v138 = vld [vmem:[%s6 + $0x50] sm:$0xff]
    %v139 = vld [vmem:[%s6 + $0x58] sm:$0xff]
    %v140 = vld [vmem:[%s6 + $0x60] sm:$0xff]
    %v141 = vld [vmem:[%s6 + $0x68] sm:$0xff]
    %v142 = vld [vmem:[%s6 + $0x70] sm:$0xff]
    %v143 = vld [vmem:[%s6 + $0x78] sm:$0xff]
    %v144 = vld [vmem:[%s6 + $0x80] sm:$0xff]
    %v145 = vld [vmem:[%s6 + $0x88] sm:$0xff]
    %v146 = vld [vmem:[%s6 + $0x90] sm:$0xff]
    %v147 = vld [vmem:[%s6 + $0x98] sm:$0xff]
    %v148 = vld [vmem:[%s6 + $0xa0] sm:$0xff]
    %v149 = vld [vmem:[%s6 + $0xa8] sm:$0xff]
    %v150 = vld [vmem:[%s6 + $0xb0] sm:$0xff]
    %v151 = vld [vmem:[%s6 + $0xb8] sm:$0xff]
    %v152 = vld [vmem:[%s6 + $0xc0] sm:$0xff]
    %v153 = vld [vmem:[%s6 + $0xc8] sm:$0xff]
    %v154 = vld [vmem:[%s6 + $0xd0] sm:$0xff]
    %v155 = vld [vmem:[%s6 + $0xd8] sm:$0xff]
    %v156 = vld [vmem:[%s6 + $0xe0] sm:$0xff]
    %v157 = vld [vmem:[%s6 + $0xe8] sm:$0xff]
    %v158 = vld [vmem:[%s6 + $0xf0] sm:$0xff]
    %v159 = vld [vmem:[%s6 + $0xf8] sm:$0xff]
    %v160 = vld [vmem:[%s6 + $0x100] sm:$0xff]
    %v161 = vld [vmem:[%s6 + $0x108] sm:$0xff]
    %v162 = vld [vmem:[%s6 + $0x110] sm:$0xff]
    %v163 = vld [vmem:[%s6 + $0x118] sm:$0xff]
    %v164 = vld [vmem:[%s6 + $0x120] sm:$0xff]
    %v165 = vld [vmem:[%s6 + $0x128] sm:$0xff]
    %v166 = vld [vmem:[%s6 + $0x130] sm:$0xff]
    %v167 = vld [vmem:[%s6 + $0x138] sm:$0xff]
    %v168 = vld [vmem:[%s6 + $0x140] sm:$0xff]
    %v169 = vld [vmem:[%s6 + $0x148] sm:$0xff]
    %v170 = vld [vmem:[%s6 + $0x150] sm:$0xff]
    %v171 = vld [vmem:[%s6 + $0x158] sm:$0xff]
    %v172 = vld [vmem:[%s6 + $0x160] sm:$0xff]
    %v173 = vld [vmem:[%s6 + $0x168] sm:$0xff]
    %v174 = vld [vmem:[%s6 + $0x170] sm:$0xff]
    %v175 = vld [vmem:[%s6 + $0x178] sm:$0xff]
    %v176 = vld [vmem:[%s6 + $0x180] sm:$0xff]
    %v177 = vld [vmem:[%s6 + $0x188] sm:$0xff]
    %v178 = vld [vmem:[%s6 + $0x190] sm:$0xff]
    %v179 = vld [vmem:[%s6 + $0x198] sm:$0xff]
    %v180 = vld [vmem:[%s6 + $0x1a0] sm:$0xff]
    %v181 = vld [vmem:[%s6 + $0x1a8] sm:$0xff]
    %v182 = vld [vmem:[%s6 + $0x1b0] sm:$0xff]
    %v183 = vld [vmem:[%s6 + $0x1b8] sm:$0xff]
    %v184 = vld [vmem:[%s6 + $0x1c0] sm:$0xff]
    %v185 = vld [vmem:[%s6 + $0x1c8] sm:$0xff]
    %v186 = vld [vmem:[%s6 + $0x1d0] sm:$0xff]
    %v187 = vld [vmem:[%s6 + $0x1d8] sm:$0xff]
    %v188 = vld [vmem:[%s6 + $0x1e0] sm:$0xff]
    %v189 = vld [vmem:[%s6 + $0x1e8] sm:$0xff]
    %v190 = vld [vmem:[%s6 + $0x1f0] sm:$0xff]
    %v191 = vld [vmem:[%s6 + $0x1f8] sm:$0xff]
    %v192 = vld [vmem:[%s7] sm:$0xff]
    %v193 = vld [vmem:[%s7 + $0x8] sm:$0xff]
    %v194 = vld [vmem:[%s7 + $0x10] sm:$0xff]
    %v195 = vld [vmem:[%s7 + $0x18] sm:$0xff]
    %v196 = vld [vmem:[%s7 + $0x20] sm:$0xff]
    %v197 = vld [vmem:[%s7 + $0x28] sm:$0xff]
    %v198 = vld [vmem:[%s7 + $0x30] sm:$0xff]
    %v199 = vld [vmem:[%s7 + $0x38] sm:$0xff]
    %v200 = vld [vmem:[%s7 + $0x40] sm:$0xff]
    %v201 = vld [vmem:[%s7 + $0x48] sm:$0xff]
    %v202 = vld [vmem:[%s7 + $0x50] sm:$0xff]
    %v203 = vld [vmem:[%s7 + $0x58] sm:$0xff]
    %v204 = vld [vmem:[%s7 + $0x60] sm:$0xff]
    %v205 = vld [vmem:[%s7 + $0x68] sm:$0xff]
    %v206 = vld [vmem:[%s7 + $0x70] sm:$0xff]
    %v207 = vld [vmem:[%s7 + $0x78] sm:$0xff]
    %v208 = vld [vmem:[%s7 + $0x80] sm:$0xff]
    %v209 = vld [vmem:[%s7 + $0x88] sm:$0xff]
    %v210 = vld [vmem:[%s7 + $0x90] sm:$0xff]
    %v211 = vld [vmem:[%s7 + $0x98] sm:$0xff]
    %v212 = vld [vmem:[%s7 + $0xa0] sm:$0xff]
    %v213 = vld [vmem:[%s7 + $0xa8] sm:$0xff]
    %v214 = vld [vmem:[%s7 + $0xb0] sm:$0xff]
    %v215 = vld [vmem:[%s7 + $0xb8] sm:$0xff]
    %v216 = vld [vmem:[%s7 + $0xc0] sm:$0xff]
    %v217 = vld [vmem:[%s7 + $0xc8] sm:$0xff]
    %v218 = vld [vmem:[%s7 + $0xd0] sm:$0xff]
    %v219 = vld [vmem:[%s7 + $0xd8] sm:$0xff]
    %v220 = vld [vmem:[%s7 + $0xe0] sm:$0xff]
    %v221 = vld [vmem:[%s7 + $0xe8] sm:$0xff]
    %v222 = vld [vmem:[%s7 + $0xf0] sm:$0xff]
    %v223 = vld [vmem:[%s7 + $0xf8] sm:$0xff]
    %v224 = vld [vmem:[%s7 + $0x100] sm:$0xff]
    %v225 = vld [vmem:[%s7 + $0x108] sm:$0xff]
    %v226 = vld [vmem:[%s7 + $0x110] sm:$0xff]
    %v227 = vld [vmem:[%s7 + $0x118] sm:$0xff]
    %v228 = vld [vmem:[%s7 + $0x120] sm:$0xff]
    %v229 = vld [vmem:[%s7 + $0x128] sm:$0xff]
    %v230 = vld [vmem:[%s7 + $0x130] sm:$0xff]
    %v231 = vld [vmem:[%s7 + $0x138] sm:$0xff]
    %v232 = vld [vmem:[%s7 + $0x140] sm:$0xff]
    %v233 = vld [vmem:[%s7 + $0x148] sm:$0xff]
    %v234 = vld [vmem:[%s7 + $0x150] sm:$0xff]
    %v235 = vld [vmem:[%s7 + $0x158] sm:$0xff]
    %v236 = vld [vmem:[%s7 + $0x160] sm:$0xff]
    %v237 = vld [vmem:[%s7 + $0x168] sm:$0xff]
    %v238 = vld [vmem:[%s7 + $0x170] sm:$0xff]
    %v239 = vld [vmem:[%s7 + $0x178] sm:$0xff]
    %v240 = vld [vmem:[%s7 + $0x180] sm:$0xff]
    %v241 = vld [vmem:[%s7 + $0x188] sm:$0xff]
    %v242 = vld [vmem:[%s7 + $0x190] sm:$0xff]
    %v243 = vld [vmem:[%s7 + $0x198] sm:$0xff]
    %v244 = vld [vmem:[%s7 + $0x1a0] sm:$0xff]
    %v245 = vld [vmem:[%s7 + $0x1a8] sm:$0xff]
    %v246 = vld [vmem:[%s7 + $0x1b0] sm:$0xff]
    %v247 = vld [vmem:[%s7 + $0x1b8] sm:$0xff]
    %v248 = vld [vmem:[%s7 + $0x1c0] sm:$0xff]
    %v249 = vld [vmem:[%s7 + $0x1c8] sm:$0xff]
    %v250 = vld [vmem:[%s7 + $0x1d0] sm:$0xff]
    %v251 = vld [vmem:[%s7 + $0x1d8] sm:$0xff]
    %v252 = vld [vmem:[%s7 + $0x1e0] sm:$0xff]
    %v253 = vld [vmem:[%s7 + $0x1e8] sm:$0xff]
    %v254 = vld [vmem:[%s7 + $0x1f0] sm:$0xff]
    %v255 = vld [vmem:[%s7 + $0x1f8] sm:$0xff]
    %v256 = vld [vmem:[%s7 + $0x200] sm:$0xff]
    %v257 = vld [vmem:[%s7 + $0x208] sm:$0xff]
    %v258 = vld [vmem:[%s7 + $0x210] sm:$0xff]
    %v259 = vld [vmem:[%s7 + $0x218] sm:$0xff]
    %v260 = vld [vmem:[%s7 + $0x220] sm:$0xff]
    %v261 = vld [vmem:[%s7 + $0x228] sm:$0xff]
    %v262 = vld [vmem:[%s7 + $0x230] sm:$0xff]
    %v263 = vld [vmem:[%s7 + $0x238] sm:$0xff]
    %v264 = vld [vmem:[%s7 + $0x240] sm:$0xff]
    %v265 = vld [vmem:[%s7 + $0x248] sm:$0xff]
    %v266 = vld [vmem:[%s7 + $0x250] sm:$0xff]
    %v267 = vld [vmem:[%s7 + $0x258] sm:$0xff]
    %v268 = vld [vmem:[%s7 + $0x260] sm:$0xff]
    %v269 = vld [vmem:[%s7 + $0x268] sm:$0xff]
    %v270 = vld [vmem:[%s7 + $0x270] sm:$0xff]
    %v271 = vld [vmem:[%s7 + $0x278] sm:$0xff]
    %v272 = vld [vmem:[%s7 + $0x280] sm:$0xff]
    %v273 = vld [vmem:[%s7 + $0x288] sm:$0xff]
    %v274 = vld [vmem:[%s7 + $0x290] sm:$0xff]
    %v275 = vld [vmem:[%s7 + $0x298] sm:$0xff]
    %v276 = vld [vmem:[%s7 + $0x2a0] sm:$0xff]
    %v277 = vld [vmem:[%s7 + $0x2a8] sm:$0xff]
    %v278 = vld [vmem:[%s7 + $0x2b0] sm:$0xff]
    %v279 = vld [vmem:[%s7 + $0x2b8] sm:$0xff]
    %v280 = vld [vmem:[%s7 + $0x2c0] sm:$0xff]
    %v281 = vld [vmem:[%s7 + $0x2c8] sm:$0xff]
    %v282 = vld [vmem:[%s7 + $0x2d0] sm:$0xff]
    %v283 = vld [vmem:[%s7 + $0x2d8] sm:$0xff]
    %v284 = vld [vmem:[%s7 + $0x2e0] sm:$0xff]
    %v285 = vld [vmem:[%s7 + $0x2e8] sm:$0xff]
    %v286 = vld [vmem:[%s7 + $0x2f0] sm:$0xff]
    %v287 = vld [vmem:[%s7 + $0x2f8] sm:$0xff]
    %v288 = vld [vmem:[%s7 + $0x300] sm:$0xff]
    %v289 = vld [vmem:[%s7 + $0x308] sm:$0xff]
    %v290 = vld [vmem:[%s7 + $0x310] sm:$0xff]
    %v291 = vld [vmem:[%s7 + $0x318] sm:$0xff]
    %v292 = vld [vmem:[%s7 + $0x320] sm:$0xff]
    %v293 = vld [vmem:[%s7 + $0x328] sm:$0xff]
    %v294 = vld [vmem:[%s7 + $0x330] sm:$0xff]
    %v295 = vld [vmem:[%s7 + $0x338] sm:$0xff]
    %v296 = vld [vmem:[%s7 + $0x340] sm:$0xff]
    %v297 = vld [vmem:[%s7 + $0x348] sm:$0xff]
    %v298 = vld [vmem:[%s7 + $0x350] sm:$0xff]
    %v299 = vld [vmem:[%s7 + $0x358] sm:$0xff]
    %v300 = vld [vmem:[%s7 + $0x360] sm:$0xff]
    %v301 = vld [vmem:[%s7 + $0x368] sm:$0xff]
    %v302 = vld [vmem:[%s7 + $0x370] sm:$0xff]
    %v303 = vld [vmem:[%s7 + $0x378] sm:$0xff]
    %v304 = vld [vmem:[%s7 + $0x380] sm:$0xff]
    %v305 = vld [vmem:[%s7 + $0x388] sm:$0xff]
    %v306 = vld [vmem:[%s7 + $0x390] sm:$0xff]
    %v307 = vld [vmem:[%s7 + $0x398] sm:$0xff]
    %v308 = vld [vmem:[%s7 + $0x3a0] sm:$0xff]
    %v309 = vld [vmem:[%s7 + $0x3a8] sm:$0xff]
    %v310 = vld [vmem:[%s7 + $0x3b0] sm:$0xff]
    %v311 = vld [vmem:[%s7 + $0x3b8] sm:$0xff]
    %v312 = vld [vmem:[%s7 + $0x3c0] sm:$0xff]
    %v313 = vld [vmem:[%s7 + $0x3c8] sm:$0xff]
    %v314 = vld [vmem:[%s7 + $0x3d0] sm:$0xff]
    %v315 = vld [vmem:[%s7 + $0x3d8] sm:$0xff]
    %v316 = vld [vmem:[%s7 + $0x3e0] sm:$0xff]
    %v317 = vld [vmem:[%s7 + $0x3e8] sm:$0xff]
    %v318 = vld [vmem:[%s7 + $0x3f0] sm:$0xff]
    %v319 = vld [vmem:[%s7 + $0x3f8] sm:$0xff]
    %v320 = vld [vmem:[%s7 + $0x400] sm:$0xff]
    %v321 = vld [vmem:[%s7 + $0x408] sm:$0xff]
    %v322 = vld [vmem:[%s7 + $0x410] sm:$0xff]
    %v323 = vld [vmem:[%s7 + $0x418] sm:$0xff]
    %v324 = vld [vmem:[%s7 + $0x420] sm:$0xff]
    %v325 = vld [vmem:[%s7 + $0x428] sm:$0xff]
    %v326 = vld [vmem:[%s7 + $0x430] sm:$0xff]
    %v327 = vld [vmem:[%s7 + $0x438] sm:$0xff]
    %v328 = vld [vmem:[%s7 + $0x440] sm:$0xff]
    %v329 = vld [vmem:[%s7 + $0x448] sm:$0xff]
    %v330 = vld [vmem:[%s7 + $0x450] sm:$0xff]
    %v331 = vld [vmem:[%s7 + $0x458] sm:$0xff]
    %v332 = vld [vmem:[%s7 + $0x460] sm:$0xff]
    %v333 = vld [vmem:[%s7 + $0x468] sm:$0xff]
    %v334 = vld [vmem:[%s7 + $0x470] sm:$0xff]
    %v335 = vld [vmem:[%s7 + $0x478] sm:$0xff]
    %v336 = vld [vmem:[%s7 + $0x480] sm:$0xff]
    %v337 = vld [vmem:[%s7 + $0x488] sm:$0xff]
    %v338 = vld [vmem:[%s7 + $0x490] sm:$0xff]
    %v339 = vld [vmem:[%s7 + $0x498] sm:$0xff]
    %v340 = vld [vmem:[%s7 + $0x4a0] sm:$0xff]
    %v341 = vld [vmem:[%s7 + $0x4a8] sm:$0xff]
    %v342 = vld [vmem:[%s7 + $0x4b0] sm:$0xff]
    %v343 = vld [vmem:[%s7 + $0x4b8] sm:$0xff]
    %v344 = vld [vmem:[%s7 + $0x4c0] sm:$0xff]
    %v345 = vld [vmem:[%s7 + $0x4c8] sm:$0xff]
    %v346 = vld [vmem:[%s7 + $0x4d0] sm:$0xff]
    %v347 = vld [vmem:[%s7 + $0x4d8] sm:$0xff]
    %v348 = vld [vmem:[%s7 + $0x4e0] sm:$0xff]
    %v349 = vld [vmem:[%s7 + $0x4e8] sm:$0xff]
    %v350 = vld [vmem:[%s7 + $0x4f0] sm:$0xff]
    %v351 = vld [vmem:[%s7 + $0x4f8] sm:$0xff]
    %v352 = vld [vmem:[%s7 + $0x500] sm:$0xff]
    %v353 = vld [vmem:[%s7 + $0x508] sm:$0xff]
    %v354 = vld [vmem:[%s7 + $0x510] sm:$0xff]
    %v355 = vld [vmem:[%s7 + $0x518] sm:$0xff]
    %v356 = vld [vmem:[%s7 + $0x520] sm:$0xff]
    %v357 = vld [vmem:[%s7 + $0x528] sm:$0xff]
    %v358 = vld [vmem:[%s7 + $0x530] sm:$0xff]
    %v359 = vld [vmem:[%s7 + $0x538] sm:$0xff]
    %v360 = vld [vmem:[%s7 + $0x540] sm:$0xff]
    %v361 = vld [vmem:[%s7 + $0x548] sm:$0xff]
    %v362 = vld [vmem:[%s7 + $0x550] sm:$0xff]
    %v363 = vld [vmem:[%s7 + $0x558] sm:$0xff]
    %v364 = vld [vmem:[%s7 + $0x560] sm:$0xff]
    %v365 = vld [vmem:[%s7 + $0x568] sm:$0xff]
    %v366 = vld [vmem:[%s7 + $0x570] sm:$0xff]
    %v367 = vld [vmem:[%s7 + $0x578] sm:$0xff]
    %v368 = vld [vmem:[%s7 + $0x580] sm:$0xff]
    %v369 = vld [vmem:[%s7 + $0x588] sm:$0xff]
    %v370 = vld [vmem:[%s7 + $0x590] sm:$0xff]
    %v371 = vld [vmem:[%s7 + $0x598] sm:$0xff]
    %v372 = vld [vmem:[%s7 + $0x5a0] sm:$0xff]
    %v373 = vld [vmem:[%s7 + $0x5a8] sm:$0xff]
    %v374 = vld [vmem:[%s7 + $0x5b0] sm:$0xff]
    %v375 = vld [vmem:[%s7 + $0x5b8] sm:$0xff]
    %v376 = vld [vmem:[%s7 + $0x5c0] sm:$0xff]
    %v377 = vld [vmem:[%s7 + $0x5c8] sm:$0xff]
    %v378 = vld [vmem:[%s7 + $0x5d0] sm:$0xff]
    %v379 = vld [vmem:[%s7 + $0x5d8] sm:$0xff]
    %v380 = vld [vmem:[%s7 + $0x5e0] sm:$0xff]
    %v381 = vld [vmem:[%s7 + $0x5e8] sm:$0xff]
    %v382 = vld [vmem:[%s7 + $0x5f0] sm:$0xff]
    %v383 = vld [vmem:[%s7 + $0x5f8] sm:$0xff]
    %v384 = vld [vmem:[%s8] sm:$0xff]
    %v385 = vld [vmem:[%s8 + $0x8] sm:$0xff]
    %v386 = vld [vmem:[%s8 + $0x10] sm:$0xff]
    %v387 = vld [vmem:[%s8 + $0x18] sm:$0xff]
    %v388 = vld [vmem:[%s8 + $0x20] sm:$0xff]
    %v389 = vld [vmem:[%s8 + $0x28] sm:$0xff]
    %v390 = vld [vmem:[%s8 + $0x30] sm:$0xff]
    %v391 = vld [vmem:[%s8 + $0x38] sm:$0xff]
    %v392 = vld [vmem:[%s8 + $0x40] sm:$0xff]
    %v393 = vld [vmem:[%s8 + $0x48] sm:$0xff]
    %v394 = vld [vmem:[%s8 + $0x50] sm:$0xff]
    %v395 = vld [vmem:[%s8 + $0x58] sm:$0xff]
    %v396 = vld [vmem:[%s8 + $0x60] sm:$0xff]
    %v397 = vld [vmem:[%s8 + $0x68] sm:$0xff]
    %v398 = vld [vmem:[%s8 + $0x70] sm:$0xff]
    %v399 = vld [vmem:[%s8 + $0x78] sm:$0xff]
    %v400 = vld [vmem:[%s8 + $0x80] sm:$0xff]
    %v401 = vld [vmem:[%s8 + $0x88] sm:$0xff]
    %v402 = vld [vmem:[%s8 + $0x90] sm:$0xff]
    %v403 = vld [vmem:[%s8 + $0x98] sm:$0xff]
    %v404 = vld [vmem:[%s8 + $0xa0] sm:$0xff]
    %v405 = vld [vmem:[%s8 + $0xa8] sm:$0xff]
    %v406 = vld [vmem:[%s8 + $0xb0] sm:$0xff]
    %v407 = vld [vmem:[%s8 + $0xb8] sm:$0xff]
    %v408 = vld [vmem:[%s8 + $0xc0] sm:$0xff]
    %v409 = vld [vmem:[%s8 + $0xc8] sm:$0xff]
    %v410 = vld [vmem:[%s8 + $0xd0] sm:$0xff]
    %v411 = vld [vmem:[%s8 + $0xd8] sm:$0xff]
    %v412 = vld [vmem:[%s8 + $0xe0] sm:$0xff]
    %v413 = vld [vmem:[%s8 + $0xe8] sm:$0xff]
    %v414 = vld [vmem:[%s8 + $0xf0] sm:$0xff]
    %v415 = vld [vmem:[%s8 + $0xf8] sm:$0xff]
    %v416 = vld [vmem:[%s8 + $0x100] sm:$0xff]
    %v417 = vld [vmem:[%s8 + $0x108] sm:$0xff]
    %v418 = vld [vmem:[%s8 + $0x110] sm:$0xff]
    %v419 = vld [vmem:[%s8 + $0x118] sm:$0xff]
    %v420 = vld [vmem:[%s8 + $0x120] sm:$0xff]
    %v421 = vld [vmem:[%s8 + $0x128] sm:$0xff]
    %v422 = vld [vmem:[%s8 + $0x130] sm:$0xff]
    %v423 = vld [vmem:[%s8 + $0x138] sm:$0xff]
    %v424 = vld [vmem:[%s8 + $0x140] sm:$0xff]
    %v425 = vld [vmem:[%s8 + $0x148] sm:$0xff]
    %v426 = vld [vmem:[%s8 + $0x150] sm:$0xff]
    %v427 = vld [vmem:[%s8 + $0x158] sm:$0xff]
    %v428 = vld [vmem:[%s8 + $0x160] sm:$0xff]
    %v429 = vld [vmem:[%s8 + $0x168] sm:$0xff]
    %v430 = vld [vmem:[%s8 + $0x170] sm:$0xff]
    %v431 = vld [vmem:[%s8 + $0x178] sm:$0xff]
    %v432 = vld [vmem:[%s8 + $0x180] sm:$0xff]
    %v433 = vld [vmem:[%s8 + $0x188] sm:$0xff]
    %v434 = vld [vmem:[%s8 + $0x190] sm:$0xff]
    %v435 = vld [vmem:[%s8 + $0x198] sm:$0xff]
    %v436 = vld [vmem:[%s8 + $0x1a0] sm:$0xff]
    %v437 = vld [vmem:[%s8 + $0x1a8] sm:$0xff]
    %v438 = vld [vmem:[%s8 + $0x1b0] sm:$0xff]
    %v439 = vld [vmem:[%s8 + $0x1b8] sm:$0xff]
    %v440 = vld [vmem:[%s8 + $0x1c0] sm:$0xff]
    %v441 = vld [vmem:[%s8 + $0x1c8] sm:$0xff]
    %v442 = vld [vmem:[%s8 + $0x1d0] sm:$0xff]
    %v443 = vld [vmem:[%s8 + $0x1d8] sm:$0xff]
    %v444 = vld [vmem:[%s8 + $0x1e0] sm:$0xff]
    %v445 = vld [vmem:[%s8 + $0x1e8] sm:$0xff]
    %v446 = vld [vmem:[%s8 + $0x1f0] sm:$0xff]
    %v447 = vld [vmem:[%s8 + $0x1f8] sm:$0xff]
    %v448 = vld [vmem:[%s8 + $0x200] sm:$0xff]
    %v449 = vld [vmem:[%s8 + $0x208] sm:$0xff]
    %v450 = vld [vmem:[%s8 + $0x210] sm:$0xff]
    %v451 = vld [vmem:[%s8 + $0x218] sm:$0xff]
    %v452 = vld [vmem:[%s8 + $0x220] sm:$0xff]
    %v453 = vld [vmem:[%s8 + $0x228] sm:$0xff]
    %v454 = vld [vmem:[%s8 + $0x230] sm:$0xff]
    %v455 = vld [vmem:[%s8 + $0x238] sm:$0xff]
    %v456 = vld [vmem:[%s8 + $0x240] sm:$0xff]
    %v457 = vld [vmem:[%s8 + $0x248] sm:$0xff]
    %v458 = vld [vmem:[%s8 + $0x250] sm:$0xff]
    %v459 = vld [vmem:[%s8 + $0x258] sm:$0xff]
    %v460 = vld [vmem:[%s8 + $0x260] sm:$0xff]
    %v461 = vld [vmem:[%s8 + $0x268] sm:$0xff]
    %v462 = vld [vmem:[%s8 + $0x270] sm:$0xff]
    %v463 = vld [vmem:[%s8 + $0x278] sm:$0xff]
    %v464 = vld [vmem:[%s8 + $0x280] sm:$0xff]
    %v465 = vld [vmem:[%s8 + $0x288] sm:$0xff]
    %v466 = vld [vmem:[%s8 + $0x290] sm:$0xff]
    %v467 = vld [vmem:[%s8 + $0x298] sm:$0xff]
    %v468 = vld [vmem:[%s8 + $0x2a0] sm:$0xff]
    %v469 = vld [vmem:[%s8 + $0x2a8] sm:$0xff]
    %v470 = vld [vmem:[%s8 + $0x2b0] sm:$0xff]
    %v471 = vld [vmem:[%s8 + $0x2b8] sm:$0xff]
    %v472 = vld [vmem:[%s8 + $0x2c0] sm:$0xff]
    %v473 = vld [vmem:[%s8 + $0x2c8] sm:$0xff]
    %v474 = vld [vmem:[%s8 + $0x2d0] sm:$0xff]
    %v475 = vld [vmem:[%s8 + $0x2d8] sm:$0xff]
    %v476 = vld [vmem:[%s8 + $0x2e0] sm:$0xff]
    %v477 = vld [vmem:[%s8 + $0x2e8] sm:$0xff]
    %v478 = vld [vmem:[%s8 + $0x2f0] sm:$0xff]
    %v479 = vld [vmem:[%s8 + $0x2f8] sm:$0xff]
    %v480 = vld [vmem:[%s8 + $0x300] sm:$0xff]
    %v481 = vld [vmem:[%s8 + $0x308] sm:$0xff]
    %v482 = vld [vmem:[%s8 + $0x310] sm:$0xff]
    %v483 = vld [vmem:[%s8 + $0x318] sm:$0xff]
    %v484 = vld [vmem:[%s8 + $0x320] sm:$0xff]
    %v485 = vld [vmem:[%s8 + $0x328] sm:$0xff]
    %v486 = vld [vmem:[%s8 + $0x330] sm:$0xff]
    %v487 = vld [vmem:[%s8 + $0x338] sm:$0xff]
    %v488 = vld [vmem:[%s8 + $0x340] sm:$0xff]
    %v489 = vld [vmem:[%s8 + $0x348] sm:$0xff]
    %v490 = vld [vmem:[%s8 + $0x350] sm:$0xff]
    %v491 = vld [vmem:[%s8 + $0x358] sm:$0xff]
    %v492 = vld [vmem:[%s8 + $0x360] sm:$0xff]
    %v493 = vld [vmem:[%s8 + $0x368] sm:$0xff]
    %v494 = vld [vmem:[%s8 + $0x370] sm:$0xff]
    %v495 = vld [vmem:[%s8 + $0x378] sm:$0xff]
    %v496 = vld [vmem:[%s8 + $0x380] sm:$0xff]
    %v497 = vld [vmem:[%s8 + $0x388] sm:$0xff]
    %v498 = vld [vmem:[%s8 + $0x390] sm:$0xff]
    %v499 = vld [vmem:[%s8 + $0x398] sm:$0xff]
    %v500 = vld [vmem:[%s8 + $0x3a0] sm:$0xff]
    %v501 = vld [vmem:[%s8 + $0x3a8] sm:$0xff]
    %v502 = vld [vmem:[%s8 + $0x3b0] sm:$0xff]
    %v503 = vld [vmem:[%s8 + $0x3b8] sm:$0xff]
    %v504 = vld [vmem:[%s8 + $0x3c0] sm:$0xff]
    %v505 = vld [vmem:[%s8 + $0x3c8] sm:$0xff]
    %v506 = vld [vmem:[%s8 + $0x3d0] sm:$0xff]
    %v507 = vld [vmem:[%s8 + $0x3d8] sm:$0xff]
    %v508 = vld [vmem:[%s8 + $0x3e0] sm:$0xff]
    %v509 = vld [vmem:[%s8 + $0x3e8] sm:$0xff]
    %v510 = vld [vmem:[%s8 + $0x3f0] sm:$0xff]
    %v511 = vld [vmem:[%s8 + $0x3f8] sm:$0xff]
    %v512 = vld [vmem:[%s9] sm:$0xff]
    %v513 = vld [vmem:[%s10] sm:$0xf]
    %v514 = vld [vmem:[%s10 + $0x4] sm:$0xf]
    %v515 = vld [vmem:[%s10 + $0x8] sm:$0xf]
    %v516 = vld [vmem:[%s10 + $0xc] sm:$0xf]
    %v517 = vld [vmem:[%s10 + $0x10] sm:$0xf]
    %v518 = vld [vmem:[%s10 + $0x14] sm:$0xf]
    %v519 = vld [vmem:[%s10 + $0x18] sm:$0xf]
    %v520 = vld [vmem:[%s10 + $0x1c] sm:$0xf]
    %v521 = vld [vmem:[%s10 + $0x20] sm:$0xf]
    %v522 = vld [vmem:[%s10 + $0x24] sm:$0xf]
    %v523 = vld [vmem:[%s10 + $0x28] sm:$0xf]
    %v524 = vld [vmem:[%s10 + $0x2c] sm:$0xf]
    %v525 = vld [vmem:[%s10 + $0x30] sm:$0xf]
    %v526 = vld [vmem:[%s10 + $0x34] sm:$0xf]
    %v527 = vld [vmem:[%s10 + $0x38] sm:$0xf]
    %v528 = vld [vmem:[%s10 + $0x3c] sm:$0xf]
    %v529 = vld [vmem:[%s10 + $0x40] sm:$0xf]
    %v530 = vld [vmem:[%s10 + $0x44] sm:$0xf]
    %v531 = vld [vmem:[%s10 + $0x48] sm:$0xf]
    %v532 = vld [vmem:[%s10 + $0x4c] sm:$0xf]
    %v533 = vld [vmem:[%s10 + $0x50] sm:$0xf]
    %v534 = vld [vmem:[%s10 + $0x54] sm:$0xf]
    %v535 = vld [vmem:[%s10 + $0x58] sm:$0xf]
    %v536 = vld [vmem:[%s10 + $0x5c] sm:$0xf]
    %v537 = vld [vmem:[%s10 + $0x60] sm:$0xf]
    %v538 = vld [vmem:[%s10 + $0x64] sm:$0xf]
    %v539 = vld [vmem:[%s10 + $0x68] sm:$0xf]
    %v540 = vld [vmem:[%s10 + $0x6c] sm:$0xf]
    %v541 = vld [vmem:[%s10 + $0x70] sm:$0xf]
    %v542 = vld [vmem:[%s10 + $0x74] sm:$0xf]
    %v543 = vld [vmem:[%s10 + $0x78] sm:$0xf]
    %v544 = vld [vmem:[%s10 + $0x7c] sm:$0xf]
    %v545 = vld [vmem:[%s11] sm:$0x1]
    %v546 = vlaneseq
    %v547 = vshrl.u32 %v546, 7
    %v548 = vmul.u32 %v547, 8
    %vm549 = vcmp.ge.s32.totalorder %v44, %v548
    %v550 = vadd.s32 %v547, 1
    %v551 = vmul.u32 %v550, 8
    %vm552 = vcmp.lt.s32.totalorder %v44, %v551
    %vm553 = vmand %vm549, %vm552
    %v554 = vld [vmem:[#allocation2] sm:$0xff]
    %v555 = vld [vmem:[#allocation2 + $0x8] sm:$0xff]
    %v556 = vld [vmem:[#allocation3] sm:$0xff]
    %v557 = vld [vmem:[#allocation3 + $0x8] sm:$0xff]
    %v558 = vpack.c.bf16 %v554, %v554
    %v559 = vpack.c.bf16 %v555, %v555
    %v592 = vunpack.c.l.b16 %v96
    %v593 = vunpack.c.h.b16 %v96
    %v594 = vunpack.c.l.b16 %v97
    %v595 = vunpack.c.h.b16 %v97
    %v596 = vunpack.c.l.b16 %v98
    %v597 = vunpack.c.h.b16 %v98
    %v598 = vunpack.c.l.b16 %v99
    %v599 = vunpack.c.h.b16 %v99
    %v600 = vunpack.c.l.b16 %v100
    %v601 = vunpack.c.h.b16 %v100
    %v602 = vunpack.c.l.b16 %v101
    %v603 = vunpack.c.h.b16 %v101
    %v604 = vunpack.c.l.b16 %v102
    %v605 = vunpack.c.h.b16 %v102
    %v606 = vunpack.c.l.b16 %v103
    %v607 = vunpack.c.h.b16 %v103
    %v608 = vunpack.c.l.b16 %v104
    %v609 = vunpack.c.h.b16 %v104
    %v610 = vunpack.c.l.b16 %v105
    %v611 = vunpack.c.h.b16 %v105
    %v612 = vunpack.c.l.b16 %v106
    %v613 = vunpack.c.h.b16 %v106
    %v614 = vunpack.c.l.b16 %v107
    %v615 = vunpack.c.h.b16 %v107
    %v616 = vunpack.c.l.b16 %v108
    %v617 = vunpack.c.h.b16 %v108
    %v618 = vunpack.c.l.b16 %v109
    %v619 = vunpack.c.h.b16 %v109
    %v620 = vunpack.c.l.b16 %v110
    %v621 = vunpack.c.h.b16 %v110
    %v622 = vunpack.c.l.b16 %v111
    %v623 = vunpack.c.h.b16 %v111
    %v624 = vunpack.c.l.b16 %v112
    %v625 = vunpack.c.h.b16 %v112
    %v626 = vunpack.c.l.b16 %v113
    %v627 = vunpack.c.h.b16 %v113
    %v628 = vunpack.c.l.b16 %v114
    %v629 = vunpack.c.h.b16 %v114
    %v630 = vunpack.c.l.b16 %v115
    %v631 = vunpack.c.h.b16 %v115
    %v632 = vunpack.c.l.b16 %v116
    %v633 = vunpack.c.h.b16 %v116
    %v634 = vunpack.c.l.b16 %v117
    %v635 = vunpack.c.h.b16 %v117
    %v636 = vunpack.c.l.b16 %v118
    %v637 = vunpack.c.h.b16 %v118
    %v638 = vunpack.c.l.b16 %v119
    %v639 = vunpack.c.h.b16 %v119
    %v640 = vunpack.c.l.b16 %v120
    %v641 = vunpack.c.h.b16 %v120
    %v642 = vunpack.c.l.b16 %v121
    %v643 = vunpack.c.h.b16 %v121
    %v644 = vunpack.c.l.b16 %v122
    %v645 = vunpack.c.h.b16 %v122
    %v646 = vunpack.c.l.b16 %v123
    %v647 = vunpack.c.h.b16 %v123
    %v648 = vunpack.c.l.b16 %v124
    %v649 = vunpack.c.h.b16 %v124
    %v650 = vunpack.c.l.b16 %v125
    %v651 = vunpack.c.h.b16 %v125
    %v652 = vunpack.c.l.b16 %v126
    %v653 = vunpack.c.h.b16 %v126
    %v654 = vunpack.c.l.b16 %v127
    %v655 = vunpack.c.h.b16 %v127
    %v656 = vpack.c.b16 %v594, %v592
    %v657 = vpack.c.b16 %v595, %v593
    %v658 = vpack.c.b16 %v598, %v596
    %v659 = vpack.c.b16 %v599, %v597
    %v660 = vpack.c.b16 %v602, %v600
    %v661 = vpack.c.b16 %v603, %v601
    %v662 = vpack.c.b16 %v606, %v604
    %v663 = vpack.c.b16 %v607, %v605
    %v664 = vpack.c.b16 %v610, %v608
    %v665 = vpack.c.b16 %v611, %v609
    %v666 = vpack.c.b16 %v614, %v612
    %v667 = vpack.c.b16 %v615, %v613
    %v668 = vpack.c.b16 %v618, %v616
    %v669 = vpack.c.b16 %v619, %v617
    %v670 = vpack.c.b16 %v622, %v620
    %v671 = vpack.c.b16 %v623, %v621
    %v672 = vpack.c.b16 %v626, %v624
    %v673 = vpack.c.b16 %v627, %v625
    %v674 = vpack.c.b16 %v630, %v628
    %v675 = vpack.c.b16 %v631, %v629
    %v676 = vpack.c.b16 %v634, %v632
    %v677 = vpack.c.b16 %v635, %v633
    %v678 = vpack.c.b16 %v638, %v636
    %v679 = vpack.c.b16 %v639, %v637
    %v680 = vpack.c.b16 %v642, %v640
    %v681 = vpack.c.b16 %v643, %v641
    %v682 = vpack.c.b16 %v646, %v644
    %v683 = vpack.c.b16 %v647, %v645
    %v684 = vpack.c.b16 %v650, %v648
    %v685 = vpack.c.b16 %v651, %v649
    %v686 = vpack.c.b16 %v654, %v652
    %v687 = vpack.c.b16 %v655, %v653
    %720 = vmatprep.subr.bf16.mxu0 %v657
    %721 = vmatpush1.bf16.msra.mxu0 %v656
    %722 = vmatprep.subr.bf16.mxu0 %v659
    %723 = vmatpush1.bf16.msra.mxu0 %v658
    %724 = vmatprep.subr.bf16.mxu0 %v661
    %725 = vmatpush1.bf16.msra.mxu0 %v660
    %726 = vmatprep.subr.bf16.mxu0 %v663
    %727 = vmatpush1.bf16.msra.mxu0 %v662
    %728 = vmatprep.subr.bf16.mxu0 %v665
    %729 = vmatpush1.bf16.msra.mxu0 %v664
    %730 = vmatprep.subr.bf16.mxu0 %v667
    %731 = vmatpush1.bf16.msra.mxu0 %v666
    %732 = vmatprep.subr.bf16.mxu0 %v669
    %733 = vmatpush1.bf16.msra.mxu0 %v668
    %734 = vmatprep.subr.bf16.mxu0 %v671
    %735 = vmatpush1.bf16.msra.mxu0 %v670
    %736 = vmatprep.subr.bf16.mxu0 %v673
    %737 = vmatpush1.bf16.msra.mxu0 %v672
    %738 = vmatprep.subr.bf16.mxu0 %v675
    %739 = vmatpush1.bf16.msra.mxu0 %v674
    %740 = vmatprep.subr.bf16.mxu0 %v677
    %741 = vmatpush1.bf16.msra.mxu0 %v676
    %742 = vmatprep.subr.bf16.mxu0 %v679
    %743 = vmatpush1.bf16.msra.mxu0 %v678
    %744 = vmatprep.subr.bf16.mxu0 %v681
    %745 = vmatpush1.bf16.msra.mxu0 %v680
    %746 = vmatprep.subr.bf16.mxu0 %v683
    %747 = vmatpush1.bf16.msra.mxu0 %v682
    %748 = vmatprep.subr.bf16.mxu0 %v685
    %749 = vmatpush1.bf16.msra.mxu0 %v684
    %750 = vmatprep.subr.bf16.mxu0 %v687
    %751 = vmatpush1.bf16.msra.mxu0 %v686
    %752 = vmatprep.mubr.bf16.mxu0 %v559
    %753 = vmatmul.mubr.bf16.gmra.mrb[0].mxu0 %v558
    %v754 = vpop.f32.mrb[0].mxu0
    %v755 = vadd.f32 0.0, %v754
    %v756 = vpop.f32.mrb[0].mxu0
    %v757 = vadd.f32 0.0, %v756
    %v758 = vpop.f32.mrb[0].mxu0
    %v759 = vpop.f32.mrb[0].mxu0
    %760 = vdwg.mxu0
    %v761 = vpack.c.bf16 %v755, %v755
    %v762 = vpack.c.bf16 %v757, %v757
    %v795 = vunpack.c.l.b16 %v64
    %v796 = vunpack.c.l.b16 %v65
    %v797 = vunpack.c.l.b16 %v66
    %v798 = vunpack.c.l.b16 %v67
    %v799 = vunpack.c.l.b16 %v68
    %v800 = vunpack.c.l.b16 %v69
    %v801 = vunpack.c.l.b16 %v70
    %v802 = vunpack.c.l.b16 %v71
    %v803 = vunpack.c.l.b16 %v72
    %v804 = vunpack.c.l.b16 %v73
    %v805 = vunpack.c.l.b16 %v74
    %v806 = vunpack.c.l.b16 %v75
    %v807 = vunpack.c.l.b16 %v76
    %v808 = vunpack.c.l.b16 %v77
    %v809 = vunpack.c.l.b16 %v78
    %v810 = vunpack.c.l.b16 %v79
    %v811 = vunpack.c.l.b16 %v80
    %v812 = vunpack.c.l.b16 %v81
    %v813 = vunpack.c.l.b16 %v82
    %v814 = vunpack.c.l.b16 %v83
    %v815 = vunpack.c.l.b16 %v84
    %v816 = vunpack.c.l.b16 %v85
    %v817 = vunpack.c.l.b16 %v86
    %v818 = vunpack.c.l.b16 %v87
    %v819 = vunpack.c.l.b16 %v88
    %v820 = vunpack.c.l.b16 %v89
    %v821 = vunpack.c.l.b16 %v90
    %v822 = vunpack.c.l.b16 %v91
    %v823 = vunpack.c.l.b16 %v92
    %v824 = vunpack.c.l.b16 %v93
    %v825 = vunpack.c.l.b16 %v94
    %v826 = vunpack.c.l.b16 %v95
    %v827 = vpack.c.b16 %v796, %v795
    %v828 = vpack.c.b16 %v798, %v797
    %v829 = vpack.c.b16 %v800, %v799
    %v830 = vpack.c.b16 %v802, %v801
    %v831 = vpack.c.b16 %v804, %v803
    %v832 = vpack.c.b16 %v806, %v805
    %v833 = vpack.c.b16 %v808, %v807
    %v834 = vpack.c.b16 %v810, %v809
    %v835 = vpack.c.b16 %v812, %v811
    %v836 = vpack.c.b16 %v814, %v813
    %v837 = vpack.c.b16 %v816, %v815
    %v838 = vpack.c.b16 %v818, %v817
    %v839 = vpack.c.b16 %v820, %v819
    %v840 = vpack.c.b16 %v822, %v821
    %v841 = vpack.c.b16 %v824, %v823
    %v842 = vpack.c.b16 %v826, %v825
    %859 = vmatprep.subr.bf16.mxu0 0
    %860 = vmatpush1.bf16.msra.mxu0 %v827
    %861 = vmatprep.subr.bf16.mxu0 0
    %862 = vmatpush1.bf16.msra.mxu0 %v828
    %863 = vmatprep.subr.bf16.mxu0 0
    %864 = vmatpush1.bf16.msra.mxu0 %v829
    %865 = vmatprep.subr.bf16.mxu0 0
    %866 = vmatpush1.bf16.msra.mxu0 %v830
    %867 = vmatprep.subr.bf16.mxu0 0
    %868 = vmatpush1.bf16.msra.mxu0 %v831
    %869 = vmatprep.subr.bf16.mxu0 0
    %870 = vmatpush1.bf16.msra.mxu0 %v832
    %871 = vmatprep.subr.bf16.mxu0 0
    %872 = vmatpush1.bf16.msra.mxu0 %v833
    %873 = vmatprep.subr.bf16.mxu0 0
    %874 = vmatpush1.bf16.msra.mxu0 %v834
    %875 = vmatprep.subr.bf16.mxu0 0
    %876 = vmatpush1.bf16.msra.mxu0 %v835
    %877 = vmatprep.subr.bf16.mxu0 0
    %878 = vmatpush1.bf16.msra.mxu0 %v836
    %879 = vmatprep.subr.bf16.mxu0 0
    %880 = vmatpush1.bf16.msra.mxu0 %v837
    %881 = vmatprep.subr.bf16.mxu0 0
    %882 = vmatpush1.bf16.msra.mxu0 %v838
    %883 = vmatprep.subr.bf16.mxu0 0
    %884 = vmatpush1.bf16.msra.mxu0 %v839
    %885 = vmatprep.subr.bf16.mxu0 0
    %886 = vmatpush1.bf16.msra.mxu0 %v840
    %887 = vmatprep.subr.bf16.mxu0 0
    %888 = vmatpush1.bf16.msra.mxu0 %v841
    %889 = vmatprep.subr.bf16.mxu0 0
    %890 = vmatpush1.bf16.msra.mxu0 %v842
    %891 = vmatprep.mubr.bf16.mxu0 %v762
    %892 = vmatmul.mubr.bf16.gmra.mrb[0].mxu0 %v761
    %v893 = vpop.f32.mrb[0].mxu0
    %v894 = vadd.f32 0.0, %v893
    %v895 = vpop.f32.mrb[0].mxu0
    %v896 = vpop.f32.mrb[0].mxu0
    %v897 = vpop.f32.mrb[0].mxu0
    %898 = vdwg.mxu0
    %v899 = vsel %vm553, %v894, -1e+30
    %vm900 = vcmask 523264
    %v901 = vsel %vm900, %v899, -inf
    %902 = vmax.xlane.f32.xlu0 %v901
    %v903 = vpop.xlane.xlu0 %902
    %v904 = vsub.f32 %v899, %v903
    %v905 = vmul.f32 %v904, 1.442695
    %v906 = vpow.pop %v905
    %v907 = vsel %vm900, %v906, 0.0
    %908 = vadd.xlane.f32.xlu0 %v907
    %v909 = vpop.xlane.xlu0 %908
    %v910 = vrcp.pop %v909
    %v911 = vmul.f32 %v906, %v910
    %v912 = vpack.c.bf16 %v911, %v911
    %v921 = vunpack.c.l.b16 %v56
    %v922 = vunpack.c.h.b16 %v56
    %v923 = vunpack.c.l.b16 %v57
    %v924 = vunpack.c.h.b16 %v57
    %v925 = vunpack.c.l.b16 %v58
    %v926 = vunpack.c.h.b16 %v58
    %v927 = vunpack.c.l.b16 %v59
    %v928 = vunpack.c.h.b16 %v59
    %v929 = vunpack.c.l.b16 %v60
    %v930 = vunpack.c.h.b16 %v60
    %v931 = vunpack.c.l.b16 %v61
    %v932 = vunpack.c.h.b16 %v61
    %v933 = vunpack.c.l.b16 %v62
    %v934 = vunpack.c.h.b16 %v62
    %v935 = vunpack.c.l.b16 %v63
    %v936 = vunpack.c.h.b16 %v63
    %v937 = vpack.c.b16 %v923, %v921
    %v938 = vpack.c.b16 %v924, %v922
    %v939 = vpack.c.b16 %v927, %v925
    %v940 = vpack.c.b16 %v928, %v926
    %v941 = vpack.c.b16 %v931, %v929
    %v942 = vpack.c.b16 %v932, %v930
    %v943 = vpack.c.b16 %v935, %v933
    %v944 = vpack.c.b16 %v936, %v934
    %v954 = vsel %vm900, %v912, 0
    %956 = vmatprep.subr.bf16.mxu0 %v938
    %957 = vmatpush1.bf16.msra.mxu0 %v937
    %958 = vmatprep.subr.bf16.mxu0 %v940
    %959 = vmatpush1.bf16.msra.mxu0 %v939
    %960 = vmatprep.subr.bf16.mxu0 %v942
    %961 = vmatpush1.bf16.msra.mxu0 %v941
    %962 = vmatprep.subr.bf16.mxu0 %v944
    %963 = vmatpush1.bf16.msra.mxu0 %v943
    %964 = vmatprep.subr.bf16.mxu0 0
    %965 = vmatpush1.bf16.msra.mxu0 0
    %966 = vmatprep.subr.bf16.mxu0 0
    %967 = vmatpush1.bf16.msra.mxu0 0
    %968 = vmatprep.subr.bf16.mxu0 0
    %969 = vmatpush1.bf16.msra.mxu0 0
    %970 = vmatprep.subr.bf16.mxu0 0
    %971 = vmatpush1.bf16.msra.mxu0 0
    %972 = vmatprep.subr.bf16.mxu0 0
    %973 = vmatpush1.bf16.msra.mxu0 0
    %974 = vmatprep.subr.bf16.mxu0 0
    %975 = vmatpush1.bf16.msra.mxu0 0
    %976 = vmatprep.subr.bf16.mxu0 0
    %977 = vmatpush1.bf16.msra.mxu0 0
    %978 = vmatprep.subr.bf16.mxu0 0
    %979 = vmatpush1.bf16.msra.mxu0 0
    %980 = vmatprep.subr.bf16.mxu0 0
    %981 = vmatpush1.bf16.msra.mxu0 0
    %982 = vmatprep.subr.bf16.mxu0 0
    %983 = vmatpush1.bf16.msra.mxu0 0
    %984 = vmatprep.subr.bf16.mxu0 0
    %985 = vmatpush1.bf16.msra.mxu0 0
    %986 = vmatprep.subr.bf16.mxu0 0
    %987 = vmatpush1.bf16.msra.mxu0 0
    %988 = vmatprep.mubr.bf16.mxu0 0
    %989 = vmatmul.mubr.bf16.gmra.mrb[0].mxu0 %v954
    %v990 = vpop.f32.mrb[0].mxu0
    %v991 = vadd.f32 0.0, %v990
    %v992 = vpop.f32.mrb[0].mxu0
    %v993 = vadd.f32 0.0, %v992
    %v994 = vpop.f32.mrb[0].mxu0
    %v995 = vpop.f32.mrb[0].mxu0
    %996 = vdwg.mxu0
    %v997 = vpack.c.bf16 %v991, %v991
    %v998 = vpack.c.bf16 %v993, %v993
    %v1031 = vunpack.c.l.b16 %v160
    %v1032 = vunpack.c.h.b16 %v160
    %v1033 = vunpack.c.l.b16 %v161
    %v1034 = vunpack.c.h.b16 %v161
    %v1035 = vunpack.c.l.b16 %v162
    %v1036 = vunpack.c.h.b16 %v162
    %v1037 = vunpack.c.l.b16 %v163
    %v1038 = vunpack.c.h.b16 %v163
    %v1039 = vunpack.c.l.b16 %v164
    %v1040 = vunpack.c.h.b16 %v164
    %v1041 = vunpack.c.l.b16 %v165
    %v1042 = vunpack.c.h.b16 %v165
    %v1043 = vunpack.c.l.b16 %v166
    %v1044 = vunpack.c.h.b16 %v166
    %v1045 = vunpack.c.l.b16 %v167
    %v1046 = vunpack.c.h.b16 %v167
    %v1047 = vunpack.c.l.b16 %v168
    %v1048 = vunpack.c.h.b16 %v168
    %v1049 = vunpack.c.l.b16 %v169
    %v1050 = vunpack.c.h.b16 %v169
    %v1051 = vunpack.c.l.b16 %v170
    %v1052 = vunpack.c.h.b16 %v170
    %v1053 = vunpack.c.l.b16 %v171
    %v1054 = vunpack.c.h.b16 %v171
    %v1055 = vunpack.c.l.b16 %v172
    %v1056 = vunpack.c.h.b16 %v172
    %v1057 = vunpack.c.l.b16 %v173
    %v1058 = vunpack.c.h.b16 %v173
    %v1059 = vunpack.c.l.b16 %v174
    %v1060 = vunpack.c.h.b16 %v174
    %v1061 = vunpack.c.l.b16 %v175
    %v1062 = vunpack.c.h.b16 %v175
    %v1063 = vunpack.c.l.b16 %v176
    %v1064 = vunpack.c.h.b16 %v176
    %v1065 = vunpack.c.l.b16 %v177
    %v1066 = vunpack.c.h.b16 %v177
    %v1067 = vunpack.c.l.b16 %v178
    %v1068 = vunpack.c.h.b16 %v178
    %v1069 = vunpack.c.l.b16 %v179
    %v1070 = vunpack.c.h.b16 %v179
    %v1071 = vunpack.c.l.b16 %v180
    %v1072 = vunpack.c.h.b16 %v180
    %v1073 = vunpack.c.l.b16 %v181
    %v1074 = vunpack.c.h.b16 %v181
    %v1075 = vunpack.c.l.b16 %v182
    %v1076 = vunpack.c.h.b16 %v182
    %v1077 = vunpack.c.l.b16 %v183
    %v1078 = vunpack.c.h.b16 %v183
    %v1079 = vunpack.c.l.b16 %v184
    %v1080 = vunpack.c.h.b16 %v184
    %v1081 = vunpack.c.l.b16 %v185
    %v1082 = vunpack.c.h.b16 %v185
    %v1083 = vunpack.c.l.b16 %v186
    %v1084 = vunpack.c.h.b16 %v186
    %v1085 = vunpack.c.l.b16 %v187
    %v1086 = vunpack.c.h.b16 %v187
    %v1087 = vunpack.c.l.b16 %v188
    %v1088 = vunpack.c.h.b16 %v188
    %v1089 = vunpack.c.l.b16 %v189
    %v1090 = vunpack.c.h.b16 %v189
    %v1091 = vunpack.c.l.b16 %v190
    %v1092 = vunpack.c.h.b16 %v190
    %v1093 = vunpack.c.l.b16 %v191
    %v1094 = vunpack.c.h.b16 %v191
    %v1095 = vpack.c.b16 %v1033, %v1031
    %v1096 = vpack.c.b16 %v1034, %v1032
    %v1097 = vpack.c.b16 %v1037, %v1035
    %v1098 = vpack.c.b16 %v1038, %v1036
    %v1099 = vpack.c.b16 %v1041, %v1039
    %v1100 = vpack.c.b16 %v1042, %v1040
    %v1101 = vpack.c.b16 %v1045, %v1043
    %v1102 = vpack.c.b16 %v1046, %v1044
    %v1103 = vpack.c.b16 %v1049, %v1047
    %v1104 = vpack.c.b16 %v1050, %v1048
    %v1105 = vpack.c.b16 %v1053, %v1051
    %v1106 = vpack.c.b16 %v1054, %v1052
    %v1107 = vpack.c.b16 %v1057, %v1055
    %v1108 = vpack.c.b16 %v1058, %v1056
    %v1109 = vpack.c.b16 %v1061, %v1059
    %v1110 = vpack.c.b16 %v1062, %v1060
    %v1111 = vpack.c.b16 %v1065, %v1063
    %v1112 = vpack.c.b16 %v1066, %v1064
    %v1113 = vpack.c.b16 %v1069, %v1067
    %v1114 = vpack.c.b16 %v1070, %v1068
    %v1115 = vpack.c.b16 %v1073, %v1071
    %v1116 = vpack.c.b16 %v1074, %v1072
    %v1117 = vpack.c.b16 %v1077, %v1075
    %v1118 = vpack.c.b16 %v1078, %v1076
    %v1119 = vpack.c.b16 %v1081, %v1079
    %v1120 = vpack.c.b16 %v1082, %v1080
    %v1121 = vpack.c.b16 %v1085, %v1083
    %v1122 = vpack.c.b16 %v1086, %v1084
    %v1123 = vpack.c.b16 %v1089, %v1087
    %v1124 = vpack.c.b16 %v1090, %v1088
    %v1125 = vpack.c.b16 %v1093, %v1091
    %v1126 = vpack.c.b16 %v1094, %v1092
    %1159 = vmatprep.subr.bf16.mxu0 %v1096
    %1160 = vmatpush1.bf16.msra.mxu0 %v1095
    %1161 = vmatprep.subr.bf16.mxu0 %v1098
    %1162 = vmatpush1.bf16.msra.mxu0 %v1097
    %1163 = vmatprep.subr.bf16.mxu0 %v1100
    %1164 = vmatpush1.bf16.msra.mxu0 %v1099
    %1165 = vmatprep.subr.bf16.mxu0 %v1102
    %1166 = vmatpush1.bf16.msra.mxu0 %v1101
    %1167 = vmatprep.subr.bf16.mxu0 %v1104
    %1168 = vmatpush1.bf16.msra.mxu0 %v1103
    %1169 = vmatprep.subr.bf16.mxu0 %v1106
    %1170 = vmatpush1.bf16.msra.mxu0 %v1105
    %1171 = vmatprep.subr.bf16.mxu0 %v1108
    %1172 = vmatpush1.bf16.msra.mxu0 %v1107
    %1173 = vmatprep.subr.bf16.mxu0 %v1110
    %1174 = vmatpush1.bf16.msra.mxu0 %v1109
    %1175 = vmatprep.subr.bf16.mxu0 %v1112
    %1176 = vmatpush1.bf16.msra.mxu0 %v1111
    %1177 = vmatprep.subr.bf16.mxu0 %v1114
    %1178 = vmatpush1.bf16.msra.mxu0 %v1113
    %1179 = vmatprep.subr.bf16.mxu0 %v1116
    %1180 = vmatpush1.bf16.msra.mxu0 %v1115
    %1181 = vmatprep.subr.bf16.mxu0 %v1118
    %1182 = vmatpush1.bf16.msra.mxu0 %v1117
    %1183 = vmatprep.subr.bf16.mxu0 %v1120
    %1184 = vmatpush1.bf16.msra.mxu0 %v1119
    %1185 = vmatprep.subr.bf16.mxu0 %v1122
    %1186 = vmatpush1.bf16.msra.mxu0 %v1121
    %1187 = vmatprep.subr.bf16.mxu0 %v1124
    %1188 = vmatpush1.bf16.msra.mxu0 %v1123
    %1189 = vmatprep.subr.bf16.mxu0 %v1126
    %1190 = vmatpush1.bf16.msra.mxu0 %v1125
    %1191 = vmatprep.mubr.bf16.mxu0 %v559
    %1192 = vmatmul.mubr.bf16.gmra.mrb[0].mxu0 %v558
    %v1193 = vpop.f32.mrb[0].mxu0
    %v1194 = vadd.f32 0.0, %v1193
    %v1195 = vpop.f32.mrb[0].mxu0
    %v1196 = vadd.f32 0.0, %v1195
    %v1197 = vpop.f32.mrb[0].mxu0
    %v1198 = vpop.f32.mrb[0].mxu0
    %1199 = vdwg.mxu0
    %v1232 = vunpack.c.l.b16 %v128
    %v1233 = vunpack.c.h.b16 %v128
    %v1234 = vunpack.c.l.b16 %v129
    %v1235 = vunpack.c.h.b16 %v129
    %v1236 = vunpack.c.l.b16 %v130
    %v1237 = vunpack.c.h.b16 %v130
    %v1238 = vunpack.c.l.b16 %v131
    %v1239 = vunpack.c.h.b16 %v131
    %v1240 = vunpack.c.l.b16 %v132
    %v1241 = vunpack.c.h.b16 %v132
    %v1242 = vunpack.c.l.b16 %v133
    %v1243 = vunpack.c.h.b16 %v133
    %v1244 = vunpack.c.l.b16 %v134
    %v1245 = vunpack.c.h.b16 %v134
    %v1246 = vunpack.c.l.b16 %v135
    %v1247 = vunpack.c.h.b16 %v135
    %v1248 = vunpack.c.l.b16 %v136
    %v1249 = vunpack.c.h.b16 %v136
    %v1250 = vunpack.c.l.b16 %v137
    %v1251 = vunpack.c.h.b16 %v137
    %v1252 = vunpack.c.l.b16 %v138
    %v1253 = vunpack.c.h.b16 %v138
    %v1254 = vunpack.c.l.b16 %v139
    %v1255 = vunpack.c.h.b16 %v139
    %v1256 = vunpack.c.l.b16 %v140
    %v1257 = vunpack.c.h.b16 %v140
    %v1258 = vunpack.c.l.b16 %v141
    %v1259 = vunpack.c.h.b16 %v141
    %v1260 = vunpack.c.l.b16 %v142
    %v1261 = vunpack.c.h.b16 %v142
    %v1262 = vunpack.c.l.b16 %v143
    %v1263 = vunpack.c.h.b16 %v143
    %v1264 = vunpack.c.l.b16 %v144
    %v1265 = vunpack.c.h.b16 %v144
    %v1266 = vunpack.c.l.b16 %v145
    %v1267 = vunpack.c.h.b16 %v145
    %v1268 = vunpack.c.l.b16 %v146
    %v1269 = vunpack.c.h.b16 %v146
    %v1270 = vunpack.c.l.b16 %v147
    %v1271 = vunpack.c.h.b16 %v147
    %v1272 = vunpack.c.l.b16 %v148
    %v1273 = vunpack.c.h.b16 %v148
    %v1274 = vunpack.c.l.b16 %v149
    %v1275 = vunpack.c.h.b16 %v149
    %v1276 = vunpack.c.l.b16 %v150
    %v1277 = vunpack.c.h.b16 %v150
    %v1278 = vunpack.c.l.b16 %v151
    %v1279 = vunpack.c.h.b16 %v151
    %v1280 = vunpack.c.l.b16 %v152
    %v1281 = vunpack.c.h.b16 %v152
    %v1282 = vunpack.c.l.b16 %v153
    %v1283 = vunpack.c.h.b16 %v153
    %v1284 = vunpack.c.l.b16 %v154
    %v1285 = vunpack.c.h.b16 %v154
    %v1286 = vunpack.c.l.b16 %v155
    %v1287 = vunpack.c.h.b16 %v155
    %v1288 = vunpack.c.l.b16 %v156
    %v1289 = vunpack.c.h.b16 %v156
    %v1290 = vunpack.c.l.b16 %v157
    %v1291 = vunpack.c.h.b16 %v157
    %v1292 = vunpack.c.l.b16 %v158
    %v1293 = vunpack.c.h.b16 %v158
    %v1294 = vunpack.c.l.b16 %v159
    %v1295 = vunpack.c.h.b16 %v159
    %v1296 = vpack.c.b16 %v1234, %v1232
    %v1297 = vpack.c.b16 %v1235, %v1233
    %v1298 = vpack.c.b16 %v1238, %v1236
    %v1299 = vpack.c.b16 %v1239, %v1237
    %v1300 = vpack.c.b16 %v1242, %v1240
    %v1301 = vpack.c.b16 %v1243, %v1241
    %v1302 = vpack.c.b16 %v1246, %v1244
    %v1303 = vpack.c.b16 %v1247, %v1245
    %v1304 = vpack.c.b16 %v1250, %v1248
    %v1305 = vpack.c.b16 %v1251, %v1249
    %v1306 = vpack.c.b16 %v1254, %v1252
    %v1307 = vpack.c.b16 %v1255, %v1253
    %v1308 = vpack.c.b16 %v1258, %v1256
    %v1309 = vpack.c.b16 %v1259, %v1257
    %v1310 = vpack.c.b16 %v1262, %v1260
    %v1311 = vpack.c.b16 %v1263, %v1261
    %v1312 = vpack.c.b16 %v1266, %v1264
    %v1313 = vpack.c.b16 %v1267, %v1265
    %v1314 = vpack.c.b16 %v1270, %v1268
    %v1315 = vpack.c.b16 %v1271, %v1269
    %v1316 = vpack.c.b16 %v1274, %v1272
    %v1317 = vpack.c.b16 %v1275, %v1273
    %v1318 = vpack.c.b16 %v1278, %v1276
    %v1319 = vpack.c.b16 %v1279, %v1277
    %v1320 = vpack.c.b16 %v1282, %v1280
    %v1321 = vpack.c.b16 %v1283, %v1281
    %v1322 = vpack.c.b16 %v1286, %v1284
    %v1323 = vpack.c.b16 %v1287, %v1285
    %v1324 = vpack.c.b16 %v1290, %v1288
    %v1325 = vpack.c.b16 %v1291, %v1289
    %v1326 = vpack.c.b16 %v1294, %v1292
    %v1327 = vpack.c.b16 %v1295, %v1293
    %1360 = vmatprep.subr.bf16.mxu0 %v1297
    %1361 = vmatpush1.bf16.msra.mxu0 %v1296
    %1362 = vmatprep.subr.bf16.mxu0 %v1299
    %1363 = vmatpush1.bf16.msra.mxu0 %v1298
    %1364 = vmatprep.subr.bf16.mxu0 %v1301
    %1365 = vmatpush1.bf16.msra.mxu0 %v1300
    %1366 = vmatprep.subr.bf16.mxu0 %v1303
    %1367 = vmatpush1.bf16.msra.mxu0 %v1302
    %1368 = vmatprep.subr.bf16.mxu0 %v1305
    %1369 = vmatpush1.bf16.msra.mxu0 %v1304
    %1370 = vmatprep.subr.bf16.mxu0 %v1307
    %1371 = vmatpush1.bf16.msra.mxu0 %v1306
    %1372 = vmatprep.subr.bf16.mxu0 %v1309
    %1373 = vmatpush1.bf16.msra.mxu0 %v1308
    %1374 = vmatprep.subr.bf16.mxu0 %v1311
    %1375 = vmatpush1.bf16.msra.mxu0 %v1310
    %1376 = vmatprep.subr.bf16.mxu0 %v1313
    %1377 = vmatpush1.bf16.msra.mxu0 %v1312
    %1378 = vmatprep.subr.bf16.mxu0 %v1315
    %1379 = vmatpush1.bf16.msra.mxu0 %v1314
    %1380 = vmatprep.subr.bf16.mxu0 %v1317
    %1381 = vmatpush1.bf16.msra.mxu0 %v1316
    %1382 = vmatprep.subr.bf16.mxu0 %v1319
    %1383 = vmatpush1.bf16.msra.mxu0 %v1318
    %1384 = vmatprep.subr.bf16.mxu0 %v1321
    %1385 = vmatpush1.bf16.msra.mxu0 %v1320
    %1386 = vmatprep.subr.bf16.mxu0 %v1323
    %1387 = vmatpush1.bf16.msra.mxu0 %v1322
    %1388 = vmatprep.subr.bf16.mxu0 %v1325
    %1389 = vmatpush1.bf16.msra.mxu0 %v1324
    %1390 = vmatprep.subr.bf16.mxu0 %v1327
    %1391 = vmatpush1.bf16.msra.mxu0 %v1326
    %1392 = vmatprep.mubr.bf16.mxu0 %v998
    %1393 = vmatmul.mubr.bf16.gmra.mrb[0].mxu0 %v997
    %v1394 = vpop.f32.mrb[0].mxu0
    %v1395 = vadd.f32 %v1194, %v1394
    %v1396 = vpop.f32.mrb[0].mxu0
    %v1397 = vadd.f32 %v1196, %v1396
    %v1398 = vpop.f32.mrb[0].mxu0
    %v1399 = vpop.f32.mrb[0].mxu0
    %1400 = vdwg.mxu0
    %v1401 = vtanh.pop %v1395
    %v1402 = vtanh.pop %v1397
    %v1403 = vld [vmem:[%s4] sm:$0xf]
    %v1404 = vpack.c.bf16 %v1401, %v1401
    %v1405 = vpack.c.bf16 %v1402, %v1402
    %v1534 = vunpack.c.l.b16 %v384
    %v1535 = vunpack.c.h.b16 %v384
    %v1536 = vunpack.c.l.b16 %v385
    %v1537 = vunpack.c.h.b16 %v385
    %v1538 = vunpack.c.l.b16 %v386
    %v1539 = vunpack.c.h.b16 %v386
    %v1540 = vunpack.c.l.b16 %v387
    %v1541 = vunpack.c.h.b16 %v387
    %v1542 = vunpack.c.l.b16 %v388
    %v1543 = vunpack.c.h.b16 %v388
    %v1544 = vunpack.c.l.b16 %v389
    %v1545 = vunpack.c.h.b16 %v389
    %v1546 = vunpack.c.l.b16 %v390
    %v1547 = vunpack.c.h.b16 %v390
    %v1548 = vunpack.c.l.b16 %v391
    %v1549 = vunpack.c.h.b16 %v391
    %v1550 = vunpack.c.l.b16 %v392
    %v1551 = vunpack.c.h.b16 %v392
    %v1552 = vunpack.c.l.b16 %v393
    %v1553 = vunpack.c.h.b16 %v393
    %v1554 = vunpack.c.l.b16 %v394
    %v1555 = vunpack.c.h.b16 %v394
    %v1556 = vunpack.c.l.b16 %v395
    %v1557 = vunpack.c.h.b16 %v395
    %v1558 = vunpack.c.l.b16 %v396
    %v1559 = vunpack.c.h.b16 %v396
    %v1560 = vunpack.c.l.b16 %v397
    %v1561 = vunpack.c.h.b16 %v397
    %v1562 = vunpack.c.l.b16 %v398
    %v1563 = vunpack.c.h.b16 %v398
    %v1564 = vunpack.c.l.b16 %v399
    %v1565 = vunpack.c.h.b16 %v399
    %v1566 = vunpack.c.l.b16 %v400
    %v1567 = vunpack.c.h.b16 %v400
    %v1568 = vunpack.c.l.b16 %v401
    %v1569 = vunpack.c.h.b16 %v401
    %v1570 = vunpack.c.l.b16 %v402
    %v1571 = vunpack.c.h.b16 %v402
    %v1572 = vunpack.c.l.b16 %v403
    %v1573 = vunpack.c.h.b16 %v403
    %v1574 = vunpack.c.l.b16 %v404
    %v1575 = vunpack.c.h.b16 %v404
    %v1576 = vunpack.c.l.b16 %v405
    %v1577 = vunpack.c.h.b16 %v405
    %v1578 = vunpack.c.l.b16 %v406
    %v1579 = vunpack.c.h.b16 %v406
    %v1580 = vunpack.c.l.b16 %v407
    %v1581 = vunpack.c.h.b16 %v407
    %v1582 = vunpack.c.l.b16 %v408
    %v1583 = vunpack.c.h.b16 %v408
    %v1584 = vunpack.c.l.b16 %v409
    %v1585 = vunpack.c.h.b16 %v409
    %v1586 = vunpack.c.l.b16 %v410
    %v1587 = vunpack.c.h.b16 %v410
    %v1588 = vunpack.c.l.b16 %v411
    %v1589 = vunpack.c.h.b16 %v411
    %v1590 = vunpack.c.l.b16 %v412
    %v1591 = vunpack.c.h.b16 %v412
    %v1592 = vunpack.c.l.b16 %v413
    %v1593 = vunpack.c.h.b16 %v413
    %v1594 = vunpack.c.l.b16 %v414
    %v1595 = vunpack.c.h.b16 %v414
    %v1596 = vunpack.c.l.b16 %v415
    %v1597 = vunpack.c.h.b16 %v415
    %v1598 = vunpack.c.l.b16 %v416
    %v1599 = vunpack.c.h.b16 %v416
    %v1600 = vunpack.c.l.b16 %v417
    %v1601 = vunpack.c.h.b16 %v417
    %v1602 = vunpack.c.l.b16 %v418
    %v1603 = vunpack.c.h.b16 %v418
    %v1604 = vunpack.c.l.b16 %v419
    %v1605 = vunpack.c.h.b16 %v419
    %v1606 = vunpack.c.l.b16 %v420
    %v1607 = vunpack.c.h.b16 %v420
    %v1608 = vunpack.c.l.b16 %v421
    %v1609 = vunpack.c.h.b16 %v421
    %v1610 = vunpack.c.l.b16 %v422
    %v1611 = vunpack.c.h.b16 %v422
    %v1612 = vunpack.c.l.b16 %v423
    %v1613 = vunpack.c.h.b16 %v423
    %v1614 = vunpack.c.l.b16 %v424
    %v1615 = vunpack.c.h.b16 %v424
    %v1616 = vunpack.c.l.b16 %v425
    %v1617 = vunpack.c.h.b16 %v425
    %v1618 = vunpack.c.l.b16 %v426
    %v1619 = vunpack.c.h.b16 %v426
    %v1620 = vunpack.c.l.b16 %v427
    %v1621 = vunpack.c.h.b16 %v427
    %v1622 = vunpack.c.l.b16 %v428
    %v1623 = vunpack.c.h.b16 %v428
    %v1624 = vunpack.c.l.b16 %v429
    %v1625 = vunpack.c.h.b16 %v429
    %v1626 = vunpack.c.l.b16 %v430
    %v1627 = vunpack.c.h.b16 %v430
    %v1628 = vunpack.c.l.b16 %v431
    %v1629 = vunpack.c.h.b16 %v431
    %v1630 = vunpack.c.l.b16 %v432
    %v1631 = vunpack.c.h.b16 %v432
    %v1632 = vunpack.c.l.b16 %v433
    %v1633 = vunpack.c.h.b16 %v433
    %v1634 = vunpack.c.l.b16 %v434
    %v1635 = vunpack.c.h.b16 %v434
    %v1636 = vunpack.c.l.b16 %v435
    %v1637 = vunpack.c.h.b16 %v435
    %v1638 = vunpack.c.l.b16 %v436
    %v1639 = vunpack.c.h.b16 %v436
    %v1640 = vunpack.c.l.b16 %v437
    %v1641 = vunpack.c.h.b16 %v437
    %v1642 = vunpack.c.l.b16 %v438
    %v1643 = vunpack.c.h.b16 %v438
    %v1644 = vunpack.c.l.b16 %v439
    %v1645 = vunpack.c.h.b16 %v439
    %v1646 = vunpack.c.l.b16 %v440
    %v1647 = vunpack.c.h.b16 %v440
    %v1648 = vunpack.c.l.b16 %v441
    %v1649 = vunpack.c.h.b16 %v441
    %v1650 = vunpack.c.l.b16 %v442
    %v1651 = vunpack.c.h.b16 %v442
    %v1652 = vunpack.c.l.b16 %v443
    %v1653 = vunpack.c.h.b16 %v443
    %v1654 = vunpack.c.l.b16 %v444
    %v1655 = vunpack.c.h.b16 %v444
    %v1656 = vunpack.c.l.b16 %v445
    %v1657 = vunpack.c.h.b16 %v445
    %v1658 = vunpack.c.l.b16 %v446
    %v1659 = vunpack.c.h.b16 %v446
    %v1660 = vunpack.c.l.b16 %v447
    %v1661 = vunpack.c.h.b16 %v447
    %v1662 = vunpack.c.l.b16 %v448
    %v1663 = vunpack.c.h.b16 %v448
    %v1664 = vunpack.c.l.b16 %v449
    %v1665 = vunpack.c.h.b16 %v449
    %v1666 = vunpack.c.l.b16 %v450
    %v1667 = vunpack.c.h.b16 %v450
    %v1668 = vunpack.c.l.b16 %v451
    %v1669 = vunpack.c.h.b16 %v451
    %v1670 = vunpack.c.l.b16 %v452
    %v1671 = vunpack.c.h.b16 %v452
    %v1672 = vunpack.c.l.b16 %v453
    %v1673 = vunpack.c.h.b16 %v453
    %v1674 = vunpack.c.l.b16 %v454
    %v1675 = vunpack.c.h.b16 %v454
    %v1676 = vunpack.c.l.b16 %v455
    %v1677 = vunpack.c.h.b16 %v455
    %v1678 = vunpack.c.l.b16 %v456
    %v1679 = vunpack.c.h.b16 %v456
    %v1680 = vunpack.c.l.b16 %v457
    %v1681 = vunpack.c.h.b16 %v457
    %v1682 = vunpack.c.l.b16 %v458
    %v1683 = vunpack.c.h.b16 %v458
    %v1684 = vunpack.c.l.b16 %v459
    %v1685 = vunpack.c.h.b16 %v459
    %v1686 = vunpack.c.l.b16 %v460
    %v1687 = vunpack.c.h.b16 %v460
    %v1688 = vunpack.c.l.b16 %v461
    %v1689 = vunpack.c.h.b16 %v461
    %v1690 = vunpack.c.l.b16 %v462
    %v1691 = vunpack.c.h.b16 %v462
    %v1692 = vunpack.c.l.b16 %v463
    %v1693 = vunpack.c.h.b16 %v463
    %v1694 = vunpack.c.l.b16 %v464
    %v1695 = vunpack.c.h.b16 %v464
    %v1696 = vunpack.c.l.b16 %v465
    %v1697 = vunpack.c.h.b16 %v465
    %v1698 = vunpack.c.l.b16 %v466
    %v1699 = vunpack.c.h.b16 %v466
    %v1700 = vunpack.c.l.b16 %v467
    %v1701 = vunpack.c.h.b16 %v467
    %v1702 = vunpack.c.l.b16 %v468
    %v1703 = vunpack.c.h.b16 %v468
    %v1704 = vunpack.c.l.b16 %v469
    %v1705 = vunpack.c.h.b16 %v469
    %v1706 = vunpack.c.l.b16 %v470
    %v1707 = vunpack.c.h.b16 %v470
    %v1708 = vunpack.c.l.b16 %v471
    %v1709 = vunpack.c.h.b16 %v471
    %v1710 = vunpack.c.l.b16 %v472
    %v1711 = vunpack.c.h.b16 %v472
    %v1712 = vunpack.c.l.b16 %v473
    %v1713 = vunpack.c.h.b16 %v473
    %v1714 = vunpack.c.l.b16 %v474
    %v1715 = vunpack.c.h.b16 %v474
    %v1716 = vunpack.c.l.b16 %v475
    %v1717 = vunpack.c.h.b16 %v475
    %v1718 = vunpack.c.l.b16 %v476
    %v1719 = vunpack.c.h.b16 %v476
    %v1720 = vunpack.c.l.b16 %v477
    %v1721 = vunpack.c.h.b16 %v477
    %v1722 = vunpack.c.l.b16 %v478
    %v1723 = vunpack.c.h.b16 %v478
    %v1724 = vunpack.c.l.b16 %v479
    %v1725 = vunpack.c.h.b16 %v479
    %v1726 = vunpack.c.l.b16 %v480
    %v1727 = vunpack.c.h.b16 %v480
    %v1728 = vunpack.c.l.b16 %v481
    %v1729 = vunpack.c.h.b16 %v481
    %v1730 = vunpack.c.l.b16 %v482
    %v1731 = vunpack.c.h.b16 %v482
    %v1732 = vunpack.c.l.b16 %v483
    %v1733 = vunpack.c.h.b16 %v483
    %v1734 = vunpack.c.l.b16 %v484
    %v1735 = vunpack.c.h.b16 %v484
    %v1736 = vunpack.c.l.b16 %v485
    %v1737 = vunpack.c.h.b16 %v485
    %v1738 = vunpack.c.l.b16 %v486
    %v1739 = vunpack.c.h.b16 %v486
    %v1740 = vunpack.c.l.b16 %v487
    %v1741 = vunpack.c.h.b16 %v487
    %v1742 = vunpack.c.l.b16 %v488
    %v1743 = vunpack.c.h.b16 %v488
    %v1744 = vunpack.c.l.b16 %v489
    %v1745 = vunpack.c.h.b16 %v489
    %v1746 = vunpack.c.l.b16 %v490
    %v1747 = vunpack.c.h.b16 %v490
    %v1748 = vunpack.c.l.b16 %v491
    %v1749 = vunpack.c.h.b16 %v491
    %v1750 = vunpack.c.l.b16 %v492
    %v1751 = vunpack.c.h.b16 %v492
    %v1752 = vunpack.c.l.b16 %v493
    %v1753 = vunpack.c.h.b16 %v493
    %v1754 = vunpack.c.l.b16 %v494
    %v1755 = vunpack.c.h.b16 %v494
    %v1756 = vunpack.c.l.b16 %v495
    %v1757 = vunpack.c.h.b16 %v495
    %v1758 = vunpack.c.l.b16 %v496
    %v1759 = vunpack.c.h.b16 %v496
    %v1760 = vunpack.c.l.b16 %v497
    %v1761 = vunpack.c.h.b16 %v497
    %v1762 = vunpack.c.l.b16 %v498
    %v1763 = vunpack.c.h.b16 %v498
    %v1764 = vunpack.c.l.b16 %v499
    %v1765 = vunpack.c.h.b16 %v499
    %v1766 = vunpack.c.l.b16 %v500
    %v1767 = vunpack.c.h.b16 %v500
    %v1768 = vunpack.c.l.b16 %v501
    %v1769 = vunpack.c.h.b16 %v501
    %v1770 = vunpack.c.l.b16 %v502
    %v1771 = vunpack.c.h.b16 %v502
    %v1772 = vunpack.c.l.b16 %v503
    %v1773 = vunpack.c.h.b16 %v503
    %v1774 = vunpack.c.l.b16 %v504
    %v1775 = vunpack.c.h.b16 %v504
    %v1776 = vunpack.c.l.b16 %v505
    %v1777 = vunpack.c.h.b16 %v505
    %v1778 = vunpack.c.l.b16 %v506
    %v1779 = vunpack.c.h.b16 %v506
    %v1780 = vunpack.c.l.b16 %v507
    %v1781 = vunpack.c.h.b16 %v507
    %v1782 = vunpack.c.l.b16 %v508
    %v1783 = vunpack.c.h.b16 %v508
    %v1784 = vunpack.c.l.b16 %v509
    %v1785 = vunpack.c.h.b16 %v509
    %v1786 = vunpack.c.l.b16 %v510
    %v1787 = vunpack.c.h.b16 %v510
    %v1788 = vunpack.c.l.b16 %v511
    %v1789 = vunpack.c.h.b16 %v511
    %v1790 = vpack.c.b16 %v1542, %v1534
    %v1791 = vpack.c.b16 %v1543, %v1535
    %v1792 = vpack.c.b16 %v1544, %v1536
    %v1793 = vpack.c.b16 %v1545, %v1537
    %v1794 = vpack.c.b16 %v1546, %v1538
    %v1795 = vpack.c.b16 %v1547, %v1539
    %v1796 = vpack.c.b16 %v1548, %v1540
    %v1797 = vpack.c.b16 %v1549, %v1541
    %v1798 = vpack.c.b16 %v1558, %v1550
    %v1799 = vpack.c.b16 %v1559, %v1551
    %v1800 = vpack.c.b16 %v1560, %v1552
    %v1801 = vpack.c.b16 %v1561, %v1553
    %v1802 = vpack.c.b16 %v1562, %v1554
    %v1803 = vpack.c.b16 %v1563, %v1555
    %v1804 = vpack.c.b16 %v1564, %v1556
    %v1805 = vpack.c.b16 %v1565, %v1557
    %v1806 = vpack.c.b16 %v1574, %v1566
    %v1807 = vpack.c.b16 %v1575, %v1567
    %v1808 = vpack.c.b16 %v1576, %v1568
    %v1809 = vpack.c.b16 %v1577, %v1569
    %v1810 = vpack.c.b16 %v1578, %v1570
    %v1811 = vpack.c.b16 %v1579, %v1571
    %v1812 = vpack.c.b16 %v1580, %v1572
    %v1813 = vpack.c.b16 %v1581, %v1573
    %v1814 = vpack.c.b16 %v1590, %v1582
    %v1815 = vpack.c.b16 %v1591, %v1583
    %v1816 = vpack.c.b16 %v1592, %v1584
    %v1817 = vpack.c.b16 %v1593, %v1585
    %v1818 = vpack.c.b16 %v1594, %v1586
    %v1819 = vpack.c.b16 %v1595, %v1587
    %v1820 = vpack.c.b16 %v1596, %v1588
    %v1821 = vpack.c.b16 %v1597, %v1589
    %v1822 = vpack.c.b16 %v1606, %v1598
    %v1823 = vpack.c.b16 %v1607, %v1599
    %v1824 = vpack.c.b16 %v1608, %v1600
    %v1825 = vpack.c.b16 %v1609, %v1601
    %v1826 = vpack.c.b16 %v1610, %v1602
    %v1827 = vpack.c.b16 %v1611, %v1603
    %v1828 = vpack.c.b16 %v1612, %v1604
    %v1829 = vpack.c.b16 %v1613, %v1605
    %v1830 = vpack.c.b16 %v1622, %v1614
    %v1831 = vpack.c.b16 %v1623, %v1615
    %v1832 = vpack.c.b16 %v1624, %v1616
    %v1833 = vpack.c.b16 %v1625, %v1617
    %v1834 = vpack.c.b16 %v1626, %v1618
    %v1835 = vpack.c.b16 %v1627, %v1619
    %v1836 = vpack.c.b16 %v1628, %v1620
    %v1837 = vpack.c.b16 %v1629, %v1621
    %v1838 = vpack.c.b16 %v1638, %v1630
    %v1839 = vpack.c.b16 %v1639, %v1631
    %v1840 = vpack.c.b16 %v1640, %v1632
    %v1841 = vpack.c.b16 %v1641, %v1633
    %v1842 = vpack.c.b16 %v1642, %v1634
    %v1843 = vpack.c.b16 %v1643, %v1635
    %v1844 = vpack.c.b16 %v1644, %v1636
    %v1845 = vpack.c.b16 %v1645, %v1637
    %v1846 = vpack.c.b16 %v1654, %v1646
    %v1847 = vpack.c.b16 %v1655, %v1647
    %v1848 = vpack.c.b16 %v1656, %v1648
    %v1849 = vpack.c.b16 %v1657, %v1649
    %v1850 = vpack.c.b16 %v1658, %v1650
    %v1851 = vpack.c.b16 %v1659, %v1651
    %v1852 = vpack.c.b16 %v1660, %v1652
    %v1853 = vpack.c.b16 %v1661, %v1653
    %v1854 = vpack.c.b16 %v1670, %v1662
    %v1855 = vpack.c.b16 %v1671, %v1663
    %v1856 = vpack.c.b16 %v1672, %v1664
    %v1857 = vpack.c.b16 %v1673, %v1665
    %v1858 = vpack.c.b16 %v1674, %v1666
    %v1859 = vpack.c.b16 %v1675, %v1667
    %v1860 = vpack.c.b16 %v1676, %v1668
    %v1861 = vpack.c.b16 %v1677, %v1669
    %v1862 = vpack.c.b16 %v1686, %v1678
    %v1863 = vpack.c.b16 %v1687, %v1679
    %v1864 = vpack.c.b16 %v1688, %v1680
    %v1865 = vpack.c.b16 %v1689, %v1681
    %v1866 = vpack.c.b16 %v1690, %v1682
    %v1867 = vpack.c.b16 %v1691, %v1683
    %v1868 = vpack.c.b16 %v1692, %v1684
    %v1869 = vpack.c.b16 %v1693, %v1685
    %v1870 = vpack.c.b16 %v1702, %v1694
    %v1871 = vpack.c.b16 %v1703, %v1695
    %v1872 = vpack.c.b16 %v1704, %v1696
    %v1873 = vpack.c.b16 %v1705, %v1697
    %v1874 = vpack.c.b16 %v1706, %v1698
    %v1875 = vpack.c.b16 %v1707, %v1699
    %v1876 = vpack.c.b16 %v1708, %v1700
    %v1877 = vpack.c.b16 %v1709, %v1701
    %v1878 = vpack.c.b16 %v1718, %v1710
    %v1879 = vpack.c.b16 %v1719, %v1711
    %v1880 = vpack.c.b16 %v1720, %v1712
    %v1881 = vpack.c.b16 %v1721, %v1713
    %v1882 = vpack.c.b16 %v1722, %v1714
    %v1883 = vpack.c.b16 %v1723, %v1715
    %v1884 = vpack.c.b16 %v1724, %v1716
    %v1885 = vpack.c.b16 %v1725, %v1717
    %v1886 = vpack.c.b16 %v1734, %v1726
    %v1887 = vpack.c.b16 %v1735, %v1727
    %v1888 = vpack.c.b16 %v1736, %v1728
    %v1889 = vpack.c.b16 %v1737, %v1729
    %v1890 = vpack.c.b16 %v1738, %v1730
    %v1891 = vpack.c.b16 %v1739, %v1731
    %v1892 = vpack.c.b16 %v1740, %v1732
    %v1893 = vpack.c.b16 %v1741, %v1733
    %v1894 = vpack.c.b16 %v1750, %v1742
    %v1895 = vpack.c.b16 %v1751, %v1743
    %v1896 = vpack.c.b16 %v1752, %v1744
    %v1897 = vpack.c.b16 %v1753, %v1745
    %v1898 = vpack.c.b16 %v1754, %v1746
    %v1899 = vpack.c.b16 %v1755, %v1747
    %v1900 = vpack.c.b16 %v1756, %v1748
    %v1901 = vpack.c.b16 %v1757, %v1749
    %v1902 = vpack.c.b16 %v1766, %v1758
    %v1903 = vpack.c.b16 %v1767, %v1759
    %v1904 = vpack.c.b16 %v1768, %v1760
    %v1905 = vpack.c.b16 %v1769, %v1761
    %v1906 = vpack.c.b16 %v1770, %v1762
    %v1907 = vpack.c.b16 %v1771, %v1763
    %v1908 = vpack.c.b16 %v1772, %v1764
    %v1909 = vpack.c.b16 %v1773, %v1765
    %v1910 = vpack.c.b16 %v1782, %v1774
    %v1911 = vpack.c.b16 %v1783, %v1775
    %v1912 = vpack.c.b16 %v1784, %v1776
    %v1913 = vpack.c.b16 %v1785, %v1777
    %v1914 = vpack.c.b16 %v1786, %v1778
    %v1915 = vpack.c.b16 %v1787, %v1779
    %v1916 = vpack.c.b16 %v1788, %v1780
    %v1917 = vpack.c.b16 %v1789, %v1781
    %2046 = vmatprep.subr.bf16.mxu0 %v1791
    %2047 = vmatpush1.bf16.msra.mxu0 %v1790
    %2048 = vmatprep.subr.bf16.mxu0 %v1799
    %2049 = vmatpush1.bf16.msra.mxu0 %v1798
    %2050 = vmatprep.subr.bf16.mxu0 %v1807
    %2051 = vmatpush1.bf16.msra.mxu0 %v1806
    %2052 = vmatprep.subr.bf16.mxu0 %v1815
    %2053 = vmatpush1.bf16.msra.mxu0 %v1814
    %2054 = vmatprep.subr.bf16.mxu0 %v1823
    %2055 = vmatpush1.bf16.msra.mxu0 %v1822
    %2056 = vmatprep.subr.bf16.mxu0 %v1831
    %2057 = vmatpush1.bf16.msra.mxu0 %v1830
    %2058 = vmatprep.subr.bf16.mxu0 %v1839
    %2059 = vmatpush1.bf16.msra.mxu0 %v1838
    %2060 = vmatprep.subr.bf16.mxu0 %v1847
    %2061 = vmatpush1.bf16.msra.mxu0 %v1846
    %2062 = vmatprep.subr.bf16.mxu0 %v1855
    %2063 = vmatpush1.bf16.msra.mxu0 %v1854
    %2064 = vmatprep.subr.bf16.mxu0 %v1863
    %2065 = vmatpush1.bf16.msra.mxu0 %v1862
    %2066 = vmatprep.subr.bf16.mxu0 %v1871
    %2067 = vmatpush1.bf16.msra.mxu0 %v1870
    %2068 = vmatprep.subr.bf16.mxu0 %v1879
    %2069 = vmatpush1.bf16.msra.mxu0 %v1878
    %2070 = vmatprep.subr.bf16.mxu0 %v1887
    %2071 = vmatpush1.bf16.msra.mxu0 %v1886
    %2072 = vmatprep.subr.bf16.mxu0 %v1895
    %2073 = vmatpush1.bf16.msra.mxu0 %v1894
    %2074 = vmatprep.subr.bf16.mxu0 %v1903
    %2075 = vmatpush1.bf16.msra.mxu0 %v1902
    %2076 = vmatprep.subr.bf16.mxu0 %v1911
    %2077 = vmatpush1.bf16.msra.mxu0 %v1910
    %2078 = vmatprep.mubr.bf16.mxu0 %v559
    %2079 = vmatmul.mubr.bf16.gmra.mrb[0].mxu0 %v558
    %v2080 = vpop.f32.mrb[0].mxu0
    %v2081 = vadd.f32 0.0, %v2080
    %v2082 = vpop.f32.mrb[0].mxu0
    %v2083 = vadd.f32 0.0, %v2082
    %v2084 = vpop.f32.mrb[0].mxu0
    %v2085 = vpop.f32.mrb[0].mxu0
    %2086 = vdwg.mxu0
    %2087 = vmatprep.subr.bf16.mxu0 %v1793
    %2088 = vmatpush1.bf16.msra.mxu0 %v1792
    %2089 = vmatprep.subr.bf16.mxu0 %v1801
    %2090 = vmatpush1.bf16.msra.mxu0 %v1800
    %2091 = vmatprep.subr.bf16.mxu0 %v1809
    %2092 = vmatpush1.bf16.msra.mxu0 %v1808
    %2093 = vmatprep.subr.bf16.mxu0 %v1817
    %2094 = vmatpush1.bf16.msra.mxu0 %v1816
    %2095 = vmatprep.subr.bf16.mxu0 %v1825
    %2096 = vmatpush1.bf16.msra.mxu0 %v1824
    %2097 = vmatprep.subr.bf16.mxu0 %v1833
    %2098 = vmatpush1.bf16.msra.mxu0 %v1832
    %2099 = vmatprep.subr.bf16.mxu0 %v1841
    %2100 = vmatpush1.bf16.msra.mxu0 %v1840
    %2101 = vmatprep.subr.bf16.mxu0 %v1849
    %2102 = vmatpush1.bf16.msra.mxu0 %v1848
    %2103 = vmatprep.subr.bf16.mxu0 %v1857
    %2104 = vmatpush1.bf16.msra.mxu0 %v1856
    %2105 = vmatprep.subr.bf16.mxu0 %v1865
    %2106 = vmatpush1.bf16.msra.mxu0 %v1864
    %2107 = vmatprep.subr.bf16.mxu0 %v1873
    %2108 = vmatpush1.bf16.msra.mxu0 %v1872
    %2109 = vmatprep.subr.bf16.mxu0 %v1881
    %2110 = vmatpush1.bf16.msra.mxu0 %v1880
    %2111 = vmatprep.subr.bf16.mxu0 %v1889
    %2112 = vmatpush1.bf16.msra.mxu0 %v1888
    %2113 = vmatprep.subr.bf16.mxu0 %v1897
    %2114 = vmatpush1.bf16.msra.mxu0 %v1896
    %2115 = vmatprep.subr.bf16.mxu0 %v1905
    %2116 = vmatpush1.bf16.msra.mxu0 %v1904
    %2117 = vmatprep.subr.bf16.mxu0 %v1913
    %2118 = vmatpush1.bf16.msra.mxu0 %v1912
    %2119 = vmatprep.mubr.bf16.mxu0 %v559
    %2120 = vmatmul.mubr.bf16.gmra.mrb[0].mxu0 %v558
    %v2121 = vpop.f32.mrb[0].mxu0
    %v2122 = vadd.f32 0.0, %v2121
    %v2123 = vpop.f32.mrb[0].mxu0
    %v2124 = vadd.f32 0.0, %v2123
    %v2125 = vpop.f32.mrb[0].mxu0
    %v2126 = vpop.f32.mrb[0].mxu0
    %2127 = vdwg.mxu0
    %2128 = vmatprep.subr.bf16.mxu0 %v1795
    %2129 = vmatpush1.bf16.msra.mxu0 %v1794
    %2130 = vmatprep.subr.bf16.mxu0 %v1803
    %2131 = vmatpush1.bf16.msra.mxu0 %v1802
    %2132 = vmatprep.subr.bf16.mxu0 %v1811
    %2133 = vmatpush1.bf16.msra.mxu0 %v1810
    %2134 = vmatprep.subr.bf16.mxu0 %v1819
    %2135 = vmatpush1.bf16.msra.mxu0 %v1818
    %2136 = vmatprep.subr.bf16.mxu0 %v1827
    %2137 = vmatpush1.bf16.msra.mxu0 %v1826
    %2138 = vmatprep.subr.bf16.mxu0 %v1835
    %2139 = vmatpush1.bf16.msra.mxu0 %v1834
    %2140 = vmatprep.subr.bf16.mxu0 %v1843
    %2141 = vmatpush1.bf16.msra.mxu0 %v1842
    %2142 = vmatprep.subr.bf16.mxu0 %v1851
    %2143 = vmatpush1.bf16.msra.mxu0 %v1850
    %2144 = vmatprep.subr.bf16.mxu0 %v1859
    %2145 = vmatpush1.bf16.msra.mxu0 %v1858
    %2146 = vmatprep.subr.bf16.mxu0 %v1867
    %2147 = vmatpush1.bf16.msra.mxu0 %v1866
    %2148 = vmatprep.subr.bf16.mxu0 %v1875
    %2149 = vmatpush1.bf16.msra.mxu0 %v1874
    %2150 = vmatprep.subr.bf16.mxu0 %v1883
    %2151 = vmatpush1.bf16.msra.mxu0 %v1882
    %2152 = vmatprep.subr.bf16.mxu0 %v1891
    %2153 = vmatpush1.bf16.msra.mxu0 %v1890
    %2154 = vmatprep.subr.bf16.mxu0 %v1899
    %2155 = vmatpush1.bf16.msra.mxu0 %v1898
    %2156 = vmatprep.subr.bf16.mxu0 %v1907
    %2157 = vmatpush1.bf16.msra.mxu0 %v1906
    %2158 = vmatprep.subr.bf16.mxu0 %v1915
    %2159 = vmatpush1.bf16.msra.mxu0 %v1914
    %2160 = vmatprep.mubr.bf16.mxu0 %v559
    %2161 = vmatmul.mubr.bf16.gmra.mrb[0].mxu0 %v558
    %v2162 = vpop.f32.mrb[0].mxu0
    %v2163 = vadd.f32 0.0, %v2162
    %v2164 = vpop.f32.mrb[0].mxu0
    %v2165 = vadd.f32 0.0, %v2164
    %v2166 = vpop.f32.mrb[0].mxu0
    %v2167 = vpop.f32.mrb[0].mxu0
    %2168 = vdwg.mxu0
    %2169 = vmatprep.subr.bf16.mxu0 %v1797
    %2170 = vmatpush1.bf16.msra.mxu0 %v1796
    %2171 = vmatprep.subr.bf16.mxu0 %v1805
    %2172 = vmatpush1.bf16.msra.mxu0 %v1804
    %2173 = vmatprep.subr.bf16.mxu0 %v1813
    %2174 = vmatpush1.bf16.msra.mxu0 %v1812
    %2175 = vmatprep.subr.bf16.mxu0 %v1821
    %2176 = vmatpush1.bf16.msra.mxu0 %v1820
    %2177 = vmatprep.subr.bf16.mxu0 %v1829
    %2178 = vmatpush1.bf16.msra.mxu0 %v1828
    %2179 = vmatprep.subr.bf16.mxu0 %v1837
    %2180 = vmatpush1.bf16.msra.mxu0 %v1836
    %2181 = vmatprep.subr.bf16.mxu0 %v1845
    %2182 = vmatpush1.bf16.msra.mxu0 %v1844
    %2183 = vmatprep.subr.bf16.mxu0 %v1853
    %2184 = vmatpush1.bf16.msra.mxu0 %v1852
    %2185 = vmatprep.subr.bf16.mxu0 %v1861
    %2186 = vmatpush1.bf16.msra.mxu0 %v1860
    %2187 = vmatprep.subr.bf16.mxu0 %v1869
    %2188 = vmatpush1.bf16.msra.mxu0 %v1868
    %2189 = vmatprep.subr.bf16.mxu0 %v1877
    %2190 = vmatpush1.bf16.msra.mxu0 %v1876
    %2191 = vmatprep.subr.bf16.mxu0 %v1885
    %2192 = vmatpush1.bf16.msra.mxu0 %v1884
    %2193 = vmatprep.subr.bf16.mxu0 %v1893
    %2194 = vmatpush1.bf16.msra.mxu0 %v1892
    %2195 = vmatprep.subr.bf16.mxu0 %v1901
    %2196 = vmatpush1.bf16.msra.mxu0 %v1900
    %2197 = vmatprep.subr.bf16.mxu0 %v1909
    %2198 = vmatpush1.bf16.msra.mxu0 %v1908
    %2199 = vmatprep.subr.bf16.mxu0 %v1917
    %2200 = vmatpush1.bf16.msra.mxu0 %v1916
    %2201 = vmatprep.mubr.bf16.mxu0 %v559
    %2202 = vmatmul.mubr.bf16.gmra.mrb[0].mxu0 %v558
    %v2203 = vpop.f32.mrb[0].mxu0
    %v2204 = vadd.f32 0.0, %v2203
    %v2205 = vpop.f32.mrb[0].mxu0
    %v2206 = vadd.f32 0.0, %v2205
    %v2207 = vpop.f32.mrb[0].mxu0
    %v2208 = vpop.f32.mrb[0].mxu0
    %2209 = vdwg.mxu0
    %v2402 = vunpack.c.l.b16 %v192
    %v2403 = vunpack.c.h.b16 %v192
    %v2404 = vunpack.c.l.b16 %v193
    %v2405 = vunpack.c.h.b16 %v193
    %v2406 = vunpack.c.l.b16 %v194
    %v2407 = vunpack.c.h.b16 %v194
    %v2408 = vunpack.c.l.b16 %v195
    %v2409 = vunpack.c.h.b16 %v195
    %v2410 = vunpack.c.l.b16 %v196
    %v2411 = vunpack.c.h.b16 %v196
    %v2412 = vunpack.c.l.b16 %v197
    %v2413 = vunpack.c.h.b16 %v197
    %v2414 = vunpack.c.l.b16 %v198
    %v2415 = vunpack.c.h.b16 %v198
    %v2416 = vunpack.c.l.b16 %v199
    %v2417 = vunpack.c.h.b16 %v199
    %v2418 = vunpack.c.l.b16 %v200
    %v2419 = vunpack.c.h.b16 %v200
    %v2420 = vunpack.c.l.b16 %v201
    %v2421 = vunpack.c.h.b16 %v201
    %v2422 = vunpack.c.l.b16 %v202
    %v2423 = vunpack.c.h.b16 %v202
    %v2424 = vunpack.c.l.b16 %v203
    %v2425 = vunpack.c.h.b16 %v203
    %v2426 = vunpack.c.l.b16 %v204
    %v2427 = vunpack.c.h.b16 %v204
    %v2428 = vunpack.c.l.b16 %v205
    %v2429 = vunpack.c.h.b16 %v205
    %v2430 = vunpack.c.l.b16 %v206
    %v2431 = vunpack.c.h.b16 %v206
    %v2432 = vunpack.c.l.b16 %v207
    %v2433 = vunpack.c.h.b16 %v207
    %v2434 = vunpack.c.l.b16 %v208
    %v2435 = vunpack.c.h.b16 %v208
    %v2436 = vunpack.c.l.b16 %v209
    %v2437 = vunpack.c.h.b16 %v209
    %v2438 = vunpack.c.l.b16 %v210
    %v2439 = vunpack.c.h.b16 %v210
    %v2440 = vunpack.c.l.b16 %v211
    %v2441 = vunpack.c.h.b16 %v211
    %v2442 = vunpack.c.l.b16 %v212
    %v2443 = vunpack.c.h.b16 %v212
    %v2444 = vunpack.c.l.b16 %v213
    %v2445 = vunpack.c.h.b16 %v213
    %v2446 = vunpack.c.l.b16 %v214
    %v2447 = vunpack.c.h.b16 %v214
    %v2448 = vunpack.c.l.b16 %v215
    %v2449 = vunpack.c.h.b16 %v215
    %v2450 = vunpack.c.l.b16 %v216
    %v2451 = vunpack.c.h.b16 %v216
    %v2452 = vunpack.c.l.b16 %v217
    %v2453 = vunpack.c.h.b16 %v217
    %v2454 = vunpack.c.l.b16 %v218
    %v2455 = vunpack.c.h.b16 %v218
    %v2456 = vunpack.c.l.b16 %v219
    %v2457 = vunpack.c.h.b16 %v219
    %v2458 = vunpack.c.l.b16 %v220
    %v2459 = vunpack.c.h.b16 %v220
    %v2460 = vunpack.c.l.b16 %v221
    %v2461 = vunpack.c.h.b16 %v221
    %v2462 = vunpack.c.l.b16 %v222
    %v2463 = vunpack.c.h.b16 %v222
    %v2464 = vunpack.c.l.b16 %v223
    %v2465 = vunpack.c.h.b16 %v223
    %v2466 = vunpack.c.l.b16 %v224
    %v2467 = vunpack.c.h.b16 %v224
    %v2468 = vunpack.c.l.b16 %v225
    %v2469 = vunpack.c.h.b16 %v225
    %v2470 = vunpack.c.l.b16 %v226
    %v2471 = vunpack.c.h.b16 %v226
    %v2472 = vunpack.c.l.b16 %v227
    %v2473 = vunpack.c.h.b16 %v227
    %v2474 = vunpack.c.l.b16 %v228
    %v2475 = vunpack.c.h.b16 %v228
    %v2476 = vunpack.c.l.b16 %v229
    %v2477 = vunpack.c.h.b16 %v229
    %v2478 = vunpack.c.l.b16 %v230
    %v2479 = vunpack.c.h.b16 %v230
    %v2480 = vunpack.c.l.b16 %v231
    %v2481 = vunpack.c.h.b16 %v231
    %v2482 = vunpack.c.l.b16 %v232
    %v2483 = vunpack.c.h.b16 %v232
    %v2484 = vunpack.c.l.b16 %v233
    %v2485 = vunpack.c.h.b16 %v233
    %v2486 = vunpack.c.l.b16 %v234
    %v2487 = vunpack.c.h.b16 %v234
    %v2488 = vunpack.c.l.b16 %v235
    %v2489 = vunpack.c.h.b16 %v235
    %v2490 = vunpack.c.l.b16 %v236
    %v2491 = vunpack.c.h.b16 %v236
    %v2492 = vunpack.c.l.b16 %v237
    %v2493 = vunpack.c.h.b16 %v237
    %v2494 = vunpack.c.l.b16 %v238
    %v2495 = vunpack.c.h.b16 %v238
    %v2496 = vunpack.c.l.b16 %v239
    %v2497 = vunpack.c.h.b16 %v239
    %v2498 = vunpack.c.l.b16 %v240
    %v2499 = vunpack.c.h.b16 %v240
    %v2500 = vunpack.c.l.b16 %v241
    %v2501 = vunpack.c.h.b16 %v241
    %v2502 = vunpack.c.l.b16 %v242
    %v2503 = vunpack.c.h.b16 %v242
    %v2504 = vunpack.c.l.b16 %v243
    %v2505 = vunpack.c.h.b16 %v243
    %v2506 = vunpack.c.l.b16 %v244
    %v2507 = vunpack.c.h.b16 %v244
    %v2508 = vunpack.c.l.b16 %v245
    %v2509 = vunpack.c.h.b16 %v245
    %v2510 = vunpack.c.l.b16 %v246
    %v2511 = vunpack.c.h.b16 %v246
    %v2512 = vunpack.c.l.b16 %v247
    %v2513 = vunpack.c.h.b16 %v247
    %v2514 = vunpack.c.l.b16 %v248
    %v2515 = vunpack.c.h.b16 %v248
    %v2516 = vunpack.c.l.b16 %v249
    %v2517 = vunpack.c.h.b16 %v249
    %v2518 = vunpack.c.l.b16 %v250
    %v2519 = vunpack.c.h.b16 %v250
    %v2520 = vunpack.c.l.b16 %v251
    %v2521 = vunpack.c.h.b16 %v251
    %v2522 = vunpack.c.l.b16 %v252
    %v2523 = vunpack.c.h.b16 %v252
    %v2524 = vunpack.c.l.b16 %v253
    %v2525 = vunpack.c.h.b16 %v253
    %v2526 = vunpack.c.l.b16 %v254
    %v2527 = vunpack.c.h.b16 %v254
    %v2528 = vunpack.c.l.b16 %v255
    %v2529 = vunpack.c.h.b16 %v255
    %v2530 = vunpack.c.l.b16 %v256
    %v2531 = vunpack.c.h.b16 %v256
    %v2532 = vunpack.c.l.b16 %v257
    %v2533 = vunpack.c.h.b16 %v257
    %v2534 = vunpack.c.l.b16 %v258
    %v2535 = vunpack.c.h.b16 %v258
    %v2536 = vunpack.c.l.b16 %v259
    %v2537 = vunpack.c.h.b16 %v259
    %v2538 = vunpack.c.l.b16 %v260
    %v2539 = vunpack.c.h.b16 %v260
    %v2540 = vunpack.c.l.b16 %v261
    %v2541 = vunpack.c.h.b16 %v261
    %v2542 = vunpack.c.l.b16 %v262
    %v2543 = vunpack.c.h.b16 %v262
    %v2544 = vunpack.c.l.b16 %v263
    %v2545 = vunpack.c.h.b16 %v263
    %v2546 = vunpack.c.l.b16 %v264
    %v2547 = vunpack.c.h.b16 %v264
    %v2548 = vunpack.c.l.b16 %v265
    %v2549 = vunpack.c.h.b16 %v265
    %v2550 = vunpack.c.l.b16 %v266
    %v2551 = vunpack.c.h.b16 %v266
    %v2552 = vunpack.c.l.b16 %v267
    %v2553 = vunpack.c.h.b16 %v267
    %v2554 = vunpack.c.l.b16 %v268
    %v2555 = vunpack.c.h.b16 %v268
    %v2556 = vunpack.c.l.b16 %v269
    %v2557 = vunpack.c.h.b16 %v269
    %v2558 = vunpack.c.l.b16 %v270
    %v2559 = vunpack.c.h.b16 %v270
    %v2560 = vunpack.c.l.b16 %v271
    %v2561 = vunpack.c.h.b16 %v271
    %v2562 = vunpack.c.l.b16 %v272
    %v2563 = vunpack.c.h.b16 %v272
    %v2564 = vunpack.c.l.b16 %v273
    %v2565 = vunpack.c.h.b16 %v273
    %v2566 = vunpack.c.l.b16 %v274
    %v2567 = vunpack.c.h.b16 %v274
    %v2568 = vunpack.c.l.b16 %v275
    %v2569 = vunpack.c.h.b16 %v275
    %v2570 = vunpack.c.l.b16 %v276
    %v2571 = vunpack.c.h.b16 %v276
    %v2572 = vunpack.c.l.b16 %v277
    %v2573 = vunpack.c.h.b16 %v277
    %v2574 = vunpack.c.l.b16 %v278
    %v2575 = vunpack.c.h.b16 %v278
    %v2576 = vunpack.c.l.b16 %v279
    %v2577 = vunpack.c.h.b16 %v279
    %v2578 = vunpack.c.l.b16 %v280
    %v2579 = vunpack.c.h.b16 %v280
    %v2580 = vunpack.c.l.b16 %v281
    %v2581 = vunpack.c.h.b16 %v281
    %v2582 = vunpack.c.l.b16 %v282
    %v2583 = vunpack.c.h.b16 %v282
    %v2584 = vunpack.c.l.b16 %v283
    %v2585 = vunpack.c.h.b16 %v283
    %v2586 = vunpack.c.l.b16 %v284
    %v2587 = vunpack.c.h.b16 %v284
    %v2588 = vunpack.c.l.b16 %v285
    %v2589 = vunpack.c.h.b16 %v285
    %v2590 = vunpack.c.l.b16 %v286
    %v2591 = vunpack.c.h.b16 %v286
    %v2592 = vunpack.c.l.b16 %v287
    %v2593 = vunpack.c.h.b16 %v287
    %v2594 = vunpack.c.l.b16 %v288
    %v2595 = vunpack.c.h.b16 %v288
    %v2596 = vunpack.c.l.b16 %v289
    %v2597 = vunpack.c.h.b16 %v289
    %v2598 = vunpack.c.l.b16 %v290
    %v2599 = vunpack.c.h.b16 %v290
    %v2600 = vunpack.c.l.b16 %v291
    %v2601 = vunpack.c.h.b16 %v291
    %v2602 = vunpack.c.l.b16 %v292
    %v2603 = vunpack.c.h.b16 %v292
    %v2604 = vunpack.c.l.b16 %v293
    %v2605 = vunpack.c.h.b16 %v293
    %v2606 = vunpack.c.l.b16 %v294
    %v2607 = vunpack.c.h.b16 %v294
    %v2608 = vunpack.c.l.b16 %v295
    %v2609 = vunpack.c.h.b16 %v295
    %v2610 = vunpack.c.l.b16 %v296
    %v2611 = vunpack.c.h.b16 %v296
    %v2612 = vunpack.c.l.b16 %v297
    %v2613 = vunpack.c.h.b16 %v297
    %v2614 = vunpack.c.l.b16 %v298
    %v2615 = vunpack.c.h.b16 %v298
    %v2616 = vunpack.c.l.b16 %v299
    %v2617 = vunpack.c.h.b16 %v299
    %v2618 = vunpack.c.l.b16 %v300
    %v2619 = vunpack.c.h.b16 %v300
    %v2620 = vunpack.c.l.b16 %v301
    %v2621 = vunpack.c.h.b16 %v301
    %v2622 = vunpack.c.l.b16 %v302
    %v2623 = vunpack.c.h.b16 %v302
    %v2624 = vunpack.c.l.b16 %v303
    %v2625 = vunpack.c.h.b16 %v303
    %v2626 = vunpack.c.l.b16 %v304
    %v2627 = vunpack.c.h.b16 %v304
    %v2628 = vunpack.c.l.b16 %v305
    %v2629 = vunpack.c.h.b16 %v305
    %v2630 = vunpack.c.l.b16 %v306
    %v2631 = vunpack.c.h.b16 %v306
    %v2632 = vunpack.c.l.b16 %v307
    %v2633 = vunpack.c.h.b16 %v307
    %v2634 = vunpack.c.l.b16 %v308
    %v2635 = vunpack.c.h.b16 %v308
    %v2636 = vunpack.c.l.b16 %v309
    %v2637 = vunpack.c.h.b16 %v309
    %v2638 = vunpack.c.l.b16 %v310
    %v2639 = vunpack.c.h.b16 %v310
    %v2640 = vunpack.c.l.b16 %v311
    %v2641 = vunpack.c.h.b16 %v311
    %v2642 = vunpack.c.l.b16 %v312
    %v2643 = vunpack.c.h.b16 %v312
    %v2644 = vunpack.c.l.b16 %v313
    %v2645 = vunpack.c.h.b16 %v313
    %v2646 = vunpack.c.l.b16 %v314
    %v2647 = vunpack.c.h.b16 %v314
    %v2648 = vunpack.c.l.b16 %v315
    %v2649 = vunpack.c.h.b16 %v315
    %v2650 = vunpack.c.l.b16 %v316
    %v2651 = vunpack.c.h.b16 %v316
    %v2652 = vunpack.c.l.b16 %v317
    %v2653 = vunpack.c.h.b16 %v317
    %v2654 = vunpack.c.l.b16 %v318
    %v2655 = vunpack.c.h.b16 %v318
    %v2656 = vunpack.c.l.b16 %v319
    %v2657 = vunpack.c.h.b16 %v319
    %v2658 = vunpack.c.l.b16 %v320
    %v2659 = vunpack.c.h.b16 %v320
    %v2660 = vunpack.c.l.b16 %v321
    %v2661 = vunpack.c.h.b16 %v321
    %v2662 = vunpack.c.l.b16 %v322
    %v2663 = vunpack.c.h.b16 %v322
    %v2664 = vunpack.c.l.b16 %v323
    %v2665 = vunpack.c.h.b16 %v323
    %v2666 = vunpack.c.l.b16 %v324
    %v2667 = vunpack.c.h.b16 %v324
    %v2668 = vunpack.c.l.b16 %v325
    %v2669 = vunpack.c.h.b16 %v325
    %v2670 = vunpack.c.l.b16 %v326
    %v2671 = vunpack.c.h.b16 %v326
    %v2672 = vunpack.c.l.b16 %v327
    %v2673 = vunpack.c.h.b16 %v327
    %v2674 = vunpack.c.l.b16 %v328
    %v2675 = vunpack.c.h.b16 %v328
    %v2676 = vunpack.c.l.b16 %v329
    %v2677 = vunpack.c.h.b16 %v329
    %v2678 = vunpack.c.l.b16 %v330
    %v2679 = vunpack.c.h.b16 %v330
    %v2680 = vunpack.c.l.b16 %v331
    %v2681 = vunpack.c.h.b16 %v331
    %v2682 = vunpack.c.l.b16 %v332
    %v2683 = vunpack.c.h.b16 %v332
    %v2684 = vunpack.c.l.b16 %v333
    %v2685 = vunpack.c.h.b16 %v333
    %v2686 = vunpack.c.l.b16 %v334
    %v2687 = vunpack.c.h.b16 %v334
    %v2688 = vunpack.c.l.b16 %v335
    %v2689 = vunpack.c.h.b16 %v335
    %v2690 = vunpack.c.l.b16 %v336
    %v2691 = vunpack.c.h.b16 %v336
    %v2692 = vunpack.c.l.b16 %v337
    %v2693 = vunpack.c.h.b16 %v337
    %v2694 = vunpack.c.l.b16 %v338
    %v2695 = vunpack.c.h.b16 %v338
    %v2696 = vunpack.c.l.b16 %v339
    %v2697 = vunpack.c.h.b16 %v339
    %v2698 = vunpack.c.l.b16 %v340
    %v2699 = vunpack.c.h.b16 %v340
    %v2700 = vunpack.c.l.b16 %v341
    %v2701 = vunpack.c.h.b16 %v341
    %v2702 = vunpack.c.l.b16 %v342
    %v2703 = vunpack.c.h.b16 %v342
    %v2704 = vunpack.c.l.b16 %v343
    %v2705 = vunpack.c.h.b16 %v343
    %v2706 = vunpack.c.l.b16 %v344
    %v2707 = vunpack.c.h.b16 %v344
    %v2708 = vunpack.c.l.b16 %v345
    %v2709 = vunpack.c.h.b16 %v345
    %v2710 = vunpack.c.l.b16 %v346
    %v2711 = vunpack.c.h.b16 %v346
    %v2712 = vunpack.c.l.b16 %v347
    %v2713 = vunpack.c.h.b16 %v347
    %v2714 = vunpack.c.l.b16 %v348
    %v2715 = vunpack.c.h.b16 %v348
    %v2716 = vunpack.c.l.b16 %v349
    %v2717 = vunpack.c.h.b16 %v349
    %v2718 = vunpack.c.l.b16 %v350
    %v2719 = vunpack.c.h.b16 %v350
    %v2720 = vunpack.c.l.b16 %v351
    %v2721 = vunpack.c.h.b16 %v351
    %v2722 = vunpack.c.l.b16 %v352
    %v2723 = vunpack.c.h.b16 %v352
    %v2724 = vunpack.c.l.b16 %v353
    %v2725 = vunpack.c.h.b16 %v353
    %v2726 = vunpack.c.l.b16 %v354
    %v2727 = vunpack.c.h.b16 %v354
    %v2728 = vunpack.c.l.b16 %v355
    %v2729 = vunpack.c.h.b16 %v355
    %v2730 = vunpack.c.l.b16 %v356
    %v2731 = vunpack.c.h.b16 %v356
    %v2732 = vunpack.c.l.b16 %v357
    %v2733 = vunpack.c.h.b16 %v357
    %v2734 = vunpack.c.l.b16 %v358
    %v2735 = vunpack.c.h.b16 %v358
    %v2736 = vunpack.c.l.b16 %v359
    %v2737 = vunpack.c.h.b16 %v359
    %v2738 = vunpack.c.l.b16 %v360
    %v2739 = vunpack.c.h.b16 %v360
    %v2740 = vunpack.c.l.b16 %v361
    %v2741 = vunpack.c.h.b16 %v361
    %v2742 = vunpack.c.l.b16 %v362
    %v2743 = vunpack.c.h.b16 %v362
    %v2744 = vunpack.c.l.b16 %v363
    %v2745 = vunpack.c.h.b16 %v363
    %v2746 = vunpack.c.l.b16 %v364
    %v2747 = vunpack.c.h.b16 %v364
    %v2748 = vunpack.c.l.b16 %v365
    %v2749 = vunpack.c.h.b16 %v365
    %v2750 = vunpack.c.l.b16 %v366
    %v2751 = vunpack.c.h.b16 %v366
    %v2752 = vunpack.c.l.b16 %v367
    %v2753 = vunpack.c.h.b16 %v367
    %v2754 = vunpack.c.l.b16 %v368
    %v2755 = vunpack.c.h.b16 %v368
    %v2756 = vunpack.c.l.b16 %v369
    %v2757 = vunpack.c.h.b16 %v369
    %v2758 = vunpack.c.l.b16 %v370
    %v2759 = vunpack.c.h.b16 %v370
    %v2760 = vunpack.c.l.b16 %v371
    %v2761 = vunpack.c.h.b16 %v371
    %v2762 = vunpack.c.l.b16 %v372
    %v2763 = vunpack.c.h.b16 %v372
    %v2764 = vunpack.c.l.b16 %v373
    %v2765 = vunpack.c.h.b16 %v373
    %v2766 = vunpack.c.l.b16 %v374
    %v2767 = vunpack.c.h.b16 %v374
    %v2768 = vunpack.c.l.b16 %v375
    %v2769 = vunpack.c.h.b16 %v375
    %v2770 = vunpack.c.l.b16 %v376
    %v2771 = vunpack.c.h.b16 %v376
    %v2772 = vunpack.c.l.b16 %v377
    %v2773 = vunpack.c.h.b16 %v377
    %v2774 = vunpack.c.l.b16 %v378
    %v2775 = vunpack.c.h.b16 %v378
    %v2776 = vunpack.c.l.b16 %v379
    %v2777 = vunpack.c.h.b16 %v379
    %v2778 = vunpack.c.l.b16 %v380
    %v2779 = vunpack.c.h.b16 %v380
    %v2780 = vunpack.c.l.b16 %v381
    %v2781 = vunpack.c.h.b16 %v381
    %v2782 = vunpack.c.l.b16 %v382
    %v2783 = vunpack.c.h.b16 %v382
    %v2784 = vunpack.c.l.b16 %v383
    %v2785 = vunpack.c.h.b16 %v383
    %v2786 = vpack.c.b16 %v2410, %v2402
    %v2787 = vpack.c.b16 %v2411, %v2403
    %v2788 = vpack.c.b16 %v2412, %v2404
    %v2789 = vpack.c.b16 %v2413, %v2405
    %v2790 = vpack.c.b16 %v2414, %v2406
    %v2791 = vpack.c.b16 %v2415, %v2407
    %v2792 = vpack.c.b16 %v2416, %v2408
    %v2793 = vpack.c.b16 %v2417, %v2409
    %v2794 = vpack.c.b16 %v2426, %v2418
    %v2795 = vpack.c.b16 %v2427, %v2419
    %v2796 = vpack.c.b16 %v2428, %v2420
    %v2797 = vpack.c.b16 %v2429, %v2421
    %v2798 = vpack.c.b16 %v2430, %v2422
    %v2799 = vpack.c.b16 %v2431, %v2423
    %v2800 = vpack.c.b16 %v2432, %v2424
    %v2801 = vpack.c.b16 %v2433, %v2425
    %v2802 = vpack.c.b16 %v2442, %v2434
    %v2803 = vpack.c.b16 %v2443, %v2435
    %v2804 = vpack.c.b16 %v2444, %v2436
    %v2805 = vpack.c.b16 %v2445, %v2437
    %v2806 = vpack.c.b16 %v2446, %v2438
    %v2807 = vpack.c.b16 %v2447, %v2439
    %v2808 = vpack.c.b16 %v2448, %v2440
    %v2809 = vpack.c.b16 %v2449, %v2441
    %v2810 = vpack.c.b16 %v2458, %v2450
    %v2811 = vpack.c.b16 %v2459, %v2451
    %v2812 = vpack.c.b16 %v2460, %v2452
    %v2813 = vpack.c.b16 %v2461, %v2453
    %v2814 = vpack.c.b16 %v2462, %v2454
    %v2815 = vpack.c.b16 %v2463, %v2455
    %v2816 = vpack.c.b16 %v2464, %v2456
    %v2817 = vpack.c.b16 %v2465, %v2457
    %v2818 = vpack.c.b16 %v2474, %v2466
    %v2819 = vpack.c.b16 %v2475, %v2467
    %v2820 = vpack.c.b16 %v2476, %v2468
    %v2821 = vpack.c.b16 %v2477, %v2469
    %v2822 = vpack.c.b16 %v2478, %v2470
    %v2823 = vpack.c.b16 %v2479, %v2471
    %v2824 = vpack.c.b16 %v2480, %v2472
    %v2825 = vpack.c.b16 %v2481, %v2473
    %v2826 = vpack.c.b16 %v2490, %v2482
    %v2827 = vpack.c.b16 %v2491, %v2483
    %v2828 = vpack.c.b16 %v2492, %v2484
    %v2829 = vpack.c.b16 %v2493, %v2485
    %v2830 = vpack.c.b16 %v2494, %v2486
    %v2831 = vpack.c.b16 %v2495, %v2487
    %v2832 = vpack.c.b16 %v2496, %v2488
    %v2833 = vpack.c.b16 %v2497, %v2489
    %v2834 = vpack.c.b16 %v2506, %v2498
    %v2835 = vpack.c.b16 %v2507, %v2499
    %v2836 = vpack.c.b16 %v2508, %v2500
    %v2837 = vpack.c.b16 %v2509, %v2501
    %v2838 = vpack.c.b16 %v2510, %v2502
    %v2839 = vpack.c.b16 %v2511, %v2503
    %v2840 = vpack.c.b16 %v2512, %v2504
    %v2841 = vpack.c.b16 %v2513, %v2505
    %v2842 = vpack.c.b16 %v2522, %v2514
    %v2843 = vpack.c.b16 %v2523, %v2515
    %v2844 = vpack.c.b16 %v2524, %v2516
    %v2845 = vpack.c.b16 %v2525, %v2517
    %v2846 = vpack.c.b16 %v2526, %v2518
    %v2847 = vpack.c.b16 %v2527, %v2519
    %v2848 = vpack.c.b16 %v2528, %v2520
    %v2849 = vpack.c.b16 %v2529, %v2521
    %v2850 = vpack.c.b16 %v2538, %v2530
    %v2851 = vpack.c.b16 %v2539, %v2531
    %v2852 = vpack.c.b16 %v2540, %v2532
    %v2853 = vpack.c.b16 %v2541, %v2533
    %v2854 = vpack.c.b16 %v2542, %v2534
    %v2855 = vpack.c.b16 %v2543, %v2535
    %v2856 = vpack.c.b16 %v2544, %v2536
    %v2857 = vpack.c.b16 %v2545, %v2537
    %v2858 = vpack.c.b16 %v2554, %v2546
    %v2859 = vpack.c.b16 %v2555, %v2547
    %v2860 = vpack.c.b16 %v2556, %v2548
    %v2861 = vpack.c.b16 %v2557, %v2549
    %v2862 = vpack.c.b16 %v2558, %v2550
    %v2863 = vpack.c.b16 %v2559, %v2551
    %v2864 = vpack.c.b16 %v2560, %v2552
    %v2865 = vpack.c.b16 %v2561, %v2553
    %v2866 = vpack.c.b16 %v2570, %v2562
    %v2867 = vpack.c.b16 %v2571, %v2563
    %v2868 = vpack.c.b16 %v2572, %v2564
    %v2869 = vpack.c.b16 %v2573, %v2565
    %v2870 = vpack.c.b16 %v2574, %v2566
    %v2871 = vpack.c.b16 %v2575, %v2567
    %v2872 = vpack.c.b16 %v2576, %v2568
    %v2873 = vpack.c.b16 %v2577, %v2569
    %v2874 = vpack.c.b16 %v2586, %v2578
    %v2875 = vpack.c.b16 %v2587, %v2579
    %v2876 = vpack.c.b16 %v2588, %v2580
    %v2877 = vpack.c.b16 %v2589, %v2581
    %v2878 = vpack.c.b16 %v2590, %v2582
    %v2879 = vpack.c.b16 %v2591, %v2583
    %v2880 = vpack.c.b16 %v2592, %v2584
    %v2881 = vpack.c.b16 %v2593, %v2585
    %v2882 = vpack.c.b16 %v2602, %v2594
    %v2883 = vpack.c.b16 %v2603, %v2595
    %v2884 = vpack.c.b16 %v2604, %v2596
    %v2885 = vpack.c.b16 %v2605, %v2597
    %v2886 = vpack.c.b16 %v2606, %v2598
    %v2887 = vpack.c.b16 %v2607, %v2599
    %v2888 = vpack.c.b16 %v2608, %v2600
    %v2889 = vpack.c.b16 %v2609, %v2601
    %v2890 = vpack.c.b16 %v2618, %v2610
    %v2891 = vpack.c.b16 %v2619, %v2611
    %v2892 = vpack.c.b16 %v2620, %v2612
    %v2893 = vpack.c.b16 %v2621, %v2613
    %v2894 = vpack.c.b16 %v2622, %v2614
    %v2895 = vpack.c.b16 %v2623, %v2615
    %v2896 = vpack.c.b16 %v2624, %v2616
    %v2897 = vpack.c.b16 %v2625, %v2617
    %v2898 = vpack.c.b16 %v2634, %v2626
    %v2899 = vpack.c.b16 %v2635, %v2627
    %v2900 = vpack.c.b16 %v2636, %v2628
    %v2901 = vpack.c.b16 %v2637, %v2629
    %v2902 = vpack.c.b16 %v2638, %v2630
    %v2903 = vpack.c.b16 %v2639, %v2631
    %v2904 = vpack.c.b16 %v2640, %v2632
    %v2905 = vpack.c.b16 %v2641, %v2633
    %v2906 = vpack.c.b16 %v2650, %v2642
    %v2907 = vpack.c.b16 %v2651, %v2643
    %v2908 = vpack.c.b16 %v2652, %v2644
    %v2909 = vpack.c.b16 %v2653, %v2645
    %v2910 = vpack.c.b16 %v2654, %v2646
    %v2911 = vpack.c.b16 %v2655, %v2647
    %v2912 = vpack.c.b16 %v2656, %v2648
    %v2913 = vpack.c.b16 %v2657, %v2649
    %v2914 = vpack.c.b16 %v2666, %v2658
    %v2915 = vpack.c.b16 %v2667, %v2659
    %v2916 = vpack.c.b16 %v2668, %v2660
    %v2917 = vpack.c.b16 %v2669, %v2661
    %v2918 = vpack.c.b16 %v2670, %v2662
    %v2919 = vpack.c.b16 %v2671, %v2663
    %v2920 = vpack.c.b16 %v2672, %v2664
    %v2921 = vpack.c.b16 %v2673, %v2665
    %v2922 = vpack.c.b16 %v2682, %v2674
    %v2923 = vpack.c.b16 %v2683, %v2675
    %v2924 = vpack.c.b16 %v2684, %v2676
    %v2925 = vpack.c.b16 %v2685, %v2677
    %v2926 = vpack.c.b16 %v2686, %v2678
    %v2927 = vpack.c.b16 %v2687, %v2679
    %v2928 = vpack.c.b16 %v2688, %v2680
    %v2929 = vpack.c.b16 %v2689, %v2681
    %v2930 = vpack.c.b16 %v2698, %v2690
    %v2931 = vpack.c.b16 %v2699, %v2691
    %v2932 = vpack.c.b16 %v2700, %v2692
    %v2933 = vpack.c.b16 %v2701, %v2693
    %v2934 = vpack.c.b16 %v2702, %v2694
    %v2935 = vpack.c.b16 %v2703, %v2695
    %v2936 = vpack.c.b16 %v2704, %v2696
    %v2937 = vpack.c.b16 %v2705, %v2697
    %v2938 = vpack.c.b16 %v2714, %v2706
    %v2939 = vpack.c.b16 %v2715, %v2707
    %v2940 = vpack.c.b16 %v2716, %v2708
    %v2941 = vpack.c.b16 %v2717, %v2709
    %v2942 = vpack.c.b16 %v2718, %v2710
    %v2943 = vpack.c.b16 %v2719, %v2711
    %v2944 = vpack.c.b16 %v2720, %v2712
    %v2945 = vpack.c.b16 %v2721, %v2713
    %v2946 = vpack.c.b16 %v2730, %v2722
    %v2947 = vpack.c.b16 %v2731, %v2723
    %v2948 = vpack.c.b16 %v2732, %v2724
    %v2949 = vpack.c.b16 %v2733, %v2725
    %v2950 = vpack.c.b16 %v2734, %v2726
    %v2951 = vpack.c.b16 %v2735, %v2727
    %v2952 = vpack.c.b16 %v2736, %v2728
    %v2953 = vpack.c.b16 %v2737, %v2729
    %v2954 = vpack.c.b16 %v2746, %v2738
    %v2955 = vpack.c.b16 %v2747, %v2739
    %v2956 = vpack.c.b16 %v2748, %v2740
    %v2957 = vpack.c.b16 %v2749, %v2741
    %v2958 = vpack.c.b16 %v2750, %v2742
    %v2959 = vpack.c.b16 %v2751, %v2743
    %v2960 = vpack.c.b16 %v2752, %v2744
    %v2961 = vpack.c.b16 %v2753, %v2745
    %v2962 = vpack.c.b16 %v2762, %v2754
    %v2963 = vpack.c.b16 %v2763, %v2755
    %v2964 = vpack.c.b16 %v2764, %v2756
    %v2965 = vpack.c.b16 %v2765, %v2757
    %v2966 = vpack.c.b16 %v2766, %v2758
    %v2967 = vpack.c.b16 %v2767, %v2759
    %v2968 = vpack.c.b16 %v2768, %v2760
    %v2969 = vpack.c.b16 %v2769, %v2761
    %v2970 = vpack.c.b16 %v2778, %v2770
    %v2971 = vpack.c.b16 %v2779, %v2771
    %v2972 = vpack.c.b16 %v2780, %v2772
    %v2973 = vpack.c.b16 %v2781, %v2773
    %v2974 = vpack.c.b16 %v2782, %v2774
    %v2975 = vpack.c.b16 %v2783, %v2775
    %v2976 = vpack.c.b16 %v2784, %v2776
    %v2977 = vpack.c.b16 %v2785, %v2777
    %3170 = vmatprep.subr.bf16.mxu0 %v2787
    %3171 = vmatpush1.bf16.msra.mxu0 %v2786
    %3172 = vmatprep.subr.bf16.mxu0 %v2795
    %3173 = vmatpush1.bf16.msra.mxu0 %v2794
    %3174 = vmatprep.subr.bf16.mxu0 %v2803
    %3175 = vmatpush1.bf16.msra.mxu0 %v2802
    %3176 = vmatprep.subr.bf16.mxu0 %v2811
    %3177 = vmatpush1.bf16.msra.mxu0 %v2810
    %3178 = vmatprep.subr.bf16.mxu0 %v2819
    %3179 = vmatpush1.bf16.msra.mxu0 %v2818
    %3180 = vmatprep.subr.bf16.mxu0 %v2827
    %3181 = vmatpush1.bf16.msra.mxu0 %v2826
    %3182 = vmatprep.subr.bf16.mxu0 %v2835
    %3183 = vmatpush1.bf16.msra.mxu0 %v2834
    %3184 = vmatprep.subr.bf16.mxu0 %v2843
    %3185 = vmatpush1.bf16.msra.mxu0 %v2842
    %3186 = vmatprep.subr.bf16.mxu0 %v2851
    %3187 = vmatpush1.bf16.msra.mxu0 %v2850
    %3188 = vmatprep.subr.bf16.mxu0 %v2859
    %3189 = vmatpush1.bf16.msra.mxu0 %v2858
    %3190 = vmatprep.subr.bf16.mxu0 %v2867
    %3191 = vmatpush1.bf16.msra.mxu0 %v2866
    %3192 = vmatprep.subr.bf16.mxu0 %v2875
    %3193 = vmatpush1.bf16.msra.mxu0 %v2874
    %3194 = vmatprep.subr.bf16.mxu0 %v2883
    %3195 = vmatpush1.bf16.msra.mxu0 %v2882
    %3196 = vmatprep.subr.bf16.mxu0 %v2891
    %3197 = vmatpush1.bf16.msra.mxu0 %v2890
    %3198 = vmatprep.subr.bf16.mxu0 %v2899
    %3199 = vmatpush1.bf16.msra.mxu0 %v2898
    %3200 = vmatprep.subr.bf16.mxu0 %v2907
    %3201 = vmatpush1.bf16.msra.mxu0 %v2906
    %3202 = vmatprep.mubr.bf16.mxu0 %v1405
    %3203 = vmatmul.mubr.bf16.gmra.mrb[0].mxu0 %v1404
    %v3204 = vpop.f32.mrb[0].mxu0
    %v3205 = vadd.f32 %v2081, %v3204
    %v3206 = vpop.f32.mrb[0].mxu0
    %v3207 = vadd.f32 %v2083, %v3206
    %v3208 = vpop.f32.mrb[0].mxu0
    %v3209 = vpop.f32.mrb[0].mxu0
    %3210 = vdwg.mxu0
    %3211 = vmatprep.subr.bf16.mxu0 %v2915
    %3212 = vmatpush1.bf16.msra.mxu0 %v2914
    %3213 = vmatprep.subr.bf16.mxu0 %v2923
    %3214 = vmatpush1.bf16.msra.mxu0 %v2922
    %3215 = vmatprep.subr.bf16.mxu0 %v2931
    %3216 = vmatpush1.bf16.msra.mxu0 %v2930
    %3217 = vmatprep.subr.bf16.mxu0 %v2939
    %3218 = vmatpush1.bf16.msra.mxu0 %v2938
    %3219 = vmatprep.subr.bf16.mxu0 %v2947
    %3220 = vmatpush1.bf16.msra.mxu0 %v2946
    %3221 = vmatprep.subr.bf16.mxu0 %v2955
    %3222 = vmatpush1.bf16.msra.mxu0 %v2954
    %3223 = vmatprep.subr.bf16.mxu0 %v2963
    %3224 = vmatpush1.bf16.msra.mxu0 %v2962
    %3225 = vmatprep.subr.bf16.mxu0 %v2971
    %3226 = vmatpush1.bf16.msra.mxu0 %v2970
    %3227 = vmatprep.subr.bf16.mxu0 0
    %3228 = vmatpush1.bf16.msra.mxu0 0
    %3229 = vmatprep.subr.bf16.mxu0 0
    %3230 = vmatpush1.bf16.msra.mxu0 0
    %3231 = vmatprep.subr.bf16.mxu0 0
    %3232 = vmatpush1.bf16.msra.mxu0 0
    %3233 = vmatprep.subr.bf16.mxu0 0
    %3234 = vmatpush1.bf16.msra.mxu0 0
    %3235 = vmatprep.subr.bf16.mxu0 0
    %3236 = vmatpush1.bf16.msra.mxu0 0
    %3237 = vmatprep.subr.bf16.mxu0 0
    %3238 = vmatpush1.bf16.msra.mxu0 0
    %3239 = vmatprep.subr.bf16.mxu0 0
    %3240 = vmatpush1.bf16.msra.mxu0 0
    %3241 = vmatprep.subr.bf16.mxu0 0
    %3242 = vmatpush1.bf16.msra.mxu0 0
    %3243 = vmatprep.mubr.bf16.mxu0 0
    %3244 = vmatmul.mubr.bf16.gmra.mrb[0].mxu0 %v1403
    %v3245 = vpop.f32.mrb[0].mxu0
    %v3246 = vadd.f32 %v3205, %v3245
    %v3247 = vpop.f32.mrb[0].mxu0
    %v3248 = vadd.f32 %v3207, %v3247
    %v3249 = vpop.f32.mrb[0].mxu0
    %v3250 = vpop.f32.mrb[0].mxu0
    %3251 = vdwg.mxu0
    %3252 = vmatprep.subr.bf16.mxu0 %v2789
    %3253 = vmatpush1.bf16.msra.mxu0 %v2788
    %3254 = vmatprep.subr.bf16.mxu0 %v2797
    %3255 = vmatpush1.bf16.msra.mxu0 %v2796
    %3256 = vmatprep.subr.bf16.mxu0 %v2805
    %3257 = vmatpush1.bf16.msra.mxu0 %v2804
    %3258 = vmatprep.subr.bf16.mxu0 %v2813
    %3259 = vmatpush1.bf16.msra.mxu0 %v2812
    %3260 = vmatprep.subr.bf16.mxu0 %v2821
    %3261 = vmatpush1.bf16.msra.mxu0 %v2820
    %3262 = vmatprep.subr.bf16.mxu0 %v2829
    %3263 = vmatpush1.bf16.msra.mxu0 %v2828
    %3264 = vmatprep.subr.bf16.mxu0 %v2837
    %3265 = vmatpush1.bf16.msra.mxu0 %v2836
    %3266 = vmatprep.subr.bf16.mxu0 %v2845
    %3267 = vmatpush1.bf16.msra.mxu0 %v2844
    %3268 = vmatprep.subr.bf16.mxu0 %v2853
    %3269 = vmatpush1.bf16.msra.mxu0 %v2852
    %3270 = vmatprep.subr.bf16.mxu0 %v2861
    %3271 = vmatpush1.bf16.msra.mxu0 %v2860
    %3272 = vmatprep.subr.bf16.mxu0 %v2869
    %3273 = vmatpush1.bf16.msra.mxu0 %v2868
    %3274 = vmatprep.subr.bf16.mxu0 %v2877
    %3275 = vmatpush1.bf16.msra.mxu0 %v2876
    %3276 = vmatprep.subr.bf16.mxu0 %v2885
    %3277 = vmatpush1.bf16.msra.mxu0 %v2884
    %3278 = vmatprep.subr.bf16.mxu0 %v2893
    %3279 = vmatpush1.bf16.msra.mxu0 %v2892
    %3280 = vmatprep.subr.bf16.mxu0 %v2901
    %3281 = vmatpush1.bf16.msra.mxu0 %v2900
    %3282 = vmatprep.subr.bf16.mxu0 %v2909
    %3283 = vmatpush1.bf16.msra.mxu0 %v2908
    %3284 = vmatprep.mubr.bf16.mxu0 %v1405
    %3285 = vmatmul.mubr.bf16.gmra.mrb[0].mxu0 %v1404
    %v3286 = vpop.f32.mrb[0].mxu0
    %v3287 = vadd.f32 %v2122, %v3286
    %v3288 = vpop.f32.mrb[0].mxu0
    %v3289 = vadd.f32 %v2124, %v3288
    %v3290 = vpop.f32.mrb[0].mxu0
    %v3291 = vpop.f32.mrb[0].mxu0
    %3292 = vdwg.mxu0
    %3293 = vmatprep.subr.bf16.mxu0 %v2917
    %3294 = vmatpush1.bf16.msra.mxu0 %v2916
    %3295 = vmatprep.subr.bf16.mxu0 %v2925
    %3296 = vmatpush1.bf16.msra.mxu0 %v2924
    %3297 = vmatprep.subr.bf16.mxu0 %v2933
    %3298 = vmatpush1.bf16.msra.mxu0 %v2932
    %3299 = vmatprep.subr.bf16.mxu0 %v2941
    %3300 = vmatpush1.bf16.msra.mxu0 %v2940
    %3301 = vmatprep.subr.bf16.mxu0 %v2949
    %3302 = vmatpush1.bf16.msra.mxu0 %v2948
    %3303 = vmatprep.subr.bf16.mxu0 %v2957
    %3304 = vmatpush1.bf16.msra.mxu0 %v2956
    %3305 = vmatprep.subr.bf16.mxu0 %v2965
    %3306 = vmatpush1.bf16.msra.mxu0 %v2964
    %3307 = vmatprep.subr.bf16.mxu0 %v2973
    %3308 = vmatpush1.bf16.msra.mxu0 %v2972
    %3309 = vmatprep.subr.bf16.mxu0 0
    %3310 = vmatpush1.bf16.msra.mxu0 0
    %3311 = vmatprep.subr.bf16.mxu0 0
    %3312 = vmatpush1.bf16.msra.mxu0 0
    %3313 = vmatprep.subr.bf16.mxu0 0
    %3314 = vmatpush1.bf16.msra.mxu0 0
    %3315 = vmatprep.subr.bf16.mxu0 0
    %3316 = vmatpush1.bf16.msra.mxu0 0
    %3317 = vmatprep.subr.bf16.mxu0 0
    %3318 = vmatpush1.bf16.msra.mxu0 0
    %3319 = vmatprep.subr.bf16.mxu0 0
    %3320 = vmatpush1.bf16.msra.mxu0 0
    %3321 = vmatprep.subr.bf16.mxu0 0
    %3322 = vmatpush1.bf16.msra.mxu0 0
    %3323 = vmatprep.subr.bf16.mxu0 0
    %3324 = vmatpush1.bf16.msra.mxu0 0
    %3325 = vmatprep.mubr.bf16.mxu0 0
    %3326 = vmatmul.mubr.bf16.gmra.mrb[0].mxu0 %v1403
    %v3327 = vpop.f32.mrb[0].mxu0
    %v3328 = vadd.f32 %v3287, %v3327
    %v3329 = vpop.f32.mrb[0].mxu0
    %v3330 = vadd.f32 %v3289, %v3329
    %v3331 = vpop.f32.mrb[0].mxu0
    %v3332 = vpop.f32.mrb[0].mxu0
    %3333 = vdwg.mxu0
    %3334 = vmatprep.subr.bf16.mxu0 %v2791
    %3335 = vmatpush1.bf16.msra.mxu0 %v2790
    %3336 = vmatprep.subr.bf16.mxu0 %v2799
    %3337 = vmatpush1.bf16.msra.mxu0 %v2798
    %3338 = vmatprep.subr.bf16.mxu0 %v2807
    %3339 = vmatpush1.bf16.msra.mxu0 %v2806
    %3340 = vmatprep.subr.bf16.mxu0 %v2815
    %3341 = vmatpush1.bf16.msra.mxu0 %v2814
    %3342 = vmatprep.subr.bf16.mxu0 %v2823
    %3343 = vmatpush1.bf16.msra.mxu0 %v2822
    %3344 = vmatprep.subr.bf16.mxu0 %v2831
    %3345 = vmatpush1.bf16.msra.mxu0 %v2830
    %3346 = vmatprep.subr.bf16.mxu0 %v2839
    %3347 = vmatpush1.bf16.msra.mxu0 %v2838
    %3348 = vmatprep.subr.bf16.mxu0 %v2847
    %3349 = vmatpush1.bf16.msra.mxu0 %v2846
    %3350 = vmatprep.subr.bf16.mxu0 %v2855
    %3351 = vmatpush1.bf16.msra.mxu0 %v2854
    %3352 = vmatprep.subr.bf16.mxu0 %v2863
    %3353 = vmatpush1.bf16.msra.mxu0 %v2862
    %3354 = vmatprep.subr.bf16.mxu0 %v2871
    %3355 = vmatpush1.bf16.msra.mxu0 %v2870
    %3356 = vmatprep.subr.bf16.mxu0 %v2879
    %3357 = vmatpush1.bf16.msra.mxu0 %v2878
    %3358 = vmatprep.subr.bf16.mxu0 %v2887
    %3359 = vmatpush1.bf16.msra.mxu0 %v2886
    %3360 = vmatprep.subr.bf16.mxu0 %v2895
    %3361 = vmatpush1.bf16.msra.mxu0 %v2894
    %3362 = vmatprep.subr.bf16.mxu0 %v2903
    %3363 = vmatpush1.bf16.msra.mxu0 %v2902
    %3364 = vmatprep.subr.bf16.mxu0 %v2911
    %3365 = vmatpush1.bf16.msra.mxu0 %v2910
    %3366 = vmatprep.mubr.bf16.mxu0 %v1405
    %3367 = vmatmul.mubr.bf16.gmra.mrb[0].mxu0 %v1404
    %v3368 = vpop.f32.mrb[0].mxu0
    %v3369 = vadd.f32 %v2163, %v3368
    %v3370 = vpop.f32.mrb[0].mxu0
    %v3371 = vadd.f32 %v2165, %v3370
    %v3372 = vpop.f32.mrb[0].mxu0
    %v3373 = vpop.f32.mrb[0].mxu0
    %3374 = vdwg.mxu0
    %3375 = vmatprep.subr.bf16.mxu0 %v2919
    %3376 = vmatpush1.bf16.msra.mxu0 %v2918
    %3377 = vmatprep.subr.bf16.mxu0 %v2927
    %3378 = vmatpush1.bf16.msra.mxu0 %v2926
    %3379 = vmatprep.subr.bf16.mxu0 %v2935
    %3380 = vmatpush1.bf16.msra.mxu0 %v2934
    %3381 = vmatprep.subr.bf16.mxu0 %v2943
    %3382 = vmatpush1.bf16.msra.mxu0 %v2942
    %3383 = vmatprep.subr.bf16.mxu0 %v2951
    %3384 = vmatpush1.bf16.msra.mxu0 %v2950
    %3385 = vmatprep.subr.bf16.mxu0 %v2959
    %3386 = vmatpush1.bf16.msra.mxu0 %v2958
    %3387 = vmatprep.subr.bf16.mxu0 %v2967
    %3388 = vmatpush1.bf16.msra.mxu0 %v2966
    %3389 = vmatprep.subr.bf16.mxu0 %v2975
    %3390 = vmatpush1.bf16.msra.mxu0 %v2974
    %3391 = vmatprep.subr.bf16.mxu0 0
    %3392 = vmatpush1.bf16.msra.mxu0 0
    %3393 = vmatprep.subr.bf16.mxu0 0
    %3394 = vmatpush1.bf16.msra.mxu0 0
    %3395 = vmatprep.subr.bf16.mxu0 0
    %3396 = vmatpush1.bf16.msra.mxu0 0
    %3397 = vmatprep.subr.bf16.mxu0 0
    %3398 = vmatpush1.bf16.msra.mxu0 0
    %3399 = vmatprep.subr.bf16.mxu0 0
    %3400 = vmatpush1.bf16.msra.mxu0 0
    %3401 = vmatprep.subr.bf16.mxu0 0
    %3402 = vmatpush1.bf16.msra.mxu0 0
    %3403 = vmatprep.subr.bf16.mxu0 0
    %3404 = vmatpush1.bf16.msra.mxu0 0
    %3405 = vmatprep.subr.bf16.mxu0 0
    %3406 = vmatpush1.bf16.msra.mxu0 0
    %3407 = vmatprep.mubr.bf16.mxu0 0
    %3408 = vmatmul.mubr.bf16.gmra.mrb[0].mxu0 %v1403
    %v3409 = vpop.f32.mrb[0].mxu0
    %v3410 = vadd.f32 %v3369, %v3409
    %v3411 = vpop.f32.mrb[0].mxu0
    %v3412 = vadd.f32 %v3371, %v3411
    %v3413 = vpop.f32.mrb[0].mxu0
    %v3414 = vpop.f32.mrb[0].mxu0
    %3415 = vdwg.mxu0
    %3416 = vmatprep.subr.bf16.mxu0 %v2793
    %3417 = vmatpush1.bf16.msra.mxu0 %v2792
    %3418 = vmatprep.subr.bf16.mxu0 %v2801
    %3419 = vmatpush1.bf16.msra.mxu0 %v2800
    %3420 = vmatprep.subr.bf16.mxu0 %v2809
    %3421 = vmatpush1.bf16.msra.mxu0 %v2808
    %3422 = vmatprep.subr.bf16.mxu0 %v2817
    %3423 = vmatpush1.bf16.msra.mxu0 %v2816
    %3424 = vmatprep.subr.bf16.mxu0 %v2825
    %3425 = vmatpush1.bf16.msra.mxu0 %v2824
    %3426 = vmatprep.subr.bf16.mxu0 %v2833
    %3427 = vmatpush1.bf16.msra.mxu0 %v2832
    %3428 = vmatprep.subr.bf16.mxu0 %v2841
    %3429 = vmatpush1.bf16.msra.mxu0 %v2840
    %3430 = vmatprep.subr.bf16.mxu0 %v2849
    %3431 = vmatpush1.bf16.msra.mxu0 %v2848
    %3432 = vmatprep.subr.bf16.mxu0 %v2857
    %3433 = vmatpush1.bf16.msra.mxu0 %v2856
    %3434 = vmatprep.subr.bf16.mxu0 %v2865
    %3435 = vmatpush1.bf16.msra.mxu0 %v2864
    %3436 = vmatprep.subr.bf16.mxu0 %v2873
    %3437 = vmatpush1.bf16.msra.mxu0 %v2872
    %3438 = vmatprep.subr.bf16.mxu0 %v2881
    %3439 = vmatpush1.bf16.msra.mxu0 %v2880
    %3440 = vmatprep.subr.bf16.mxu0 %v2889
    %3441 = vmatpush1.bf16.msra.mxu0 %v2888
    %3442 = vmatprep.subr.bf16.mxu0 %v2897
    %3443 = vmatpush1.bf16.msra.mxu0 %v2896
    %3444 = vmatprep.subr.bf16.mxu0 %v2905
    %3445 = vmatpush1.bf16.msra.mxu0 %v2904
    %3446 = vmatprep.subr.bf16.mxu0 %v2913
    %3447 = vmatpush1.bf16.msra.mxu0 %v2912
    %3448 = vmatprep.mubr.bf16.mxu0 %v1405
    %3449 = vmatmul.mubr.bf16.gmra.mrb[0].mxu0 %v1404
    %v3450 = vpop.f32.mrb[0].mxu0
    %v3451 = vadd.f32 %v2204, %v3450
    %v3452 = vpop.f32.mrb[0].mxu0
    %v3453 = vadd.f32 %v2206, %v3452
    %v3454 = vpop.f32.mrb[0].mxu0
    %v3455 = vpop.f32.mrb[0].mxu0
    %3456 = vdwg.mxu0
    %3457 = vmatprep.subr.bf16.mxu0 %v2921
    %3458 = vmatpush1.bf16.msra.mxu0 %v2920
    %3459 = vmatprep.subr.bf16.mxu0 %v2929
    %3460 = vmatpush1.bf16.msra.mxu0 %v2928
    %3461 = vmatprep.subr.bf16.mxu0 %v2937
    %3462 = vmatpush1.bf16.msra.mxu0 %v2936
    %3463 = vmatprep.subr.bf16.mxu0 %v2945
    %3464 = vmatpush1.bf16.msra.mxu0 %v2944
    %3465 = vmatprep.subr.bf16.mxu0 %v2953
    %3466 = vmatpush1.bf16.msra.mxu0 %v2952
    %3467 = vmatprep.subr.bf16.mxu0 %v2961
    %3468 = vmatpush1.bf16.msra.mxu0 %v2960
    %3469 = vmatprep.subr.bf16.mxu0 %v2969
    %3470 = vmatpush1.bf16.msra.mxu0 %v2968
    %3471 = vmatprep.subr.bf16.mxu0 %v2977
    %3472 = vmatpush1.bf16.msra.mxu0 %v2976
    %3473 = vmatprep.subr.bf16.mxu0 0
    %3474 = vmatpush1.bf16.msra.mxu0 0
    %3475 = vmatprep.subr.bf16.mxu0 0
    %3476 = vmatpush1.bf16.msra.mxu0 0
    %3477 = vmatprep.subr.bf16.mxu0 0
    %3478 = vmatpush1.bf16.msra.mxu0 0
    %3479 = vmatprep.subr.bf16.mxu0 0
    %3480 = vmatpush1.bf16.msra.mxu0 0
    %3481 = vmatprep.subr.bf16.mxu0 0
    %3482 = vmatpush1.bf16.msra.mxu0 0
    %3483 = vmatprep.subr.bf16.mxu0 0
    %3484 = vmatpush1.bf16.msra.mxu0 0
    %3485 = vmatprep.subr.bf16.mxu0 0
    %3486 = vmatpush1.bf16.msra.mxu0 0
    %3487 = vmatprep.subr.bf16.mxu0 0
    %3488 = vmatpush1.bf16.msra.mxu0 0
    %3489 = vmatprep.mubr.bf16.mxu0 0
    %3490 = vmatmul.mubr.bf16.gmra.mrb[0].mxu0 %v1403
    %v3491 = vpop.f32.mrb[0].mxu0
    %v3492 = vadd.f32 %v3451, %v3491
    %v3493 = vpop.f32.mrb[0].mxu0
    %v3494 = vadd.f32 %v3453, %v3493
    %v3495 = vpop.f32.mrb[0].mxu0
    %v3496 = vpop.f32.mrb[0].mxu0
    %3497 = vdwg.mxu0
    %v3499 = vlaneseq
    %v3500 = vshrl.u32 %v3499, 7
    %v3501 = vsub.s32 0, %v3500
    %v3502 = vrot.slane %v512, %v3501
    %v3503 = vlaneseq
    %v3504 = vshrl.u32 %v3503, 7
    %v3505 = vsub.s32 1, %v3504
    %v3506 = vrot.slane %v512, %v3505
    %v3507 = vlaneseq
    %v3508 = vshrl.u32 %v3507, 7
    %v3509 = vsub.s32 2, %v3508
    %v3510 = vrot.slane %v512, %v3509
    %v3511 = vlaneseq
    %v3512 = vshrl.u32 %v3511, 7
    %v3513 = vsub.s32 3, %v3512
    %v3514 = vrot.slane %v512, %v3513
    %v3515 = vlaneseq
    %v3516 = vshrl.u32 %v3515, 7
    %v3517 = vsub.s32 4, %v3516
    %v3518 = vrot.slane %v512, %v3517
    %v3519 = vlaneseq
    %v3520 = vshrl.u32 %v3519, 7
    %v3521 = vsub.s32 5, %v3520
    %v3522 = vrot.slane %v512, %v3521
    %v3523 = vlaneseq
    %v3524 = vshrl.u32 %v3523, 7
    %v3525 = vsub.s32 6, %v3524
    %v3526 = vrot.slane %v512, %v3525
    %v3527 = vlaneseq
    %v3528 = vshrl.u32 %v3527, 7
    %v3529 = vsub.s32 7, %v3528
    %v3530 = vrot.slane %v512, %v3529
    %v3539 = vadd.f32 %v3246, %v3502
    %v3540 = vadd.f32 %v3248, %v3506
    %v3541 = vadd.f32 %v3328, %v3510
    %v3542 = vadd.f32 %v3330, %v3514
    %v3543 = vadd.f32 %v3410, %v3518
    %v3544 = vadd.f32 %v3412, %v3522
    %v3545 = vadd.f32 %v3492, %v3526
    %v3546 = vadd.f32 %v3494, %v3530
    %v3547 = vxor.u32 %v3539, 2147483648
    %v3548 = vxor.u32 %v3540, 2147483648
    %v3549 = vmul.f32 %v3547, 1.442695
    %v3550 = vpow.pop %v3549
    %v3551 = vmul.f32 %v3548, 1.442695
    %v3552 = vpow.pop %v3551
    %v3553 = vadd.f32 %v3550, 1.0
    %v3554 = vadd.f32 %v3552, 1.0
    %v3555 = vrcp.pop %v3553
    %v3556 = vmul.f32 1.0, %v3555
    %v3557 = vrcp.pop %v3554
    %v3558 = vmul.f32 1.0, %v3557
    %v3559 = vxor.u32 %v3541, 2147483648
    %v3560 = vxor.u32 %v3542, 2147483648
    %v3561 = vmul.f32 %v3559, 1.442695
    %v3562 = vpow.pop %v3561
    %v3563 = vmul.f32 %v3560, 1.442695
    %v3564 = vpow.pop %v3563
    %v3565 = vadd.f32 %v3562, 1.0
    %v3566 = vadd.f32 %v3564, 1.0
    %v3567 = vrcp.pop %v3565
    %v3568 = vmul.f32 1.0, %v3567
    %v3569 = vrcp.pop %v3566
    %v3570 = vmul.f32 1.0, %v3569
    %v3571 = vtanh.pop %v3543
    %v3572 = vtanh.pop %v3544
    %v3573 = vxor.u32 %v3545, 2147483648
    %v3574 = vxor.u32 %v3546, 2147483648
    %v3575 = vmul.f32 %v3573, 1.442695
    %v3576 = vpow.pop %v3575
    %v3577 = vmul.f32 %v3574, 1.442695
    %v3578 = vpow.pop %v3577
    %v3579 = vadd.f32 %v3576, 1.0
    %v3580 = vadd.f32 %v3578, 1.0
    %v3581 = vrcp.pop %v3579
    %v3582 = vmul.f32 1.0, %v3581
    %v3583 = vrcp.pop %v3580
    %v3584 = vmul.f32 1.0, %v3583
    %v3585 = vmul.f32 %v3568, %v556
    %v3586 = vmul.f32 %v3570, %v557
    %v3587 = vmul.f32 %v3556, %v3571
    %v3588 = vmul.f32 %v3558, %v3572
    %v3589 = vadd.f32 %v3585, %v3587
    %v3590 = vadd.f32 %v3586, %v3588
    %v3591 = vtanh.pop %v3589
    %v3592 = vtanh.pop %v3590
    %v3593 = vmul.f32 %v3582, %v3591
    %v3594 = vmul.f32 %v3584, %v3592
    %3595 = vst [vmem:[#allocation2] sm:$0xff] %v3593
    %3596 = vst [vmem:[#allocation2 + $0x8] sm:$0xff] %v3594
    %3597 = vst [vmem:[#allocation3] sm:$0xff] %v3589
    %3598 = vst [vmem:[#allocation3 + $0x8] sm:$0xff] %v3590
    %v3599 = vpack.c.bf16 %v3593, %v3593
    %v3600 = vpack.c.bf16 %v3594, %v3594
    %v3602 = vlaneseq
    %v3603 = vshrl.u32 %v3602, 7
    %v3604 = vsub.s32 0, %v3603
    %v3605 = vrot.slane %v545, %v3604
    %v3639 = vunpack.c.l.b16 %v513
    %v3640 = vunpack.c.l.b16 %v514
    %v3641 = vunpack.c.l.b16 %v515
    %v3642 = vunpack.c.l.b16 %v516
    %v3643 = vunpack.c.l.b16 %v517
    %v3644 = vunpack.c.l.b16 %v518
    %v3645 = vunpack.c.l.b16 %v519
    %v3646 = vunpack.c.l.b16 %v520
    %v3647 = vunpack.c.l.b16 %v521
    %v3648 = vunpack.c.l.b16 %v522
    %v3649 = vunpack.c.l.b16 %v523
    %v3650 = vunpack.c.l.b16 %v524
    %v3651 = vunpack.c.l.b16 %v525
    %v3652 = vunpack.c.l.b16 %v526
    %v3653 = vunpack.c.l.b16 %v527
    %v3654 = vunpack.c.l.b16 %v528
    %v3655 = vunpack.c.l.b16 %v529
    %v3656 = vunpack.c.l.b16 %v530
    %v3657 = vunpack.c.l.b16 %v531
    %v3658 = vunpack.c.l.b16 %v532
    %v3659 = vunpack.c.l.b16 %v533
    %v3660 = vunpack.c.l.b16 %v534
    %v3661 = vunpack.c.l.b16 %v535
    %v3662 = vunpack.c.l.b16 %v536
    %v3663 = vunpack.c.l.b16 %v537
    %v3664 = vunpack.c.l.b16 %v538
    %v3665 = vunpack.c.l.b16 %v539
    %v3666 = vunpack.c.l.b16 %v540
    %v3667 = vunpack.c.l.b16 %v541
    %v3668 = vunpack.c.l.b16 %v542
    %v3669 = vunpack.c.l.b16 %v543
    %v3670 = vunpack.c.l.b16 %v544
    %v3671 = vpack.c.b16 %v3640, %v3639
    %v3672 = vpack.c.b16 %v3642, %v3641
    %v3673 = vpack.c.b16 %v3644, %v3643
    %v3674 = vpack.c.b16 %v3646, %v3645
    %v3675 = vpack.c.b16 %v3648, %v3647
    %v3676 = vpack.c.b16 %v3650, %v3649
    %v3677 = vpack.c.b16 %v3652, %v3651
    %v3678 = vpack.c.b16 %v3654, %v3653
    %v3679 = vpack.c.b16 %v3656, %v3655
    %v3680 = vpack.c.b16 %v3658, %v3657
    %v3681 = vpack.c.b16 %v3660, %v3659
    %v3682 = vpack.c.b16 %v3662, %v3661
    %v3683 = vpack.c.b16 %v3664, %v3663
    %v3684 = vpack.c.b16 %v3666, %v3665
    %v3685 = vpack.c.b16 %v3668, %v3667
    %v3686 = vpack.c.b16 %v3670, %v3669
    %3703 = vmatprep.subr.bf16.mxu0 0
    %3704 = vmatpush1.bf16.msra.mxu0 %v3671
    %3705 = vmatprep.subr.bf16.mxu0 0
    %3706 = vmatpush1.bf16.msra.mxu0 %v3672
    %3707 = vmatprep.subr.bf16.mxu0 0
    %3708 = vmatpush1.bf16.msra.mxu0 %v3673
    %3709 = vmatprep.subr.bf16.mxu0 0
    %3710 = vmatpush1.bf16.msra.mxu0 %v3674
    %3711 = vmatprep.subr.bf16.mxu0 0
    %3712 = vmatpush1.bf16.msra.mxu0 %v3675
    %3713 = vmatprep.subr.bf16.mxu0 0
    %3714 = vmatpush1.bf16.msra.mxu0 %v3676
    %3715 = vmatprep.subr.bf16.mxu0 0
    %3716 = vmatpush1.bf16.msra.mxu0 %v3677
    %3717 = vmatprep.subr.bf16.mxu0 0
    %3718 = vmatpush1.bf16.msra.mxu0 %v3678
    %3719 = vmatprep.subr.bf16.mxu0 0
    %3720 = vmatpush1.bf16.msra.mxu0 %v3679
    %3721 = vmatprep.subr.bf16.mxu0 0
    %3722 = vmatpush1.bf16.msra.mxu0 %v3680
    %3723 = vmatprep.subr.bf16.mxu0 0
    %3724 = vmatpush1.bf16.msra.mxu0 %v3681
    %3725 = vmatprep.subr.bf16.mxu0 0
    %3726 = vmatpush1.bf16.msra.mxu0 %v3682
    %3727 = vmatprep.subr.bf16.mxu0 0
    %3728 = vmatpush1.bf16.msra.mxu0 %v3683
    %3729 = vmatprep.subr.bf16.mxu0 0
    %3730 = vmatpush1.bf16.msra.mxu0 %v3684
    %3731 = vmatprep.subr.bf16.mxu0 0
    %3732 = vmatpush1.bf16.msra.mxu0 %v3685
    %3733 = vmatprep.subr.bf16.mxu0 0
    %3734 = vmatpush1.bf16.msra.mxu0 %v3686
    %3735 = vmatprep.mubr.bf16.mxu0 %v3600
    %3736 = vmatmul.mubr.bf16.gmra.mrb[0].mxu0 %v3599
    %v3737 = vpop.f32.mrb[0].mxu0
    %v3738 = vadd.f32 %v3605, %v3737
    %v3739 = vpop.f32.mrb[0].mxu0
    %v3740 = vpop.f32.mrb[0].mxu0
    %v3741 = vpop.f32.mrb[0].mxu0
    %3742 = vdwg.mxu0
    %3743 = vmax.xlane.f32.xlu0 %v3738
    %v3744 = vpop.xlane.xlu0 %3743
    %v3745 = vsub.f32 %v3738, %v3744
    %v3746 = vmul.f32 %v3745, 1.442695
    %v3747 = vpow.pop %v3746
    %3748 = vadd.xlane.f32.xlu0 %v3747
    %v3749 = vpop.xlane.xlu0 %3748
    %v3750 = vlog2.pop %v3749
    %v3751 = vmul.f32 %v3750, 0.6931472
    %v3752 = vsub.f32 %v3745, %v3751
    %s3753 = scalar_lea.vmem [#allocation4], 8
    %3754 = vst [vmem:[%s3753] sm:$0xff] %v3752
    %v3755 = vld [vmem:[#allocation2] sm:$0xff]
    %v3756 = vld [vmem:[#allocation2 + $0x8] sm:$0xff]
    %v3757 = vld [vmem:[#allocation3] sm:$0xff]
    %v3758 = vld [vmem:[#allocation3 + $0x8] sm:$0xff]
    %v3759 = vpack.c.bf16 %v3755, %v3755
    %v3760 = vpack.c.bf16 %v3756, %v3756
    %3761 = vmatprep.subr.bf16.mxu0 %v657
    %3762 = vmatpush1.bf16.msra.mxu0 %v656
    %3763 = vmatprep.subr.bf16.mxu0 %v659
    %3764 = vmatpush1.bf16.msra.mxu0 %v658
    %3765 = vmatprep.subr.bf16.mxu0 %v661
    %3766 = vmatpush1.bf16.msra.mxu0 %v660
    %3767 = vmatprep.subr.bf16.mxu0 %v663
    %3768 = vmatpush1.bf16.msra.mxu0 %v662
    %3769 = vmatprep.subr.bf16.mxu0 %v665
    %3770 = vmatpush1.bf16.msra.mxu0 %v664
    %3771 = vmatprep.subr.bf16.mxu0 %v667
    %3772 = vmatpush1.bf16.msra.mxu0 %v666
    %3773 = vmatprep.subr.bf16.mxu0 %v669
    %3774 = vmatpush1.bf16.msra.mxu0 %v668
    %3775 = vmatprep.subr.bf16.mxu0 %v671
    %3776 = vmatpush1.bf16.msra.mxu0 %v670
    %3777 = vmatprep.subr.bf16.mxu0 %v673
    %3778 = vmatpush1.bf16.msra.mxu0 %v672
    %3779 = vmatprep.subr.bf16.mxu0 %v675
    %3780 = vmatpush1.bf16.msra.mxu0 %v674
    %3781 = vmatprep.subr.bf16.mxu0 %v677
    %3782 = vmatpush1.bf16.msra.mxu0 %v676
    %3783 = vmatprep.subr.bf16.mxu0 %v679
    %3784 = vmatpush1.bf16.msra.mxu0 %v678
    %3785 = vmatprep.subr.bf16.mxu0 %v681
    %3786 = vmatpush1.bf16.msra.mxu0 %v680
    %3787 = vmatprep.subr.bf16.mxu0 %v683
    %3788 = vmatpush1.bf16.msra.mxu0 %v682
    %3789 = vmatprep.subr.bf16.mxu0 %v685
    %3790 = vmatpush1.bf16.msra.mxu0 %v684
    %3791 = vmatprep.subr.bf16.mxu0 %v687
    %3792 = vmatpush1.bf16.msra.mxu0 %v686
    %3793 = vmatprep.mubr.bf16.mxu0 %v3760
    %3794 = vmatmul.mubr.bf16.gmra.mrb[0].mxu0 %v3759
    %v3795 = vpop.f32.mrb[0].mxu0
    %v3796 = vadd.f32 0.0, %v3795
    %v3797 = vpop.f32.mrb[0].mxu0
    %v3798 = vadd.f32 0.0, %v3797
    %v3799 = vpop.f32.mrb[0].mxu0
    %v3800 = vpop.f32.mrb[0].mxu0
    %3801 = vdwg.mxu0
    %v3802 = vpack.c.bf16 %v3796, %v3796
    %v3803 = vpack.c.bf16 %v3798, %v3798
    %3804 = vmatprep.subr.bf16.mxu0 0
    %3805 = vmatpush1.bf16.msra.mxu0 %v827
    %3806 = vmatprep.subr.bf16.mxu0 0
    %3807 = vmatpush1.bf16.msra.mxu0 %v828
    %3808 = vmatprep.subr.bf16.mxu0 0
    %3809 = vmatpush1.bf16.msra.mxu0 %v829
    %3810 = vmatprep.subr.bf16.mxu0 0
    %3811 = vmatpush1.bf16.msra.mxu0 %v830
    %3812 = vmatprep.subr.bf16.mxu0 0
    %3813 = vmatpush1.bf16.msra.mxu0 %v831
    %3814 = vmatprep.subr.bf16.mxu0 0
    %3815 = vmatpush1.bf16.msra.mxu0 %v832
    %3816 = vmatprep.subr.bf16.mxu0 0
    %3817 = vmatpush1.bf16.msra.mxu0 %v833
    %3818 = vmatprep.subr.bf16.mxu0 0
    %3819 = vmatpush1.bf16.msra.mxu0 %v834
    %3820 = vmatprep.subr.bf16.mxu0 0
    %3821 = vmatpush1.bf16.msra.mxu0 %v835
    %3822 = vmatprep.subr.bf16.mxu0 0
    %3823 = vmatpush1.bf16.msra.mxu0 %v836
    %3824 = vmatprep.subr.bf16.mxu0 0
    %3825 = vmatpush1.bf16.msra.mxu0 %v837
    %3826 = vmatprep.subr.bf16.mxu0 0
    %3827 = vmatpush1.bf16.msra.mxu0 %v838
    %3828 = vmatprep.subr.bf16.mxu0 0
    %3829 = vmatpush1.bf16.msra.mxu0 %v839
    %3830 = vmatprep.subr.bf16.mxu0 0
    %3831 = vmatpush1.bf16.msra.mxu0 %v840
    %3832 = vmatprep.subr.bf16.mxu0 0
    %3833 = vmatpush1.bf16.msra.mxu0 %v841
    %3834 = vmatprep.subr.bf16.mxu0 0
    %3835 = vmatpush1.bf16.msra.mxu0 %v842
    %3836 = vmatprep.mubr.bf16.mxu0 %v3803
    %3837 = vmatmul.mubr.bf16.gmra.mrb[0].mxu0 %v3802
    %v3838 = vpop.f32.mrb[0].mxu0
    %v3839 = vadd.f32 0.0, %v3838
    %v3840 = vpop.f32.mrb[0].mxu0
    %v3841 = vpop.f32.mrb[0].mxu0
    %v3842 = vpop.f32.mrb[0].mxu0
    %3843 = vdwg.mxu0
    %v3844 = vsel %vm553, %v3839, -1e+30
    %v3845 = vsel %vm900, %v3844, -inf
    %3846 = vmax.xlane.f32.xlu0 %v3845
    %v3847 = vpop.xlane.xlu0 %3846
    %v3848 = vsub.f32 %v3844, %v3847
    %v3849 = vmul.f32 %v3848, 1.442695
    %v3850 = vpow.pop %v3849
    %v3851 = vsel %vm900, %v3850, 0.0
    %3852 = vadd.xlane.f32.xlu0 %v3851
    %v3853 = vpop.xlane.xlu0 %3852
    %v3854 = vrcp.pop %v3853
    %v3855 = vmul.f32 %v3850, %v3854
    %v3856 = vpack.c.bf16 %v3855, %v3855
    %v3858 = vsel %vm900, %v3856, 0
    %3860 = vmatprep.subr.bf16.mxu0 %v938
    %3861 = vmatpush1.bf16.msra.mxu0 %v937
    %3862 = vmatprep.subr.bf16.mxu0 %v940
    %3863 = vmatpush1.bf16.msra.mxu0 %v939
    %3864 = vmatprep.subr.bf16.mxu0 %v942
    %3865 = vmatpush1.bf16.msra.mxu0 %v941
    %3866 = vmatprep.subr.bf16.mxu0 %v944
    %3867 = vmatpush1.bf16.msra.mxu0 %v943
    %3868 = vmatprep.subr.bf16.mxu0 0
    %3869 = vmatpush1.bf16.msra.mxu0 0
    %3870 = vmatprep.subr.bf16.mxu0 0
    %3871 = vmatpush1.bf16.msra.mxu0 0
    %3872 = vmatprep.subr.bf16.mxu0 0
    %3873 = vmatpush1.bf16.msra.mxu0 0
    %3874 = vmatprep.subr.bf16.mxu0 0
    %3875 = vmatpush1.bf16.msra.mxu0 0
    %3876 = vmatprep.subr.bf16.mxu0 0
    %3877 = vmatpush1.bf16.msra.mxu0 0
    %3878 = vmatprep.subr.bf16.mxu0 0
    %3879 = vmatpush1.bf16.msra.mxu0 0
    %3880 = vmatprep.subr.bf16.mxu0 0
    %3881 = vmatpush1.bf16.msra.mxu0 0
    %3882 = vmatprep.subr.bf16.mxu0 0
    %3883 = vmatpush1.bf16.msra.mxu0 0
    %3884 = vmatprep.subr.bf16.mxu0 0
    %3885 = vmatpush1.bf16.msra.mxu0 0
    %3886 = vmatprep.subr.bf16.mxu0 0
    %3887 = vmatpush1.bf16.msra.mxu0 0
    %3888 = vmatprep.subr.bf16.mxu0 0
    %3889 = vmatpush1.bf16.msra.mxu0 0
    %3890 = vmatprep.subr.bf16.mxu0 0
    %3891 = vmatpush1.bf16.msra.mxu0 0
    %3892 = vmatprep.mubr.bf16.mxu0 0
    %3893 = vmatmul.mubr.bf16.gmra.mrb[0].mxu0 %v3858
    %v3894 = vpop.f32.mrb[0].mxu0
    %v3895 = vadd.f32 0.0, %v3894
    %v3896 = vpop.f32.mrb[0].mxu0
    %v3897 = vadd.f32 0.0, %v3896
    %v3898 = vpop.f32.mrb[0].mxu0
    %v3899 = vpop.f32.mrb[0].mxu0
    %3900 = vdwg.mxu0
    %v3901 = vpack.c.bf16 %v3895, %v3895
    %v3902 = vpack.c.bf16 %v3897, %v3897
    %3903 = vmatprep.subr.bf16.mxu0 %v1096
    %3904 = vmatpush1.bf16.msra.mxu0 %v1095
    %3905 = vmatprep.subr.bf16.mxu0 %v1098
    %3906 = vmatpush1.bf16.msra.mxu0 %v1097
    %3907 = vmatprep.subr.bf16.mxu0 %v1100
    %3908 = vmatpush1.bf16.msra.mxu0 %v1099
    %3909 = vmatprep.subr.bf16.mxu0 %v1102
    %3910 = vmatpush1.bf16.msra.mxu0 %v1101
    %3911 = vmatprep.subr.bf16.mxu0 %v1104
    %3912 = vmatpush1.bf16.msra.mxu0 %v1103
    %3913 = vmatprep.subr.bf16.mxu0 %v1106
    %3914 = vmatpush1.bf16.msra.mxu0 %v1105
    %3915 = vmatprep.subr.bf16.mxu0 %v1108
    %3916 = vmatpush1.bf16.msra.mxu0 %v1107
    %3917 = vmatprep.subr.bf16.mxu0 %v1110
    %3918 = vmatpush1.bf16.msra.mxu0 %v1109
    %3919 = vmatprep.subr.bf16.mxu0 %v1112
    %3920 = vmatpush1.bf16.msra.mxu0 %v1111
    %3921 = vmatprep.subr.bf16.mxu0 %v1114
    %3922 = vmatpush1.bf16.msra.mxu0 %v1113
    %3923 = vmatprep.subr.bf16.mxu0 %v1116
    %3924 = vmatpush1.bf16.msra.mxu0 %v1115
    %3925 = vmatprep.subr.bf16.mxu0 %v1118
    %3926 = vmatpush1.bf16.msra.mxu0 %v1117
    %3927 = vmatprep.subr.bf16.mxu0 %v1120
    %3928 = vmatpush1.bf16.msra.mxu0 %v1119
    %3929 = vmatprep.subr.bf16.mxu0 %v1122
    %3930 = vmatpush1.bf16.msra.mxu0 %v1121
    %3931 = vmatprep.subr.bf16.mxu0 %v1124
    %3932 = vmatpush1.bf16.msra.mxu0 %v1123
    %3933 = vmatprep.subr.bf16.mxu0 %v1126
    %3934 = vmatpush1.bf16.msra.mxu0 %v1125
    %3935 = vmatprep.mubr.bf16.mxu0 %v3760
    %3936 = vmatmul.mubr.bf16.gmra.mrb[0].mxu0 %v3759
    %v3937 = vpop.f32.mrb[0].mxu0
    %v3938 = vadd.f32 0.0, %v3937
    %v3939 = vpop.f32.mrb[0].mxu0
    %v3940 = vadd.f32 0.0, %v3939
    %v3941 = vpop.f32.mrb[0].mxu0
    %v3942 = vpop.f32.mrb[0].mxu0
    %3943 = vdwg.mxu0
    %3944 = vmatprep.subr.bf16.mxu0 %v1297
    %3945 = vmatpush1.bf16.msra.mxu0 %v1296
    %3946 = vmatprep.subr.bf16.mxu0 %v1299
    %3947 = vmatpush1.bf16.msra.mxu0 %v1298
    %3948 = vmatprep.subr.bf16.mxu0 %v1301
    %3949 = vmatpush1.bf16.msra.mxu0 %v1300
    %3950 = vmatprep.subr.bf16.mxu0 %v1303
    %3951 = vmatpush1.bf16.msra.mxu0 %v1302
    %3952 = vmatprep.subr.bf16.mxu0 %v1305
    %3953 = vmatpush1.bf16.msra.mxu0 %v1304
    %3954 = vmatprep.subr.bf16.mxu0 %v1307
    %3955 = vmatpush1.bf16.msra.mxu0 %v1306
    %3956 = vmatprep.subr.bf16.mxu0 %v1309
    %3957 = vmatpush1.bf16.msra.mxu0 %v1308
    %3958 = vmatprep.subr.bf16.mxu0 %v1311
    %3959 = vmatpush1.bf16.msra.mxu0 %v1310
    %3960 = vmatprep.subr.bf16.mxu0 %v1313
    %3961 = vmatpush1.bf16.msra.mxu0 %v1312
    %3962 = vmatprep.subr.bf16.mxu0 %v1315
    %3963 = vmatpush1.bf16.msra.mxu0 %v1314
    %3964 = vmatprep.subr.bf16.mxu0 %v1317
    %3965 = vmatpush1.bf16.msra.mxu0 %v1316
    %3966 = vmatprep.subr.bf16.mxu0 %v1319
    %3967 = vmatpush1.bf16.msra.mxu0 %v1318
    %3968 = vmatprep.subr.bf16.mxu0 %v1321
    %3969 = vmatpush1.bf16.msra.mxu0 %v1320
    %3970 = vmatprep.subr.bf16.mxu0 %v1323
    %3971 = vmatpush1.bf16.msra.mxu0 %v1322
    %3972 = vmatprep.subr.bf16.mxu0 %v1325
    %3973 = vmatpush1.bf16.msra.mxu0 %v1324
    %3974 = vmatprep.subr.bf16.mxu0 %v1327
    %3975 = vmatpush1.bf16.msra.mxu0 %v1326
    %3976 = vmatprep.mubr.bf16.mxu0 %v3902
    %3977 = vmatmul.mubr.bf16.gmra.mrb[0].mxu0 %v3901
    %v3978 = vpop.f32.mrb[0].mxu0
    %v3979 = vadd.f32 %v3938, %v3978
    %v3980 = vpop.f32.mrb[0].mxu0
    %v3981 = vadd.f32 %v3940, %v3980
    %v3982 = vpop.f32.mrb[0].mxu0
    %v3983 = vpop.f32.mrb[0].mxu0
    %3984 = vdwg.mxu0
    %v3985 = vtanh.pop %v3979
    %v3986 = vtanh.pop %v3981
    %s3987 = scalar_lea.vmem %s4, 4
    %v3988 = vld [vmem:[%s3987] sm:$0xf]
    %v3989 = vpack.c.bf16 %v3985, %v3985
    %v3990 = vpack.c.bf16 %v3986, %v3986
    %3991 = vmatprep.subr.bf16.mxu0 %v1791
    %3992 = vmatpush1.bf16.msra.mxu0 %v1790
    %3993 = vmatprep.subr.bf16.mxu0 %v1799
    %3994 = vmatpush1.bf16.msra.mxu0 %v1798
    %3995 = vmatprep.subr.bf16.mxu0 %v1807
    %3996 = vmatpush1.bf16.msra.mxu0 %v1806
    %3997 = vmatprep.subr.bf16.mxu0 %v1815
    %3998 = vmatpush1.bf16.msra.mxu0 %v1814
    %3999 = vmatprep.subr.bf16.mxu0 %v1823
    %4000 = vmatpush1.bf16.msra.mxu0 %v1822
    %4001 = vmatprep.subr.bf16.mxu0 %v1831
    %4002 = vmatpush1.bf16.msra.mxu0 %v1830
    %4003 = vmatprep.subr.bf16.mxu0 %v1839
    %4004 = vmatpush1.bf16.msra.mxu0 %v1838
    %4005 = vmatprep.subr.bf16.mxu0 %v1847
    %4006 = vmatpush1.bf16.msra.mxu0 %v1846
    %4007 = vmatprep.subr.bf16.mxu0 %v1855
    %4008 = vmatpush1.bf16.msra.mxu0 %v1854
    %4009 = vmatprep.subr.bf16.mxu0 %v1863
    %4010 = vmatpush1.bf16.msra.mxu0 %v1862
    %4011 = vmatprep.subr.bf16.mxu0 %v1871
    %4012 = vmatpush1.bf16.msra.mxu0 %v1870
    %4013 = vmatprep.subr.bf16.mxu0 %v1879
    %4014 = vmatpush1.bf16.msra.mxu0 %v1878
    %4015 = vmatprep.subr.bf16.mxu0 %v1887
    %4016 = vmatpush1.bf16.msra.mxu0 %v1886
    %4017 = vmatprep.subr.bf16.mxu0 %v1895
    %4018 = vmatpush1.bf16.msra.mxu0 %v1894
    %4019 = vmatprep.subr.bf16.mxu0 %v1903
    %4020 = vmatpush1.bf16.msra.mxu0 %v1902
    %4021 = vmatprep.subr.bf16.mxu0 %v1911
    %4022 = vmatpush1.bf16.msra.mxu0 %v1910
    %4023 = vmatprep.mubr.bf16.mxu0 %v3760
    %4024 = vmatmul.mubr.bf16.gmra.mrb[0].mxu0 %v3759
    %v4025 = vpop.f32.mrb[0].mxu0
    %v4026 = vadd.f32 0.0, %v4025
    %v4027 = vpop.f32.mrb[0].mxu0
    %v4028 = vadd.f32 0.0, %v4027
    %v4029 = vpop.f32.mrb[0].mxu0
    %v4030 = vpop.f32.mrb[0].mxu0
    %4031 = vdwg.mxu0
    %4032 = vmatprep.subr.bf16.mxu0 %v1793
    %4033 = vmatpush1.bf16.msra.mxu0 %v1792
    %4034 = vmatprep.subr.bf16.mxu0 %v1801
    %4035 = vmatpush1.bf16.msra.mxu0 %v1800
    %4036 = vmatprep.subr.bf16.mxu0 %v1809
    %4037 = vmatpush1.bf16.msra.mxu0 %v1808
    %4038 = vmatprep.subr.bf16.mxu0 %v1817
    %4039 = vmatpush1.bf16.msra.mxu0 %v1816
    %4040 = vmatprep.subr.bf16.mxu0 %v1825
    %4041 = vmatpush1.bf16.msra.mxu0 %v1824
    %4042 = vmatprep.subr.bf16.mxu0 %v1833
    %4043 = vmatpush1.bf16.msra.mxu0 %v1832
    %4044 = vmatprep.subr.bf16.mxu0 %v1841
    %4045 = vmatpush1.bf16.msra.mxu0 %v1840
    %4046 = vmatprep.subr.bf16.mxu0 %v1849
    %4047 = vmatpush1.bf16.msra.mxu0 %v1848
    %4048 = vmatprep.subr.bf16.mxu0 %v1857
    %4049 = vmatpush1.bf16.msra.mxu0 %v1856
    %4050 = vmatprep.subr.bf16.mxu0 %v1865
    %4051 = vmatpush1.bf16.msra.mxu0 %v1864
    %4052 = vmatprep.subr.bf16.mxu0 %v1873
    %4053 = vmatpush1.bf16.msra.mxu0 %v1872
    %4054 = vmatprep.subr.bf16.mxu0 %v1881
    %4055 = vmatpush1.bf16.msra.mxu0 %v1880
    %4056 = vmatprep.subr.bf16.mxu0 %v1889
    %4057 = vmatpush1.bf16.msra.mxu0 %v1888
    %4058 = vmatprep.subr.bf16.mxu0 %v1897
    %4059 = vmatpush1.bf16.msra.mxu0 %v1896
    %4060 = vmatprep.subr.bf16.mxu0 %v1905
    %4061 = vmatpush1.bf16.msra.mxu0 %v1904
    %4062 = vmatprep.subr.bf16.mxu0 %v1913
    %4063 = vmatpush1.bf16.msra.mxu0 %v1912
    %4064 = vmatprep.mubr.bf16.mxu0 %v3760
    %4065 = vmatmul.mubr.bf16.gmra.mrb[0].mxu0 %v3759
    %v4066 = vpop.f32.mrb[0].mxu0
    %v4067 = vadd.f32 0.0, %v4066
    %v4068 = vpop.f32.mrb[0].mxu0
    %v4069 = vadd.f32 0.0, %v4068
    %v4070 = vpop.f32.mrb[0].mxu0
    %v4071 = vpop.f32.mrb[0].mxu0
    %4072 = vdwg.mxu0
    %4073 = vmatprep.subr.bf16.mxu0 %v1795
    %4074 = vmatpush1.bf16.msra.mxu0 %v1794
    %4075 = vmatprep.subr.bf16.mxu0 %v1803
    %4076 = vmatpush1.bf16.msra.mxu0 %v1802
    %4077 = vmatprep.subr.bf16.mxu0 %v1811
    %4078 = vmatpush1.bf16.msra.mxu0 %v1810
    %4079 = vmatprep.subr.bf16.mxu0 %v1819
    %4080 = vmatpush1.bf16.msra.mxu0 %v1818
    %4081 = vmatprep.subr.bf16.mxu0 %v1827
    %4082 = vmatpush1.bf16.msra.mxu0 %v1826
    %4083 = vmatprep.subr.bf16.mxu0 %v1835
    %4084 = vmatpush1.bf16.msra.mxu0 %v1834
    %4085 = vmatprep.subr.bf16.mxu0 %v1843
    %4086 = vmatpush1.bf16.msra.mxu0 %v1842
    %4087 = vmatprep.subr.bf16.mxu0 %v1851
    %4088 = vmatpush1.bf16.msra.mxu0 %v1850
    %4089 = vmatprep.subr.bf16.mxu0 %v1859
    %4090 = vmatpush1.bf16.msra.mxu0 %v1858
    %4091 = vmatprep.subr.bf16.mxu0 %v1867
    %4092 = vmatpush1.bf16.msra.mxu0 %v1866
    %4093 = vmatprep.subr.bf16.mxu0 %v1875
    %4094 = vmatpush1.bf16.msra.mxu0 %v1874
    %4095 = vmatprep.subr.bf16.mxu0 %v1883
    %4096 = vmatpush1.bf16.msra.mxu0 %v1882
    %4097 = vmatprep.subr.bf16.mxu0 %v1891
    %4098 = vmatpush1.bf16.msra.mxu0 %v1890
    %4099 = vmatprep.subr.bf16.mxu0 %v1899
    %4100 = vmatpush1.bf16.msra.mxu0 %v1898
    %4101 = vmatprep.subr.bf16.mxu0 %v1907
    %4102 = vmatpush1.bf16.msra.mxu0 %v1906
    %4103 = vmatprep.subr.bf16.mxu0 %v1915
    %4104 = vmatpush1.bf16.msra.mxu0 %v1914
    %4105 = vmatprep.mubr.bf16.mxu0 %v3760
    %4106 = vmatmul.mubr.bf16.gmra.mrb[0].mxu0 %v3759
    %v4107 = vpop.f32.mrb[0].mxu0
    %v4108 = vadd.f32 0.0, %v4107
    %v4109 = vpop.f32.mrb[0].mxu0
    %v4110 = vadd.f32 0.0, %v4109
    %v4111 = vpop.f32.mrb[0].mxu0
    %v4112 = vpop.f32.mrb[0].mxu0
    %4113 = vdwg.mxu0
    %4114 = vmatprep.subr.bf16.mxu0 %v1797
    %4115 = vmatpush1.bf16.msra.mxu0 %v1796
    %4116 = vmatprep.subr.bf16.mxu0 %v1805
    %4117 = vmatpush1.bf16.msra.mxu0 %v1804
    %4118 = vmatprep.subr.bf16.mxu0 %v1813
    %4119 = vmatpush1.bf16.msra.mxu0 %v1812
    %4120 = vmatprep.subr.bf16.mxu0 %v1821
    %4121 = vmatpush1.bf16.msra.mxu0 %v1820
    %4122 = vmatprep.subr.bf16.mxu0 %v1829
    %4123 = vmatpush1.bf16.msra.mxu0 %v1828
    %4124 = vmatprep.subr.bf16.mxu0 %v1837
    %4125 = vmatpush1.bf16.msra.mxu0 %v1836
    %4126 = vmatprep.subr.bf16.mxu0 %v1845
    %4127 = vmatpush1.bf16.msra.mxu0 %v1844
    %4128 = vmatprep.subr.bf16.mxu0 %v1853
    %4129 = vmatpush1.bf16.msra.mxu0 %v1852
    %4130 = vmatprep.subr.bf16.mxu0 %v1861
    %4131 = vmatpush1.bf16.msra.mxu0 %v1860
    %4132 = vmatprep.subr.bf16.mxu0 %v1869
    %4133 = vmatpush1.bf16.msra.mxu0 %v1868
    %4134 = vmatprep.subr.bf16.mxu0 %v1877
    %4135 = vmatpush1.bf16.msra.mxu0 %v1876
    %4136 = vmatprep.subr.bf16.mxu0 %v1885
    %4137 = vmatpush1.bf16.msra.mxu0 %v1884
    %4138 = vmatprep.subr.bf16.mxu0 %v1893
    %4139 = vmatpush1.bf16.msra.mxu0 %v1892
    %4140 = vmatprep.subr.bf16.mxu0 %v1901
    %4141 = vmatpush1.bf16.msra.mxu0 %v1900
    %4142 = vmatprep.subr.bf16.mxu0 %v1909
    %4143 = vmatpush1.bf16.msra.mxu0 %v1908
    %4144 = vmatprep.subr.bf16.mxu0 %v1917
    %4145 = vmatpush1.bf16.msra.mxu0 %v1916
    %4146 = vmatprep.mubr.bf16.mxu0 %v3760
    %4147 = vmatmul.mubr.bf16.gmra.mrb[0].mxu0 %v3759
    %v4148 = vpop.f32.mrb[0].mxu0
    %v4149 = vadd.f32 0.0, %v4148
    %v4150 = vpop.f32.mrb[0].mxu0
    %v4151 = vadd.f32 0.0, %v4150
    %v4152 = vpop.f32.mrb[0].mxu0
    %v4153 = vpop.f32.mrb[0].mxu0
    %4154 = vdwg.mxu0
    %4155 = vmatprep.subr.bf16.mxu0 %v2787
    %4156 = vmatpush1.bf16.msra.mxu0 %v2786
    %4157 = vmatprep.subr.bf16.mxu0 %v2795
    %4158 = vmatpush1.bf16.msra.mxu0 %v2794
    %4159 = vmatprep.subr.bf16.mxu0 %v2803
    %4160 = vmatpush1.bf16.msra.mxu0 %v2802
    %4161 = vmatprep.subr.bf16.mxu0 %v2811
    %4162 = vmatpush1.bf16.msra.mxu0 %v2810
    %4163 = vmatprep.subr.bf16.mxu0 %v2819
    %4164 = vmatpush1.bf16.msra.mxu0 %v2818
    %4165 = vmatprep.subr.bf16.mxu0 %v2827
    %4166 = vmatpush1.bf16.msra.mxu0 %v2826
    %4167 = vmatprep.subr.bf16.mxu0 %v2835
    %4168 = vmatpush1.bf16.msra.mxu0 %v2834
    %4169 = vmatprep.subr.bf16.mxu0 %v2843
    %4170 = vmatpush1.bf16.msra.mxu0 %v2842
    %4171 = vmatprep.subr.bf16.mxu0 %v2851
    %4172 = vmatpush1.bf16.msra.mxu0 %v2850
    %4173 = vmatprep.subr.bf16.mxu0 %v2859
    %4174 = vmatpush1.bf16.msra.mxu0 %v2858
    %4175 = vmatprep.subr.bf16.mxu0 %v2867
    %4176 = vmatpush1.bf16.msra.mxu0 %v2866
    %4177 = vmatprep.subr.bf16.mxu0 %v2875
    %4178 = vmatpush1.bf16.msra.mxu0 %v2874
    %4179 = vmatprep.subr.bf16.mxu0 %v2883
    %4180 = vmatpush1.bf16.msra.mxu0 %v2882
    %4181 = vmatprep.subr.bf16.mxu0 %v2891
    %4182 = vmatpush1.bf16.msra.mxu0 %v2890
    %4183 = vmatprep.subr.bf16.mxu0 %v2899
    %4184 = vmatpush1.bf16.msra.mxu0 %v2898
    %4185 = vmatprep.subr.bf16.mxu0 %v2907
    %4186 = vmatpush1.bf16.msra.mxu0 %v2906
    %4187 = vmatprep.mubr.bf16.mxu0 %v3990
    %4188 = vmatmul.mubr.bf16.gmra.mrb[0].mxu0 %v3989
    %v4189 = vpop.f32.mrb[0].mxu0
    %v4190 = vadd.f32 %v4026, %v4189
    %v4191 = vpop.f32.mrb[0].mxu0
    %v4192 = vadd.f32 %v4028, %v4191
    %v4193 = vpop.f32.mrb[0].mxu0
    %v4194 = vpop.f32.mrb[0].mxu0
    %4195 = vdwg.mxu0
    %4196 = vmatprep.subr.bf16.mxu0 %v2915
    %4197 = vmatpush1.bf16.msra.mxu0 %v2914
    %4198 = vmatprep.subr.bf16.mxu0 %v2923
    %4199 = vmatpush1.bf16.msra.mxu0 %v2922
    %4200 = vmatprep.subr.bf16.mxu0 %v2931
    %4201 = vmatpush1.bf16.msra.mxu0 %v2930
    %4202 = vmatprep.subr.bf16.mxu0 %v2939
    %4203 = vmatpush1.bf16.msra.mxu0 %v2938
    %4204 = vmatprep.subr.bf16.mxu0 %v2947
    %4205 = vmatpush1.bf16.msra.mxu0 %v2946
    %4206 = vmatprep.subr.bf16.mxu0 %v2955
    %4207 = vmatpush1.bf16.msra.mxu0 %v2954
    %4208 = vmatprep.subr.bf16.mxu0 %v2963
    %4209 = vmatpush1.bf16.msra.mxu0 %v2962
    %4210 = vmatprep.subr.bf16.mxu0 %v2971
    %4211 = vmatpush1.bf16.msra.mxu0 %v2970
    %4212 = vmatprep.subr.bf16.mxu0 0
    %4213 = vmatpush1.bf16.msra.mxu0 0
    %4214 = vmatprep.subr.bf16.mxu0 0
    %4215 = vmatpush1.bf16.msra.mxu0 0
    %4216 = vmatprep.subr.bf16.mxu0 0
    %4217 = vmatpush1.bf16.msra.mxu0 0
    %4218 = vmatprep.subr.bf16.mxu0 0
    %4219 = vmatpush1.bf16.msra.mxu0 0
    %4220 = vmatprep.subr.bf16.mxu0 0
    %4221 = vmatpush1.bf16.msra.mxu0 0
    %4222 = vmatprep.subr.bf16.mxu0 0
    %4223 = vmatpush1.bf16.msra.mxu0 0
    %4224 = vmatprep.subr.bf16.mxu0 0
    %4225 = vmatpush1.bf16.msra.mxu0 0
    %4226 = vmatprep.subr.bf16.mxu0 0
    %4227 = vmatpush1.bf16.msra.mxu0 0
    %4228 = vmatprep.mubr.bf16.mxu0 0
    %4229 = vmatmul.mubr.bf16.gmra.mrb[0].mxu0 %v3988
    %v4230 = vpop.f32.mrb[0].mxu0
    %v4231 = vadd.f32 %v4190, %v4230
    %v4232 = vpop.f32.mrb[0].mxu0
    %v4233 = vadd.f32 %v4192, %v4232
    %v4234 = vpop.f32.mrb[0].mxu0
    %v4235 = vpop.f32.mrb[0].mxu0
    %4236 = vdwg.mxu0
    %4237 = vmatprep.subr.bf16.mxu0 %v2789
    %4238 = vmatpush1.bf16.msra.mxu0 %v2788
    %4239 = vmatprep.subr.bf16.mxu0 %v2797
    %4240 = vmatpush1.bf16.msra.mxu0 %v2796
    %4241 = vmatprep.subr.bf16.mxu0 %v2805
    %4242 = vmatpush1.bf16.msra.mxu0 %v2804
    %4243 = vmatprep.subr.bf16.mxu0 %v2813
    %4244 = vmatpush1.bf16.msra.mxu0 %v2812
    %4245 = vmatprep.subr.bf16.mxu0 %v2821
    %4246 = vmatpush1.bf16.msra.mxu0 %v2820
    %4247 = vmatprep.subr.bf16.mxu0 %v2829
    %4248 = vmatpush1.bf16.msra.mxu0 %v2828
    %4249 = vmatprep.subr.bf16.mxu0 %v2837
    %4250 = vmatpush1.bf16.msra.mxu0 %v2836
    %4251 = vmatprep.subr.bf16.mxu0 %v2845
    %4252 = vmatpush1.bf16.msra.mxu0 %v2844
    %4253 = vmatprep.subr.bf16.mxu0 %v2853
    %4254 = vmatpush1.bf16.msra.mxu0 %v2852
    %4255 = vmatprep.subr.bf16.mxu0 %v2861
    %4256 = vmatpush1.bf16.msra.mxu0 %v2860
    %4257 = vmatprep.subr.bf16.mxu0 %v2869
    %4258 = vmatpush1.bf16.msra.mxu0 %v2868
    %4259 = vmatprep.subr.bf16.mxu0 %v2877
    %4260 = vmatpush1.bf16.msra.mxu0 %v2876
    %4261 = vmatprep.subr.bf16.mxu0 %v2885
    %4262 = vmatpush1.bf16.msra.mxu0 %v2884
    %4263 = vmatprep.subr.bf16.mxu0 %v2893
    %4264 = vmatpush1.bf16.msra.mxu0 %v2892
    %4265 = vmatprep.subr.bf16.mxu0 %v2901
    %4266 = vmatpush1.bf16.msra.mxu0 %v2900
    %4267 = vmatprep.subr.bf16.mxu0 %v2909
    %4268 = vmatpush1.bf16.msra.mxu0 %v2908
    %4269 = vmatprep.mubr.bf16.mxu0 %v3990
    %4270 = vmatmul.mubr.bf16.gmra.mrb[0].mxu0 %v3989
    %v4271 = vpop.f32.mrb[0].mxu0
    %v4272 = vadd.f32 %v4067, %v4271
    %v4273 = vpop.f32.mrb[0].mxu0
    %v4274 = vadd.f32 %v4069, %v4273
    %v4275 = vpop.f32.mrb[0].mxu0
    %v4276 = vpop.f32.mrb[0].mxu0
    %4277 = vdwg.mxu0
    %4278 = vmatprep.subr.bf16.mxu0 %v2917
    %4279 = vmatpush1.bf16.msra.mxu0 %v2916
    %4280 = vmatprep.subr.bf16.mxu0 %v2925
    %4281 = vmatpush1.bf16.msra.mxu0 %v2924
    %4282 = vmatprep.subr.bf16.mxu0 %v2933
    %4283 = vmatpush1.bf16.msra.mxu0 %v2932
    %4284 = vmatprep.subr.bf16.mxu0 %v2941
    %4285 = vmatpush1.bf16.msra.mxu0 %v2940
    %4286 = vmatprep.subr.bf16.mxu0 %v2949
    %4287 = vmatpush1.bf16.msra.mxu0 %v2948
    %4288 = vmatprep.subr.bf16.mxu0 %v2957
    %4289 = vmatpush1.bf16.msra.mxu0 %v2956
    %4290 = vmatprep.subr.bf16.mxu0 %v2965
    %4291 = vmatpush1.bf16.msra.mxu0 %v2964
    %4292 = vmatprep.subr.bf16.mxu0 %v2973
    %4293 = vmatpush1.bf16.msra.mxu0 %v2972
    %4294 = vmatprep.subr.bf16.mxu0 0
    %4295 = vmatpush1.bf16.msra.mxu0 0
    %4296 = vmatprep.subr.bf16.mxu0 0
    %4297 = vmatpush1.bf16.msra.mxu0 0
    %4298 = vmatprep.subr.bf16.mxu0 0
    %4299 = vmatpush1.bf16.msra.mxu0 0
    %4300 = vmatprep.subr.bf16.mxu0 0
    %4301 = vmatpush1.bf16.msra.mxu0 0
    %4302 = vmatprep.subr.bf16.mxu0 0
    %4303 = vmatpush1.bf16.msra.mxu0 0
    %4304 = vmatprep.subr.bf16.mxu0 0
    %4305 = vmatpush1.bf16.msra.mxu0 0
    %4306 = vmatprep.subr.bf16.mxu0 0
    %4307 = vmatpush1.bf16.msra.mxu0 0
    %4308 = vmatprep.subr.bf16.mxu0 0
    %4309 = vmatpush1.bf16.msra.mxu0 0
    %4310 = vmatprep.mubr.bf16.mxu0 0
    %4311 = vmatmul.mubr.bf16.gmra.mrb[0].mxu0 %v3988
    %v4312 = vpop.f32.mrb[0].mxu0
    %v4313 = vadd.f32 %v4272, %v4312
    %v4314 = vpop.f32.mrb[0].mxu0
    %v4315 = vadd.f32 %v4274, %v4314
    %v4316 = vpop.f32.mrb[0].mxu0
    %v4317 = vpop.f32.mrb[0].mxu0
    %4318 = vdwg.mxu0
    %4319 = vmatprep.subr.bf16.mxu0 %v2791
    %4320 = vmatpush1.bf16.msra.mxu0 %v2790
    %4321 = vmatprep.subr.bf16.mxu0 %v2799
    %4322 = vmatpush1.bf16.msra.mxu0 %v2798
    %4323 = vmatprep.subr.bf16.mxu0 %v2807
    %4324 = vmatpush1.bf16.msra.mxu0 %v2806
    %4325 = vmatprep.subr.bf16.mxu0 %v2815
    %4326 = vmatpush1.bf16.msra.mxu0 %v2814
    %4327 = vmatprep.subr.bf16.mxu0 %v2823
    %4328 = vmatpush1.bf16.msra.mxu0 %v2822
    %4329 = vmatprep.subr.bf16.mxu0 %v2831
    %4330 = vmatpush1.bf16.msra.mxu0 %v2830
    %4331 = vmatprep.subr.bf16.mxu0 %v2839
    %4332 = vmatpush1.bf16.msra.mxu0 %v2838
    %4333 = vmatprep.subr.bf16.mxu0 %v2847
    %4334 = vmatpush1.bf16.msra.mxu0 %v2846
    %4335 = vmatprep.subr.bf16.mxu0 %v2855
    %4336 = vmatpush1.bf16.msra.mxu0 %v2854
    %4337 = vmatprep.subr.bf16.mxu0 %v2863
    %4338 = vmatpush1.bf16.msra.mxu0 %v2862
    %4339 = vmatprep.subr.bf16.mxu0 %v2871
    %4340 = vmatpush1.bf16.msra.mxu0 %v2870
    %4341 = vmatprep.subr.bf16.mxu0 %v2879
    %4342 = vmatpush1.bf16.msra.mxu0 %v2878
    %4343 = vmatprep.subr.bf16.mxu0 %v2887
    %4344 = vmatpush1.bf16.msra.mxu0 %v2886
    %4345 = vmatprep.subr.bf16.mxu0 %v2895
    %4346 = vmatpush1.bf16.msra.mxu0 %v2894
    %4347 = vmatprep.subr.bf16.mxu0 %v2903
    %4348 = vmatpush1.bf16.msra.mxu0 %v2902
    %4349 = vmatprep.subr.bf16.mxu0 %v2911
    %4350 = vmatpush1.bf16.msra.mxu0 %v2910
    %4351 = vmatprep.mubr.bf16.mxu0 %v3990
    %4352 = vmatmul.mubr.bf16.gmra.mrb[0].mxu0 %v3989
    %v4353 = vpop.f32.mrb[0].mxu0
    %v4354 = vadd.f32 %v4108, %v4353
    %v4355 = vpop.f32.mrb[0].mxu0
    %v4356 = vadd.f32 %v4110, %v4355
    %v4357 = vpop.f32.mrb[0].mxu0
    %v4358 = vpop.f32.mrb[0].mxu0
    %4359 = vdwg.mxu0
    %4360 = vmatprep.subr.bf16.mxu0 %v2919
    %4361 = vmatpush1.bf16.msra.mxu0 %v2918
    %4362 = vmatprep.subr.bf16.mxu0 %v2927
    %4363 = vmatpush1.bf16.msra.mxu0 %v2926
    %4364 = vmatprep.subr.bf16.mxu0 %v2935
    %4365 = vmatpush1.bf16.msra.mxu0 %v2934
    %4366 = vmatprep.subr.bf16.mxu0 %v2943
    %4367 = vmatpush1.bf16.msra.mxu0 %v2942
    %4368 = vmatprep.subr.bf16.mxu0 %v2951
    %4369 = vmatpush1.bf16.msra.mxu0 %v2950
    %4370 = vmatprep.subr.bf16.mxu0 %v2959
    %4371 = vmatpush1.bf16.msra.mxu0 %v2958
    %4372 = vmatprep.subr.bf16.mxu0 %v2967
    %4373 = vmatpush1.bf16.msra.mxu0 %v2966
    %4374 = vmatprep.subr.bf16.mxu0 %v2975
    %4375 = vmatpush1.bf16.msra.mxu0 %v2974
    %4376 = vmatprep.subr.bf16.mxu0 0
    %4377 = vmatpush1.bf16.msra.mxu0 0
    %4378 = vmatprep.subr.bf16.mxu0 0
    %4379 = vmatpush1.bf16.msra.mxu0 0
    %4380 = vmatprep.subr.bf16.mxu0 0
    %4381 = vmatpush1.bf16.msra.mxu0 0
    %4382 = vmatprep.subr.bf16.mxu0 0
    %4383 = vmatpush1.bf16.msra.mxu0 0
    %4384 = vmatprep.subr.bf16.mxu0 0
    %4385 = vmatpush1.bf16.msra.mxu0 0
    %4386 = vmatprep.subr.bf16.mxu0 0
    %4387 = vmatpush1.bf16.msra.mxu0 0
    %4388 = vmatprep.subr.bf16.mxu0 0
    %4389 = vmatpush1.bf16.msra.mxu0 0
    %4390 = vmatprep.subr.bf16.mxu0 0
    %4391 = vmatpush1.bf16.msra.mxu0 0
    %4392 = vmatprep.mubr.bf16.mxu0 0
    %4393 = vmatmul.mubr.bf16.gmra.mrb[0].mxu0 %v3988
    %v4394 = vpop.f32.mrb[0].mxu0
    %v4395 = vadd.f32 %v4354, %v4394
    %v4396 = vpop.f32.mrb[0].mxu0
    %v4397 = vadd.f32 %v4356, %v4396
    %v4398 = vpop.f32.mrb[0].mxu0
    %v4399 = vpop.f32.mrb[0].mxu0
    %4400 = vdwg.mxu0
    %4401 = vmatprep.subr.bf16.mxu0 %v2793
    %4402 = vmatpush1.bf16.msra.mxu0 %v2792
    %4403 = vmatprep.subr.bf16.mxu0 %v2801
    %4404 = vmatpush1.bf16.msra.mxu0 %v2800
    %4405 = vmatprep.subr.bf16.mxu0 %v2809
    %4406 = vmatpush1.bf16.msra.mxu0 %v2808
    %4407 = vmatprep.subr.bf16.mxu0 %v2817
    %4408 = vmatpush1.bf16.msra.mxu0 %v2816
    %4409 = vmatprep.subr.bf16.mxu0 %v2825
    %4410 = vmatpush1.bf16.msra.mxu0 %v2824
    %4411 = vmatprep.subr.bf16.mxu0 %v2833
    %4412 = vmatpush1.bf16.msra.mxu0 %v2832
    %4413 = vmatprep.subr.bf16.mxu0 %v2841
    %4414 = vmatpush1.bf16.msra.mxu0 %v2840
    %4415 = vmatprep.subr.bf16.mxu0 %v2849
    %4416 = vmatpush1.bf16.msra.mxu0 %v2848
    %4417 = vmatprep.subr.bf16.mxu0 %v2857
    %4418 = vmatpush1.bf16.msra.mxu0 %v2856
    %4419 = vmatprep.subr.bf16.mxu0 %v2865
    %4420 = vmatpush1.bf16.msra.mxu0 %v2864
    %4421 = vmatprep.subr.bf16.mxu0 %v2873
    %4422 = vmatpush1.bf16.msra.mxu0 %v2872
    %4423 = vmatprep.subr.bf16.mxu0 %v2881
    %4424 = vmatpush1.bf16.msra.mxu0 %v2880
    %4425 = vmatprep.subr.bf16.mxu0 %v2889
    %4426 = vmatpush1.bf16.msra.mxu0 %v2888
    %4427 = vmatprep.subr.bf16.mxu0 %v2897
    %4428 = vmatpush1.bf16.msra.mxu0 %v2896
    %4429 = vmatprep.subr.bf16.mxu0 %v2905
    %4430 = vmatpush1.bf16.msra.mxu0 %v2904
    %4431 = vmatprep.subr.bf16.mxu0 %v2913
    %4432 = vmatpush1.bf16.msra.mxu0 %v2912
    %4433 = vmatprep.mubr.bf16.mxu0 %v3990
    %4434 = vmatmul.mubr.bf16.gmra.mrb[0].mxu0 %v3989
    %v4435 = vpop.f32.mrb[0].mxu0
    %v4436 = vadd.f32 %v4149, %v4435
    %v4437 = vpop.f32.mrb[0].mxu0
    %v4438 = vadd.f32 %v4151, %v4437
    %v4439 = vpop.f32.mrb[0].mxu0
    %v4440 = vpop.f32.mrb[0].mxu0
    %4441 = vdwg.mxu0
    %4442 = vmatprep.subr.bf16.mxu0 %v2921
    %4443 = vmatpush1.bf16.msra.mxu0 %v2920
    %4444 = vmatprep.subr.bf16.mxu0 %v2929
    %4445 = vmatpush1.bf16.msra.mxu0 %v2928
    %4446 = vmatprep.subr.bf16.mxu0 %v2937
    %4447 = vmatpush1.bf16.msra.mxu0 %v2936
    %4448 = vmatprep.subr.bf16.mxu0 %v2945
    %4449 = vmatpush1.bf16.msra.mxu0 %v2944
    %4450 = vmatprep.subr.bf16.mxu0 %v2953
    %4451 = vmatpush1.bf16.msra.mxu0 %v2952
    %4452 = vmatprep.subr.bf16.mxu0 %v2961
    %4453 = vmatpush1.bf16.msra.mxu0 %v2960
    %4454 = vmatprep.subr.bf16.mxu0 %v2969
    %4455 = vmatpush1.bf16.msra.mxu0 %v2968
    %4456 = vmatprep.subr.bf16.mxu0 %v2977
    %4457 = vmatpush1.bf16.msra.mxu0 %v2976
    %4458 = vmatprep.subr.bf16.mxu0 0
    %4459 = vmatpush1.bf16.msra.mxu0 0
    %4460 = vmatprep.subr.bf16.mxu0 0
    %4461 = vmatpush1.bf16.msra.mxu0 0
    %4462 = vmatprep.subr.bf16.mxu0 0
    %4463 = vmatpush1.bf16.msra.mxu0 0
    %4464 = vmatprep.subr.bf16.mxu0 0
    %4465 = vmatpush1.bf16.msra.mxu0 0
    %4466 = vmatprep.subr.bf16.mxu0 0
    %4467 = vmatpush1.bf16.msra.mxu0 0
    %4468 = vmatprep.subr.bf16.mxu0 0
    %4469 = vmatpush1.bf16.msra.mxu0 0
    %4470 = vmatprep.subr.bf16.mxu0 0
    %4471 = vmatpush1.bf16.msra.mxu0 0
    %4472 = vmatprep.subr.bf16.mxu0 0
    %4473 = vmatpush1.bf16.msra.mxu0 0
    %4474 = vmatprep.mubr.bf16.mxu0 0
    %4475 = vmatmul.mubr.bf16.gmra.mrb[0].mxu0 %v3988
    %v4476 = vpop.f32.mrb[0].mxu0
    %v4477 = vadd.f32 %v4436, %v4476
    %v4478 = vpop.f32.mrb[0].mxu0
    %v4479 = vadd.f32 %v4438, %v4478
    %v4480 = vpop.f32.mrb[0].mxu0
    %v4481 = vpop.f32.mrb[0].mxu0
    %4482 = vdwg.mxu0
    %v4483 = vadd.f32 %v4231, %v3502
    %v4484 = vadd.f32 %v4233, %v3506
    %v4485 = vadd.f32 %v4313, %v3510
    %v4486 = vadd.f32 %v4315, %v3514
    %v4487 = vadd.f32 %v4395, %v3518
    %v4488 = vadd.f32 %v4397, %v3522
    %v4489 = vadd.f32 %v4477, %v3526
    %v4490 = vadd.f32 %v4479, %v3530
    %v4491 = vxor.u32 %v4483, 2147483648
    %v4492 = vxor.u32 %v4484, 2147483648
    %v4493 = vmul.f32 %v4491, 1.442695
    %v4494 = vpow.pop %v4493
    %v4495 = vmul.f32 %v4492, 1.442695
    %v4496 = vpow.pop %v4495
    %v4497 = vadd.f32 %v4494, 1.0
    %v4498 = vadd.f32 %v4496, 1.0
    %v4499 = vrcp.pop %v4497
    %v4500 = vmul.f32 1.0, %v4499
    %v4501 = vrcp.pop %v4498
    %v4502 = vmul.f32 1.0, %v4501
    %v4503 = vxor.u32 %v4485, 2147483648
    %v4504 = vxor.u32 %v4486, 2147483648
    %v4505 = vmul.f32 %v4503, 1.442695
    %v4506 = vpow.pop %v4505
    %v4507 = vmul.f32 %v4504, 1.442695
    %v4508 = vpow.pop %v4507
    %v4509 = vadd.f32 %v4506, 1.0
    %v4510 = vadd.f32 %v4508, 1.0
    %v4511 = vrcp.pop %v4509
    %v4512 = vmul.f32 1.0, %v4511
    %v4513 = vrcp.pop %v4510
    %v4514 = vmul.f32 1.0, %v4513
    %v4515 = vtanh.pop %v4487
    %v4516 = vtanh.pop %v4488
    %v4517 = vxor.u32 %v4489, 2147483648
    %v4518 = vxor.u32 %v4490, 2147483648
    %v4519 = vmul.f32 %v4517, 1.442695
    %v4520 = vpow.pop %v4519
    %v4521 = vmul.f32 %v4518, 1.442695
    %v4522 = vpow.pop %v4521
    %v4523 = vadd.f32 %v4520, 1.0
    %v4524 = vadd.f32 %v4522, 1.0
    %v4525 = vrcp.pop %v4523
    %v4526 = vmul.f32 1.0, %v4525
    %v4527 = vrcp.pop %v4524
    %v4528 = vmul.f32 1.0, %v4527
    %v4529 = vmul.f32 %v4512, %v3757
    %v4530 = vmul.f32 %v4514, %v3758
    %v4531 = vmul.f32 %v4500, %v4515
    %v4532 = vmul.f32 %v4502, %v4516
    %v4533 = vadd.f32 %v4529, %v4531
    %v4534 = vadd.f32 %v4530, %v4532
    %v4535 = vtanh.pop %v4533
    %v4536 = vtanh.pop %v4534
    %v4537 = vmul.f32 %v4526, %v4535
    %v4538 = vmul.f32 %v4528, %v4536
    %4539 = vst [vmem:[#allocation2] sm:$0xff] %v4537
    %4540 = vst [vmem:[#allocation2 + $0x8] sm:$0xff] %v4538
    %4541 = vst [vmem:[#allocation3] sm:$0xff] %v4533
    %4542 = vst [vmem:[#allocation3 + $0x8] sm:$0xff] %v4534
    %v4543 = vpack.c.bf16 %v4537, %v4537
    %v4544 = vpack.c.bf16 %v4538, %v4538
    %4545 = vmatprep.subr.bf16.mxu0 0
    %4546 = vmatpush1.bf16.msra.mxu0 %v3671
    %4547 = vmatprep.subr.bf16.mxu0 0
    %4548 = vmatpush1.bf16.msra.mxu0 %v3672
    %4549 = vmatprep.subr.bf16.mxu0 0
    %4550 = vmatpush1.bf16.msra.mxu0 %v3673
    %4551 = vmatprep.subr.bf16.mxu0 0
    %4552 = vmatpush1.bf16.msra.mxu0 %v3674
    %4553 = vmatprep.subr.bf16.mxu0 0
    %4554 = vmatpush1.bf16.msra.mxu0 %v3675
    %4555 = vmatprep.subr.bf16.mxu0 0
    %4556 = vmatpush1.bf16.msra.mxu0 %v3676
    %4557 = vmatprep.subr.bf16.mxu0 0
    %4558 = vmatpush1.bf16.msra.mxu0 %v3677
    %4559 = vmatprep.subr.bf16.mxu0 0
    %4560 = vmatpush1.bf16.msra.mxu0 %v3678
    %4561 = vmatprep.subr.bf16.mxu0 0
    %4562 = vmatpush1.bf16.msra.mxu0 %v3679
    %4563 = vmatprep.subr.bf16.mxu0 0
    %4564 = vmatpush1.bf16.msra.mxu0 %v3680
    %4565 = vmatprep.subr.bf16.mxu0 0
    %4566 = vmatpush1.bf16.msra.mxu0 %v3681
    %4567 = vmatprep.subr.bf16.mxu0 0
    %4568 = vmatpush1.bf16.msra.mxu0 %v3682
    %4569 = vmatprep.subr.bf16.mxu0 0
    %4570 = vmatpush1.bf16.msra.mxu0 %v3683
    %4571 = vmatprep.subr.bf16.mxu0 0
    %4572 = vmatpush1.bf16.msra.mxu0 %v3684
    %4573 = vmatprep.subr.bf16.mxu0 0
    %4574 = vmatpush1.bf16.msra.mxu0 %v3685
    %4575 = vmatprep.subr.bf16.mxu0 0
    %4576 = vmatpush1.bf16.msra.mxu0 %v3686
    %4577 = vmatprep.mubr.bf16.mxu0 %v4544
    %4578 = vmatmul.mubr.bf16.gmra.mrb[0].mxu0 %v4543
    %v4579 = vpop.f32.mrb[0].mxu0
    %v4580 = vadd.f32 %v3605, %v4579
    %v4581 = vpop.f32.mrb[0].mxu0
    %v4582 = vpop.f32.mrb[0].mxu0
    %v4583 = vpop.f32.mrb[0].mxu0
    %4584 = vdwg.mxu0
    %4585 = vmax.xlane.f32.xlu0 %v4580
    %v4586 = vpop.xlane.xlu0 %4585
    %v4587 = vsub.f32 %v4580, %v4586
    %v4588 = vmul.f32 %v4587, 1.442695
    %v4589 = vpow.pop %v4588
    %4590 = vadd.xlane.f32.xlu0 %v4589
    %v4591 = vpop.xlane.xlu0 %4590
    %v4592 = vlog2.pop %v4591
    %v4593 = vmul.f32 %v4592, 0.6931472
    %v4594 = vsub.f32 %v4587, %v4593
    %s4595 = scalar_lea.vmem [#allocation4], 16
    %4596 = vst [vmem:[%s4595] sm:$0xff] %v4594
    %v4597 = vld [vmem:[#allocation2] sm:$0xff]
    %v4598 = vld [vmem:[#allocation2 + $0x8] sm:$0xff]
    %v4599 = vld [vmem:[#allocation3] sm:$0xff]
    %v4600 = vld [vmem:[#allocation3 + $0x8] sm:$0xff]
    %v4601 = vpack.c.bf16 %v4597, %v4597
    %v4602 = vpack.c.bf16 %v4598, %v4598
    %4603 = vmatprep.subr.bf16.mxu0 %v657
    %4604 = vmatpush1.bf16.msra.mxu0 %v656
    %4605 = vmatprep.subr.bf16.mxu0 %v659
    %4606 = vmatpush1.bf16.msra.mxu0 %v658
    %4607 = vmatprep.subr.bf16.mxu0 %v661
    %4608 = vmatpush1.bf16.msra.mxu0 %v660
    %4609 = vmatprep.subr.bf16.mxu0 %v663
    %4610 = vmatpush1.bf16.msra.mxu0 %v662
    %4611 = vmatprep.subr.bf16.mxu0 %v665
    %4612 = vmatpush1.bf16.msra.mxu0 %v664
    %4613 = vmatprep.subr.bf16.mxu0 %v667
    %4614 = vmatpush1.bf16.msra.mxu0 %v666
    %4615 = vmatprep.subr.bf16.mxu0 %v669
    %4616 = vmatpush1.bf16.msra.mxu0 %v668
    %4617 = vmatprep.subr.bf16.mxu0 %v671
    %4618 = vmatpush1.bf16.msra.mxu0 %v670
    %4619 = vmatprep.subr.bf16.mxu0 %v673
    %4620 = vmatpush1.bf16.msra.mxu0 %v672
    %4621 = vmatprep.subr.bf16.mxu0 %v675
    %4622 = vmatpush1.bf16.msra.mxu0 %v674
    %4623 = vmatprep.subr.bf16.mxu0 %v677
    %4624 = vmatpush1.bf16.msra.mxu0 %v676
    %4625 = vmatprep.subr.bf16.mxu0 %v679
    %4626 = vmatpush1.bf16.msra.mxu0 %v678
    %4627 = vmatprep.subr.bf16.mxu0 %v681
    %4628 = vmatpush1.bf16.msra.mxu0 %v680
    %4629 = vmatprep.subr.bf16.mxu0 %v683
    %4630 = vmatpush1.bf16.msra.mxu0 %v682
    %4631 = vmatprep.subr.bf16.mxu0 %v685
    %4632 = vmatpush1.bf16.msra.mxu0 %v684
    %4633 = vmatprep.subr.bf16.mxu0 %v687
    %4634 = vmatpush1.bf16.msra.mxu0 %v686
    %4635 = vmatprep.mubr.bf16.mxu0 %v4602
    %4636 = vmatmul.mubr.bf16.gmra.mrb[0].mxu0 %v4601
    %v4637 = vpop.f32.mrb[0].mxu0
    %v4638 = vadd.f32 0.0, %v4637
    %v4639 = vpop.f32.mrb[0].mxu0
    %v4640 = vadd.f32 0.0, %v4639
    %v4641 = vpop.f32.mrb[0].mxu0
    %v4642 = vpop.f32.mrb[0].mxu0
    %4643 = vdwg.mxu0
    %v4644 = vpack.c.bf16 %v4638, %v4638
    %v4645 = vpack.c.bf16 %v4640, %v4640
    %4646 = vmatprep.subr.bf16.mxu0 0
    %4647 = vmatpush1.bf16.msra.mxu0 %v827
    %4648 = vmatprep.subr.bf16.mxu0 0
    %4649 = vmatpush1.bf16.msra.mxu0 %v828
    %4650 = vmatprep.subr.bf16.mxu0 0
    %4651 = vmatpush1.bf16.msra.mxu0 %v829
    %4652 = vmatprep.subr.bf16.mxu0 0
    %4653 = vmatpush1.bf16.msra.mxu0 %v830
    %4654 = vmatprep.subr.bf16.mxu0 0
    %4655 = vmatpush1.bf16.msra.mxu0 %v831
    %4656 = vmatprep.subr.bf16.mxu0 0
    %4657 = vmatpush1.bf16.msra.mxu0 %v832
    %4658 = vmatprep.subr.bf16.mxu0 0
    %4659 = vmatpush1.bf16.msra.mxu0 %v833
    %4660 = vmatprep.subr.bf16.mxu0 0
    %4661 = vmatpush1.bf16.msra.mxu0 %v834
    %4662 = vmatprep.subr.bf16.mxu0 0
    %4663 = vmatpush1.bf16.msra.mxu0 %v835
    %4664 = vmatprep.subr.bf16.mxu0 0
    %4665 = vmatpush1.bf16.msra.mxu0 %v836
    %4666 = vmatprep.subr.bf16.mxu0 0
    %4667 = vmatpush1.bf16.msra.mxu0 %v837
    %4668 = vmatprep.subr.bf16.mxu0 0
    %4669 = vmatpush1.bf16.msra.mxu0 %v838
    %4670 = vmatprep.subr.bf16.mxu0 0
    %4671 = vmatpush1.bf16.msra.mxu0 %v839
    %4672 = vmatprep.subr.bf16.mxu0 0
    %4673 = vmatpush1.bf16.msra.mxu0 %v840
    %4674 = vmatprep.subr.bf16.mxu0 0
    %4675 = vmatpush1.bf16.msra.mxu0 %v841
    %4676 = vmatprep.subr.bf16.mxu0 0
    %4677 = vmatpush1.bf16.msra.mxu0 %v842
    %4678 = vmatprep.mubr.bf16.mxu0 %v4645
    %4679 = vmatmul.mubr.bf16.gmra.mrb[0].mxu0 %v4644
    %v4680 = vpop.f32.mrb[0].mxu0
    %v4681 = vadd.f32 0.0, %v4680
    %v4682 = vpop.f32.mrb[0].mxu0
    %v4683 = vpop.f32.mrb[0].mxu0
    %v4684 = vpop.f32.mrb[0].mxu0
    %4685 = vdwg.mxu0
    %v4686 = vsel %vm553, %v4681, -1e+30
    %v4687 = vsel %vm900, %v4686, -inf
    %4688 = vmax.xlane.f32.xlu0 %v4687
    %v4689 = vpop.xlane.xlu0 %4688
    %v4690 = vsub.f32 %v4686, %v4689
    %v4691 = vmul.f32 %v4690, 1.442695
    %v4692 = vpow.pop %v4691
    %v4693 = vsel %vm900, %v4692, 0.0
    %4694 = vadd.xlane.f32.xlu0 %v4693
    %v4695 = vpop.xlane.xlu0 %4694
    %v4696 = vrcp.pop %v4695
    %v4697 = vmul.f32 %v4692, %v4696
    %v4698 = vpack.c.bf16 %v4697, %v4697
    %v4700 = vsel %vm900, %v4698, 0
    %4702 = vmatprep.subr.bf16.mxu0 %v938
    %4703 = vmatpush1.bf16.msra.mxu0 %v937
    %4704 = vmatprep.subr.bf16.mxu0 %v940
    %4705 = vmatpush1.bf16.msra.mxu0 %v939
    %4706 = vmatprep.subr.bf16.mxu0 %v942
    %4707 = vmatpush1.bf16.msra.mxu0 %v941
    %4708 = vmatprep.subr.bf16.mxu0 %v944
    %4709 = vmatpush1.bf16.msra.mxu0 %v943
    %4710 = vmatprep.subr.bf16.mxu0 0
    %4711 = vmatpush1.bf16.msra.mxu0 0
    %4712 = vmatprep.subr.bf16.mxu0 0
    %4713 = vmatpush1.bf16.msra.mxu0 0
    %4714 = vmatprep.subr.bf16.mxu0 0
    %4715 = vmatpush1.bf16.msra.mxu0 0
    %4716 = vmatprep.subr.bf16.mxu0 0
    %4717 = vmatpush1.bf16.msra.mxu0 0
    %4718 = vmatprep.subr.bf16.mxu0 0
    %4719 = vmatpush1.bf16.msra.mxu0 0
    %4720 = vmatprep.subr.bf16.mxu0 0
    %4721 = vmatpush1.bf16.msra.mxu0 0
    %4722 = vmatprep.subr.bf16.mxu0 0
    %4723 = vmatpush1.bf16.msra.mxu0 0
    %4724 = vmatprep.subr.bf16.mxu0 0
    %4725 = vmatpush1.bf16.msra.mxu0 0
    %4726 = vmatprep.subr.bf16.mxu0 0
    %4727 = vmatpush1.bf16.msra.mxu0 0
    %4728 = vmatprep.subr.bf16.mxu0 0
    %4729 = vmatpush1.bf16.msra.mxu0 0
    %4730 = vmatprep.subr.bf16.mxu0 0
    %4731 = vmatpush1.bf16.msra.mxu0 0
    %4732 = vmatprep.subr.bf16.mxu0 0
    %4733 = vmatpush1.bf16.msra.mxu0 0
    %4734 = vmatprep.mubr.bf16.mxu0 0
    %4735 = vmatmul.mubr.bf16.gmra.mrb[0].mxu0 %v4700
    %v4736 = vpop.f32.mrb[0].mxu0
    %v4737 = vadd.f32 0.0, %v4736
    %v4738 = vpop.f32.mrb[0].mxu0
    %v4739 = vadd.f32 0.0, %v4738
    %v4740 = vpop.f32.mrb[0].mxu0
    %v4741 = vpop.f32.mrb[0].mxu0
    %4742 = vdwg.mxu0
    %v4743 = vpack.c.bf16 %v4737, %v4737
    %v4744 = vpack.c.bf16 %v4739, %v4739
    %4745 = vmatprep.subr.bf16.mxu0 %v1096
    %4746 = vmatpush1.bf16.msra.mxu0 %v1095
    %4747 = vmatprep.subr.bf16.mxu0 %v1098
    %4748 = vmatpush1.bf16.msra.mxu0 %v1097
    %4749 = vmatprep.subr.bf16.mxu0 %v1100
    %4750 = vmatpush1.bf16.msra.mxu0 %v1099
    %4751 = vmatprep.subr.bf16.mxu0 %v1102
    %4752 = vmatpush1.bf16.msra.mxu0 %v1101
    %4753 = vmatprep.subr.bf16.mxu0 %v1104
    %4754 = vmatpush1.bf16.msra.mxu0 %v1103
    %4755 = vmatprep.subr.bf16.mxu0 %v1106
    %4756 = vmatpush1.bf16.msra.mxu0 %v1105
    %4757 = vmatprep.subr.bf16.mxu0 %v1108
    %4758 = vmatpush1.bf16.msra.mxu0 %v1107
    %4759 = vmatprep.subr.bf16.mxu0 %v1110
    %4760 = vmatpush1.bf16.msra.mxu0 %v1109
    %4761 = vmatprep.subr.bf16.mxu0 %v1112
    %4762 = vmatpush1.bf16.msra.mxu0 %v1111
    %4763 = vmatprep.subr.bf16.mxu0 %v1114
    %4764 = vmatpush1.bf16.msra.mxu0 %v1113
    %4765 = vmatprep.subr.bf16.mxu0 %v1116
    %4766 = vmatpush1.bf16.msra.mxu0 %v1115
    %4767 = vmatprep.subr.bf16.mxu0 %v1118
    %4768 = vmatpush1.bf16.msra.mxu0 %v1117
    %4769 = vmatprep.subr.bf16.mxu0 %v1120
    %4770 = vmatpush1.bf16.msra.mxu0 %v1119
    %4771 = vmatprep.subr.bf16.mxu0 %v1122
    %4772 = vmatpush1.bf16.msra.mxu0 %v1121
    %4773 = vmatprep.subr.bf16.mxu0 %v1124
    %4774 = vmatpush1.bf16.msra.mxu0 %v1123
    %4775 = vmatprep.subr.bf16.mxu0 %v1126
    %4776 = vmatpush1.bf16.msra.mxu0 %v1125
    %4777 = vmatprep.mubr.bf16.mxu0 %v4602
    %4778 = vmatmul.mubr.bf16.gmra.mrb[0].mxu0 %v4601
    %v4779 = vpop.f32.mrb[0].mxu0
    %v4780 = vadd.f32 0.0, %v4779
    %v4781 = vpop.f32.mrb[0].mxu0
    %v4782 = vadd.f32 0.0, %v4781
    %v4783 = vpop.f32.mrb[0].mxu0
    %v4784 = vpop.f32.mrb[0].mxu0
    %4785 = vdwg.mxu0
    %4786 = vmatprep.subr.bf16.mxu0 %v1297
    %4787 = vmatpush1.bf16.msra.mxu0 %v1296
    %4788 = vmatprep.subr.bf16.mxu0 %v1299
    %4789 = vmatpush1.bf16.msra.mxu0 %v1298
    %4790 = vmatprep.subr.bf16.mxu0 %v1301
    %4791 = vmatpush1.bf16.msra.mxu0 %v1300
    %4792 = vmatprep.subr.bf16.mxu0 %v1303
    %4793 = vmatpush1.bf16.msra.mxu0 %v1302
    %4794 = vmatprep.subr.bf16.mxu0 %v1305
    %4795 = vmatpush1.bf16.msra.mxu0 %v1304
    %4796 = vmatprep.subr.bf16.mxu0 %v1307
    %4797 = vmatpush1.bf16.msra.mxu0 %v1306
    %4798 = vmatprep.subr.bf16.mxu0 %v1309
    %4799 = vmatpush1.bf16.msra.mxu0 %v1308
    %4800 = vmatprep.subr.bf16.mxu0 %v1311
    %4801 = vmatpush1.bf16.msra.mxu0 %v1310
    %4802 = vmatprep.subr.bf16.mxu0 %v1313
    %4803 = vmatpush1.bf16.msra.mxu0 %v1312
    %4804 = vmatprep.subr.bf16.mxu0 %v1315
    %4805 = vmatpush1.bf16.msra.mxu0 %v1314
    %4806 = vmatprep.subr.bf16.mxu0 %v1317
    %4807 = vmatpush1.bf16.msra.mxu0 %v1316
    %4808 = vmatprep.subr.bf16.mxu0 %v1319
    %4809 = vmatpush1.bf16.msra.mxu0 %v1318
    %4810 = vmatprep.subr.bf16.mxu0 %v1321
    %4811 = vmatpush1.bf16.msra.mxu0 %v1320
    %4812 = vmatprep.subr.bf16.mxu0 %v1323
    %4813 = vmatpush1.bf16.msra.mxu0 %v1322
    %4814 = vmatprep.subr.bf16.mxu0 %v1325
    %4815 = vmatpush1.bf16.msra.mxu0 %v1324
    %4816 = vmatprep.subr.bf16.mxu0 %v1327
    %4817 = vmatpush1.bf16.msra.mxu0 %v1326
    %4818 = vmatprep.mubr.bf16.mxu0 %v4744
    %4819 = vmatmul.mubr.bf16.gmra.mrb[0].mxu0 %v4743
    %v4820 = vpop.f32.mrb[0].mxu0
    %v4821 = vadd.f32 %v4780, %v4820
    %v4822 = vpop.f32.mrb[0].mxu0
    %v4823 = vadd.f32 %v4782, %v4822
    %v4824 = vpop.f32.mrb[0].mxu0
    %v4825 = vpop.f32.mrb[0].mxu0
    %4826 = vdwg.mxu0
    %v4827 = vtanh.pop %v4821
    %v4828 = vtanh.pop %v4823
    %s4829 = scalar_lea.vmem %s4, 8
    %v4830 = vld [vmem:[%s4829] sm:$0xf]
    %v4831 = vpack.c.bf16 %v4827, %v4827
    %v4832 = vpack.c.bf16 %v4828, %v4828
    %4833 = vmatprep.subr.bf16.mxu0 %v1791
    %4834 = vmatpush1.bf16.msra.mxu0 %v1790
    %4835 = vmatprep.subr.bf16.mxu0 %v1799
    %4836 = vmatpush1.bf16.msra.mxu0 %v1798
    %4837 = vmatprep.subr.bf16.mxu0 %v1807
    %4838 = vmatpush1.bf16.msra.mxu0 %v1806
    %4839 = vmatprep.subr.bf16.mxu0 %v1815
    %4840 = vmatpush1.bf16.msra.mxu0 %v1814
    %4841 = vmatprep.subr.bf16.mxu0 %v1823
    %4842 = vmatpush1.bf16.msra.mxu0 %v1822
    %4843 = vmatprep.subr.bf16.mxu0 %v1831
    %4844 = vmatpush1.bf16.msra.mxu0 %v1830
    %4845 = vmatprep.subr.bf16.mxu0 %v1839
    %4846 = vmatpush1.bf16.msra.mxu0 %v1838
    %4847 = vmatprep.subr.bf16.mxu0 %v1847
    %4848 = vmatpush1.bf16.msra.mxu0 %v1846
    %4849 = vmatprep.subr.bf16.mxu0 %v1855
    %4850 = vmatpush1.bf16.msra.mxu0 %v1854
    %4851 = vmatprep.subr.bf16.mxu0 %v1863
    %4852 = vmatpush1.bf16.msra.mxu0 %v1862
    %4853 = vmatprep.subr.bf16.mxu0 %v1871
    %4854 = vmatpush1.bf16.msra.mxu0 %v1870
    %4855 = vmatprep.subr.bf16.mxu0 %v1879
    %4856 = vmatpush1.bf16.msra.mxu0 %v1878
    %4857 = vmatprep.subr.bf16.mxu0 %v1887
    %4858 = vmatpush1.bf16.msra.mxu0 %v1886
    %4859 = vmatprep.subr.bf16.mxu0 %v1895
    %4860 = vmatpush1.bf16.msra.mxu0 %v1894
    %4861 = vmatprep.subr.bf16.mxu0 %v1903
    %4862 = vmatpush1.bf16.msra.mxu0 %v1902
    %4863 = vmatprep.subr.bf16.mxu0 %v1911
    %4864 = vmatpush1.bf16.msra.mxu0 %v1910
    %4865 = vmatprep.mubr.bf16.mxu0 %v4602
    %4866 = vmatmul.mubr.bf16.gmra.mrb[0].mxu0 %v4601
    %v4867 = vpop.f32.mrb[0].mxu0
    %v4868 = vadd.f32 0.0, %v4867
    %v4869 = vpop.f32.mrb[0].mxu0
    %v4870 = vadd.f32 0.0, %v4869
    %v4871 = vpop.f32.mrb[0].mxu0
    %v4872 = vpop.f32.mrb[0].mxu0
    %4873 = vdwg.mxu0
    %4874 = vmatprep.subr.bf16.mxu0 %v1793
    %4875 = vmatpush1.bf16.msra.mxu0 %v1792
    %4876 = vmatprep.subr.bf16.mxu0 %v1801
    %4877 = vmatpush1.bf16.msra.mxu0 %v1800
    %4878 = vmatprep.subr.bf16.mxu0 %v1809
    %4879 = vmatpush1.bf16.msra.mxu0 %v1808
    %4880 = vmatprep.subr.bf16.mxu0 %v1817
    %4881 = vmatpush1.bf16.msra.mxu0 %v1816
    %4882 = vmatprep.subr.bf16.mxu0 %v1825
    %4883 = vmatpush1.bf16.msra.mxu0 %v1824
    %4884 = vmatprep.subr.bf16.mxu0 %v1833
    %4885 = vmatpush1.bf16.msra.mxu0 %v1832
    %4886 = vmatprep.subr.bf16.mxu0 %v1841
    %4887 = vmatpush1.bf16.msra.mxu0 %v1840
    %4888 = vmatprep.subr.bf16.mxu0 %v1849
    %4889 = vmatpush1.bf16.msra.mxu0 %v1848
    %4890 = vmatprep.subr.bf16.mxu0 %v1857
    %4891 = vmatpush1.bf16.msra.mxu0 %v1856
    %4892 = vmatprep.subr.bf16.mxu0 %v1865
    %4893 = vmatpush1.bf16.msra.mxu0 %v1864
    %4894 = vmatprep.subr.bf16.mxu0 %v1873
    %4895 = vmatpush1.bf16.msra.mxu0 %v1872
    %4896 = vmatprep.subr.bf16.mxu0 %v1881
    %4897 = vmatpush1.bf16.msra.mxu0 %v1880
    %4898 = vmatprep.subr.bf16.mxu0 %v1889
    %4899 = vmatpush1.bf16.msra.mxu0 %v1888
    %4900 = vmatprep.subr.bf16.mxu0 %v1897
    %4901 = vmatpush1.bf16.msra.mxu0 %v1896
    %4902 = vmatprep.subr.bf16.mxu0 %v1905
    %4903 = vmatpush1.bf16.msra.mxu0 %v1904
    %4904 = vmatprep.subr.bf16.mxu0 %v1913
    %4905 = vmatpush1.bf16.msra.mxu0 %v1912
    %4906 = vmatprep.mubr.bf16.mxu0 %v4602
    %4907 = vmatmul.mubr.bf16.gmra.mrb[0].mxu0 %v4601
    %v4908 = vpop.f32.mrb[0].mxu0
    %v4909 = vadd.f32 0.0, %v4908
    %v4910 = vpop.f32.mrb[0].mxu0
    %v4911 = vadd.f32 0.0, %v4910
    %v4912 = vpop.f32.mrb[0].mxu0
    %v4913 = vpop.f32.mrb[0].mxu0
    %4914 = vdwg.mxu0
    %4915 = vmatprep.subr.bf16.mxu0 %v1795
    %4916 = vmatpush1.bf16.msra.mxu0 %v1794
    %4917 = vmatprep.subr.bf16.mxu0 %v1803
    %4918 = vmatpush1.bf16.msra.mxu0 %v1802
    %4919 = vmatprep.subr.bf16.mxu0 %v1811
    %4920 = vmatpush1.bf16.msra.mxu0 %v1810
    %4921 = vmatprep.subr.bf16.mxu0 %v1819
    %4922 = vmatpush1.bf16.msra.mxu0 %v1818
    %4923 = vmatprep.subr.bf16.mxu0 %v1827
    %4924 = vmatpush1.bf16.msra.mxu0 %v1826
    %4925 = vmatprep.subr.bf16.mxu0 %v1835
    %4926 = vmatpush1.bf16.msra.mxu0 %v1834
    %4927 = vmatprep.subr.bf16.mxu0 %v1843
    %4928 = vmatpush1.bf16.msra.mxu0 %v1842
    %4929 = vmatprep.subr.bf16.mxu0 %v1851
    %4930 = vmatpush1.bf16.msra.mxu0 %v1850
    %4931 = vmatprep.subr.bf16.mxu0 %v1859
    %4932 = vmatpush1.bf16.msra.mxu0 %v1858
    %4933 = vmatprep.subr.bf16.mxu0 %v1867
    %4934 = vmatpush1.bf16.msra.mxu0 %v1866
    %4935 = vmatprep.subr.bf16.mxu0 %v1875
    %4936 = vmatpush1.bf16.msra.mxu0 %v1874
    %4937 = vmatprep.subr.bf16.mxu0 %v1883
    %4938 = vmatpush1.bf16.msra.mxu0 %v1882
    %4939 = vmatprep.subr.bf16.mxu0 %v1891
    %4940 = vmatpush1.bf16.msra.mxu0 %v1890
    %4941 = vmatprep.subr.bf16.mxu0 %v1899
    %4942 = vmatpush1.bf16.msra.mxu0 %v1898
    %4943 = vmatprep.subr.bf16.mxu0 %v1907
    %4944 = vmatpush1.bf16.msra.mxu0 %v1906
    %4945 = vmatprep.subr.bf16.mxu0 %v1915
    %4946 = vmatpush1.bf16.msra.mxu0 %v1914
    %4947 = vmatprep.mubr.bf16.mxu0 %v4602
    %4948 = vmatmul.mubr.bf16.gmra.mrb[0].mxu0 %v4601
    %v4949 = vpop.f32.mrb[0].mxu0
    %v4950 = vadd.f32 0.0, %v4949
    %v4951 = vpop.f32.mrb[0].mxu0
    %v4952 = vadd.f32 0.0, %v4951
    %v4953 = vpop.f32.mrb[0].mxu0
    %v4954 = vpop.f32.mrb[0].mxu0
    %4955 = vdwg.mxu0
    %4956 = vmatprep.subr.bf16.mxu0 %v1797
    %4957 = vmatpush1.bf16.msra.mxu0 %v1796
    %4958 = vmatprep.subr.bf16.mxu0 %v1805
    %4959 = vmatpush1.bf16.msra.mxu0 %v1804
    %4960 = vmatprep.subr.bf16.mxu0 %v1813
    %4961 = vmatpush1.bf16.msra.mxu0 %v1812
    %4962 = vmatprep.subr.bf16.mxu0 %v1821
    %4963 = vmatpush1.bf16.msra.mxu0 %v1820
    %4964 = vmatprep.subr.bf16.mxu0 %v1829
    %4965 = vmatpush1.bf16.msra.mxu0 %v1828
    %4966 = vmatprep.subr.bf16.mxu0 %v1837
    %4967 = vmatpush1.bf16.msra.mxu0 %v1836
    %4968 = vmatprep.subr.bf16.mxu0 %v1845
    %4969 = vmatpush1.bf16.msra.mxu0 %v1844
    %4970 = vmatprep.subr.bf16.mxu0 %v1853
    %4971 = vmatpush1.bf16.msra.mxu0 %v1852
    %4972 = vmatprep.subr.bf16.mxu0 %v1861
    %4973 = vmatpush1.bf16.msra.mxu0 %v1860
    %4974 = vmatprep.subr.bf16.mxu0 %v1869
    %4975 = vmatpush1.bf16.msra.mxu0 %v1868
    %4976 = vmatprep.subr.bf16.mxu0 %v1877
    %4977 = vmatpush1.bf16.msra.mxu0 %v1876
    %4978 = vmatprep.subr.bf16.mxu0 %v1885
    %4979 = vmatpush1.bf16.msra.mxu0 %v1884
    %4980 = vmatprep.subr.bf16.mxu0 %v1893
    %4981 = vmatpush1.bf16.msra.mxu0 %v1892
    %4982 = vmatprep.subr.bf16.mxu0 %v1901
    %4983 = vmatpush1.bf16.msra.mxu0 %v1900
    %4984 = vmatprep.subr.bf16.mxu0 %v1909
    %4985 = vmatpush1.bf16.msra.mxu0 %v1908
    %4986 = vmatprep.subr.bf16.mxu0 %v1917
    %4987 = vmatpush1.bf16.msra.mxu0 %v1916
    %4988 = vmatprep.mubr.bf16.mxu0 %v4602
    %4989 = vmatmul.mubr.bf16.gmra.mrb[0].mxu0 %v4601
    %v4990 = vpop.f32.mrb[0].mxu0
    %v4991 = vadd.f32 0.0, %v4990
    %v4992 = vpop.f32.mrb[0].mxu0
    %v4993 = vadd.f32 0.0, %v4992
    %v4994 = vpop.f32.mrb[0].mxu0
    %v4995 = vpop.f32.mrb[0].mxu0
    %4996 = vdwg.mxu0
    %4997 = vmatprep.subr.bf16.mxu0 %v2787
    %4998 = vmatpush1.bf16.msra.mxu0 %v2786
    %4999 = vmatprep.subr.bf16.mxu0 %v2795
    %5000 = vmatpush1.bf16.msra.mxu0 %v2794
    %5001 = vmatprep.subr.bf16.mxu0 %v2803
    %5002 = vmatpush1.bf16.msra.mxu0 %v2802
    %5003 = vmatprep.subr.bf16.mxu0 %v2811
    %5004 = vmatpush1.bf16.msra.mxu0 %v2810
    %5005 = vmatprep.subr.bf16.mxu0 %v2819
    %5006 = vmatpush1.bf16.msra.mxu0 %v2818
    %5007 = vmatprep.subr.bf16.mxu0 %v2827
    %5008 = vmatpush1.bf16.msra.mxu0 %v2826
    %5009 = vmatprep.subr.bf16.mxu0 %v2835
    %5010 = vmatpush1.bf16.msra.mxu0 %v2834
    %5011 = vmatprep.subr.bf16.mxu0 %v2843
    %5012 = vmatpush1.bf16.msra.mxu0 %v2842
    %5013 = vmatprep.subr.bf16.mxu0 %v2851
    %5014 = vmatpush1.bf16.msra.mxu0 %v2850
    %5015 = vmatprep.subr.bf16.mxu0 %v2859
    %5016 = vmatpush1.bf16.msra.mxu0 %v2858
    %5017 = vmatprep.subr.bf16.mxu0 %v2867
    %5018 = vmatpush1.bf16.msra.mxu0 %v2866
    %5019 = vmatprep.subr.bf16.mxu0 %v2875
    %5020 = vmatpush1.bf16.msra.mxu0 %v2874
    %5021 = vmatprep.subr.bf16.mxu0 %v2883
    %5022 = vmatpush1.bf16.msra.mxu0 %v2882
    %5023 = vmatprep.subr.bf16.mxu0 %v2891
    %5024 = vmatpush1.bf16.msra.mxu0 %v2890
    %5025 = vmatprep.subr.bf16.mxu0 %v2899
    %5026 = vmatpush1.bf16.msra.mxu0 %v2898
    %5027 = vmatprep.subr.bf16.mxu0 %v2907
    %5028 = vmatpush1.bf16.msra.mxu0 %v2906
    %5029 = vmatprep.mubr.bf16.mxu0 %v4832
    %5030 = vmatmul.mubr.bf16.gmra.mrb[0].mxu0 %v4831
    %v5031 = vpop.f32.mrb[0].mxu0
    %v5032 = vadd.f32 %v4868, %v5031
    %v5033 = vpop.f32.mrb[0].mxu0
    %v5034 = vadd.f32 %v4870, %v5033
    %v5035 = vpop.f32.mrb[0].mxu0
    %v5036 = vpop.f32.mrb[0].mxu0
    %5037 = vdwg.mxu0
    %5038 = vmatprep.subr.bf16.mxu0 %v2915
    %5039 = vmatpush1.bf16.msra.mxu0 %v2914
    %5040 = vmatprep.subr.bf16.mxu0 %v2923
    %5041 = vmatpush1.bf16.msra.mxu0 %v2922
    %5042 = vmatprep.subr.bf16.mxu0 %v2931
    %5043 = vmatpush1.bf16.msra.mxu0 %v2930
    %5044 = vmatprep.subr.bf16.mxu0 %v2939
    %5045 = vmatpush1.bf16.msra.mxu0 %v2938
    %5046 = vmatprep.subr.bf16.mxu0 %v2947
    %5047 = vmatpush1.bf16.msra.mxu0 %v2946
    %5048 = vmatprep.subr.bf16.mxu0 %v2955
    %5049 = vmatpush1.bf16.msra.mxu0 %v2954
    %5050 = vmatprep.subr.bf16.mxu0 %v2963
    %5051 = vmatpush1.bf16.msra.mxu0 %v2962
    %5052 = vmatprep.subr.bf16.mxu0 %v2971
    %5053 = vmatpush1.bf16.msra.mxu0 %v2970
    %5054 = vmatprep.subr.bf16.mxu0 0
    %5055 = vmatpush1.bf16.msra.mxu0 0
    %5056 = vmatprep.subr.bf16.mxu0 0
    %5057 = vmatpush1.bf16.msra.mxu0 0
    %5058 = vmatprep.subr.bf16.mxu0 0
    %5059 = vmatpush1.bf16.msra.mxu0 0
    %5060 = vmatprep.subr.bf16.mxu0 0
    %5061 = vmatpush1.bf16.msra.mxu0 0
    %5062 = vmatprep.subr.bf16.mxu0 0
    %5063 = vmatpush1.bf16.msra.mxu0 0
    %5064 = vmatprep.subr.bf16.mxu0 0
    %5065 = vmatpush1.bf16.msra.mxu0 0
    %5066 = vmatprep.subr.bf16.mxu0 0
    %5067 = vmatpush1.bf16.msra.mxu0 0
    %5068 = vmatprep.subr.bf16.mxu0 0
    %5069 = vmatpush1.bf16.msra.mxu0 0
    %5070 = vmatprep.mubr.bf16.mxu0 0
    %5071 = vmatmul.mubr.bf16.gmra.mrb[0].mxu0 %v4830
    %v5072 = vpop.f32.mrb[0].mxu0
    %v5073 = vadd.f32 %v5032, %v5072
    %v5074 = vpop.f32.mrb[0].mxu0
    %v5075 = vadd.f32 %v5034, %v5074
    %v5076 = vpop.f32.mrb[0].mxu0
    %v5077 = vpop.f32.mrb[0].mxu0
    %5078 = vdwg.mxu0
    %5079 = vmatprep.subr.bf16.mxu0 %v2789
    %5080 = vmatpush1.bf16.msra.mxu0 %v2788
    %5081 = vmatprep.subr.bf16.mxu0 %v2797
    %5082 = vmatpush1.bf16.msra.mxu0 %v2796
    %5083 = vmatprep.subr.bf16.mxu0 %v2805
    %5084 = vmatpush1.bf16.msra.mxu0 %v2804
    %5085 = vmatprep.subr.bf16.mxu0 %v2813
    %5086 = vmatpush1.bf16.msra.mxu0 %v2812
    %5087 = vmatprep.subr.bf16.mxu0 %v2821
    %5088 = vmatpush1.bf16.msra.mxu0 %v2820
    %5089 = vmatprep.subr.bf16.mxu0 %v2829
    %5090 = vmatpush1.bf16.msra.mxu0 %v2828
    %5091 = vmatprep.subr.bf16.mxu0 %v2837
    %5092 = vmatpush1.bf16.msra.mxu0 %v2836
    %5093 = vmatprep.subr.bf16.mxu0 %v2845
    %5094 = vmatpush1.bf16.msra.mxu0 %v2844
    %5095 = vmatprep.subr.bf16.mxu0 %v2853
    %5096 = vmatpush1.bf16.msra.mxu0 %v2852
    %5097 = vmatprep.subr.bf16.mxu0 %v2861
    %5098 = vmatpush1.bf16.msra.mxu0 %v2860
    %5099 = vmatprep.subr.bf16.mxu0 %v2869
    %5100 = vmatpush1.bf16.msra.mxu0 %v2868
    %5101 = vmatprep.subr.bf16.mxu0 %v2877
    %5102 = vmatpush1.bf16.msra.mxu0 %v2876
    %5103 = vmatprep.subr.bf16.mxu0 %v2885
    %5104 = vmatpush1.bf16.msra.mxu0 %v2884
    %5105 = vmatprep.subr.bf16.mxu0 %v2893
    %5106 = vmatpush1.bf16.msra.mxu0 %v2892
    %5107 = vmatprep.subr.bf16.mxu0 %v2901
    %5108 = vmatpush1.bf16.msra.mxu0 %v2900
    %5109 = vmatprep.subr.bf16.mxu0 %v2909
    %5110 = vmatpush1.bf16.msra.mxu0 %v2908
    %5111 = vmatprep.mubr.bf16.mxu0 %v4832
    %5112 = vmatmul.mubr.bf16.gmra.mrb[0].mxu0 %v4831
    %v5113 = vpop.f32.mrb[0].mxu0
    %v5114 = vadd.f32 %v4909, %v5113
    %v5115 = vpop.f32.mrb[0].mxu0
    %v5116 = vadd.f32 %v4911, %v5115
    %v5117 = vpop.f32.mrb[0].mxu0
    %v5118 = vpop.f32.mrb[0].mxu0
    %5119 = vdwg.mxu0
    %5120 = vmatprep.subr.bf16.mxu0 %v2917
    %5121 = vmatpush1.bf16.msra.mxu0 %v2916
    %5122 = vmatprep.subr.bf16.mxu0 %v2925
    %5123 = vmatpush1.bf16.msra.mxu0 %v2924
    %5124 = vmatprep.subr.bf16.mxu0 %v2933
    %5125 = vmatpush1.bf16.msra.mxu0 %v2932
    %5126 = vmatprep.subr.bf16.mxu0 %v2941
    %5127 = vmatpush1.bf16.msra.mxu0 %v2940
    %5128 = vmatprep.subr.bf16.mxu0 %v2949
    %5129 = vmatpush1.bf16.msra.mxu0 %v2948
    %5130 = vmatprep.subr.bf16.mxu0 %v2957
    %5131 = vmatpush1.bf16.msra.mxu0 %v2956
    %5132 = vmatprep.subr.bf16.mxu0 %v2965
    %5133 = vmatpush1.bf16.msra.mxu0 %v2964
    %5134 = vmatprep.subr.bf16.mxu0 %v2973
    %5135 = vmatpush1.bf16.msra.mxu0 %v2972
    %5136 = vmatprep.subr.bf16.mxu0 0
    %5137 = vmatpush1.bf16.msra.mxu0 0
    %5138 = vmatprep.subr.bf16.mxu0 0
    %5139 = vmatpush1.bf16.msra.mxu0 0
    %5140 = vmatprep.subr.bf16.mxu0 0
    %5141 = vmatpush1.bf16.msra.mxu0 0
    %5142 = vmatprep.subr.bf16.mxu0 0
    %5143 = vmatpush1.bf16.msra.mxu0 0
    %5144 = vmatprep.subr.bf16.mxu0 0
    %5145 = vmatpush1.bf16.msra.mxu0 0
    %5146 = vmatprep.subr.bf16.mxu0 0
    %5147 = vmatpush1.bf16.msra.mxu0 0
    %5148 = vmatprep.subr.bf16.mxu0 0
    %5149 = vmatpush1.bf16.msra.mxu0 0
    %5150 = vmatprep.subr.bf16.mxu0 0
    %5151 = vmatpush1.bf16.msra.mxu0 0
    %5152 = vmatprep.mubr.bf16.mxu0 0
    %5153 = vmatmul.mubr.bf16.gmra.mrb[0].mxu0 %v4830
    %v5154 = vpop.f32.mrb[0].mxu0
    %v5155 = vadd.f32 %v5114, %v5154
    %v5156 = vpop.f32.mrb[0].mxu0
    %v5157 = vadd.f32 %v5116, %v5156
    %v5158 = vpop.f32.mrb[0].mxu0
    %v5159 = vpop.f32.mrb[0].mxu0
    %5160 = vdwg.mxu0
    %5161 = vmatprep.subr.bf16.mxu0 %v2791
    %5162 = vmatpush1.bf16.msra.mxu0 %v2790
    %5163 = vmatprep.subr.bf16.mxu0 %v2799
    %5164 = vmatpush1.bf16.msra.mxu0 %v2798
    %5165 = vmatprep.subr.bf16.mxu0 %v2807
    %5166 = vmatpush1.bf16.msra.mxu0 %v2806
    %5167 = vmatprep.subr.bf16.mxu0 %v2815
    %5168 = vmatpush1.bf16.msra.mxu0 %v2814
    %5169 = vmatprep.subr.bf16.mxu0 %v2823
    %5170 = vmatpush1.bf16.msra.mxu0 %v2822
    %5171 = vmatprep.subr.bf16.mxu0 %v2831
    %5172 = vmatpush1.bf16.msra.mxu0 %v2830
    %5173 = vmatprep.subr.bf16.mxu0 %v2839
    %5174 = vmatpush1.bf16.msra.mxu0 %v2838
    %5175 = vmatprep.subr.bf16.mxu0 %v2847
    %5176 = vmatpush1.bf16.msra.mxu0 %v2846
    %5177 = vmatprep.subr.bf16.mxu0 %v2855
    %5178 = vmatpush1.bf16.msra.mxu0 %v2854
    %5179 = vmatprep.subr.bf16.mxu0 %v2863
    %5180 = vmatpush1.bf16.msra.mxu0 %v2862
    %5181 = vmatprep.subr.bf16.mxu0 %v2871
    %5182 = vmatpush1.bf16.msra.mxu0 %v2870
    %5183 = vmatprep.subr.bf16.mxu0 %v2879
    %5184 = vmatpush1.bf16.msra.mxu0 %v2878
    %5185 = vmatprep.subr.bf16.mxu0 %v2887
    %5186 = vmatpush1.bf16.msra.mxu0 %v2886
    %5187 = vmatprep.subr.bf16.mxu0 %v2895
    %5188 = vmatpush1.bf16.msra.mxu0 %v2894
    %5189 = vmatprep.subr.bf16.mxu0 %v2903
    %5190 = vmatpush1.bf16.msra.mxu0 %v2902
    %5191 = vmatprep.subr.bf16.mxu0 %v2911
    %5192 = vmatpush1.bf16.msra.mxu0 %v2910
    %5193 = vmatprep.mubr.bf16.mxu0 %v4832
    %5194 = vmatmul.mubr.bf16.gmra.mrb[0].mxu0 %v4831
    %v5195 = vpop.f32.mrb[0].mxu0
    %v5196 = vadd.f32 %v4950, %v5195
    %v5197 = vpop.f32.mrb[0].mxu0
    %v5198 = vadd.f32 %v4952, %v5197
    %v5199 = vpop.f32.mrb[0].mxu0
    %v5200 = vpop.f32.mrb[0].mxu0
    %5201 = vdwg.mxu0
    %5202 = vmatprep.subr.bf16.mxu0 %v2919
    %5203 = vmatpush1.bf16.msra.mxu0 %v2918
    %5204 = vmatprep.subr.bf16.mxu0 %v2927
    %5205 = vmatpush1.bf16.msra.mxu0 %v2926
    %5206 = vmatprep.subr.bf16.mxu0 %v2935
    %5207 = vmatpush1.bf16.msra.mxu0 %v2934
    %5208 = vmatprep.subr.bf16.mxu0 %v2943
    %5209 = vmatpush1.bf16.msra.mxu0 %v2942
    %5210 = vmatprep.subr.bf16.mxu0 %v2951
    %5211 = vmatpush1.bf16.msra.mxu0 %v2950
    %5212 = vmatprep.subr.bf16.mxu0 %v2959
    %5213 = vmatpush1.bf16.msra.mxu0 %v2958
    %5214 = vmatprep.subr.bf16.mxu0 %v2967
    %5215 = vmatpush1.bf16.msra.mxu0 %v2966
    %5216 = vmatprep.subr.bf16.mxu0 %v2975
    %5217 = vmatpush1.bf16.msra.mxu0 %v2974
    %5218 = vmatprep.subr.bf16.mxu0 0
    %5219 = vmatpush1.bf16.msra.mxu0 0
    %5220 = vmatprep.subr.bf16.mxu0 0
    %5221 = vmatpush1.bf16.msra.mxu0 0
    %5222 = vmatprep.subr.bf16.mxu0 0
    %5223 = vmatpush1.bf16.msra.mxu0 0
    %5224 = vmatprep.subr.bf16.mxu0 0
    %5225 = vmatpush1.bf16.msra.mxu0 0
    %5226 = vmatprep.subr.bf16.mxu0 0
    %5227 = vmatpush1.bf16.msra.mxu0 0
    %5228 = vmatprep.subr.bf16.mxu0 0
    %5229 = vmatpush1.bf16.msra.mxu0 0
    %5230 = vmatprep.subr.bf16.mxu0 0
    %5231 = vmatpush1.bf16.msra.mxu0 0
    %5232 = vmatprep.subr.bf16.mxu0 0
    %5233 = vmatpush1.bf16.msra.mxu0 0
    %5234 = vmatprep.mubr.bf16.mxu0 0
    %5235 = vmatmul.mubr.bf16.gmra.mrb[0].mxu0 %v4830
    %v5236 = vpop.f32.mrb[0].mxu0
    %v5237 = vadd.f32 %v5196, %v5236
    %v5238 = vpop.f32.mrb[0].mxu0
    %v5239 = vadd.f32 %v5198, %v5238
    %v5240 = vpop.f32.mrb[0].mxu0
    %v5241 = vpop.f32.mrb[0].mxu0
    %5242 = vdwg.mxu0
    %5243 = vmatprep.subr.bf16.mxu0 %v2793
    %5244 = vmatpush1.bf16.msra.mxu0 %v2792
    %5245 = vmatprep.subr.bf16.mxu0 %v2801
    %5246 = vmatpush1.bf16.msra.mxu0 %v2800
    %5247 = vmatprep.subr.bf16.mxu0 %v2809
    %5248 = vmatpush1.bf16.msra.mxu0 %v2808
    %5249 = vmatprep.subr.bf16.mxu0 %v2817
    %5250 = vmatpush1.bf16.msra.mxu0 %v2816
    %5251 = vmatprep.subr.bf16.mxu0 %v2825
    %5252 = vmatpush1.bf16.msra.mxu0 %v2824
    %5253 = vmatprep.subr.bf16.mxu0 %v2833
    %5254 = vmatpush1.bf16.msra.mxu0 %v2832
    %5255 = vmatprep.subr.bf16.mxu0 %v2841
    %5256 = vmatpush1.bf16.msra.mxu0 %v2840
    %5257 = vmatprep.subr.bf16.mxu0 %v2849
    %5258 = vmatpush1.bf16.msra.mxu0 %v2848
    %5259 = vmatprep.subr.bf16.mxu0 %v2857
    %5260 = vmatpush1.bf16.msra.mxu0 %v2856
    %5261 = vmatprep.subr.bf16.mxu0 %v2865
    %5262 = vmatpush1.bf16.msra.mxu0 %v2864
    %5263 = vmatprep.subr.bf16.mxu0 %v2873
    %5264 = vmatpush1.bf16.msra.mxu0 %v2872
    %5265 = vmatprep.subr.bf16.mxu0 %v2881
    %5266 = vmatpush1.bf16.msra.mxu0 %v2880
    %5267 = vmatprep.subr.bf16.mxu0 %v2889
    %5268 = vmatpush1.bf16.msra.mxu0 %v2888
    %5269 = vmatprep.subr.bf16.mxu0 %v2897
    %5270 = vmatpush1.bf16.msra.mxu0 %v2896
    %5271 = vmatprep.subr.bf16.mxu0 %v2905
    %5272 = vmatpush1.bf16.msra.mxu0 %v2904
    %5273 = vmatprep.subr.bf16.mxu0 %v2913
    %5274 = vmatpush1.bf16.msra.mxu0 %v2912
    %5275 = vmatprep.mubr.bf16.mxu0 %v4832
    %5276 = vmatmul.mubr.bf16.gmra.mrb[0].mxu0 %v4831
    %v5277 = vpop.f32.mrb[0].mxu0
    %v5278 = vadd.f32 %v4991, %v5277
    %v5279 = vpop.f32.mrb[0].mxu0
    %v5280 = vadd.f32 %v4993, %v5279
    %v5281 = vpop.f32.mrb[0].mxu0
    %v5282 = vpop.f32.mrb[0].mxu0
    %5283 = vdwg.mxu0
    %5284 = vmatprep.subr.bf16.mxu0 %v2921
    %5285 = vmatpush1.bf16.msra.mxu0 %v2920
    %5286 = vmatprep.subr.bf16.mxu0 %v2929
    %5287 = vmatpush1.bf16.msra.mxu0 %v2928
    %5288 = vmatprep.subr.bf16.mxu0 %v2937
    %5289 = vmatpush1.bf16.msra.mxu0 %v2936
    %5290 = vmatprep.subr.bf16.mxu0 %v2945
    %5291 = vmatpush1.bf16.msra.mxu0 %v2944
    %5292 = vmatprep.subr.bf16.mxu0 %v2953
    %5293 = vmatpush1.bf16.msra.mxu0 %v2952
    %5294 = vmatprep.subr.bf16.mxu0 %v2961
    %5295 = vmatpush1.bf16.msra.mxu0 %v2960
    %5296 = vmatprep.subr.bf16.mxu0 %v2969
    %5297 = vmatpush1.bf16.msra.mxu0 %v2968
    %5298 = vmatprep.subr.bf16.mxu0 %v2977
    %5299 = vmatpush1.bf16.msra.mxu0 %v2976
    %5300 = vmatprep.subr.bf16.mxu0 0
    %5301 = vmatpush1.bf16.msra.mxu0 0
    %5302 = vmatprep.subr.bf16.mxu0 0
    %5303 = vmatpush1.bf16.msra.mxu0 0
    %5304 = vmatprep.subr.bf16.mxu0 0
    %5305 = vmatpush1.bf16.msra.mxu0 0
    %5306 = vmatprep.subr.bf16.mxu0 0
    %5307 = vmatpush1.bf16.msra.mxu0 0
    %5308 = vmatprep.subr.bf16.mxu0 0
    %5309 = vmatpush1.bf16.msra.mxu0 0
    %5310 = vmatprep.subr.bf16.mxu0 0
    %5311 = vmatpush1.bf16.msra.mxu0 0
    %5312 = vmatprep.subr.bf16.mxu0 0
    %5313 = vmatpush1.bf16.msra.mxu0 0
    %5314 = vmatprep.subr.bf16.mxu0 0
    %5315 = vmatpush1.bf16.msra.mxu0 0
    %5316 = vmatprep.mubr.bf16.mxu0 0
    %5317 = vmatmul.mubr.bf16.gmra.mrb[0].mxu0 %v4830
    %v5318 = vpop.f32.mrb[0].mxu0
    %v5319 = vadd.f32 %v5278, %v5318
    %v5320 = vpop.f32.mrb[0].mxu0
    %v5321 = vadd.f32 %v5280, %v5320
    %v5322 = vpop.f32.mrb[0].mxu0
    %v5323 = vpop.f32.mrb[0].mxu0
    %5324 = vdwg.mxu0
    %v5325 = vadd.f32 %v5073, %v3502
    %v5326 = vadd.f32 %v5075, %v3506
    %v5327 = vadd.f32 %v5155, %v3510
    %v5328 = vadd.f32 %v5157, %v3514
    %v5329 = vadd.f32 %v5237, %v3518
    %v5330 = vadd.f32 %v5239, %v3522
    %v5331 = vadd.f32 %v5319, %v3526
    %v5332 = vadd.f32 %v5321, %v3530
    %v5333 = vxor.u32 %v5325, 2147483648
    %v5334 = vxor.u32 %v5326, 2147483648
    %v5335 = vmul.f32 %v5333, 1.442695
    %v5336 = vpow.pop %v5335
    %v5337 = vmul.f32 %v5334, 1.442695
    %v5338 = vpow.pop %v5337
    %v5339 = vadd.f32 %v5336, 1.0
    %v5340 = vadd.f32 %v5338, 1.0
    %v5341 = vrcp.pop %v5339
    %v5342 = vmul.f32 1.0, %v5341
    %v5343 = vrcp.pop %v5340
    %v5344 = vmul.f32 1.0, %v5343
    %v5345 = vxor.u32 %v5327, 2147483648
    %v5346 = vxor.u32 %v5328, 2147483648
    %v5347 = vmul.f32 %v5345, 1.442695
    %v5348 = vpow.pop %v5347
    %v5349 = vmul.f32 %v5346, 1.442695
    %v5350 = vpow.pop %v5349
    %v5351 = vadd.f32 %v5348, 1.0
    %v5352 = vadd.f32 %v5350, 1.0
    %v5353 = vrcp.pop %v5351
    %v5354 = vmul.f32 1.0, %v5353
    %v5355 = vrcp.pop %v5352
    %v5356 = vmul.f32 1.0, %v5355
    %v5357 = vtanh.pop %v5329
    %v5358 = vtanh.pop %v5330
    %v5359 = vxor.u32 %v5331, 2147483648
    %v5360 = vxor.u32 %v5332, 2147483648
    %v5361 = vmul.f32 %v5359, 1.442695
    %v5362 = vpow.pop %v5361
    %v5363 = vmul.f32 %v5360, 1.442695
    %v5364 = vpow.pop %v5363
    %v5365 = vadd.f32 %v5362, 1.0
    %v5366 = vadd.f32 %v5364, 1.0
    %v5367 = vrcp.pop %v5365
    %v5368 = vmul.f32 1.0, %v5367
    %v5369 = vrcp.pop %v5366
    %v5370 = vmul.f32 1.0, %v5369
    %v5371 = vmul.f32 %v5354, %v4599
    %v5372 = vmul.f32 %v5356, %v4600
    %v5373 = vmul.f32 %v5342, %v5357
    %v5374 = vmul.f32 %v5344, %v5358
    %v5375 = vadd.f32 %v5371, %v5373
    %v5376 = vadd.f32 %v5372, %v5374
    %v5377 = vtanh.pop %v5375
    %v5378 = vtanh.pop %v5376
    %v5379 = vmul.f32 %v5368, %v5377
    %v5380 = vmul.f32 %v5370, %v5378
    %5381 = vst [vmem:[#allocation2] sm:$0xff] %v5379
    %5382 = vst [vmem:[#allocation2 + $0x8] sm:$0xff] %v5380
    %5383 = vst [vmem:[#allocation3] sm:$0xff] %v5375
    %5384 = vst [vmem:[#allocation3 + $0x8] sm:$0xff] %v5376
    %v5385 = vpack.c.bf16 %v5379, %v5379
    %v5386 = vpack.c.bf16 %v5380, %v5380
    %5387 = vmatprep.subr.bf16.mxu0 0
    %5388 = vmatpush1.bf16.msra.mxu0 %v3671
    %5389 = vmatprep.subr.bf16.mxu0 0
    %5390 = vmatpush1.bf16.msra.mxu0 %v3672
    %5391 = vmatprep.subr.bf16.mxu0 0
    %5392 = vmatpush1.bf16.msra.mxu0 %v3673
    %5393 = vmatprep.subr.bf16.mxu0 0
    %5394 = vmatpush1.bf16.msra.mxu0 %v3674
    %5395 = vmatprep.subr.bf16.mxu0 0
    %5396 = vmatpush1.bf16.msra.mxu0 %v3675
    %5397 = vmatprep.subr.bf16.mxu0 0
    %5398 = vmatpush1.bf16.msra.mxu0 %v3676
    %5399 = vmatprep.subr.bf16.mxu0 0
    %5400 = vmatpush1.bf16.msra.mxu0 %v3677
    %5401 = vmatprep.subr.bf16.mxu0 0
    %5402 = vmatpush1.bf16.msra.mxu0 %v3678
    %5403 = vmatprep.subr.bf16.mxu0 0
    %5404 = vmatpush1.bf16.msra.mxu0 %v3679
    %5405 = vmatprep.subr.bf16.mxu0 0
    %5406 = vmatpush1.bf16.msra.mxu0 %v3680
    %5407 = vmatprep.subr.bf16.mxu0 0
    %5408 = vmatpush1.bf16.msra.mxu0 %v3681
    %5409 = vmatprep.subr.bf16.mxu0 0
    %5410 = vmatpush1.bf16.msra.mxu0 %v3682
    %5411 = vmatprep.subr.bf16.mxu0 0
    %5412 = vmatpush1.bf16.msra.mxu0 %v3683
    %5413 = vmatprep.subr.bf16.mxu0 0
    %5414 = vmatpush1.bf16.msra.mxu0 %v3684
    %5415 = vmatprep.subr.bf16.mxu0 0
    %5416 = vmatpush1.bf16.msra.mxu0 %v3685
    %5417 = vmatprep.subr.bf16.mxu0 0
    %5418 = vmatpush1.bf16.msra.mxu0 %v3686
    %5419 = vmatprep.mubr.bf16.mxu0 %v5386
    %5420 = vmatmul.mubr.bf16.gmra.mrb[0].mxu0 %v5385
    %v5421 = vpop.f32.mrb[0].mxu0
    %v5422 = vadd.f32 %v3605, %v5421
    %v5423 = vpop.f32.mrb[0].mxu0
    %v5424 = vpop.f32.mrb[0].mxu0
    %v5425 = vpop.f32.mrb[0].mxu0
    %5426 = vdwg.mxu0
    %5427 = vmax.xlane.f32.xlu0 %v5422
    %v5428 = vpop.xlane.xlu0 %5427
    %v5429 = vsub.f32 %v5422, %v5428
    %v5430 = vmul.f32 %v5429, 1.442695
    %v5431 = vpow.pop %v5430
    %5432 = vadd.xlane.f32.xlu0 %v5431
    %v5433 = vpop.xlane.xlu0 %5432
    %v5434 = vlog2.pop %v5433
    %v5435 = vmul.f32 %v5434, 0.6931472
    %v5436 = vsub.f32 %v5429, %v5435
    %s5437 = scalar_lea.vmem [#allocation4], 24
    %5438 = vst [vmem:[%s5437] sm:$0xff] %v5436
    %v5439 = vld [vmem:[#allocation2] sm:$0xff]
    %v5440 = vld [vmem:[#allocation2 + $0x8] sm:$0xff]
    %v5441 = vld [vmem:[#allocation3] sm:$0xff]
    %v5442 = vld [vmem:[#allocation3 + $0x8] sm:$0xff]
    %v5443 = vpack.c.bf16 %v5439, %v5439
    %v5444 = vpack.c.bf16 %v5440, %v5440
    %5445 = vmatprep.subr.bf16.mxu0 %v657
    %5446 = vmatpush1.bf16.msra.mxu0 %v656
    %5447 = vmatprep.subr.bf16.mxu0 %v659
    %5448 = vmatpush1.bf16.msra.mxu0 %v658
    %5449 = vmatprep.subr.bf16.mxu0 %v661
    %5450 = vmatpush1.bf16.msra.mxu0 %v660
    %5451 = vmatprep.subr.bf16.mxu0 %v663
    %5452 = vmatpush1.bf16.msra.mxu0 %v662
    %5453 = vmatprep.subr.bf16.mxu0 %v665
    %5454 = vmatpush1.bf16.msra.mxu0 %v664
    %5455 = vmatprep.subr.bf16.mxu0 %v667
    %5456 = vmatpush1.bf16.msra.mxu0 %v666
    %5457 = vmatprep.subr.bf16.mxu0 %v669
    %5458 = vmatpush1.bf16.msra.mxu0 %v668
    %5459 = vmatprep.subr.bf16.mxu0 %v671
    %5460 = vmatpush1.bf16.msra.mxu0 %v670
    %5461 = vmatprep.subr.bf16.mxu0 %v673
    %5462 = vmatpush1.bf16.msra.mxu0 %v672
    %5463 = vmatprep.subr.bf16.mxu0 %v675
    %5464 = vmatpush1.bf16.msra.mxu0 %v674
    %5465 = vmatprep.subr.bf16.mxu0 %v677
    %5466 = vmatpush1.bf16.msra.mxu0 %v676
    %5467 = vmatprep.subr.bf16.mxu0 %v679
    %5468 = vmatpush1.bf16.msra.mxu0 %v678
    %5469 = vmatprep.subr.bf16.mxu0 %v681
    %5470 = vmatpush1.bf16.msra.mxu0 %v680
    %5471 = vmatprep.subr.bf16.mxu0 %v683
    %5472 = vmatpush1.bf16.msra.mxu0 %v682
    %5473 = vmatprep.subr.bf16.mxu0 %v685
    %5474 = vmatpush1.bf16.msra.mxu0 %v684
    %5475 = vmatprep.subr.bf16.mxu0 %v687
    %5476 = vmatpush1.bf16.msra.mxu0 %v686
    %5477 = vmatprep.mubr.bf16.mxu0 %v5444
    %5478 = vmatmul.mubr.bf16.gmra.mrb[0].mxu0 %v5443
    %v5479 = vpop.f32.mrb[0].mxu0
    %v5480 = vadd.f32 0.0, %v5479
    %v5481 = vpop.f32.mrb[0].mxu0
    %v5482 = vadd.f32 0.0, %v5481
    %v5483 = vpop.f32.mrb[0].mxu0
    %v5484 = vpop.f32.mrb[0].mxu0
    %5485 = vdwg.mxu0
    %v5486 = vpack.c.bf16 %v5480, %v5480
    %v5487 = vpack.c.bf16 %v5482, %v5482
    %5488 = vmatprep.subr.bf16.mxu0 0
    %5489 = vmatpush1.bf16.msra.mxu0 %v827
    %5490 = vmatprep.subr.bf16.mxu0 0
    %5491 = vmatpush1.bf16.msra.mxu0 %v828
    %5492 = vmatprep.subr.bf16.mxu0 0
    %5493 = vmatpush1.bf16.msra.mxu0 %v829
    %5494 = vmatprep.subr.bf16.mxu0 0
    %5495 = vmatpush1.bf16.msra.mxu0 %v830
    %5496 = vmatprep.subr.bf16.mxu0 0
    %5497 = vmatpush1.bf16.msra.mxu0 %v831
    %5498 = vmatprep.subr.bf16.mxu0 0
    %5499 = vmatpush1.bf16.msra.mxu0 %v832
    %5500 = vmatprep.subr.bf16.mxu0 0
    %5501 = vmatpush1.bf16.msra.mxu0 %v833
    %5502 = vmatprep.subr.bf16.mxu0 0
    %5503 = vmatpush1.bf16.msra.mxu0 %v834
    %5504 = vmatprep.subr.bf16.mxu0 0
    %5505 = vmatpush1.bf16.msra.mxu0 %v835
    %5506 = vmatprep.subr.bf16.mxu0 0
    %5507 = vmatpush1.bf16.msra.mxu0 %v836
    %5508 = vmatprep.subr.bf16.mxu0 0
    %5509 = vmatpush1.bf16.msra.mxu0 %v837
    %5510 = vmatprep.subr.bf16.mxu0 0
    %5511 = vmatpush1.bf16.msra.mxu0 %v838
    %5512 = vmatprep.subr.bf16.mxu0 0
    %5513 = vmatpush1.bf16.msra.mxu0 %v839
    %5514 = vmatprep.subr.bf16.mxu0 0
    %5515 = vmatpush1.bf16.msra.mxu0 %v840
    %5516 = vmatprep.subr.bf16.mxu0 0
    %5517 = vmatpush1.bf16.msra.mxu0 %v841
    %5518 = vmatprep.subr.bf16.mxu0 0
    %5519 = vmatpush1.bf16.msra.mxu0 %v842
    %5520 = vmatprep.mubr.bf16.mxu0 %v5487
    %5521 = vmatmul.mubr.bf16.gmra.mrb[0].mxu0 %v5486
    %v5522 = vpop.f32.mrb[0].mxu0
    %v5523 = vadd.f32 0.0, %v5522
    %v5524 = vpop.f32.mrb[0].mxu0
    %v5525 = vpop.f32.mrb[0].mxu0
    %v5526 = vpop.f32.mrb[0].mxu0
    %5527 = vdwg.mxu0
    %v5528 = vsel %vm553, %v5523, -1e+30
    %v5529 = vsel %vm900, %v5528, -inf
    %5530 = vmax.xlane.f32.xlu0 %v5529
    %v5531 = vpop.xlane.xlu0 %5530
    %v5532 = vsub.f32 %v5528, %v5531
    %v5533 = vmul.f32 %v5532, 1.442695
    %v5534 = vpow.pop %v5533
    %v5535 = vsel %vm900, %v5534, 0.0
    %5536 = vadd.xlane.f32.xlu0 %v5535
    %v5537 = vpop.xlane.xlu0 %5536
    %v5538 = vrcp.pop %v5537
    %v5539 = vmul.f32 %v5534, %v5538
    %v5540 = vpack.c.bf16 %v5539, %v5539
    %v5542 = vsel %vm900, %v5540, 0
    %5544 = vmatprep.subr.bf16.mxu0 %v938
    %5545 = vmatpush1.bf16.msra.mxu0 %v937
    %5546 = vmatprep.subr.bf16.mxu0 %v940
    %5547 = vmatpush1.bf16.msra.mxu0 %v939
    %5548 = vmatprep.subr.bf16.mxu0 %v942
    %5549 = vmatpush1.bf16.msra.mxu0 %v941
    %5550 = vmatprep.subr.bf16.mxu0 %v944
    %5551 = vmatpush1.bf16.msra.mxu0 %v943
    %5552 = vmatprep.subr.bf16.mxu0 0
    %5553 = vmatpush1.bf16.msra.mxu0 0
    %5554 = vmatprep.subr.bf16.mxu0 0
    %5555 = vmatpush1.bf16.msra.mxu0 0
    %5556 = vmatprep.subr.bf16.mxu0 0
    %5557 = vmatpush1.bf16.msra.mxu0 0
    %5558 = vmatprep.subr.bf16.mxu0 0
    %5559 = vmatpush1.bf16.msra.mxu0 0
    %5560 = vmatprep.subr.bf16.mxu0 0
    %5561 = vmatpush1.bf16.msra.mxu0 0
    %5562 = vmatprep.subr.bf16.mxu0 0
    %5563 = vmatpush1.bf16.msra.mxu0 0
    %5564 = vmatprep.subr.bf16.mxu0 0
    %5565 = vmatpush1.bf16.msra.mxu0 0
    %5566 = vmatprep.subr.bf16.mxu0 0
    %5567 = vmatpush1.bf16.msra.mxu0 0
    %5568 = vmatprep.subr.bf16.mxu0 0
    %5569 = vmatpush1.bf16.msra.mxu0 0
    %5570 = vmatprep.subr.bf16.mxu0 0
    %5571 = vmatpush1.bf16.msra.mxu0 0
    %5572 = vmatprep.subr.bf16.mxu0 0
    %5573 = vmatpush1.bf16.msra.mxu0 0
    %5574 = vmatprep.subr.bf16.mxu0 0
    %5575 = vmatpush1.bf16.msra.mxu0 0
    %5576 = vmatprep.mubr.bf16.mxu0 0
    %5577 = vmatmul.mubr.bf16.gmra.mrb[0].mxu0 %v5542
    %v5578 = vpop.f32.mrb[0].mxu0
    %v5579 = vadd.f32 0.0, %v5578
    %v5580 = vpop.f32.mrb[0].mxu0
    %v5581 = vadd.f32 0.0, %v5580
    %v5582 = vpop.f32.mrb[0].mxu0
    %v5583 = vpop.f32.mrb[0].mxu0
    %5584 = vdwg.mxu0
    %v5585 = vpack.c.bf16 %v5579, %v5579
    %v5586 = vpack.c.bf16 %v5581, %v5581
    %5587 = vmatprep.subr.bf16.mxu0 %v1096
    %5588 = vmatpush1.bf16.msra.mxu0 %v1095
    %5589 = vmatprep.subr.bf16.mxu0 %v1098
    %5590 = vmatpush1.bf16.msra.mxu0 %v1097
    %5591 = vmatprep.subr.bf16.mxu0 %v1100
    %5592 = vmatpush1.bf16.msra.mxu0 %v1099
    %5593 = vmatprep.subr.bf16.mxu0 %v1102
    %5594 = vmatpush1.bf16.msra.mxu0 %v1101
    %5595 = vmatprep.subr.bf16.mxu0 %v1104
    %5596 = vmatpush1.bf16.msra.mxu0 %v1103
    %5597 = vmatprep.subr.bf16.mxu0 %v1106
    %5598 = vmatpush1.bf16.msra.mxu0 %v1105
    %5599 = vmatprep.subr.bf16.mxu0 %v1108
    %5600 = vmatpush1.bf16.msra.mxu0 %v1107
    %5601 = vmatprep.subr.bf16.mxu0 %v1110
    %5602 = vmatpush1.bf16.msra.mxu0 %v1109
    %5603 = vmatprep.subr.bf16.mxu0 %v1112
    %5604 = vmatpush1.bf16.msra.mxu0 %v1111
    %5605 = vmatprep.subr.bf16.mxu0 %v1114
    %5606 = vmatpush1.bf16.msra.mxu0 %v1113
    %5607 = vmatprep.subr.bf16.mxu0 %v1116
    %5608 = vmatpush1.bf16.msra.mxu0 %v1115
    %5609 = vmatprep.subr.bf16.mxu0 %v1118
    %5610 = vmatpush1.bf16.msra.mxu0 %v1117
    %5611 = vmatprep.subr.bf16.mxu0 %v1120
    %5612 = vmatpush1.bf16.msra.mxu0 %v1119
    %5613 = vmatprep.subr.bf16.mxu0 %v1122
    %5614 = vmatpush1.bf16.msra.mxu0 %v1121
    %5615 = vmatprep.subr.bf16.mxu0 %v1124
    %5616 = vmatpush1.bf16.msra.mxu0 %v1123
    %5617 = vmatprep.subr.bf16.mxu0 %v1126
    %5618 = vmatpush1.bf16.msra.mxu0 %v1125
    %5619 = vmatprep.mubr.bf16.mxu0 %v5444
    %5620 = vmatmul.mubr.bf16.gmra.mrb[0].mxu0 %v5443
    %v5621 = vpop.f32.mrb[0].mxu0
    %v5622 = vadd.f32 0.0, %v5621
    %v5623 = vpop.f32.mrb[0].mxu0
    %v5624 = vadd.f32 0.0, %v5623
    %v5625 = vpop.f32.mrb[0].mxu0
    %v5626 = vpop.f32.mrb[0].mxu0
    %5627 = vdwg.mxu0
    %5628 = vmatprep.subr.bf16.mxu0 %v1297
    %5629 = vmatpush1.bf16.msra.mxu0 %v1296
    %5630 = vmatprep.subr.bf16.mxu0 %v1299
    %5631 = vmatpush1.bf16.msra.mxu0 %v1298
    %5632 = vmatprep.subr.bf16.mxu0 %v1301
    %5633 = vmatpush1.bf16.msra.mxu0 %v1300
    %5634 = vmatprep.subr.bf16.mxu0 %v1303
    %5635 = vmatpush1.bf16.msra.mxu0 %v1302
    %5636 = vmatprep.subr.bf16.mxu0 %v1305
    %5637 = vmatpush1.bf16.msra.mxu0 %v1304
    %5638 = vmatprep.subr.bf16.mxu0 %v1307
    %5639 = vmatpush1.bf16.msra.mxu0 %v1306
    %5640 = vmatprep.subr.bf16.mxu0 %v1309
    %5641 = vmatpush1.bf16.msra.mxu0 %v1308
    %5642 = vmatprep.subr.bf16.mxu0 %v1311
    %5643 = vmatpush1.bf16.msra.mxu0 %v1310
    %5644 = vmatprep.subr.bf16.mxu0 %v1313
    %5645 = vmatpush1.bf16.msra.mxu0 %v1312
    %5646 = vmatprep.subr.bf16.mxu0 %v1315
    %5647 = vmatpush1.bf16.msra.mxu0 %v1314
    %5648 = vmatprep.subr.bf16.mxu0 %v1317
    %5649 = vmatpush1.bf16.msra.mxu0 %v1316
    %5650 = vmatprep.subr.bf16.mxu0 %v1319
    %5651 = vmatpush1.bf16.msra.mxu0 %v1318
    %5652 = vmatprep.subr.bf16.mxu0 %v1321
    %5653 = vmatpush1.bf16.msra.mxu0 %v1320
    %5654 = vmatprep.subr.bf16.mxu0 %v1323
    %5655 = vmatpush1.bf16.msra.mxu0 %v1322
    %5656 = vmatprep.subr.bf16.mxu0 %v1325
    %5657 = vmatpush1.bf16.msra.mxu0 %v1324
    %5658 = vmatprep.subr.bf16.mxu0 %v1327
    %5659 = vmatpush1.bf16.msra.mxu0 %v1326
    %5660 = vmatprep.mubr.bf16.mxu0 %v5586
    %5661 = vmatmul.mubr.bf16.gmra.mrb[0].mxu0 %v5585
    %v5662 = vpop.f32.mrb[0].mxu0
    %v5663 = vadd.f32 %v5622, %v5662
    %v5664 = vpop.f32.mrb[0].mxu0
    %v5665 = vadd.f32 %v5624, %v5664
    %v5666 = vpop.f32.mrb[0].mxu0
    %v5667 = vpop.f32.mrb[0].mxu0
    %5668 = vdwg.mxu0
    %v5669 = vtanh.pop %v5663
    %v5670 = vtanh.pop %v5665
    %s5671 = scalar_lea.vmem %s4, 12
    %v5672 = vld [vmem:[%s5671] sm:$0xf]
    %v5673 = vpack.c.bf16 %v5669, %v5669
    %v5674 = vpack.c.bf16 %v5670, %v5670
    %5675 = vmatprep.subr.bf16.mxu0 %v1791
    %5676 = vmatpush1.bf16.msra.mxu0 %v1790
    %5677 = vmatprep.subr.bf16.mxu0 %v1799
    %5678 = vmatpush1.bf16.msra.mxu0 %v1798
    %5679 = vmatprep.subr.bf16.mxu0 %v1807
    %5680 = vmatpush1.bf16.msra.mxu0 %v1806
    %5681 = vmatprep.subr.bf16.mxu0 %v1815
    %5682 = vmatpush1.bf16.msra.mxu0 %v1814
    %5683 = vmatprep.subr.bf16.mxu0 %v1823
    %5684 = vmatpush1.bf16.msra.mxu0 %v1822
    %5685 = vmatprep.subr.bf16.mxu0 %v1831
    %5686 = vmatpush1.bf16.msra.mxu0 %v1830
    %5687 = vmatprep.subr.bf16.mxu0 %v1839
    %5688 = vmatpush1.bf16.msra.mxu0 %v1838
    %5689 = vmatprep.subr.bf16.mxu0 %v1847
    %5690 = vmatpush1.bf16.msra.mxu0 %v1846
    %5691 = vmatprep.subr.bf16.mxu0 %v1855
    %5692 = vmatpush1.bf16.msra.mxu0 %v1854
    %5693 = vmatprep.subr.bf16.mxu0 %v1863
    %5694 = vmatpush1.bf16.msra.mxu0 %v1862
    %5695 = vmatprep.subr.bf16.mxu0 %v1871
    %5696 = vmatpush1.bf16.msra.mxu0 %v1870
    %5697 = vmatprep.subr.bf16.mxu0 %v1879
    %5698 = vmatpush1.bf16.msra.mxu0 %v1878
    %5699 = vmatprep.subr.bf16.mxu0 %v1887
    %5700 = vmatpush1.bf16.msra.mxu0 %v1886
    %5701 = vmatprep.subr.bf16.mxu0 %v1895
    %5702 = vmatpush1.bf16.msra.mxu0 %v1894
    %5703 = vmatprep.subr.bf16.mxu0 %v1903
    %5704 = vmatpush1.bf16.msra.mxu0 %v1902
    %5705 = vmatprep.subr.bf16.mxu0 %v1911
    %5706 = vmatpush1.bf16.msra.mxu0 %v1910
    %5707 = vmatprep.mubr.bf16.mxu0 %v5444
    %5708 = vmatmul.mubr.bf16.gmra.mrb[0].mxu0 %v5443
    %v5709 = vpop.f32.mrb[0].mxu0
    %v5710 = vadd.f32 0.0, %v5709
    %v5711 = vpop.f32.mrb[0].mxu0
    %v5712 = vadd.f32 0.0, %v5711
    %v5713 = vpop.f32.mrb[0].mxu0
    %v5714 = vpop.f32.mrb[0].mxu0
    %5715 = vdwg.mxu0
    %5716 = vmatprep.subr.bf16.mxu0 %v1793
    %5717 = vmatpush1.bf16.msra.mxu0 %v1792
    %5718 = vmatprep.subr.bf16.mxu0 %v1801
    %5719 = vmatpush1.bf16.msra.mxu0 %v1800
    %5720 = vmatprep.subr.bf16.mxu0 %v1809
    %5721 = vmatpush1.bf16.msra.mxu0 %v1808
    %5722 = vmatprep.subr.bf16.mxu0 %v1817
    %5723 = vmatpush1.bf16.msra.mxu0 %v1816
    %5724 = vmatprep.subr.bf16.mxu0 %v1825
    %5725 = vmatpush1.bf16.msra.mxu0 %v1824
    %5726 = vmatprep.subr.bf16.mxu0 %v1833
    %5727 = vmatpush1.bf16.msra.mxu0 %v1832
    %5728 = vmatprep.subr.bf16.mxu0 %v1841
    %5729 = vmatpush1.bf16.msra.mxu0 %v1840
    %5730 = vmatprep.subr.bf16.mxu0 %v1849
    %5731 = vmatpush1.bf16.msra.mxu0 %v1848
    %5732 = vmatprep.subr.bf16.mxu0 %v1857
    %5733 = vmatpush1.bf16.msra.mxu0 %v1856
    %5734 = vmatprep.subr.bf16.mxu0 %v1865
    %5735 = vmatpush1.bf16.msra.mxu0 %v1864
    %5736 = vmatprep.subr.bf16.mxu0 %v1873
    %5737 = vmatpush1.bf16.msra.mxu0 %v1872
    %5738 = vmatprep.subr.bf16.mxu0 %v1881
    %5739 = vmatpush1.bf16.msra.mxu0 %v1880
    %5740 = vmatprep.subr.bf16.mxu0 %v1889
    %5741 = vmatpush1.bf16.msra.mxu0 %v1888
    %5742 = vmatprep.subr.bf16.mxu0 %v1897
    %5743 = vmatpush1.bf16.msra.mxu0 %v1896
    %5744 = vmatprep.subr.bf16.mxu0 %v1905
    %5745 = vmatpush1.bf16.msra.mxu0 %v1904
    %5746 = vmatprep.subr.bf16.mxu0 %v1913
    %5747 = vmatpush1.bf16.msra.mxu0 %v1912
    %5748 = vmatprep.mubr.bf16.mxu0 %v5444
    %5749 = vmatmul.mubr.bf16.gmra.mrb[0].mxu0 %v5443
    %v5750 = vpop.f32.mrb[0].mxu0
    %v5751 = vadd.f32 0.0, %v5750
    %v5752 = vpop.f32.mrb[0].mxu0
    %v5753 = vadd.f32 0.0, %v5752
    %v5754 = vpop.f32.mrb[0].mxu0
    %v5755 = vpop.f32.mrb[0].mxu0
    %5756 = vdwg.mxu0
    %5757 = vmatprep.subr.bf16.mxu0 %v1795
    %5758 = vmatpush1.bf16.msra.mxu0 %v1794
    %5759 = vmatprep.subr.bf16.mxu0 %v1803
    %5760 = vmatpush1.bf16.msra.mxu0 %v1802
    %5761 = vmatprep.subr.bf16.mxu0 %v1811
    %5762 = vmatpush1.bf16.msra.mxu0 %v1810
    %5763 = vmatprep.subr.bf16.mxu0 %v1819
    %5764 = vmatpush1.bf16.msra.mxu0 %v1818
    %5765 = vmatprep.subr.bf16.mxu0 %v1827
    %5766 = vmatpush1.bf16.msra.mxu0 %v1826
    %5767 = vmatprep.subr.bf16.mxu0 %v1835
    %5768 = vmatpush1.bf16.msra.mxu0 %v1834
    %5769 = vmatprep.subr.bf16.mxu0 %v1843
    %5770 = vmatpush1.bf16.msra.mxu0 %v1842
    %5771 = vmatprep.subr.bf16.mxu0 %v1851
    %5772 = vmatpush1.bf16.msra.mxu0 %v1850
    %5773 = vmatprep.subr.bf16.mxu0 %v1859
    %5774 = vmatpush1.bf16.msra.mxu0 %v1858
    %5775 = vmatprep.subr.bf16.mxu0 %v1867
    %5776 = vmatpush1.bf16.msra.mxu0 %v1866
    %5777 = vmatprep.subr.bf16.mxu0 %v1875
    %5778 = vmatpush1.bf16.msra.mxu0 %v1874
    %5779 = vmatprep.subr.bf16.mxu0 %v1883
    %5780 = vmatpush1.bf16.msra.mxu0 %v1882
    %5781 = vmatprep.subr.bf16.mxu0 %v1891
    %5782 = vmatpush1.bf16.msra.mxu0 %v1890
    %5783 = vmatprep.subr.bf16.mxu0 %v1899
    %5784 = vmatpush1.bf16.msra.mxu0 %v1898
    %5785 = vmatprep.subr.bf16.mxu0 %v1907
    %5786 = vmatpush1.bf16.msra.mxu0 %v1906
    %5787 = vmatprep.subr.bf16.mxu0 %v1915
    %5788 = vmatpush1.bf16.msra.mxu0 %v1914
    %5789 = vmatprep.mubr.bf16.mxu0 %v5444
    %5790 = vmatmul.mubr.bf16.gmra.mrb[0].mxu0 %v5443
    %v5791 = vpop.f32.mrb[0].mxu0
    %v5792 = vadd.f32 0.0, %v5791
    %v5793 = vpop.f32.mrb[0].mxu0
    %v5794 = vadd.f32 0.0, %v5793
    %v5795 = vpop.f32.mrb[0].mxu0
    %v5796 = vpop.f32.mrb[0].mxu0
    %5797 = vdwg.mxu0
    %5798 = vmatprep.subr.bf16.mxu0 %v1797
    %5799 = vmatpush1.bf16.msra.mxu0 %v1796
    %5800 = vmatprep.subr.bf16.mxu0 %v1805
    %5801 = vmatpush1.bf16.msra.mxu0 %v1804
    %5802 = vmatprep.subr.bf16.mxu0 %v1813
    %5803 = vmatpush1.bf16.msra.mxu0 %v1812
    %5804 = vmatprep.subr.bf16.mxu0 %v1821
    %5805 = vmatpush1.bf16.msra.mxu0 %v1820
    %5806 = vmatprep.subr.bf16.mxu0 %v1829
    %5807 = vmatpush1.bf16.msra.mxu0 %v1828
    %5808 = vmatprep.subr.bf16.mxu0 %v1837
    %5809 = vmatpush1.bf16.msra.mxu0 %v1836
    %5810 = vmatprep.subr.bf16.mxu0 %v1845
    %5811 = vmatpush1.bf16.msra.mxu0 %v1844
    %5812 = vmatprep.subr.bf16.mxu0 %v1853
    %5813 = vmatpush1.bf16.msra.mxu0 %v1852
    %5814 = vmatprep.subr.bf16.mxu0 %v1861
    %5815 = vmatpush1.bf16.msra.mxu0 %v1860
    %5816 = vmatprep.subr.bf16.mxu0 %v1869
    %5817 = vmatpush1.bf16.msra.mxu0 %v1868
    %5818 = vmatprep.subr.bf16.mxu0 %v1877
    %5819 = vmatpush1.bf16.msra.mxu0 %v1876
    %5820 = vmatprep.subr.bf16.mxu0 %v1885
    %5821 = vmatpush1.bf16.msra.mxu0 %v1884
    %5822 = vmatprep.subr.bf16.mxu0 %v1893
    %5823 = vmatpush1.bf16.msra.mxu0 %v1892
    %5824 = vmatprep.subr.bf16.mxu0 %v1901
    %5825 = vmatpush1.bf16.msra.mxu0 %v1900
    %5826 = vmatprep.subr.bf16.mxu0 %v1909
    %5827 = vmatpush1.bf16.msra.mxu0 %v1908
    %5828 = vmatprep.subr.bf16.mxu0 %v1917
    %5829 = vmatpush1.bf16.msra.mxu0 %v1916
    %5830 = vmatprep.mubr.bf16.mxu0 %v5444
    %5831 = vmatmul.mubr.bf16.gmra.mrb[0].mxu0 %v5443
    %v5832 = vpop.f32.mrb[0].mxu0
    %v5833 = vadd.f32 0.0, %v5832
    %v5834 = vpop.f32.mrb[0].mxu0
    %v5835 = vadd.f32 0.0, %v5834
    %v5836 = vpop.f32.mrb[0].mxu0
    %v5837 = vpop.f32.mrb[0].mxu0
    %5838 = vdwg.mxu0
    %5839 = vmatprep.subr.bf16.mxu0 %v2787
    %5840 = vmatpush1.bf16.msra.mxu0 %v2786
    %5841 = vmatprep.subr.bf16.mxu0 %v2795
    %5842 = vmatpush1.bf16.msra.mxu0 %v2794
    %5843 = vmatprep.subr.bf16.mxu0 %v2803
    %5844 = vmatpush1.bf16.msra.mxu0 %v2802
    %5845 = vmatprep.subr.bf16.mxu0 %v2811
    %5846 = vmatpush1.bf16.msra.mxu0 %v2810
    %5847 = vmatprep.subr.bf16.mxu0 %v2819
    %5848 = vmatpush1.bf16.msra.mxu0 %v2818
    %5849 = vmatprep.subr.bf16.mxu0 %v2827
    %5850 = vmatpush1.bf16.msra.mxu0 %v2826
    %5851 = vmatprep.subr.bf16.mxu0 %v2835
    %5852 = vmatpush1.bf16.msra.mxu0 %v2834
    %5853 = vmatprep.subr.bf16.mxu0 %v2843
    %5854 = vmatpush1.bf16.msra.mxu0 %v2842
    %5855 = vmatprep.subr.bf16.mxu0 %v2851
    %5856 = vmatpush1.bf16.msra.mxu0 %v2850
    %5857 = vmatprep.subr.bf16.mxu0 %v2859
    %5858 = vmatpush1.bf16.msra.mxu0 %v2858
    %5859 = vmatprep.subr.bf16.mxu0 %v2867
    %5860 = vmatpush1.bf16.msra.mxu0 %v2866
    %5861 = vmatprep.subr.bf16.mxu0 %v2875
    %5862 = vmatpush1.bf16.msra.mxu0 %v2874
    %5863 = vmatprep.subr.bf16.mxu0 %v2883
    %5864 = vmatpush1.bf16.msra.mxu0 %v2882
    %5865 = vmatprep.subr.bf16.mxu0 %v2891
    %5866 = vmatpush1.bf16.msra.mxu0 %v2890
    %5867 = vmatprep.subr.bf16.mxu0 %v2899
    %5868 = vmatpush1.bf16.msra.mxu0 %v2898
    %5869 = vmatprep.subr.bf16.mxu0 %v2907
    %5870 = vmatpush1.bf16.msra.mxu0 %v2906
    %5871 = vmatprep.mubr.bf16.mxu0 %v5674
    %5872 = vmatmul.mubr.bf16.gmra.mrb[0].mxu0 %v5673
    %v5873 = vpop.f32.mrb[0].mxu0
    %v5874 = vadd.f32 %v5710, %v5873
    %v5875 = vpop.f32.mrb[0].mxu0
    %v5876 = vadd.f32 %v5712, %v5875
    %v5877 = vpop.f32.mrb[0].mxu0
    %v5878 = vpop.f32.mrb[0].mxu0
    %5879 = vdwg.mxu0
    %5880 = vmatprep.subr.bf16.mxu0 %v2915
    %5881 = vmatpush1.bf16.msra.mxu0 %v2914
    %5882 = vmatprep.subr.bf16.mxu0 %v2923
    %5883 = vmatpush1.bf16.msra.mxu0 %v2922
    %5884 = vmatprep.subr.bf16.mxu0 %v2931
    %5885 = vmatpush1.bf16.msra.mxu0 %v2930
    %5886 = vmatprep.subr.bf16.mxu0 %v2939
    %5887 = vmatpush1.bf16.msra.mxu0 %v2938
    %5888 = vmatprep.subr.bf16.mxu0 %v2947
    %5889 = vmatpush1.bf16.msra.mxu0 %v2946
    %5890 = vmatprep.subr.bf16.mxu0 %v2955
    %5891 = vmatpush1.bf16.msra.mxu0 %v2954
    %5892 = vmatprep.subr.bf16.mxu0 %v2963
    %5893 = vmatpush1.bf16.msra.mxu0 %v2962
    %5894 = vmatprep.subr.bf16.mxu0 %v2971
    %5895 = vmatpush1.bf16.msra.mxu0 %v2970
    %5896 = vmatprep.subr.bf16.mxu0 0
    %5897 = vmatpush1.bf16.msra.mxu0 0
    %5898 = vmatprep.subr.bf16.mxu0 0
    %5899 = vmatpush1.bf16.msra.mxu0 0
    %5900 = vmatprep.subr.bf16.mxu0 0
    %5901 = vmatpush1.bf16.msra.mxu0 0
    %5902 = vmatprep.subr.bf16.mxu0 0
    %5903 = vmatpush1.bf16.msra.mxu0 0
    %5904 = vmatprep.subr.bf16.mxu0 0
    %5905 = vmatpush1.bf16.msra.mxu0 0
    %5906 = vmatprep.subr.bf16.mxu0 0
    %5907 = vmatpush1.bf16.msra.mxu0 0
    %5908 = vmatprep.subr.bf16.mxu0 0
    %5909 = vmatpush1.bf16.msra.mxu0 0
    %5910 = vmatprep.subr.bf16.mxu0 0
    %5911 = vmatpush1.bf16.msra.mxu0 0
    %5912 = vmatprep.mubr.bf16.mxu0 0
    %5913 = vmatmul.mubr.bf16.gmra.mrb[0].mxu0 %v5672
    %v5914 = vpop.f32.mrb[0].mxu0
    %v5915 = vadd.f32 %v5874, %v5914
    %v5916 = vpop.f32.mrb[0].mxu0
    %v5917 = vadd.f32 %v5876, %v5916
    %v5918 = vpop.f32.mrb[0].mxu0
    %v5919 = vpop.f32.mrb[0].mxu0
    %5920 = vdwg.mxu0
    %5921 = vmatprep.subr.bf16.mxu0 %v2789
    %5922 = vmatpush1.bf16.msra.mxu0 %v2788
    %5923 = vmatprep.subr.bf16.mxu0 %v2797
    %5924 = vmatpush1.bf16.msra.mxu0 %v2796
    %5925 = vmatprep.subr.bf16.mxu0 %v2805
    %5926 = vmatpush1.bf16.msra.mxu0 %v2804
    %5927 = vmatprep.subr.bf16.mxu0 %v2813
    %5928 = vmatpush1.bf16.msra.mxu0 %v2812
    %5929 = vmatprep.subr.bf16.mxu0 %v2821
    %5930 = vmatpush1.bf16.msra.mxu0 %v2820
    %5931 = vmatprep.subr.bf16.mxu0 %v2829
    %5932 = vmatpush1.bf16.msra.mxu0 %v2828
    %5933 = vmatprep.subr.bf16.mxu0 %v2837
    %5934 = vmatpush1.bf16.msra.mxu0 %v2836
    %5935 = vmatprep.subr.bf16.mxu0 %v2845
    %5936 = vmatpush1.bf16.msra.mxu0 %v2844
    %5937 = vmatprep.subr.bf16.mxu0 %v2853
    %5938 = vmatpush1.bf16.msra.mxu0 %v2852
    %5939 = vmatprep.subr.bf16.mxu0 %v2861
    %5940 = vmatpush1.bf16.msra.mxu0 %v2860
    %5941 = vmatprep.subr.bf16.mxu0 %v2869
    %5942 = vmatpush1.bf16.msra.mxu0 %v2868
    %5943 = vmatprep.subr.bf16.mxu0 %v2877
    %5944 = vmatpush1.bf16.msra.mxu0 %v2876
    %5945 = vmatprep.subr.bf16.mxu0 %v2885
    %5946 = vmatpush1.bf16.msra.mxu0 %v2884
    %5947 = vmatprep.subr.bf16.mxu0 %v2893
    %5948 = vmatpush1.bf16.msra.mxu0 %v2892
    %5949 = vmatprep.subr.bf16.mxu0 %v2901
    %5950 = vmatpush1.bf16.msra.mxu0 %v2900
    %5951 = vmatprep.subr.bf16.mxu0 %v2909
    %5952 = vmatpush1.bf16.msra.mxu0 %v2908
    %5953 = vmatprep.mubr.bf16.mxu0 %v5674
    %5954 = vmatmul.mubr.bf16.gmra.mrb[0].mxu0 %v5673
    %v5955 = vpop.f32.mrb[0].mxu0
    %v5956 = vadd.f32 %v5751, %v5955
    %v5957 = vpop.f32.mrb[0].mxu0
    %v5958 = vadd.f32 %v5753, %v5957
    %v5959 = vpop.f32.mrb[0].mxu0
    %v5960 = vpop.f32.mrb[0].mxu0
    %5961 = vdwg.mxu0
    %5962 = vmatprep.subr.bf16.mxu0 %v2917
    %5963 = vmatpush1.bf16.msra.mxu0 %v2916
    %5964 = vmatprep.subr.bf16.mxu0 %v2925
    %5965 = vmatpush1.bf16.msra.mxu0 %v2924
    %5966 = vmatprep.subr.bf16.mxu0 %v2933
    %5967 = vmatpush1.bf16.msra.mxu0 %v2932
    %5968 = vmatprep.subr.bf16.mxu0 %v2941
    %5969 = vmatpush1.bf16.msra.mxu0 %v2940
    %5970 = vmatprep.subr.bf16.mxu0 %v2949
    %5971 = vmatpush1.bf16.msra.mxu0 %v2948
    %5972 = vmatprep.subr.bf16.mxu0 %v2957
    %5973 = vmatpush1.bf16.msra.mxu0 %v2956
    %5974 = vmatprep.subr.bf16.mxu0 %v2965
    %5975 = vmatpush1.bf16.msra.mxu0 %v2964
    %5976 = vmatprep.subr.bf16.mxu0 %v2973
    %5977 = vmatpush1.bf16.msra.mxu0 %v2972
    %5978 = vmatprep.subr.bf16.mxu0 0
    %5979 = vmatpush1.bf16.msra.mxu0 0
    %5980 = vmatprep.subr.bf16.mxu0 0
    %5981 = vmatpush1.bf16.msra.mxu0 0
    %5982 = vmatprep.subr.bf16.mxu0 0
    %5983 = vmatpush1.bf16.msra.mxu0 0
    %5984 = vmatprep.subr.bf16.mxu0 0
    %5985 = vmatpush1.bf16.msra.mxu0 0
    %5986 = vmatprep.subr.bf16.mxu0 0
    %5987 = vmatpush1.bf16.msra.mxu0 0
    %5988 = vmatprep.subr.bf16.mxu0 0
    %5989 = vmatpush1.bf16.msra.mxu0 0
    %5990 = vmatprep.subr.bf16.mxu0 0
    %5991 = vmatpush1.bf16.msra.mxu0 0
    %5992 = vmatprep.subr.bf16.mxu0 0
    %5993 = vmatpush1.bf16.msra.mxu0 0
    %5994 = vmatprep.mubr.bf16.mxu0 0
    %5995 = vmatmul.mubr.bf16.gmra.mrb[0].mxu0 %v5672
    %v5996 = vpop.f32.mrb[0].mxu0
    %v5997 = vadd.f32 %v5956, %v5996
    %v5998 = vpop.f32.mrb[0].mxu0
    %v5999 = vadd.f32 %v5958, %v5998
    %v6000 = vpop.f32.mrb[0].mxu0
    %v6001 = vpop.f32.mrb[0].mxu0
    %6002 = vdwg.mxu0
    %6003 = vmatprep.subr.bf16.mxu0 %v2791
    %6004 = vmatpush1.bf16.msra.mxu0 %v2790
    %6005 = vmatprep.subr.bf16.mxu0 %v2799
    %6006 = vmatpush1.bf16.msra.mxu0 %v2798
    %6007 = vmatprep.subr.bf16.mxu0 %v2807
    %6008 = vmatpush1.bf16.msra.mxu0 %v2806
    %6009 = vmatprep.subr.bf16.mxu0 %v2815
    %6010 = vmatpush1.bf16.msra.mxu0 %v2814
    %6011 = vmatprep.subr.bf16.mxu0 %v2823
    %6012 = vmatpush1.bf16.msra.mxu0 %v2822
    %6013 = vmatprep.subr.bf16.mxu0 %v2831
    %6014 = vmatpush1.bf16.msra.mxu0 %v2830
    %6015 = vmatprep.subr.bf16.mxu0 %v2839
    %6016 = vmatpush1.bf16.msra.mxu0 %v2838
    %6017 = vmatprep.subr.bf16.mxu0 %v2847
    %6018 = vmatpush1.bf16.msra.mxu0 %v2846
    %6019 = vmatprep.subr.bf16.mxu0 %v2855
    %6020 = vmatpush1.bf16.msra.mxu0 %v2854
    %6021 = vmatprep.subr.bf16.mxu0 %v2863
    %6022 = vmatpush1.bf16.msra.mxu0 %v2862
    %6023 = vmatprep.subr.bf16.mxu0 %v2871
    %6024 = vmatpush1.bf16.msra.mxu0 %v2870
    %6025 = vmatprep.subr.bf16.mxu0 %v2879
    %6026 = vmatpush1.bf16.msra.mxu0 %v2878
    %6027 = vmatprep.subr.bf16.mxu0 %v2887
    %6028 = vmatpush1.bf16.msra.mxu0 %v2886
    %6029 = vmatprep.subr.bf16.mxu0 %v2895
    %6030 = vmatpush1.bf16.msra.mxu0 %v2894
    %6031 = vmatprep.subr.bf16.mxu0 %v2903
    %6032 = vmatpush1.bf16.msra.mxu0 %v2902
    %6033 = vmatprep.subr.bf16.mxu0 %v2911
    %6034 = vmatpush1.bf16.msra.mxu0 %v2910
    %6035 = vmatprep.mubr.bf16.mxu0 %v5674
    %6036 = vmatmul.mubr.bf16.gmra.mrb[0].mxu0 %v5673
    %v6037 = vpop.f32.mrb[0].mxu0
    %v6038 = vadd.f32 %v5792, %v6037
    %v6039 = vpop.f32.mrb[0].mxu0
    %v6040 = vadd.f32 %v5794, %v6039
    %v6041 = vpop.f32.mrb[0].mxu0
    %v6042 = vpop.f32.mrb[0].mxu0
    %6043 = vdwg.mxu0
    %6044 = vmatprep.subr.bf16.mxu0 %v2919
    %6045 = vmatpush1.bf16.msra.mxu0 %v2918
    %6046 = vmatprep.subr.bf16.mxu0 %v2927
    %6047 = vmatpush1.bf16.msra.mxu0 %v2926
    %6048 = vmatprep.subr.bf16.mxu0 %v2935
    %6049 = vmatpush1.bf16.msra.mxu0 %v2934
    %6050 = vmatprep.subr.bf16.mxu0 %v2943
    %6051 = vmatpush1.bf16.msra.mxu0 %v2942
    %6052 = vmatprep.subr.bf16.mxu0 %v2951
    %6053 = vmatpush1.bf16.msra.mxu0 %v2950
    %6054 = vmatprep.subr.bf16.mxu0 %v2959
    %6055 = vmatpush1.bf16.msra.mxu0 %v2958
    %6056 = vmatprep.subr.bf16.mxu0 %v2967
    %6057 = vmatpush1.bf16.msra.mxu0 %v2966
    %6058 = vmatprep.subr.bf16.mxu0 %v2975
    %6059 = vmatpush1.bf16.msra.mxu0 %v2974
    %6060 = vmatprep.subr.bf16.mxu0 0
    %6061 = vmatpush1.bf16.msra.mxu0 0
    %6062 = vmatprep.subr.bf16.mxu0 0
    %6063 = vmatpush1.bf16.msra.mxu0 0
    %6064 = vmatprep.subr.bf16.mxu0 0
    %6065 = vmatpush1.bf16.msra.mxu0 0
    %6066 = vmatprep.subr.bf16.mxu0 0
    %6067 = vmatpush1.bf16.msra.mxu0 0
    %6068 = vmatprep.subr.bf16.mxu0 0
    %6069 = vmatpush1.bf16.msra.mxu0 0
    %6070 = vmatprep.subr.bf16.mxu0 0
    %6071 = vmatpush1.bf16.msra.mxu0 0
    %6072 = vmatprep.subr.bf16.mxu0 0
    %6073 = vmatpush1.bf16.msra.mxu0 0
    %6074 = vmatprep.subr.bf16.mxu0 0
    %6075 = vmatpush1.bf16.msra.mxu0 0
    %6076 = vmatprep.mubr.bf16.mxu0 0
    %6077 = vmatmul.mubr.bf16.gmra.mrb[0].mxu0 %v5672
    %v6078 = vpop.f32.mrb[0].mxu0
    %v6079 = vadd.f32 %v6038, %v6078
    %v6080 = vpop.f32.mrb[0].mxu0
    %v6081 = vadd.f32 %v6040, %v6080
    %v6082 = vpop.f32.mrb[0].mxu0
    %v6083 = vpop.f32.mrb[0].mxu0
    %6084 = vdwg.mxu0
    %6085 = vmatprep.subr.bf16.mxu0 %v2793
    %6086 = vmatpush1.bf16.msra.mxu0 %v2792
    %6087 = vmatprep.subr.bf16.mxu0 %v2801
    %6088 = vmatpush1.bf16.msra.mxu0 %v2800
    %6089 = vmatprep.subr.bf16.mxu0 %v2809
    %6090 = vmatpush1.bf16.msra.mxu0 %v2808
    %6091 = vmatprep.subr.bf16.mxu0 %v2817
    %6092 = vmatpush1.bf16.msra.mxu0 %v2816
    %6093 = vmatprep.subr.bf16.mxu0 %v2825
    %6094 = vmatpush1.bf16.msra.mxu0 %v2824
    %6095 = vmatprep.subr.bf16.mxu0 %v2833
    %6096 = vmatpush1.bf16.msra.mxu0 %v2832
    %6097 = vmatprep.subr.bf16.mxu0 %v2841
    %6098 = vmatpush1.bf16.msra.mxu0 %v2840
    %6099 = vmatprep.subr.bf16.mxu0 %v2849
    %6100 = vmatpush1.bf16.msra.mxu0 %v2848
    %6101 = vmatprep.subr.bf16.mxu0 %v2857
    %6102 = vmatpush1.bf16.msra.mxu0 %v2856
    %6103 = vmatprep.subr.bf16.mxu0 %v2865
    %6104 = vmatpush1.bf16.msra.mxu0 %v2864
    %6105 = vmatprep.subr.bf16.mxu0 %v2873
    %6106 = vmatpush1.bf16.msra.mxu0 %v2872
    %6107 = vmatprep.subr.bf16.mxu0 %v2881
    %6108 = vmatpush1.bf16.msra.mxu0 %v2880
    %6109 = vmatprep.subr.bf16.mxu0 %v2889
    %6110 = vmatpush1.bf16.msra.mxu0 %v2888
    %6111 = vmatprep.subr.bf16.mxu0 %v2897
    %6112 = vmatpush1.bf16.msra.mxu0 %v2896
    %6113 = vmatprep.subr.bf16.mxu0 %v2905
    %6114 = vmatpush1.bf16.msra.mxu0 %v2904
    %6115 = vmatprep.subr.bf16.mxu0 %v2913
    %6116 = vmatpush1.bf16.msra.mxu0 %v2912
    %6117 = vmatprep.mubr.bf16.mxu0 %v5674
    %6118 = vmatmul.mubr.bf16.gmra.mrb[0].mxu0 %v5673
    %v6119 = vpop.f32.mrb[0].mxu0
    %v6120 = vadd.f32 %v5833, %v6119
    %v6121 = vpop.f32.mrb[0].mxu0
    %v6122 = vadd.f32 %v5835, %v6121
    %v6123 = vpop.f32.mrb[0].mxu0
    %v6124 = vpop.f32.mrb[0].mxu0
    %6125 = vdwg.mxu0
    %6126 = vmatprep.subr.bf16.mxu0 %v2921
    %6127 = vmatpush1.bf16.msra.mxu0 %v2920
    %6128 = vmatprep.subr.bf16.mxu0 %v2929
    %6129 = vmatpush1.bf16.msra.mxu0 %v2928
    %6130 = vmatprep.subr.bf16.mxu0 %v2937
    %6131 = vmatpush1.bf16.msra.mxu0 %v2936
    %6132 = vmatprep.subr.bf16.mxu0 %v2945
    %6133 = vmatpush1.bf16.msra.mxu0 %v2944
    %6134 = vmatprep.subr.bf16.mxu0 %v2953
    %6135 = vmatpush1.bf16.msra.mxu0 %v2952
    %6136 = vmatprep.subr.bf16.mxu0 %v2961
    %6137 = vmatpush1.bf16.msra.mxu0 %v2960
    %6138 = vmatprep.subr.bf16.mxu0 %v2969
    %6139 = vmatpush1.bf16.msra.mxu0 %v2968
    %6140 = vmatprep.subr.bf16.mxu0 %v2977
    %6141 = vmatpush1.bf16.msra.mxu0 %v2976
    %6142 = vmatprep.subr.bf16.mxu0 0
    %6143 = vmatpush1.bf16.msra.mxu0 0
    %6144 = vmatprep.subr.bf16.mxu0 0
    %6145 = vmatpush1.bf16.msra.mxu0 0
    %6146 = vmatprep.subr.bf16.mxu0 0
    %6147 = vmatpush1.bf16.msra.mxu0 0
    %6148 = vmatprep.subr.bf16.mxu0 0
    %6149 = vmatpush1.bf16.msra.mxu0 0
    %6150 = vmatprep.subr.bf16.mxu0 0
    %6151 = vmatpush1.bf16.msra.mxu0 0
    %6152 = vmatprep.subr.bf16.mxu0 0
    %6153 = vmatpush1.bf16.msra.mxu0 0
    %6154 = vmatprep.subr.bf16.mxu0 0
    %6155 = vmatpush1.bf16.msra.mxu0 0
    %6156 = vmatprep.subr.bf16.mxu0 0
    %6157 = vmatpush1.bf16.msra.mxu0 0
    %6158 = vmatprep.mubr.bf16.mxu0 0
    %6159 = vmatmul.mubr.bf16.gmra.mrb[0].mxu0 %v5672
    %v6160 = vpop.f32.mrb[0].mxu0
    %v6161 = vadd.f32 %v6120, %v6160
    %v6162 = vpop.f32.mrb[0].mxu0
    %v6163 = vadd.f32 %v6122, %v6162
    %v6164 = vpop.f32.mrb[0].mxu0
    %v6165 = vpop.f32.mrb[0].mxu0
    %6166 = vdwg.mxu0
    %v6167 = vadd.f32 %v5915, %v3502
    %v6168 = vadd.f32 %v5917, %v3506
    %v6169 = vadd.f32 %v5997, %v3510
    %v6170 = vadd.f32 %v5999, %v3514
    %v6171 = vadd.f32 %v6079, %v3518
    %v6172 = vadd.f32 %v6081, %v3522
    %v6173 = vadd.f32 %v6161, %v3526
    %v6174 = vadd.f32 %v6163, %v3530
    %v6175 = vxor.u32 %v6167, 2147483648
    %v6176 = vxor.u32 %v6168, 2147483648
    %v6177 = vmul.f32 %v6175, 1.442695
    %v6178 = vpow.pop %v6177
    %v6179 = vmul.f32 %v6176, 1.442695
    %v6180 = vpow.pop %v6179
    %v6181 = vadd.f32 %v6178, 1.0
    %v6182 = vadd.f32 %v6180, 1.0
    %v6183 = vrcp.pop %v6181
    %v6184 = vmul.f32 1.0, %v6183
    %v6185 = vrcp.pop %v6182
    %v6186 = vmul.f32 1.0, %v6185
    %v6187 = vxor.u32 %v6169, 2147483648
    %v6188 = vxor.u32 %v6170, 2147483648
    %v6189 = vmul.f32 %v6187, 1.442695
    %v6190 = vpow.pop %v6189
    %v6191 = vmul.f32 %v6188, 1.442695
    %v6192 = vpow.pop %v6191
    %v6193 = vadd.f32 %v6190, 1.0
    %v6194 = vadd.f32 %v6192, 1.0
    %v6195 = vrcp.pop %v6193
    %v6196 = vmul.f32 1.0, %v6195
    %v6197 = vrcp.pop %v6194
    %v6198 = vmul.f32 1.0, %v6197
    %v6199 = vtanh.pop %v6171
    %v6200 = vtanh.pop %v6172
    %v6201 = vxor.u32 %v6173, 2147483648
    %v6202 = vxor.u32 %v6174, 2147483648
    %v6203 = vmul.f32 %v6201, 1.442695
    %v6204 = vpow.pop %v6203
    %v6205 = vmul.f32 %v6202, 1.442695
    %v6206 = vpow.pop %v6205
    %v6207 = vadd.f32 %v6204, 1.0
    %v6208 = vadd.f32 %v6206, 1.0
    %v6209 = vrcp.pop %v6207
    %v6210 = vmul.f32 1.0, %v6209
    %v6211 = vrcp.pop %v6208
    %v6212 = vmul.f32 1.0, %v6211
    %v6213 = vmul.f32 %v6196, %v5441
    %v6214 = vmul.f32 %v6198, %v5442
    %v6215 = vmul.f32 %v6184, %v6199
    %v6216 = vmul.f32 %v6186, %v6200
    %v6217 = vadd.f32 %v6213, %v6215
    %v6218 = vadd.f32 %v6214, %v6216
    %v6219 = vtanh.pop %v6217
    %v6220 = vtanh.pop %v6218
    %v6221 = vmul.f32 %v6210, %v6219
    %v6222 = vmul.f32 %v6212, %v6220
    %6223 = vst [vmem:[#allocation2] sm:$0xff] %v6221
    %6224 = vst [vmem:[#allocation2 + $0x8] sm:$0xff] %v6222
    %6225 = vst [vmem:[#allocation3] sm:$0xff] %v6217
    %6226 = vst [vmem:[#allocation3 + $0x8] sm:$0xff] %v6218
    %v6227 = vpack.c.bf16 %v6221, %v6221
    %v6228 = vpack.c.bf16 %v6222, %v6222
    %6229 = vmatprep.subr.bf16.mxu0 0
    %6230 = vmatpush1.bf16.msra.mxu0 %v3671
    %6231 = vmatprep.subr.bf16.mxu0 0
    %6232 = vmatpush1.bf16.msra.mxu0 %v3672
    %6233 = vmatprep.subr.bf16.mxu0 0
    %6234 = vmatpush1.bf16.msra.mxu0 %v3673
    %6235 = vmatprep.subr.bf16.mxu0 0
    %6236 = vmatpush1.bf16.msra.mxu0 %v3674
    %6237 = vmatprep.subr.bf16.mxu0 0
    %6238 = vmatpush1.bf16.msra.mxu0 %v3675
    %6239 = vmatprep.subr.bf16.mxu0 0
    %6240 = vmatpush1.bf16.msra.mxu0 %v3676
    %6241 = vmatprep.subr.bf16.mxu0 0
    %6242 = vmatpush1.bf16.msra.mxu0 %v3677
    %6243 = vmatprep.subr.bf16.mxu0 0
    %6244 = vmatpush1.bf16.msra.mxu0 %v3678
    %6245 = vmatprep.subr.bf16.mxu0 0
    %6246 = vmatpush1.bf16.msra.mxu0 %v3679
    %6247 = vmatprep.subr.bf16.mxu0 0
    %6248 = vmatpush1.bf16.msra.mxu0 %v3680
    %6249 = vmatprep.subr.bf16.mxu0 0
    %6250 = vmatpush1.bf16.msra.mxu0 %v3681
    %6251 = vmatprep.subr.bf16.mxu0 0
    %6252 = vmatpush1.bf16.msra.mxu0 %v3682
    %6253 = vmatprep.subr.bf16.mxu0 0
    %6254 = vmatpush1.bf16.msra.mxu0 %v3683
    %6255 = vmatprep.subr.bf16.mxu0 0
    %6256 = vmatpush1.bf16.msra.mxu0 %v3684
    %6257 = vmatprep.subr.bf16.mxu0 0
    %6258 = vmatpush1.bf16.msra.mxu0 %v3685
    %6259 = vmatprep.subr.bf16.mxu0 0
    %6260 = vmatpush1.bf16.msra.mxu0 %v3686
    %6261 = vmatprep.mubr.bf16.mxu0 %v6228
    %6262 = vmatmul.mubr.bf16.gmra.mrb[0].mxu0 %v6227
    %v6263 = vpop.f32.mrb[0].mxu0
    %v6264 = vadd.f32 %v3605, %v6263
    %v6265 = vpop.f32.mrb[0].mxu0
    %v6266 = vpop.f32.mrb[0].mxu0
    %v6267 = vpop.f32.mrb[0].mxu0
    %6268 = vdwg.mxu0
    %6269 = vmax.xlane.f32.xlu0 %v6264
    %v6270 = vpop.xlane.xlu0 %6269
    %v6271 = vsub.f32 %v6264, %v6270
    %v6272 = vmul.f32 %v6271, 1.442695
    %v6273 = vpow.pop %v6272
    %6274 = vadd.xlane.f32.xlu0 %v6273
    %v6275 = vpop.xlane.xlu0 %6274
    %v6276 = vlog2.pop %v6275
    %v6277 = vmul.f32 %v6276, 0.6931472
    %v6278 = vsub.f32 %v6271, %v6277
    %s6279 = scalar_lea.vmem [#allocation4], 32
    %6280 = vst [vmem:[%s6279] sm:$0xff] %v6278
    %v6281 = vld [vmem:[#allocation2] sm:$0xff]
    %v6282 = vld [vmem:[#allocation2 + $0x8] sm:$0xff]
    %v6283 = vld [vmem:[#allocation3] sm:$0xff]
    %v6284 = vld [vmem:[#allocation3 + $0x8] sm:$0xff]
    %v6285 = vpack.c.bf16 %v6281, %v6281
    %v6286 = vpack.c.bf16 %v6282, %v6282
    %6287 = vmatprep.subr.bf16.mxu0 %v657
    %6288 = vmatpush1.bf16.msra.mxu0 %v656
    %6289 = vmatprep.subr.bf16.mxu0 %v659
    %6290 = vmatpush1.bf16.msra.mxu0 %v658
    %6291 = vmatprep.subr.bf16.mxu0 %v661
    %6292 = vmatpush1.bf16.msra.mxu0 %v660
    %6293 = vmatprep.subr.bf16.mxu0 %v663
    %6294 = vmatpush1.bf16.msra.mxu0 %v662
    %6295 = vmatprep.subr.bf16.mxu0 %v665
    %6296 = vmatpush1.bf16.msra.mxu0 %v664
    %6297 = vmatprep.subr.bf16.mxu0 %v667
    %6298 = vmatpush1.bf16.msra.mxu0 %v666
    %6299 = vmatprep.subr.bf16.mxu0 %v669
    %6300 = vmatpush1.bf16.msra.mxu0 %v668
    %6301 = vmatprep.subr.bf16.mxu0 %v671
    %6302 = vmatpush1.bf16.msra.mxu0 %v670
    %6303 = vmatprep.subr.bf16.mxu0 %v673
    %6304 = vmatpush1.bf16.msra.mxu0 %v672
    %6305 = vmatprep.subr.bf16.mxu0 %v675
    %6306 = vmatpush1.bf16.msra.mxu0 %v674
    %6307 = vmatprep.subr.bf16.mxu0 %v677
    %6308 = vmatpush1.bf16.msra.mxu0 %v676
    %6309 = vmatprep.subr.bf16.mxu0 %v679
    %6310 = vmatpush1.bf16.msra.mxu0 %v678
    %6311 = vmatprep.subr.bf16.mxu0 %v681
    %6312 = vmatpush1.bf16.msra.mxu0 %v680
    %6313 = vmatprep.subr.bf16.mxu0 %v683
    %6314 = vmatpush1.bf16.msra.mxu0 %v682
    %6315 = vmatprep.subr.bf16.mxu0 %v685
    %6316 = vmatpush1.bf16.msra.mxu0 %v684
    %6317 = vmatprep.subr.bf16.mxu0 %v687
    %6318 = vmatpush1.bf16.msra.mxu0 %v686
    %6319 = vmatprep.mubr.bf16.mxu0 %v6286
    %6320 = vmatmul.mubr.bf16.gmra.mrb[0].mxu0 %v6285
    %v6321 = vpop.f32.mrb[0].mxu0
    %v6322 = vadd.f32 0.0, %v6321
    %v6323 = vpop.f32.mrb[0].mxu0
    %v6324 = vadd.f32 0.0, %v6323
    %v6325 = vpop.f32.mrb[0].mxu0
    %v6326 = vpop.f32.mrb[0].mxu0
    %6327 = vdwg.mxu0
    %v6328 = vpack.c.bf16 %v6322, %v6322
    %v6329 = vpack.c.bf16 %v6324, %v6324
    %6330 = vmatprep.subr.bf16.mxu0 0
    %6331 = vmatpush1.bf16.msra.mxu0 %v827
    %6332 = vmatprep.subr.bf16.mxu0 0
    %6333 = vmatpush1.bf16.msra.mxu0 %v828
    %6334 = vmatprep.subr.bf16.mxu0 0
    %6335 = vmatpush1.bf16.msra.mxu0 %v829
    %6336 = vmatprep.subr.bf16.mxu0 0
    %6337 = vmatpush1.bf16.msra.mxu0 %v830
    %6338 = vmatprep.subr.bf16.mxu0 0
    %6339 = vmatpush1.bf16.msra.mxu0 %v831
    %6340 = vmatprep.subr.bf16.mxu0 0
    %6341 = vmatpush1.bf16.msra.mxu0 %v832
    %6342 = vmatprep.subr.bf16.mxu0 0
    %6343 = vmatpush1.bf16.msra.mxu0 %v833
    %6344 = vmatprep.subr.bf16.mxu0 0
    %6345 = vmatpush1.bf16.msra.mxu0 %v834
    %6346 = vmatprep.subr.bf16.mxu0 0
    %6347 = vmatpush1.bf16.msra.mxu0 %v835
    %6348 = vmatprep.subr.bf16.mxu0 0
    %6349 = vmatpush1.bf16.msra.mxu0 %v836
    %6350 = vmatprep.subr.bf16.mxu0 0
    %6351 = vmatpush1.bf16.msra.mxu0 %v837
    %6352 = vmatprep.subr.bf16.mxu0 0
    %6353 = vmatpush1.bf16.msra.mxu0 %v838
    %6354 = vmatprep.subr.bf16.mxu0 0
    %6355 = vmatpush1.bf16.msra.mxu0 %v839
    %6356 = vmatprep.subr.bf16.mxu0 0
    %6357 = vmatpush1.bf16.msra.mxu0 %v840
    %6358 = vmatprep.subr.bf16.mxu0 0
    %6359 = vmatpush1.bf16.msra.mxu0 %v841
    %6360 = vmatprep.subr.bf16.mxu0 0
    %6361 = vmatpush1.bf16.msra.mxu0 %v842
    %6362 = vmatprep.mubr.bf16.mxu0 %v6329
    %6363 = vmatmul.mubr.bf16.gmra.mrb[0].mxu0 %v6328
    %v6364 = vpop.f32.mrb[0].mxu0
    %v6365 = vadd.f32 0.0, %v6364
    %v6366 = vpop.f32.mrb[0].mxu0
    %v6367 = vpop.f32.mrb[0].mxu0
    %v6368 = vpop.f32.mrb[0].mxu0
    %6369 = vdwg.mxu0
    %v6370 = vsel %vm553, %v6365, -1e+30
    %v6371 = vsel %vm900, %v6370, -inf
    %6372 = vmax.xlane.f32.xlu0 %v6371
    %v6373 = vpop.xlane.xlu0 %6372
    %v6374 = vsub.f32 %v6370, %v6373
    %v6375 = vmul.f32 %v6374, 1.442695
    %v6376 = vpow.pop %v6375
    %v6377 = vsel %vm900, %v6376, 0.0
    %6378 = vadd.xlane.f32.xlu0 %v6377
    %v6379 = vpop.xlane.xlu0 %6378
    %v6380 = vrcp.pop %v6379
    %v6381 = vmul.f32 %v6376, %v6380
    %v6382 = vpack.c.bf16 %v6381, %v6381
    %v6384 = vsel %vm900, %v6382, 0
    %6386 = vmatprep.subr.bf16.mxu0 %v938
    %6387 = vmatpush1.bf16.msra.mxu0 %v937
    %6388 = vmatprep.subr.bf16.mxu0 %v940
    %6389 = vmatpush1.bf16.msra.mxu0 %v939
    %6390 = vmatprep.subr.bf16.mxu0 %v942
    %6391 = vmatpush1.bf16.msra.mxu0 %v941
    %6392 = vmatprep.subr.bf16.mxu0 %v944
    %6393 = vmatpush1.bf16.msra.mxu0 %v943
    %6394 = vmatprep.subr.bf16.mxu0 0
    %6395 = vmatpush1.bf16.msra.mxu0 0
    %6396 = vmatprep.subr.bf16.mxu0 0
    %6397 = vmatpush1.bf16.msra.mxu0 0
    %6398 = vmatprep.subr.bf16.mxu0 0
    %6399 = vmatpush1.bf16.msra.mxu0 0
    %6400 = vmatprep.subr.bf16.mxu0 0
    %6401 = vmatpush1.bf16.msra.mxu0 0
    %6402 = vmatprep.subr.bf16.mxu0 0
    %6403 = vmatpush1.bf16.msra.mxu0 0
    %6404 = vmatprep.subr.bf16.mxu0 0
    %6405 = vmatpush1.bf16.msra.mxu0 0
    %6406 = vmatprep.subr.bf16.mxu0 0
    %6407 = vmatpush1.bf16.msra.mxu0 0
    %6408 = vmatprep.subr.bf16.mxu0 0
    %6409 = vmatpush1.bf16.msra.mxu0 0
    %6410 = vmatprep.subr.bf16.mxu0 0
    %6411 = vmatpush1.bf16.msra.mxu0 0
    %6412 = vmatprep.subr.bf16.mxu0 0
    %6413 = vmatpush1.bf16.msra.mxu0 0
    %6414 = vmatprep.subr.bf16.mxu0 0
    %6415 = vmatpush1.bf16.msra.mxu0 0
    %6416 = vmatprep.subr.bf16.mxu0 0
    %6417 = vmatpush1.bf16.msra.mxu0 0
    %6418 = vmatprep.mubr.bf16.mxu0 0
    %6419 = vmatmul.mubr.bf16.gmra.mrb[0].mxu0 %v6384
    %v6420 = vpop.f32.mrb[0].mxu0
    %v6421 = vadd.f32 0.0, %v6420
    %v6422 = vpop.f32.mrb[0].mxu0
    %v6423 = vadd.f32 0.0, %v6422
    %v6424 = vpop.f32.mrb[0].mxu0
    %v6425 = vpop.f32.mrb[0].mxu0
    %6426 = vdwg.mxu0
    %v6427 = vpack.c.bf16 %v6421, %v6421
    %v6428 = vpack.c.bf16 %v6423, %v6423
    %6429 = vmatprep.subr.bf16.mxu0 %v1096
    %6430 = vmatpush1.bf16.msra.mxu0 %v1095
    %6431 = vmatprep.subr.bf16.mxu0 %v1098
    %6432 = vmatpush1.bf16.msra.mxu0 %v1097
    %6433 = vmatprep.subr.bf16.mxu0 %v1100
    %6434 = vmatpush1.bf16.msra.mxu0 %v1099
    %6435 = vmatprep.subr.bf16.mxu0 %v1102
    %6436 = vmatpush1.bf16.msra.mxu0 %v1101
    %6437 = vmatprep.subr.bf16.mxu0 %v1104
    %6438 = vmatpush1.bf16.msra.mxu0 %v1103
    %6439 = vmatprep.subr.bf16.mxu0 %v1106
    %6440 = vmatpush1.bf16.msra.mxu0 %v1105
    %6441 = vmatprep.subr.bf16.mxu0 %v1108
    %6442 = vmatpush1.bf16.msra.mxu0 %v1107
    %6443 = vmatprep.subr.bf16.mxu0 %v1110
    %6444 = vmatpush1.bf16.msra.mxu0 %v1109
    %6445 = vmatprep.subr.bf16.mxu0 %v1112
    %6446 = vmatpush1.bf16.msra.mxu0 %v1111
    %6447 = vmatprep.subr.bf16.mxu0 %v1114
    %6448 = vmatpush1.bf16.msra.mxu0 %v1113
    %6449 = vmatprep.subr.bf16.mxu0 %v1116
    %6450 = vmatpush1.bf16.msra.mxu0 %v1115
    %6451 = vmatprep.subr.bf16.mxu0 %v1118
    %6452 = vmatpush1.bf16.msra.mxu0 %v1117
    %6453 = vmatprep.subr.bf16.mxu0 %v1120
    %6454 = vmatpush1.bf16.msra.mxu0 %v1119
    %6455 = vmatprep.subr.bf16.mxu0 %v1122
    %6456 = vmatpush1.bf16.msra.mxu0 %v1121
    %6457 = vmatprep.subr.bf16.mxu0 %v1124
    %6458 = vmatpush1.bf16.msra.mxu0 %v1123
    %6459 = vmatprep.subr.bf16.mxu0 %v1126
    %6460 = vmatpush1.bf16.msra.mxu0 %v1125
    %6461 = vmatprep.mubr.bf16.mxu0 %v6286
    %6462 = vmatmul.mubr.bf16.gmra.mrb[0].mxu0 %v6285
    %v6463 = vpop.f32.mrb[0].mxu0
    %v6464 = vadd.f32 0.0, %v6463
    %v6465 = vpop.f32.mrb[0].mxu0
    %v6466 = vadd.f32 0.0, %v6465
    %v6467 = vpop.f32.mrb[0].mxu0
    %v6468 = vpop.f32.mrb[0].mxu0
    %6469 = vdwg.mxu0
    %6470 = vmatprep.subr.bf16.mxu0 %v1297
    %6471 = vmatpush1.bf16.msra.mxu0 %v1296
    %6472 = vmatprep.subr.bf16.mxu0 %v1299
    %6473 = vmatpush1.bf16.msra.mxu0 %v1298
    %6474 = vmatprep.subr.bf16.mxu0 %v1301
    %6475 = vmatpush1.bf16.msra.mxu0 %v1300
    %6476 = vmatprep.subr.bf16.mxu0 %v1303
    %6477 = vmatpush1.bf16.msra.mxu0 %v1302
    %6478 = vmatprep.subr.bf16.mxu0 %v1305
    %6479 = vmatpush1.bf16.msra.mxu0 %v1304
    %6480 = vmatprep.subr.bf16.mxu0 %v1307
    %6481 = vmatpush1.bf16.msra.mxu0 %v1306
    %6482 = vmatprep.subr.bf16.mxu0 %v1309
    %6483 = vmatpush1.bf16.msra.mxu0 %v1308
    %6484 = vmatprep.subr.bf16.mxu0 %v1311
    %6485 = vmatpush1.bf16.msra.mxu0 %v1310
    %6486 = vmatprep.subr.bf16.mxu0 %v1313
    %6487 = vmatpush1.bf16.msra.mxu0 %v1312
    %6488 = vmatprep.subr.bf16.mxu0 %v1315
    %6489 = vmatpush1.bf16.msra.mxu0 %v1314
    %6490 = vmatprep.subr.bf16.mxu0 %v1317
    %6491 = vmatpush1.bf16.msra.mxu0 %v1316
    %6492 = vmatprep.subr.bf16.mxu0 %v1319
    %6493 = vmatpush1.bf16.msra.mxu0 %v1318
    %6494 = vmatprep.subr.bf16.mxu0 %v1321
    %6495 = vmatpush1.bf16.msra.mxu0 %v1320
    %6496 = vmatprep.subr.bf16.mxu0 %v1323
    %6497 = vmatpush1.bf16.msra.mxu0 %v1322
    %6498 = vmatprep.subr.bf16.mxu0 %v1325
    %6499 = vmatpush1.bf16.msra.mxu0 %v1324
    %6500 = vmatprep.subr.bf16.mxu0 %v1327
    %6501 = vmatpush1.bf16.msra.mxu0 %v1326
    %6502 = vmatprep.mubr.bf16.mxu0 %v6428
    %6503 = vmatmul.mubr.bf16.gmra.mrb[0].mxu0 %v6427
    %v6504 = vpop.f32.mrb[0].mxu0
    %v6505 = vadd.f32 %v6464, %v6504
    %v6506 = vpop.f32.mrb[0].mxu0
    %v6507 = vadd.f32 %v6466, %v6506
    %v6508 = vpop.f32.mrb[0].mxu0
    %v6509 = vpop.f32.mrb[0].mxu0
    %6510 = vdwg.mxu0
    %v6511 = vtanh.pop %v6505
    %v6512 = vtanh.pop %v6507
    %s6513 = scalar_lea.vmem %s4, 16
    %v6514 = vld [vmem:[%s6513] sm:$0xf]
    %v6515 = vpack.c.bf16 %v6511, %v6511
    %v6516 = vpack.c.bf16 %v6512, %v6512
    %6517 = vmatprep.subr.bf16.mxu0 %v1791
    %6518 = vmatpush1.bf16.msra.mxu0 %v1790
    %6519 = vmatprep.subr.bf16.mxu0 %v1799
    %6520 = vmatpush1.bf16.msra.mxu0 %v1798
    %6521 = vmatprep.subr.bf16.mxu0 %v1807
    %6522 = vmatpush1.bf16.msra.mxu0 %v1806
    %6523 = vmatprep.subr.bf16.mxu0 %v1815
    %6524 = vmatpush1.bf16.msra.mxu0 %v1814
    %6525 = vmatprep.subr.bf16.mxu0 %v1823
    %6526 = vmatpush1.bf16.msra.mxu0 %v1822
    %6527 = vmatprep.subr.bf16.mxu0 %v1831
    %6528 = vmatpush1.bf16.msra.mxu0 %v1830
    %6529 = vmatprep.subr.bf16.mxu0 %v1839
    %6530 = vmatpush1.bf16.msra.mxu0 %v1838
    %6531 = vmatprep.subr.bf16.mxu0 %v1847
    %6532 = vmatpush1.bf16.msra.mxu0 %v1846
    %6533 = vmatprep.subr.bf16.mxu0 %v1855
    %6534 = vmatpush1.bf16.msra.mxu0 %v1854
    %6535 = vmatprep.subr.bf16.mxu0 %v1863
    %6536 = vmatpush1.bf16.msra.mxu0 %v1862
    %6537 = vmatprep.subr.bf16.mxu0 %v1871
    %6538 = vmatpush1.bf16.msra.mxu0 %v1870
    %6539 = vmatprep.subr.bf16.mxu0 %v1879
    %6540 = vmatpush1.bf16.msra.mxu0 %v1878
    %6541 = vmatprep.subr.bf16.mxu0 %v1887
    %6542 = vmatpush1.bf16.msra.mxu0 %v1886
    %6543 = vmatprep.subr.bf16.mxu0 %v1895
    %6544 = vmatpush1.bf16.msra.mxu0 %v1894
    %6545 = vmatprep.subr.bf16.mxu0 %v1903
    %6546 = vmatpush1.bf16.msra.mxu0 %v1902
    %6547 = vmatprep.subr.bf16.mxu0 %v1911
    %6548 = vmatpush1.bf16.msra.mxu0 %v1910
    %6549 = vmatprep.mubr.bf16.mxu0 %v6286
    %6550 = vmatmul.mubr.bf16.gmra.mrb[0].mxu0 %v6285
    %v6551 = vpop.f32.mrb[0].mxu0
    %v6552 = vadd.f32 0.0, %v6551
    %v6553 = vpop.f32.mrb[0].mxu0
    %v6554 = vadd.f32 0.0, %v6553
    %v6555 = vpop.f32.mrb[0].mxu0
    %v6556 = vpop.f32.mrb[0].mxu0
    %6557 = vdwg.mxu0
    %6558 = vmatprep.subr.bf16.mxu0 %v1793
    %6559 = vmatpush1.bf16.msra.mxu0 %v1792
    %6560 = vmatprep.subr.bf16.mxu0 %v1801
    %6561 = vmatpush1.bf16.msra.mxu0 %v1800
    %6562 = vmatprep.subr.bf16.mxu0 %v1809
    %6563 = vmatpush1.bf16.msra.mxu0 %v1808
    %6564 = vmatprep.subr.bf16.mxu0 %v1817
    %6565 = vmatpush1.bf16.msra.mxu0 %v1816
    %6566 = vmatprep.subr.bf16.mxu0 %v1825
    %6567 = vmatpush1.bf16.msra.mxu0 %v1824
    %6568 = vmatprep.subr.bf16.mxu0 %v1833
    %6569 = vmatpush1.bf16.msra.mxu0 %v1832
    %6570 = vmatprep.subr.bf16.mxu0 %v1841
    %6571 = vmatpush1.bf16.msra.mxu0 %v1840
    %6572 = vmatprep.subr.bf16.mxu0 %v1849
    %6573 = vmatpush1.bf16.msra.mxu0 %v1848
    %6574 = vmatprep.subr.bf16.mxu0 %v1857
    %6575 = vmatpush1.bf16.msra.mxu0 %v1856
    %6576 = vmatprep.subr.bf16.mxu0 %v1865
    %6577 = vmatpush1.bf16.msra.mxu0 %v1864
    %6578 = vmatprep.subr.bf16.mxu0 %v1873
    %6579 = vmatpush1.bf16.msra.mxu0 %v1872
    %6580 = vmatprep.subr.bf16.mxu0 %v1881
    %6581 = vmatpush1.bf16.msra.mxu0 %v1880
    %6582 = vmatprep.subr.bf16.mxu0 %v1889
    %6583 = vmatpush1.bf16.msra.mxu0 %v1888
    %6584 = vmatprep.subr.bf16.mxu0 %v1897
    %6585 = vmatpush1.bf16.msra.mxu0 %v1896
    %6586 = vmatprep.subr.bf16.mxu0 %v1905
    %6587 = vmatpush1.bf16.msra.mxu0 %v1904
    %6588 = vmatprep.subr.bf16.mxu0 %v1913
    %6589 = vmatpush1.bf16.msra.mxu0 %v1912
    %6590 = vmatprep.mubr.bf16.mxu0 %v6286
    %6591 = vmatmul.mubr.bf16.gmra.mrb[0].mxu0 %v6285
    %v6592 = vpop.f32.mrb[0].mxu0
    %v6593 = vadd.f32 0.0, %v6592
    %v6594 = vpop.f32.mrb[0].mxu0
    %v6595 = vadd.f32 0.0, %v6594
    %v6596 = vpop.f32.mrb[0].mxu0
    %v6597 = vpop.f32.mrb[0].mxu0
    %6598 = vdwg.mxu0
    %6599 = vmatprep.subr.bf16.mxu0 %v1795
    %6600 = vmatpush1.bf16.msra.mxu0 %v1794
    %6601 = vmatprep.subr.bf16.mxu0 %v1803
    %6602 = vmatpush1.bf16.msra.mxu0 %v1802
    %6603 = vmatprep.subr.bf16.mxu0 %v1811
    %6604 = vmatpush1.bf16.msra.mxu0 %v1810
    %6605 = vmatprep.subr.bf16.mxu0 %v1819
    %6606 = vmatpush1.bf16.msra.mxu0 %v1818
    %6607 = vmatprep.subr.bf16.mxu0 %v1827
    %6608 = vmatpush1.bf16.msra.mxu0 %v1826
    %6609 = vmatprep.subr.bf16.mxu0 %v1835
    %6610 = vmatpush1.bf16.msra.mxu0 %v1834
    %6611 = vmatprep.subr.bf16.mxu0 %v1843
    %6612 = vmatpush1.bf16.msra.mxu0 %v1842
    %6613 = vmatprep.subr.bf16.mxu0 %v1851
    %6614 = vmatpush1.bf16.msra.mxu0 %v1850
    %6615 = vmatprep.subr.bf16.mxu0 %v1859
    %6616 = vmatpush1.bf16.msra.mxu0 %v1858
    %6617 = vmatprep.subr.bf16.mxu0 %v1867
    %6618 = vmatpush1.bf16.msra.mxu0 %v1866
    %6619 = vmatprep.subr.bf16.mxu0 %v1875
    %6620 = vmatpush1.bf16.msra.mxu0 %v1874
    %6621 = vmatprep.subr.bf16.mxu0 %v1883
    %6622 = vmatpush1.bf16.msra.mxu0 %v1882
    %6623 = vmatprep.subr.bf16.mxu0 %v1891
    %6624 = vmatpush1.bf16.msra.mxu0 %v1890
    %6625 = vmatprep.subr.bf16.mxu0 %v1899
    %6626 = vmatpush1.bf16.msra.mxu0 %v1898
    %6627 = vmatprep.subr.bf16.mxu0 %v1907
    %6628 = vmatpush1.bf16.msra.mxu0 %v1906
    %6629 = vmatprep.subr.bf16.mxu0 %v1915
    %6630 = vmatpush1.bf16.msra.mxu0 %v1914
    %6631 = vmatprep.mubr.bf16.mxu0 %v6286
    %6632 = vmatmul.mubr.bf16.gmra.mrb[0].mxu0 %v6285
    %v6633 = vpop.f32.mrb[0].mxu0
    %v6634 = vadd.f32 0.0, %v6633
    %v6635 = vpop.f32.mrb[0].mxu0
    %v6636 = vadd.f32 0.0, %v6635
    %v6637 = vpop.f32.mrb[0].mxu0
    %v6638 = vpop.f32.mrb[0].mxu0
    %6639 = vdwg.mxu0
    %6640 = vmatprep.subr.bf16.mxu0 %v1797
    %6641 = vmatpush1.bf16.msra.mxu0 %v1796
    %6642 = vmatprep.subr.bf16.mxu0 %v1805
    %6643 = vmatpush1.bf16.msra.mxu0 %v1804
    %6644 = vmatprep.subr.bf16.mxu0 %v1813
    %6645 = vmatpush1.bf16.msra.mxu0 %v1812
    %6646 = vmatprep.subr.bf16.mxu0 %v1821
    %6647 = vmatpush1.bf16.msra.mxu0 %v1820
    %6648 = vmatprep.subr.bf16.mxu0 %v1829
    %6649 = vmatpush1.bf16.msra.mxu0 %v1828
    %6650 = vmatprep.subr.bf16.mxu0 %v1837
    %6651 = vmatpush1.bf16.msra.mxu0 %v1836
    %6652 = vmatprep.subr.bf16.mxu0 %v1845
    %6653 = vmatpush1.bf16.msra.mxu0 %v1844
    %6654 = vmatprep.subr.bf16.mxu0 %v1853
    %6655 = vmatpush1.bf16.msra.mxu0 %v1852
    %6656 = vmatprep.subr.bf16.mxu0 %v1861
    %6657 = vmatpush1.bf16.msra.mxu0 %v1860
    %6658 = vmatprep.subr.bf16.mxu0 %v1869
    %6659 = vmatpush1.bf16.msra.mxu0 %v1868
    %6660 = vmatprep.subr.bf16.mxu0 %v1877
    %6661 = vmatpush1.bf16.msra.mxu0 %v1876
    %6662 = vmatprep.subr.bf16.mxu0 %v1885
    %6663 = vmatpush1.bf16.msra.mxu0 %v1884
    %6664 = vmatprep.subr.bf16.mxu0 %v1893
    %6665 = vmatpush1.bf16.msra.mxu0 %v1892
    %6666 = vmatprep.subr.bf16.mxu0 %v1901
    %6667 = vmatpush1.bf16.msra.mxu0 %v1900
    %6668 = vmatprep.subr.bf16.mxu0 %v1909
    %6669 = vmatpush1.bf16.msra.mxu0 %v1908
    %6670 = vmatprep.subr.bf16.mxu0 %v1917
    %6671 = vmatpush1.bf16.msra.mxu0 %v1916
    %6672 = vmatprep.mubr.bf16.mxu0 %v6286
    %6673 = vmatmul.mubr.bf16.gmra.mrb[0].mxu0 %v6285
    %v6674 = vpop.f32.mrb[0].mxu0
    %v6675 = vadd.f32 0.0, %v6674
    %v6676 = vpop.f32.mrb[0].mxu0
    %v6677 = vadd.f32 0.0, %v6676
    %v6678 = vpop.f32.mrb[0].mxu0
    %v6679 = vpop.f32.mrb[0].mxu0
    %6680 = vdwg.mxu0
    %6681 = vmatprep.subr.bf16.mxu0 %v2787
    %6682 = vmatpush1.bf16.msra.mxu0 %v2786
    %6683 = vmatprep.subr.bf16.mxu0 %v2795
    %6684 = vmatpush1.bf16.msra.mxu0 %v2794
    %6685 = vmatprep.subr.bf16.mxu0 %v2803
    %6686 = vmatpush1.bf16.msra.mxu0 %v2802
    %6687 = vmatprep.subr.bf16.mxu0 %v2811
    %6688 = vmatpush1.bf16.msra.mxu0 %v2810
    %6689 = vmatprep.subr.bf16.mxu0 %v2819
    %6690 = vmatpush1.bf16.msra.mxu0 %v2818
    %6691 = vmatprep.subr.bf16.mxu0 %v2827
    %6692 = vmatpush1.bf16.msra.mxu0 %v2826
    %6693 = vmatprep.subr.bf16.mxu0 %v2835
    %6694 = vmatpush1.bf16.msra.mxu0 %v2834
    %6695 = vmatprep.subr.bf16.mxu0 %v2843
    %6696 = vmatpush1.bf16.msra.mxu0 %v2842
    %6697 = vmatprep.subr.bf16.mxu0 %v2851
    %6698 = vmatpush1.bf16.msra.mxu0 %v2850
    %6699 = vmatprep.subr.bf16.mxu0 %v2859
    %6700 = vmatpush1.bf16.msra.mxu0 %v2858
    %6701 = vmatprep.subr.bf16.mxu0 %v2867
    %6702 = vmatpush1.bf16.msra.mxu0 %v2866
    %6703 = vmatprep.subr.bf16.mxu0 %v2875
    %6704 = vmatpush1.bf16.msra.mxu0 %v2874
    %6705 = vmatprep.subr.bf16.mxu0 %v2883
    %6706 = vmatpush1.bf16.msra.mxu0 %v2882
    %6707 = vmatprep.subr.bf16.mxu0 %v2891
    %6708 = vmatpush1.bf16.msra.mxu0 %v2890
    %6709 = vmatprep.subr.bf16.mxu0 %v2899
    %6710 = vmatpush1.bf16.msra.mxu0 %v2898
    %6711 = vmatprep.subr.bf16.mxu0 %v2907
    %6712 = vmatpush1.bf16.msra.mxu0 %v2906
    %6713 = vmatprep.mubr.bf16.mxu0 %v6516
    %6714 = vmatmul.mubr.bf16.gmra.mrb[0].mxu0 %v6515
    %v6715 = vpop.f32.mrb[0].mxu0
    %v6716 = vadd.f32 %v6552, %v6715
    %v6717 = vpop.f32.mrb[0].mxu0
    %v6718 = vadd.f32 %v6554, %v6717
    %v6719 = vpop.f32.mrb[0].mxu0
    %v6720 = vpop.f32.mrb[0].mxu0
    %6721 = vdwg.mxu0
    %6722 = vmatprep.subr.bf16.mxu0 %v2915
    %6723 = vmatpush1.bf16.msra.mxu0 %v2914
    %6724 = vmatprep.subr.bf16.mxu0 %v2923
    %6725 = vmatpush1.bf16.msra.mxu0 %v2922
    %6726 = vmatprep.subr.bf16.mxu0 %v2931
    %6727 = vmatpush1.bf16.msra.mxu0 %v2930
    %6728 = vmatprep.subr.bf16.mxu0 %v2939
    %6729 = vmatpush1.bf16.msra.mxu0 %v2938
    %6730 = vmatprep.subr.bf16.mxu0 %v2947
    %6731 = vmatpush1.bf16.msra.mxu0 %v2946
    %6732 = vmatprep.subr.bf16.mxu0 %v2955
    %6733 = vmatpush1.bf16.msra.mxu0 %v2954
    %6734 = vmatprep.subr.bf16.mxu0 %v2963
    %6735 = vmatpush1.bf16.msra.mxu0 %v2962
    %6736 = vmatprep.subr.bf16.mxu0 %v2971
    %6737 = vmatpush1.bf16.msra.mxu0 %v2970
    %6738 = vmatprep.subr.bf16.mxu0 0
    %6739 = vmatpush1.bf16.msra.mxu0 0
    %6740 = vmatprep.subr.bf16.mxu0 0
    %6741 = vmatpush1.bf16.msra.mxu0 0
    %6742 = vmatprep.subr.bf16.mxu0 0
    %6743 = vmatpush1.bf16.msra.mxu0 0
    %6744 = vmatprep.subr.bf16.mxu0 0
    %6745 = vmatpush1.bf16.msra.mxu0 0
    %6746 = vmatprep.subr.bf16.mxu0 0
    %6747 = vmatpush1.bf16.msra.mxu0 0
    %6748 = vmatprep.subr.bf16.mxu0 0
    %6749 = vmatpush1.bf16.msra.mxu0 0
    %6750 = vmatprep.subr.bf16.mxu0 0
    %6751 = vmatpush1.bf16.msra.mxu0 0
    %6752 = vmatprep.subr.bf16.mxu0 0
    %6753 = vmatpush1.bf16.msra.mxu0 0
    %6754 = vmatprep.mubr.bf16.mxu0 0
    %6755 = vmatmul.mubr.bf16.gmra.mrb[0].mxu0 %v6514
    %v6756 = vpop.f32.mrb[0].mxu0
    %v6757 = vadd.f32 %v6716, %v6756
    %v6758 = vpop.f32.mrb[0].mxu0
    %v6759 = vadd.f32 %v6718, %v6758
    %v6760 = vpop.f32.mrb[0].mxu0
    %v6761 = vpop.f32.mrb[0].mxu0
    %6762 = vdwg.mxu0
    %6763 = vmatprep.subr.bf16.mxu0 %v2789
    %6764 = vmatpush1.bf16.msra.mxu0 %v2788
    %6765 = vmatprep.subr.bf16.mxu0 %v2797
    %6766 = vmatpush1.bf16.msra.mxu0 %v2796
    %6767 = vmatprep.subr.bf16.mxu0 %v2805
    %6768 = vmatpush1.bf16.msra.mxu0 %v2804
    %6769 = vmatprep.subr.bf16.mxu0 %v2813
    %6770 = vmatpush1.bf16.msra.mxu0 %v2812
    %6771 = vmatprep.subr.bf16.mxu0 %v2821
    %6772 = vmatpush1.bf16.msra.mxu0 %v2820
    %6773 = vmatprep.subr.bf16.mxu0 %v2829
    %6774 = vmatpush1.bf16.msra.mxu0 %v2828
    %6775 = vmatprep.subr.bf16.mxu0 %v2837
    %6776 = vmatpush1.bf16.msra.mxu0 %v2836
    %6777 = vmatprep.subr.bf16.mxu0 %v2845
    %6778 = vmatpush1.bf16.msra.mxu0 %v2844
    %6779 = vmatprep.subr.bf16.mxu0 %v2853
    %6780 = vmatpush1.bf16.msra.mxu0 %v2852
    %6781 = vmatprep.subr.bf16.mxu0 %v2861
    %6782 = vmatpush1.bf16.msra.mxu0 %v2860
    %6783 = vmatprep.subr.bf16.mxu0 %v2869
    %6784 = vmatpush1.bf16.msra.mxu0 %v2868
    %6785 = vmatprep.subr.bf16.mxu0 %v2877
    %6786 = vmatpush1.bf16.msra.mxu0 %v2876
    %6787 = vmatprep.subr.bf16.mxu0 %v2885
    %6788 = vmatpush1.bf16.msra.mxu0 %v2884
    %6789 = vmatprep.subr.bf16.mxu0 %v2893
    %6790 = vmatpush1.bf16.msra.mxu0 %v2892
    %6791 = vmatprep.subr.bf16.mxu0 %v2901
    %6792 = vmatpush1.bf16.msra.mxu0 %v2900
    %6793 = vmatprep.subr.bf16.mxu0 %v2909
    %6794 = vmatpush1.bf16.msra.mxu0 %v2908
    %6795 = vmatprep.mubr.bf16.mxu0 %v6516
    %6796 = vmatmul.mubr.bf16.gmra.mrb[0].mxu0 %v6515
    %v6797 = vpop.f32.mrb[0].mxu0
    %v6798 = vadd.f32 %v6593, %v6797
    %v6799 = vpop.f32.mrb[0].mxu0
    %v6800 = vadd.f32 %v6595, %v6799
    %v6801 = vpop.f32.mrb[0].mxu0
    %v6802 = vpop.f32.mrb[0].mxu0
    %6803 = vdwg.mxu0
    %6804 = vmatprep.subr.bf16.mxu0 %v2917
    %6805 = vmatpush1.bf16.msra.mxu0 %v2916
    %6806 = vmatprep.subr.bf16.mxu0 %v2925
    %6807 = vmatpush1.bf16.msra.mxu0 %v2924
    %6808 = vmatprep.subr.bf16.mxu0 %v2933
    %6809 = vmatpush1.bf16.msra.mxu0 %v2932
    %6810 = vmatprep.subr.bf16.mxu0 %v2941
    %6811 = vmatpush1.bf16.msra.mxu0 %v2940
    %6812 = vmatprep.subr.bf16.mxu0 %v2949
    %6813 = vmatpush1.bf16.msra.mxu0 %v2948
    %6814 = vmatprep.subr.bf16.mxu0 %v2957
    %6815 = vmatpush1.bf16.msra.mxu0 %v2956
    %6816 = vmatprep.subr.bf16.mxu0 %v2965
    %6817 = vmatpush1.bf16.msra.mxu0 %v2964
    %6818 = vmatprep.subr.bf16.mxu0 %v2973
    %6819 = vmatpush1.bf16.msra.mxu0 %v2972
    %6820 = vmatprep.subr.bf16.mxu0 0
    %6821 = vmatpush1.bf16.msra.mxu0 0
    %6822 = vmatprep.subr.bf16.mxu0 0
    %6823 = vmatpush1.bf16.msra.mxu0 0
    %6824 = vmatprep.subr.bf16.mxu0 0
    %6825 = vmatpush1.bf16.msra.mxu0 0
    %6826 = vmatprep.subr.bf16.mxu0 0
    %6827 = vmatpush1.bf16.msra.mxu0 0
    %6828 = vmatprep.subr.bf16.mxu0 0
    %6829 = vmatpush1.bf16.msra.mxu0 0
    %6830 = vmatprep.subr.bf16.mxu0 0
    %6831 = vmatpush1.bf16.msra.mxu0 0
    %6832 = vmatprep.subr.bf16.mxu0 0
    %6833 = vmatpush1.bf16.msra.mxu0 0
    %6834 = vmatprep.subr.bf16.mxu0 0
    %6835 = vmatpush1.bf16.msra.mxu0 0
    %6836 = vmatprep.mubr.bf16.mxu0 0
    %6837 = vmatmul.mubr.bf16.gmra.mrb[0].mxu0 %v6514
    %v6838 = vpop.f32.mrb[0].mxu0
    %v6839 = vadd.f32 %v6798, %v6838
    %v6840 = vpop.f32.mrb[0].mxu0
    %v6841 = vadd.f32 %v6800, %v6840
    %v6842 = vpop.f32.mrb[0].mxu0
    %v6843 = vpop.f32.mrb[0].mxu0
    %6844 = vdwg.mxu0
    %6845 = vmatprep.subr.bf16.mxu0 %v2791
    %6846 = vmatpush1.bf16.msra.mxu0 %v2790
    %6847 = vmatprep.subr.bf16.mxu0 %v2799
    %6848 = vmatpush1.bf16.msra.mxu0 %v2798
    %6849 = vmatprep.subr.bf16.mxu0 %v2807
    %6850 = vmatpush1.bf16.msra.mxu0 %v2806
    %6851 = vmatprep.subr.bf16.mxu0 %v2815
    %6852 = vmatpush1.bf16.msra.mxu0 %v2814
    %6853 = vmatprep.subr.bf16.mxu0 %v2823
    %6854 = vmatpush1.bf16.msra.mxu0 %v2822
    %6855 = vmatprep.subr.bf16.mxu0 %v2831
    %6856 = vmatpush1.bf16.msra.mxu0 %v2830
    %6857 = vmatprep.subr.bf16.mxu0 %v2839
    %6858 = vmatpush1.bf16.msra.mxu0 %v2838
    %6859 = vmatprep.subr.bf16.mxu0 %v2847
    %6860 = vmatpush1.bf16.msra.mxu0 %v2846
    %6861 = vmatprep.subr.bf16.mxu0 %v2855
    %6862 = vmatpush1.bf16.msra.mxu0 %v2854
    %6863 = vmatprep.subr.bf16.mxu0 %v2863
    %6864 = vmatpush1.bf16.msra.mxu0 %v2862
    %6865 = vmatprep.subr.bf16.mxu0 %v2871
    %6866 = vmatpush1.bf16.msra.mxu0 %v2870
    %6867 = vmatprep.subr.bf16.mxu0 %v2879
    %6868 = vmatpush1.bf16.msra.mxu0 %v2878
    %6869 = vmatprep.subr.bf16.mxu0 %v2887
    %6870 = vmatpush1.bf16.msra.mxu0 %v2886
    %6871 = vmatprep.subr.bf16.mxu0 %v2895
    %6872 = vmatpush1.bf16.msra.mxu0 %v2894
    %6873 = vmatprep.subr.bf16.mxu0 %v2903
    %6874 = vmatpush1.bf16.msra.mxu0 %v2902
    %6875 = vmatprep.subr.bf16.mxu0 %v2911
    %6876 = vmatpush1.bf16.msra.mxu0 %v2910
    %6877 = vmatprep.mubr.bf16.mxu0 %v6516
    %6878 = vmatmul.mubr.bf16.gmra.mrb[0].mxu0 %v6515
    %v6879 = vpop.f32.mrb[0].mxu0
    %v6880 = vadd.f32 %v6634, %v6879
    %v6881 = vpop.f32.mrb[0].mxu0
    %v6882 = vadd.f32 %v6636, %v6881
    %v6883 = vpop.f32.mrb[0].mxu0
    %v6884 = vpop.f32.mrb[0].mxu0
    %6885 = vdwg.mxu0
    %6886 = vmatprep.subr.bf16.mxu0 %v2919
    %6887 = vmatpush1.bf16.msra.mxu0 %v2918
    %6888 = vmatprep.subr.bf16.mxu0 %v2927
    %6889 = vmatpush1.bf16.msra.mxu0 %v2926
    %6890 = vmatprep.subr.bf16.mxu0 %v2935
    %6891 = vmatpush1.bf16.msra.mxu0 %v2934
    %6892 = vmatprep.subr.bf16.mxu0 %v2943
    %6893 = vmatpush1.bf16.msra.mxu0 %v2942
    %6894 = vmatprep.subr.bf16.mxu0 %v2951
    %6895 = vmatpush1.bf16.msra.mxu0 %v2950
    %6896 = vmatprep.subr.bf16.mxu0 %v2959
    %6897 = vmatpush1.bf16.msra.mxu0 %v2958
    %6898 = vmatprep.subr.bf16.mxu0 %v2967
    %6899 = vmatpush1.bf16.msra.mxu0 %v2966
    %6900 = vmatprep.subr.bf16.mxu0 %v2975
    %6901 = vmatpush1.bf16.msra.mxu0 %v2974
    %6902 = vmatprep.subr.bf16.mxu0 0
    %6903 = vmatpush1.bf16.msra.mxu0 0
    %6904 = vmatprep.subr.bf16.mxu0 0
    %6905 = vmatpush1.bf16.msra.mxu0 0
    %6906 = vmatprep.subr.bf16.mxu0 0
    %6907 = vmatpush1.bf16.msra.mxu0 0
    %6908 = vmatprep.subr.bf16.mxu0 0
    %6909 = vmatpush1.bf16.msra.mxu0 0
    %6910 = vmatprep.subr.bf16.mxu0 0
    %6911 = vmatpush1.bf16.msra.mxu0 0
    %6912 = vmatprep.subr.bf16.mxu0 0
    %6913 = vmatpush1.bf16.msra.mxu0 0
    %6914 = vmatprep.subr.bf16.mxu0 0
    %6915 = vmatpush1.bf16.msra.mxu0 0
    %6916 = vmatprep.subr.bf16.mxu0 0
    %6917 = vmatpush1.bf16.msra.mxu0 0
    %6918 = vmatprep.mubr.bf16.mxu0 0
    %6919 = vmatmul.mubr.bf16.gmra.mrb[0].mxu0 %v6514
    %v6920 = vpop.f32.mrb[0].mxu0
    %v6921 = vadd.f32 %v6880, %v6920
    %v6922 = vpop.f32.mrb[0].mxu0
    %v6923 = vadd.f32 %v6882, %v6922
    %v6924 = vpop.f32.mrb[0].mxu0
    %v6925 = vpop.f32.mrb[0].mxu0
    %6926 = vdwg.mxu0
    %6927 = vmatprep.subr.bf16.mxu0 %v2793
    %6928 = vmatpush1.bf16.msra.mxu0 %v2792
    %6929 = vmatprep.subr.bf16.mxu0 %v2801
    %6930 = vmatpush1.bf16.msra.mxu0 %v2800
    %6931 = vmatprep.subr.bf16.mxu0 %v2809
    %6932 = vmatpush1.bf16.msra.mxu0 %v2808
    %6933 = vmatprep.subr.bf16.mxu0 %v2817
    %6934 = vmatpush1.bf16.msra.mxu0 %v2816
    %6935 = vmatprep.subr.bf16.mxu0 %v2825
    %6936 = vmatpush1.bf16.msra.mxu0 %v2824
    %6937 = vmatprep.subr.bf16.mxu0 %v2833
    %6938 = vmatpush1.bf16.msra.mxu0 %v2832
    %6939 = vmatprep.subr.bf16.mxu0 %v2841
    %6940 = vmatpush1.bf16.msra.mxu0 %v2840
    %6941 = vmatprep.subr.bf16.mxu0 %v2849
    %6942 = vmatpush1.bf16.msra.mxu0 %v2848
    %6943 = vmatprep.subr.bf16.mxu0 %v2857
    %6944 = vmatpush1.bf16.msra.mxu0 %v2856
    %6945 = vmatprep.subr.bf16.mxu0 %v2865
    %6946 = vmatpush1.bf16.msra.mxu0 %v2864
    %6947 = vmatprep.subr.bf16.mxu0 %v2873
    %6948 = vmatpush1.bf16.msra.mxu0 %v2872
    %6949 = vmatprep.subr.bf16.mxu0 %v2881
    %6950 = vmatpush1.bf16.msra.mxu0 %v2880
    %6951 = vmatprep.subr.bf16.mxu0 %v2889
    %6952 = vmatpush1.bf16.msra.mxu0 %v2888
    %6953 = vmatprep.subr.bf16.mxu0 %v2897
    %6954 = vmatpush1.bf16.msra.mxu0 %v2896
    %6955 = vmatprep.subr.bf16.mxu0 %v2905
    %6956 = vmatpush1.bf16.msra.mxu0 %v2904
    %6957 = vmatprep.subr.bf16.mxu0 %v2913
    %6958 = vmatpush1.bf16.msra.mxu0 %v2912
    %6959 = vmatprep.mubr.bf16.mxu0 %v6516
    %6960 = vmatmul.mubr.bf16.gmra.mrb[0].mxu0 %v6515
    %v6961 = vpop.f32.mrb[0].mxu0
    %v6962 = vadd.f32 %v6675, %v6961
    %v6963 = vpop.f32.mrb[0].mxu0
    %v6964 = vadd.f32 %v6677, %v6963
    %v6965 = vpop.f32.mrb[0].mxu0
    %v6966 = vpop.f32.mrb[0].mxu0
    %6967 = vdwg.mxu0
    %6968 = vmatprep.subr.bf16.mxu0 %v2921
    %6969 = vmatpush1.bf16.msra.mxu0 %v2920
    %6970 = vmatprep.subr.bf16.mxu0 %v2929
    %6971 = vmatpush1.bf16.msra.mxu0 %v2928
    %6972 = vmatprep.subr.bf16.mxu0 %v2937
    %6973 = vmatpush1.bf16.msra.mxu0 %v2936
    %6974 = vmatprep.subr.bf16.mxu0 %v2945
    %6975 = vmatpush1.bf16.msra.mxu0 %v2944
    %6976 = vmatprep.subr.bf16.mxu0 %v2953
    %6977 = vmatpush1.bf16.msra.mxu0 %v2952
    %6978 = vmatprep.subr.bf16.mxu0 %v2961
    %6979 = vmatpush1.bf16.msra.mxu0 %v2960
    %6980 = vmatprep.subr.bf16.mxu0 %v2969
    %6981 = vmatpush1.bf16.msra.mxu0 %v2968
    %6982 = vmatprep.subr.bf16.mxu0 %v2977
    %6983 = vmatpush1.bf16.msra.mxu0 %v2976
    %6984 = vmatprep.subr.bf16.mxu0 0
    %6985 = vmatpush1.bf16.msra.mxu0 0
    %6986 = vmatprep.subr.bf16.mxu0 0
    %6987 = vmatpush1.bf16.msra.mxu0 0
    %6988 = vmatprep.subr.bf16.mxu0 0
    %6989 = vmatpush1.bf16.msra.mxu0 0
    %6990 = vmatprep.subr.bf16.mxu0 0
    %6991 = vmatpush1.bf16.msra.mxu0 0
    %6992 = vmatprep.subr.bf16.mxu0 0
    %6993 = vmatpush1.bf16.msra.mxu0 0
    %6994 = vmatprep.subr.bf16.mxu0 0
    %6995 = vmatpush1.bf16.msra.mxu0 0
    %6996 = vmatprep.subr.bf16.mxu0 0
    %6997 = vmatpush1.bf16.msra.mxu0 0
    %6998 = vmatprep.subr.bf16.mxu0 0
    %6999 = vmatpush1.bf16.msra.mxu0 0
    %7000 = vmatprep.mubr.bf16.mxu0 0
    %7001 = vmatmul.mubr.bf16.gmra.mrb[0].mxu0 %v6514
    %v7002 = vpop.f32.mrb[0].mxu0
    %v7003 = vadd.f32 %v6962, %v7002
    %v7004 = vpop.f32.mrb[0].mxu0
    %v7005 = vadd.f32 %v6964, %v7004
    %v7006 = vpop.f32.mrb[0].mxu0
    %v7007 = vpop.f32.mrb[0].mxu0
    %7008 = vdwg.mxu0
    %v7009 = vadd.f32 %v6757, %v3502
    %v7010 = vadd.f32 %v6759, %v3506
    %v7011 = vadd.f32 %v6839, %v3510
    %v7012 = vadd.f32 %v6841, %v3514
    %v7013 = vadd.f32 %v6921, %v3518
    %v7014 = vadd.f32 %v6923, %v3522
    %v7015 = vadd.f32 %v7003, %v3526
    %v7016 = vadd.f32 %v7005, %v3530
    %v7017 = vxor.u32 %v7009, 2147483648
    %v7018 = vxor.u32 %v7010, 2147483648
    %v7019 = vmul.f32 %v7017, 1.442695
    %v7020 = vpow.pop %v7019
    %v7021 = vmul.f32 %v7018, 1.442695
    %v7022 = vpow.pop %v7021
    %v7023 = vadd.f32 %v7020, 1.0
    %v7024 = vadd.f32 %v7022, 1.0
    %v7025 = vrcp.pop %v7023
    %v7026 = vmul.f32 1.0, %v7025
    %v7027 = vrcp.pop %v7024
    %v7028 = vmul.f32 1.0, %v7027
    %v7029 = vxor.u32 %v7011, 2147483648
    %v7030 = vxor.u32 %v7012, 2147483648
    %v7031 = vmul.f32 %v7029, 1.442695
    %v7032 = vpow.pop %v7031
    %v7033 = vmul.f32 %v7030, 1.442695
    %v7034 = vpow.pop %v7033
    %v7035 = vadd.f32 %v7032, 1.0
    %v7036 = vadd.f32 %v7034, 1.0
    %v7037 = vrcp.pop %v7035
    %v7038 = vmul.f32 1.0, %v7037
    %v7039 = vrcp.pop %v7036
    %v7040 = vmul.f32 1.0, %v7039
    %v7041 = vtanh.pop %v7013
    %v7042 = vtanh.pop %v7014
    %v7043 = vxor.u32 %v7015, 2147483648
    %v7044 = vxor.u32 %v7016, 2147483648
    %v7045 = vmul.f32 %v7043, 1.442695
    %v7046 = vpow.pop %v7045
    %v7047 = vmul.f32 %v7044, 1.442695
    %v7048 = vpow.pop %v7047
    %v7049 = vadd.f32 %v7046, 1.0
    %v7050 = vadd.f32 %v7048, 1.0
    %v7051 = vrcp.pop %v7049
    %v7052 = vmul.f32 1.0, %v7051
    %v7053 = vrcp.pop %v7050
    %v7054 = vmul.f32 1.0, %v7053
    %v7055 = vmul.f32 %v7038, %v6283
    %v7056 = vmul.f32 %v7040, %v6284
    %v7057 = vmul.f32 %v7026, %v7041
    %v7058 = vmul.f32 %v7028, %v7042
    %v7059 = vadd.f32 %v7055, %v7057
    %v7060 = vadd.f32 %v7056, %v7058
    %v7061 = vtanh.pop %v7059
    %v7062 = vtanh.pop %v7060
    %v7063 = vmul.f32 %v7052, %v7061
    %v7064 = vmul.f32 %v7054, %v7062
    %7065 = vst [vmem:[#allocation2] sm:$0xff] %v7063
    %7066 = vst [vmem:[#allocation2 + $0x8] sm:$0xff] %v7064
    %7067 = vst [vmem:[#allocation3] sm:$0xff] %v7059
    %7068 = vst [vmem:[#allocation3 + $0x8] sm:$0xff] %v7060
    %v7069 = vpack.c.bf16 %v7063, %v7063
    %v7070 = vpack.c.bf16 %v7064, %v7064
    %7071 = vmatprep.subr.bf16.mxu0 0
    %7072 = vmatpush1.bf16.msra.mxu0 %v3671
    %7073 = vmatprep.subr.bf16.mxu0 0
    %7074 = vmatpush1.bf16.msra.mxu0 %v3672
    %7075 = vmatprep.subr.bf16.mxu0 0
    %7076 = vmatpush1.bf16.msra.mxu0 %v3673
    %7077 = vmatprep.subr.bf16.mxu0 0
    %7078 = vmatpush1.bf16.msra.mxu0 %v3674
    %7079 = vmatprep.subr.bf16.mxu0 0
    %7080 = vmatpush1.bf16.msra.mxu0 %v3675
    %7081 = vmatprep.subr.bf16.mxu0 0
    %7082 = vmatpush1.bf16.msra.mxu0 %v3676
    %7083 = vmatprep.subr.bf16.mxu0 0
    %7084 = vmatpush1.bf16.msra.mxu0 %v3677
    %7085 = vmatprep.subr.bf16.mxu0 0
    %7086 = vmatpush1.bf16.msra.mxu0 %v3678
    %7087 = vmatprep.subr.bf16.mxu0 0
    %7088 = vmatpush1.bf16.msra.mxu0 %v3679
    %7089 = vmatprep.subr.bf16.mxu0 0
    %7090 = vmatpush1.bf16.msra.mxu0 %v3680
    %7091 = vmatprep.subr.bf16.mxu0 0
    %7092 = vmatpush1.bf16.msra.mxu0 %v3681
    %7093 = vmatprep.subr.bf16.mxu0 0
    %7094 = vmatpush1.bf16.msra.mxu0 %v3682
    %7095 = vmatprep.subr.bf16.mxu0 0
    %7096 = vmatpush1.bf16.msra.mxu0 %v3683
    %7097 = vmatprep.subr.bf16.mxu0 0
    %7098 = vmatpush1.bf16.msra.mxu0 %v3684
    %7099 = vmatprep.subr.bf16.mxu0 0
    %7100 = vmatpush1.bf16.msra.mxu0 %v3685
    %7101 = vmatprep.subr.bf16.mxu0 0
    %7102 = vmatpush1.bf16.msra.mxu0 %v3686
    %7103 = vmatprep.mubr.bf16.mxu0 %v7070
    %7104 = vmatmul.mubr.bf16.gmra.mrb[0].mxu0 %v7069
    %v7105 = vpop.f32.mrb[0].mxu0
    %v7106 = vadd.f32 %v3605, %v7105
    %v7107 = vpop.f32.mrb[0].mxu0
    %v7108 = vpop.f32.mrb[0].mxu0
    %v7109 = vpop.f32.mrb[0].mxu0
    %7110 = vdwg.mxu0
    %7111 = vmax.xlane.f32.xlu0 %v7106
    %v7112 = vpop.xlane.xlu0 %7111
    %v7113 = vsub.f32 %v7106, %v7112
    %v7114 = vmul.f32 %v7113, 1.442695
    %v7115 = vpow.pop %v7114
    %7116 = vadd.xlane.f32.xlu0 %v7115
    %v7117 = vpop.xlane.xlu0 %7116
    %v7118 = vlog2.pop %v7117
    %v7119 = vmul.f32 %v7118, 0.6931472
    %v7120 = vsub.f32 %v7113, %v7119
    %s7121 = scalar_lea.vmem [#allocation4], 40
    %7122 = vst [vmem:[%s7121] sm:$0xff] %v7120
    // Predicated region
    $region50: #{nmt_forward.3} parent=1 // pred_check
      _
    $region51: #{nmt_forward.3} parent=1 // pred_check_branch
      %7124 = sbr.rel (0) target = $region53
    $region52: #{nmt_forward.3} parent=1 // pred_region
      %s7126 = ssub.s32 768, 768
      %7127 = vsyncadd [#allocation5], %s7126
      %s7128 = sshll.u32 [#allocation4], 4
      %s7129 = int_to_ptr.vmem [resolvable:$true] %s7128
      %7134 = dma.vmem_to_hbm [thread:$0]  %s7129, 768, %s12, [#allocation5], 128, 128, 8
    $region53: #{nmt_forward.3} parent=1 // pred_fallthru
      _
    // Predicated region
    $region54: #{nmt_forward.3} parent=1 // pred_check
      _
    $region55: #{nmt_forward.3} parent=1 // pred_check_branch
      %7136 = sbr.rel (0) target = $region57
    $region56: #{nmt_forward.3} parent=1 // pred_region
      %7137 = dma.done [#allocation5], 768
    $region57: #{nmt_forward.3} parent=1 // pred_fallthru
      _
    %7138 = vsyncpa [#allocation5], 1

</llo_original>
